<compile_context>
chip_gen: v7x
topology: tpu7x:2x2x1
jax: 0.10.0
libtpu: 0.0.40
codegen_flags: <defaults>
</compile_context>

<pallas_src>
import functools

import numpy as np
import jax
import jax.numpy as jnp
from jax.experimental import pallas as pl
from jax.experimental.pallas import tpu as pltpu


# ----------------------------------------------------------------------------
# Fused kernel: patch-embed -> (halo scratch) -> in-VMEM im2col -> neck matmul
#               + folded BN bias + LeakyReLU -> head matmul + bias -> sigmoid.
# ----------------------------------------------------------------------------
def _yolo_fused_kernel(xp_ref, wp_ref, mask_ref, wn_ref, bn_ref, wh_ref,
                       bh_ref, o_ref, fpad_ref, *, wf):
    """
    xp_ref  : (R, K)          bf16  flattened 64x64 image patches (R rows)
    wp_ref  : (K, Cf)         bf16  patch-embed weight          (resident)
    mask_ref: (R, 9*Cf)       f32   0/1 validity mask, 3x3 taps (resident)
    wn_ref  : (9*Cf, 512)     bf16  neck weight, BN scale folded(resident)
    bn_ref  : (1, 512)        f32   folded BN bias              (resident)
    wh_ref  : (512, 128)      f32-> bf16 head weight, lane-pad  (resident)
    bh_ref  : (1, 128)        f32   head bias, lane-padded      (resident)
    o_ref   : (R, 128)        f32   sigmoid predictions (lane-dense)
    fpad_ref: (R + 2*pad, Cf) f32   VMEM scratch, row-halo-padded features
    """
    pad0 = max(8, wf + 1)
    cf = fpad_ref.shape[1]
    r = fpad_ref.shape[0] - 2 * pad0

    # Backbone stand-in: non-overlapping 64x64 patch embedding, one full-K dot.
    feat = jnp.dot(xp_ref[...], wp_ref[...], preferred_element_type=jnp.float32)

    # Stage the (R, Cf) feature rows in a halo-padded scratch: rows above and
    # below are zero so every 3x3 tap becomes a plain static sublane slice.
    zpad = jnp.zeros((pad0, cf), jnp.float32)
    fpad_ref[0:pad0, :] = zpad
    fpad_ref[pad0 + r:pad0 + r + pad0, :] = zpad
    fpad_ref[pad0:pad0 + r, :] = feat

    # In-VMEM im2col for the 3x3 / pad=1 conv: tap (kh, kw) of output row i is
    # input row i + (kh-1)*wf + (kw-1); spatial / image-boundary validity is
    # applied with the precomputed 0/1 mask (handles left/right wrap and
    # top/bottom + cross-image rows).
    pieces = []
    for kh in range(3):
        for kw in range(3):
            s = (kh - 1) * wf + (kw - 1)
            pieces.append(fpad_ref[pad0 + s:pad0 + s + r, :])
    xcol = (jnp.concatenate(pieces, axis=-1) * mask_ref[...]).astype(jnp.bfloat16)

    # Neck: conv-as-matmul (K = 9*Cf) + folded BN bias + LeakyReLU(0.1).
    neck = jnp.dot(xcol, wn_ref[...], preferred_element_type=jnp.float32)
    neck = neck + bn_ref[...]
    neck = jnp.where(neck > 0, neck, 0.1 * neck)

    # Head: 1x1 conv (out channels lane-padded to 128) + bias + sigmoid.
    out = jnp.dot(neck.astype(jnp.bfloat16), wh_ref[...],
                  preferred_element_type=jnp.float32) + bh_ref[...]
    o_ref[...] = jax.nn.sigmoid(out).astype(o_ref.dtype)


# ----------------------------------------------------------------------------
# Wrapper: layout plumbing + pallas_call construction.
# ----------------------------------------------------------------------------
def yolo_forward_pallas(x_nchw, w_patch, w_neck, bn_bias, w_head, b_head, *,
                        stride, c_out, batch_block=None):
    n, c, hin, win = x_nchw.shape
    assert hin % stride == 0 and win % stride == 0
    hf, wf = hin // stride, win // stride
    k = stride * stride * c
    cf = w_patch.shape[1]
    neck_out = w_neck.shape[1]
    lane = w_head.shape[1]
    assert w_patch.shape[0] == k and w_neck.shape[0] == 9 * cf

    if batch_block is None:
        batch_block = n                      # single grid step at toy sizes
    assert n % batch_block == 0
    rows_blk = batch_block * hf * wf
    m = n * hf * wf
    assert rows_blk == m or rows_blk % 8 == 0

    # Layout plumbing (XLA glue): NCHW -> bf16 -> (M, 64*64*3) patch rows.
    # TODO(synk): fold this patch extraction / transpose into the kernel's DMA
    # (index the NCHW input directly per patch row) to avoid one extra HBM
    # pass over the image at large input sizes.
    x = x_nchw.astype(jnp.bfloat16)
    x = jnp.transpose(x, (0, 2, 3, 1))                            # NHWC
    x = x.reshape(n, hf, stride, wf, stride, c)
    x = x.transpose(0, 1, 3, 2, 4, 5).reshape(m, k)

    # 0/1 validity mask for the 9 conv taps (same for every batch block ->
    # constant index_map, fetched once, stays resident in VMEM).
    ii, jj = np.meshgrid(np.arange(hf), np.arange(wf), indexing="ij")
    ii = np.tile(ii.reshape(-1), batch_block)
    jj = np.tile(jj.reshape(-1), batch_block)
    taps = []
    for kh in range(3):
        for kw in range(3):
            valid = ((ii + kh - 1 >= 0) & (ii + kh - 1 < hf) &
                     (jj + kw - 1 >= 0) & (jj + kw - 1 < wf))
            taps.append(np.repeat(valid[:, None], cf, axis=1))
    mask = jnp.asarray(np.concatenate(taps, axis=1).astype(np.float32))

    pad0 = max(8, wf + 1)
    kernel = functools.partial(_yolo_fused_kernel, wf=wf)

    out = pl.pallas_call(
        kernel,
        out_shape=jax.ShapeDtypeStruct((m, lane), jnp.float32),
        grid=(n // batch_block,),
        in_specs=[
            pl.BlockSpec((rows_blk, k), lambda b: (b, 0)),        # patches
            pl.BlockSpec((k, cf), lambda b: (0, 0)),              # resident
            pl.BlockSpec((rows_blk, 9 * cf), lambda b: (0, 0)),   # resident
            pl.BlockSpec((9 * cf, neck_out), lambda b: (0, 0)),   # resident
            pl.BlockSpec((1, neck_out), lambda b: (0, 0)),        # resident
            pl.BlockSpec((neck_out, lane), lambda b: (0, 0)),     # resident
            pl.BlockSpec((1, lane), lambda b: (0, 0)),            # resident
        ],
        out_specs=pl.BlockSpec((rows_blk, lane), lambda b: (b, 0)),
        scratch_shapes=[pltpu.VMEM((rows_blk + 2 * pad0, cf), jnp.float32)],
        compiler_params=pltpu.CompilerParams(
            dimension_semantics=("parallel",)),
    )(x, w_patch, mask, w_neck, bn_bias, w_head, b_head)

    return out[:, :c_out].reshape(n, hf, wf, c_out)


# ----------------------------------------------------------------------------
# Model wrapper (parameter setup).
# ----------------------------------------------------------------------------
class YoloModelPallas:
    LANE = 128

    def __init__(self, input_size, num_classes, feat_dims=128, seed=0):
        self.stride = 64
        self.grid_size = input_size // self.stride
        self.num_classes = num_classes
        self.feat_dims = feat_dims
        neck_out = 512
        self.head_out = 10 + num_classes   # 2 boxes * (4 coords + 1 obj) + cls

        key = jax.random.PRNGKey(seed)
        k_bb, k_wn, k_bn, k_wh, k_bh = jax.random.split(key, 5)

        # TODO(synk): build_backbone() (pretrained VGG/ResNet + gdown checkpoint
        # download) has no in-script Pallas equivalent; replaced by a
        # deterministic strided patch-embed stand-in producing the same
        # (N, feat_dims, H/64, W/64) feature-map shape.
        w_patch = 0.02 * jax.random.normal(
            k_bb, (self.stride * self.stride * 3, feat_dims), jnp.float32)
        self.w_patch = w_patch.astype(jnp.bfloat16)

        # Neck ConvBlock: Conv2d(feat_dims, 512, k=3, pad=1, bias=False)
        #                 + BatchNorm (inference, folded) + LeakyReLU(0.1).
        w_neck = 0.05 * jax.random.normal(
            k_wn, (3, 3, feat_dims, neck_out), jnp.float32)       # HWIO

        bn_keys = jax.random.split(k_bn, 4)
        gamma = 1.0 + 0.1 * jax.random.normal(bn_keys[0], (neck_out,), jnp.float32)
        beta = 0.1 * jax.random.normal(bn_keys[1], (neck_out,), jnp.float32)
        mean = 0.1 * jax.random.normal(bn_keys[2], (neck_out,), jnp.float32)
        var = jnp.abs(1.0 + 0.1 * jax.random.normal(bn_keys[3], (neck_out,), jnp.float32))
        scale = gamma / jnp.sqrt(var + 1e-5)

        # Fold BN scale into the conv weight columns (LeakyReLU comes after,
        # so this is mathematically identical); only the bias add stays in
        # the kernel.
        w_neck_folded = w_neck * scale[None, None, None, :]
        self.w_neck = w_neck_folded.reshape(9 * feat_dims, neck_out).astype(jnp.bfloat16)
        self.bn_bias = (beta - mean * scale).reshape(1, neck_out).astype(jnp.float32)

        # Head: Conv2d(512, 10+num_classes, k=1) -> zero-pad out-channels to
        # 128 so the kernel's output stores are lane-dense; slice afterwards.
        w_head = 0.05 * jax.random.normal(k_wh, (neck_out, self.head_out), jnp.float32)
        b_head = 0.05 * jax.random.normal(k_bh, (self.head_out,), jnp.float32)
        pad_c = self.LANE - self.head_out
        self.w_head = jnp.pad(w_head, ((0, 0), (0, pad_c))).astype(jnp.bfloat16)
        self.b_head = jnp.pad(b_head, (0, pad_c)).reshape(1, self.LANE).astype(jnp.float32)

    def __call__(self, x_nchw, batch_block=None):
        return yolo_forward_pallas(
            x_nchw, self.w_patch, self.w_neck, self.bn_bias,
            self.w_head, self.b_head,
            stride=self.stride, c_out=self.head_out, batch_block=batch_block)


# ----------------------------------------------------------------------------
if __name__ == "__main__":
    input_size = 128          # -> grid_size = 128 // 64 = 2
    num_classes = 20          # -> 30 output channels (8 box + 2 obj + 20 cls)
    batch = 8                 # -> M = 8 * 2 * 2 = 32 rows, one grid step

    key = jax.random.PRNGKey(0)
    x = jax.random.normal(key, (batch, 3, input_size, input_size), jnp.float32)  # NCHW

    model = YoloModelPallas(input_size=input_size, num_classes=num_classes,
                            feat_dims=128, seed=0)
    fwd = jax.jit(lambda inp: model(inp))
    out = jax.block_until_ready(fwd(x))

    g = input_size // 64
    assert out.shape == (batch, g, g, 10 + num_classes), out.shape
    assert bool(jnp.all((out >= 0.0) & (out <= 1.0))), "sigmoid range violated"
    assert bool(jnp.all(jnp.isfinite(out))), "non-finite outputs"
    print("KERNEL_OK")
</pallas_src>

<mosaic_0001>
module attributes {stable_mosaic.version = 11 : i64} {
  func.func @_yolo_fused_kernel(%arg0: i32, %arg1: memref<32x12288xbf16, #tpu.memory_space<vmem>>, %arg2: memref<12288x128xbf16, #tpu.memory_space<vmem>>, %arg3: memref<32x1152xf32, #tpu.memory_space<vmem>>, %arg4: memref<1152x512xbf16, #tpu.memory_space<vmem>>, %arg5: memref<1x512xf32, #tpu.memory_space<vmem>>, %arg6: memref<512x128xbf16, #tpu.memory_space<vmem>>, %arg7: memref<1x128xf32, #tpu.memory_space<vmem>>, %arg8: memref<32x128xf32, #tpu.memory_space<vmem>>, %arg9: memref<48x128xf32, #tpu.memory_space<vmem>>) attributes {dimension_semantics = [#tpu.dimension_semantics<parallel>], iteration_bounds = array<i64: 1>, scalar_prefetch = 0 : i64, scratch_operands = 1 : i64, tpu.core_type = #tpu.core_type<tc>, window_params = [{transform_indices = @transform_0, window_bounds = array<i64: 32, 12288>}, {pipeline_mode = #tpu.pipeline_mode<synchronous>, transform_indices = @transform_1, window_bounds = array<i64: 12288, 128>}, {pipeline_mode = #tpu.pipeline_mode<synchronous>, transform_indices = @transform_2, window_bounds = array<i64: 32, 1152>}, {pipeline_mode = #tpu.pipeline_mode<synchronous>, transform_indices = @transform_3, window_bounds = array<i64: 1152, 512>}, {pipeline_mode = #tpu.pipeline_mode<synchronous>, transform_indices = @transform_4, window_bounds = array<i64: 1, 512>}, {pipeline_mode = #tpu.pipeline_mode<synchronous>, transform_indices = @transform_5, window_bounds = array<i64: 512, 128>}, {pipeline_mode = #tpu.pipeline_mode<synchronous>, transform_indices = @transform_6, window_bounds = array<i64: 1, 128>}, {transform_indices = @transform_7, window_bounds = array<i64: 32, 128>}]} {
    %c0 = arith.constant 0 : index
    %c0_0 = arith.constant 0 : index
    %0 = vector.load %arg1[%c0, %c0_0] : memref<32x12288xbf16, #tpu.memory_space<vmem>>, vector<32x12288xbf16>
    %c0_1 = arith.constant 0 : index
    %c0_2 = arith.constant 0 : index
    %1 = vector.load %arg2[%c0_1, %c0_2] : memref<12288x128xbf16, #tpu.memory_space<vmem>>, vector<12288x128xbf16>
    %cst = arith.constant dense<0.000000e+00> : vector<32x128xf32>
    %2 = tpu.matmul %0, %1, %cst {dimension_numbers = #tpu.dot_dimension_numbers<[1], [0], [0], [1], [0, 0, 1, 1], [], []>} : vector<32x12288xbf16>, vector<12288x128xbf16>, vector<32x128xf32> -> vector<32x128xf32>
    %cst_3 = arith.constant 0.000000e+00 : f32
    %3 = vector.broadcast %cst_3 : f32 to vector<8x128xf32>
    %c0_4 = arith.constant 0 : index
    %c0_5 = arith.constant 0 : index
    %4 = vector.load %arg9[%c0_4, %c0_5] : memref<48x128xf32, #tpu.memory_space<vmem>>, vector<8x128xf32>
    tpu.vector_store %arg9[%c0_4, %c0_5], %3 {strides = array<i32>} : memref<48x128xf32, #tpu.memory_space<vmem>>, vector<8x128xf32>,
    %c40 = arith.constant 40 : index
    %c0_6 = arith.constant 0 : index
    %5 = vector.load %arg9[%c40, %c0_6] : memref<48x128xf32, #tpu.memory_space<vmem>>, vector<8x128xf32>
    tpu.vector_store %arg9[%c40, %c0_6], %3 {strides = array<i32>} : memref<48x128xf32, #tpu.memory_space<vmem>>, vector<8x128xf32>,
    %c8 = arith.constant 8 : index
    %c0_7 = arith.constant 0 : index
    %6 = vector.load %arg9[%c8, %c0_7] : memref<48x128xf32, #tpu.memory_space<vmem>>, vector<32x128xf32>
    tpu.vector_store %arg9[%c8, %c0_7], %2 {strides = array<i32>} : memref<48x128xf32, #tpu.memory_space<vmem>>, vector<32x128xf32>,
    %c5 = arith.constant 5 : index
    %c0_8 = arith.constant 0 : index
    %7 = vector.load %arg9[%c5, %c0_8] : memref<48x128xf32, #tpu.memory_space<vmem>>, vector<32x128xf32>
    %c6 = arith.constant 6 : index
    %c0_9 = arith.constant 0 : index
    %8 = vector.load %arg9[%c6, %c0_9] : memref<48x128xf32, #tpu.memory_space<vmem>>, vector<32x128xf32>
    %c7 = arith.constant 7 : index
    %c0_10 = arith.constant 0 : index
    %9 = vector.load %arg9[%c7, %c0_10] : memref<48x128xf32, #tpu.memory_space<vmem>>, vector<32x128xf32>
    %c7_11 = arith.constant 7 : index
    %c0_12 = arith.constant 0 : index
    %10 = vector.load %arg9[%c7_11, %c0_12] : memref<48x128xf32, #tpu.memory_space<vmem>>, vector<32x128xf32>
    %c8_13 = arith.constant 8 : index
    %c0_14 = arith.constant 0 : index
    %11 = vector.load %arg9[%c8_13, %c0_14] : memref<48x128xf32, #tpu.memory_space<vmem>>, vector<32x128xf32>
    %c9 = arith.constant 9 : index
    %c0_15 = arith.constant 0 : index
    %12 = vector.load %arg9[%c9, %c0_15] : memref<48x128xf32, #tpu.memory_space<vmem>>, vector<32x128xf32>
    %c9_16 = arith.constant 9 : index
    %c0_17 = arith.constant 0 : index
    %13 = vector.load %arg9[%c9_16, %c0_17] : memref<48x128xf32, #tpu.memory_space<vmem>>, vector<32x128xf32>
    %c10 = arith.constant 10 : index
    %c0_18 = arith.constant 0 : index
    %14 = vector.load %arg9[%c10, %c0_18] : memref<48x128xf32, #tpu.memory_space<vmem>>, vector<32x128xf32>
    %c11 = arith.constant 11 : index
    %c0_19 = arith.constant 0 : index
    %15 = vector.load %arg9[%c11, %c0_19] : memref<48x128xf32, #tpu.memory_space<vmem>>, vector<32x128xf32>
    %16 = tpu.concatenate %7, %8, %9, %10, %11, %12, %13, %14, %15 in 1 : vector<32x128xf32>, vector<32x128xf32>, vector<32x128xf32>, vector<32x128xf32>, vector<32x128xf32>, vector<32x128xf32>, vector<32x128xf32>, vector<32x128xf32>, vector<32x128xf32> -> vector<32x1152xf32>
    %c0_20 = arith.constant 0 : index
    %c0_21 = arith.constant 0 : index
    %17 = vector.load %arg3[%c0_20, %c0_21] : memref<32x1152xf32, #tpu.memory_space<vmem>>, vector<32x1152xf32>
    %18 = arith.mulf %16, %17 : vector<32x1152xf32>
    %19 = arith.truncf %18 : vector<32x1152xf32> to vector<32x1152xbf16>
    %c0_22 = arith.constant 0 : index
    %c0_23 = arith.constant 0 : index
    %20 = vector.load %arg4[%c0_22, %c0_23] : memref<1152x512xbf16, #tpu.memory_space<vmem>>, vector<1152x512xbf16>
    %cst_24 = arith.constant dense<0.000000e+00> : vector<32x512xf32>
    %21 = tpu.matmul %19, %20, %cst_24 {dimension_numbers = #tpu.dot_dimension_numbers<[1], [0], [0], [1], [0, 0, 1, 1], [], []>} : vector<32x1152xbf16>, vector<1152x512xbf16>, vector<32x512xf32> -> vector<32x512xf32>
    %c0_25 = arith.constant 0 : index
    %c0_26 = arith.constant 0 : index
    %22 = vector.load %arg5[%c0_25, %c0_26] : memref<1x512xf32, #tpu.memory_space<vmem>>, vector<1x512xf32>
    %23 = vector.broadcast %22 : vector<1x512xf32> to vector<32x512xf32>
    %24 = arith.addf %21, %23 : vector<32x512xf32>
    %cst_27 = arith.constant 0.000000e+00 : f32
    %25 = vector.broadcast %cst_27 : f32 to vector<32x512xf32>
    %26 = arith.cmpf ogt, %24, %25 : vector<32x512xf32>
    %cst_28 = arith.constant 1.000000e-01 : f32
    %27 = vector.broadcast %cst_28 : f32 to vector<32x512xf32>
    %28 = arith.mulf %27, %24 : vector<32x512xf32>
    %29 = arith.select %26, %24, %28 : vector<32x512xi1>, vector<32x512xf32>
    %30 = arith.truncf %29 : vector<32x512xf32> to vector<32x512xbf16>
    %c0_29 = arith.constant 0 : index
    %c0_30 = arith.constant 0 : index
    %31 = vector.load %arg6[%c0_29, %c0_30] : memref<512x128xbf16, #tpu.memory_space<vmem>>, vector<512x128xbf16>
    %cst_31 = arith.constant dense<0.000000e+00> : vector<32x128xf32>
    %32 = tpu.matmul %30, %31, %cst_31 {dimension_numbers = #tpu.dot_dimension_numbers<[1], [0], [0], [1], [0, 0, 1, 1], [], []>} : vector<32x512xbf16>, vector<512x128xbf16>, vector<32x128xf32> -> vector<32x128xf32>
    %c0_32 = arith.constant 0 : index
    %c0_33 = arith.constant 0 : index
    %33 = vector.load %arg7[%c0_32, %c0_33] : memref<1x128xf32, #tpu.memory_space<vmem>>, vector<1x128xf32>
    %34 = vector.broadcast %33 : vector<1x128xf32> to vector<32x128xf32>
    %35 = arith.addf %32, %34 : vector<32x128xf32>
    %36 = arith.negf %35 : vector<32x128xf32>
    %37 = math.exp %36 : vector<32x128xf32>
    %cst_34 = arith.constant 1.000000e+00 : f32
    %38 = vector.broadcast %cst_34 : f32 to vector<32x128xf32>
    %39 = arith.addf %38, %37 : vector<32x128xf32>
    %40 = arith.divf %38, %39 : vector<32x128xf32>
    %c0_35 = arith.constant 0 : index
    %c0_36 = arith.constant 0 : index
    %41 = vector.load %arg8[%c0_35, %c0_36] : memref<32x128xf32, #tpu.memory_space<vmem>>, vector<32x128xf32>
    tpu.vector_store %arg8[%c0_35, %c0_36], %40 {strides = array<i32>} : memref<32x128xf32, #tpu.memory_space<vmem>>, vector<32x128xf32>,
    return
  }
  func.func @transform_0(%arg0: i32) -> (i32, i32) {
    %c0_i32 = arith.constant 0 : i32
    %c0_i32_0 = arith.constant 0 : i32
    return %arg0, %c0_i32 : i32, i32
  }
  func.func @transform_1(%arg0: i32) -> (i32, i32) {
    %c0_i32 = arith.constant 0 : i32
    %c0_i32_0 = arith.constant 0 : i32
    %c0_i32_1 = arith.constant 0 : i32
    return %c0_i32, %c0_i32_0 : i32, i32
  }
  func.func @transform_2(%arg0: i32) -> (i32, i32) {
    %c0_i32 = arith.constant 0 : i32
    %c0_i32_0 = arith.constant 0 : i32
    %c0_i32_1 = arith.constant 0 : i32
    return %c0_i32, %c0_i32_0 : i32, i32
  }
  func.func @transform_3(%arg0: i32) -> (i32, i32) {
    %c0_i32 = arith.constant 0 : i32
    %c0_i32_0 = arith.constant 0 : i32
    %c0_i32_1 = arith.constant 0 : i32
    return %c0_i32, %c0_i32_0 : i32, i32
  }
  func.func @transform_4(%arg0: i32) -> (i32, i32) {
    %c0_i32 = arith.constant 0 : i32
    %c0_i32_0 = arith.constant 0 : i32
    %c0_i32_1 = arith.constant 0 : i32
    return %c0_i32, %c0_i32_0 : i32, i32
  }
  func.func @transform_5(%arg0: i32) -> (i32, i32) {
    %c0_i32 = arith.constant 0 : i32
    %c0_i32_0 = arith.constant 0 : i32
    %c0_i32_1 = arith.constant 0 : i32
    return %c0_i32, %c0_i32_0 : i32, i32
  }
  func.func @transform_6(%arg0: i32) -> (i32, i32) {
    %c0_i32 = arith.constant 0 : i32
    %c0_i32_0 = arith.constant 0 : i32
    %c0_i32_1 = arith.constant 0 : i32
    return %c0_i32, %c0_i32_0 : i32, i32
  }
  func.func @transform_7(%arg0: i32) -> (i32, i32) {
    %c0_i32 = arith.constant 0 : i32
    %c0_i32_0 = arith.constant 0 : i32
    return %arg0, %c0_i32 : i32, i32
  }
}

</mosaic_0001>

<llo_original>
// kernel: _lambda_.1
$region0: #{_lambda_.1}
  #allocation0 [shape = 'u32[]', space=smem, size = 0x4, offset = 0x4, fixed_abs, tag = 'smem constant byte address 0x4 - core index']
  #allocation1 [shape = 'u32[144,128]{1,0:T(1,128)}', space=vmem, size = 0x12000, scoped, tag = 'internal scratch']
  #allocation2 [shape = 'f32[48,128]{1,0:T(8,128)}', space=vmem, size = 0x6000, scoped, tag = 'scratch operand']
  %s0 = inlined_call_operand.vmem [shape: bf16[32,12288], index: 0, kind: input, shape index: {}]
  %s1 = inlined_call_operand.hbm [shape: bf16[12288,128], index: 1, kind: input, shape index: {}]
  %s2 = inlined_call_operand.vmem [shape: f32[32,1152], index: 2, kind: input, shape index: {}]
  %s3 = inlined_call_operand.vmem [shape: bf16[1152,512], index: 3, kind: input, shape index: {}]
  %s4 = inlined_call_operand.vmem [shape: f32[1,512], index: 4, kind: input, shape index: {}]
  %s5 = inlined_call_operand.vmem [shape: bf16[512,128], index: 5, kind: input, shape index: {}]
  %s6 = inlined_call_operand.vmem [shape: f32[1,128], index: 6, kind: input, shape index: {}]
  %s7 = inlined_call_operand.hbm [shape: f32[32,128], index: 7, kind: output, shape index: {}]
  %s8 = sld [smem:[#allocation0]]
  $region42: #{_lambda_.1} parent=0
    _
  %s10 = ssub.s32 1, %s8
  %s11 = scalar_select 0, %s10, %s8
  $region1: #{_lambda_.1} parent=0
    #allocation3 [shape = 'u8[3145728]{0}', space=vmem, size = 0x300000, scoped, tag = 'input window, operand 1, single buffered']
    #allocation4 [shape = 's32[1]{0}', space=sflag, size = 0x4, scoped, tag = 'scoped memory for _lambda_.1']
    #allocation5 [shape = 's32[1]{0}', space=sflag, size = 0x4, scoped, tag = 'scoped memory for _lambda_.1']
    #allocation6 [shape = 'u8[16384]{0}', space=vmem, size = 0x4000, scoped, tag = 'output window, operand 0, single buffered']
    %12 = vsyncpa [#allocation4], 0
    %13 = vsyncpa [#allocation5], 0
    // Predicated region
    $region2: #{_lambda_.1} parent=1 // pred_check
      _
    $region3: #{_lambda_.1} parent=1 // pred_check_branch
      %15 = sbr.rel (0) target = $region5
    $region4: #{_lambda_.1} parent=1 // pred_region
      _
    $region5: #{_lambda_.1} parent=1 // pred_fallthru
      _
    // Predicated region
    $region6: #{_lambda_.1} parent=1 // pred_check
      _
    $region7: #{_lambda_.1} parent=1 // pred_check_branch
      %17 = sbr.rel (0) target = $region9
    $region8: #{_lambda_.1} parent=1 // pred_region
      %s19 = ssub.s32 98304, 98304
      %20 = vsyncadd [#allocation4], %s19
      %s21 = sshll.u32 [#allocation3], 4
      %s22 = int_to_ptr.vmem [resolvable:$true] %s21
      %27 = dma.hbm_to_vmem [thread:$0]  %s1, 98304, %s22, [#allocation4], 64, 64, 4
    $region9: #{_lambda_.1} parent=1 // pred_fallthru
      _
    // Predicated region
    $region10: #{_lambda_.1} parent=1 // pred_check
      _
    $region11: #{_lambda_.1} parent=1 // pred_check_branch
      %29 = sbr.rel (0) target = $region13
    $region12: #{_lambda_.1} parent=1 // pred_region
      _
    $region13: #{_lambda_.1} parent=1 // pred_fallthru
      _
    // Predicated region
    $region14: #{_lambda_.1} parent=1 // pred_check
      _
    $region15: #{_lambda_.1} parent=1 // pred_check_branch
      %31 = sbr.rel (0) target = $region17
    $region16: #{_lambda_.1} parent=1 // pred_region
      _
    $region17: #{_lambda_.1} parent=1 // pred_fallthru
      _
    // Predicated region
    $region18: #{_lambda_.1} parent=1 // pred_check
      _
    $region19: #{_lambda_.1} parent=1 // pred_check_branch
      %33 = sbr.rel (0) target = $region21
    $region20: #{_lambda_.1} parent=1 // pred_region
      _
    $region21: #{_lambda_.1} parent=1 // pred_fallthru
      _
    // Predicated region
    $region22: #{_lambda_.1} parent=1 // pred_check
      _
    $region23: #{_lambda_.1} parent=1 // pred_check_branch
      %35 = sbr.rel (0) target = $region25
    $region24: #{_lambda_.1} parent=1 // pred_region
      _
    $region25: #{_lambda_.1} parent=1 // pred_fallthru
      _
    // Predicated region
    $region26: #{_lambda_.1} parent=1 // pred_check
      _
    $region27: #{_lambda_.1} parent=1 // pred_check_branch
      %37 = sbr.rel (0) target = $region29
    $region28: #{_lambda_.1} parent=1 // pred_region
      _
    $region29: #{_lambda_.1} parent=1 // pred_fallthru
      _
    // Predicated region
    $region30: #{_lambda_.1} parent=1 // pred_check
      _
    $region31: #{_lambda_.1} parent=1 // pred_check_branch
      %39 = sbr.rel (0) target = $region33
    $region32: #{_lambda_.1} parent=1 // pred_region
      %40 = dma.done [#allocation4], 98304
    $region33: #{_lambda_.1} parent=1 // pred_fallthru
      _
    %v42 = vld [vmem:[%s0] sm:$0xff]
    %v43 = vld [vmem:[%s0 + $0x8] sm:$0xff]
    %v44 = vld [vmem:[%s0 + $0x10] sm:$0xff]
    %v45 = vld [vmem:[%s0 + $0x18] sm:$0xff]
    %v46 = vld [vmem:[%s0 + $0x20] sm:$0xff]
    %v47 = vld [vmem:[%s0 + $0x28] sm:$0xff]
    %v48 = vld [vmem:[%s0 + $0x30] sm:$0xff]
    %v49 = vld [vmem:[%s0 + $0x38] sm:$0xff]
    %v50 = vld [vmem:[%s0 + $0x40] sm:$0xff]
    %v51 = vld [vmem:[%s0 + $0x48] sm:$0xff]
    %v52 = vld [vmem:[%s0 + $0x50] sm:$0xff]
    %v53 = vld [vmem:[%s0 + $0x58] sm:$0xff]
    %v54 = vld [vmem:[%s0 + $0x60] sm:$0xff]
    %v55 = vld [vmem:[%s0 + $0x68] sm:$0xff]
    %v56 = vld [vmem:[%s0 + $0x70] sm:$0xff]
    %v57 = vld [vmem:[%s0 + $0x78] sm:$0xff]
    %v58 = vld [vmem:[%s0 + $0x80] sm:$0xff]
    %v59 = vld [vmem:[%s0 + $0x88] sm:$0xff]
    %v60 = vld [vmem:[%s0 + $0x90] sm:$0xff]
    %v61 = vld [vmem:[%s0 + $0x98] sm:$0xff]
    %v62 = vld [vmem:[%s0 + $0xa0] sm:$0xff]
    %v63 = vld [vmem:[%s0 + $0xa8] sm:$0xff]
    %v64 = vld [vmem:[%s0 + $0xb0] sm:$0xff]
    %v65 = vld [vmem:[%s0 + $0xb8] sm:$0xff]
    %v66 = vld [vmem:[%s0 + $0xc0] sm:$0xff]
    %v67 = vld [vmem:[%s0 + $0xc8] sm:$0xff]
    %v68 = vld [vmem:[%s0 + $0xd0] sm:$0xff]
    %v69 = vld [vmem:[%s0 + $0xd8] sm:$0xff]
    %v70 = vld [vmem:[%s0 + $0xe0] sm:$0xff]
    %v71 = vld [vmem:[%s0 + $0xe8] sm:$0xff]
    %v72 = vld [vmem:[%s0 + $0xf0] sm:$0xff]
    %v73 = vld [vmem:[%s0 + $0xf8] sm:$0xff]
    %v74 = vld [vmem:[%s0 + $0x100] sm:$0xff]
    %v75 = vld [vmem:[%s0 + $0x108] sm:$0xff]
    %v76 = vld [vmem:[%s0 + $0x110] sm:$0xff]
    %v77 = vld [vmem:[%s0 + $0x118] sm:$0xff]
    %v78 = vld [vmem:[%s0 + $0x120] sm:$0xff]
    %v79 = vld [vmem:[%s0 + $0x128] sm:$0xff]
    %v80 = vld [vmem:[%s0 + $0x130] sm:$0xff]
    %v81 = vld [vmem:[%s0 + $0x138] sm:$0xff]
    %v82 = vld [vmem:[%s0 + $0x140] sm:$0xff]
    %v83 = vld [vmem:[%s0 + $0x148] sm:$0xff]
    %v84 = vld [vmem:[%s0 + $0x150] sm:$0xff]
    %v85 = vld [vmem:[%s0 + $0x158] sm:$0xff]
    %v86 = vld [vmem:[%s0 + $0x160] sm:$0xff]
    %v87 = vld [vmem:[%s0 + $0x168] sm:$0xff]
    %v88 = vld [vmem:[%s0 + $0x170] sm:$0xff]
    %v89 = vld [vmem:[%s0 + $0x178] sm:$0xff]
    %v90 = vld [vmem:[%s0 + $0x180] sm:$0xff]
    %v91 = vld [vmem:[%s0 + $0x188] sm:$0xff]
    %v92 = vld [vmem:[%s0 + $0x190] sm:$0xff]
    %v93 = vld [vmem:[%s0 + $0x198] sm:$0xff]
    %v94 = vld [vmem:[%s0 + $0x1a0] sm:$0xff]
    %v95 = vld [vmem:[%s0 + $0x1a8] sm:$0xff]
    %v96 = vld [vmem:[%s0 + $0x1b0] sm:$0xff]
    %v97 = vld [vmem:[%s0 + $0x1b8] sm:$0xff]
    %v98 = vld [vmem:[%s0 + $0x1c0] sm:$0xff]
    %v99 = vld [vmem:[%s0 + $0x1c8] sm:$0xff]
    %v100 = vld [vmem:[%s0 + $0x1d0] sm:$0xff]
    %v101 = vld [vmem:[%s0 + $0x1d8] sm:$0xff]
    %v102 = vld [vmem:[%s0 + $0x1e0] sm:$0xff]
    %v103 = vld [vmem:[%s0 + $0x1e8] sm:$0xff]
    %v104 = vld [vmem:[%s0 + $0x1f0] sm:$0xff]
    %v105 = vld [vmem:[%s0 + $0x1f8] sm:$0xff]
    %v106 = vld [vmem:[%s0 + $0x200] sm:$0xff]
    %v107 = vld [vmem:[%s0 + $0x208] sm:$0xff]
    %v108 = vld [vmem:[%s0 + $0x210] sm:$0xff]
    %v109 = vld [vmem:[%s0 + $0x218] sm:$0xff]
    %v110 = vld [vmem:[%s0 + $0x220] sm:$0xff]
    %v111 = vld [vmem:[%s0 + $0x228] sm:$0xff]
    %v112 = vld [vmem:[%s0 + $0x230] sm:$0xff]
    %v113 = vld [vmem:[%s0 + $0x238] sm:$0xff]
    %v114 = vld [vmem:[%s0 + $0x240] sm:$0xff]
    %v115 = vld [vmem:[%s0 + $0x248] sm:$0xff]
    %v116 = vld [vmem:[%s0 + $0x250] sm:$0xff]
    %v117 = vld [vmem:[%s0 + $0x258] sm:$0xff]
    %v118 = vld [vmem:[%s0 + $0x260] sm:$0xff]
    %v119 = vld [vmem:[%s0 + $0x268] sm:$0xff]
    %v120 = vld [vmem:[%s0 + $0x270] sm:$0xff]
    %v121 = vld [vmem:[%s0 + $0x278] sm:$0xff]
    %v122 = vld [vmem:[%s0 + $0x280] sm:$0xff]
    %v123 = vld [vmem:[%s0 + $0x288] sm:$0xff]
    %v124 = vld [vmem:[%s0 + $0x290] sm:$0xff]
    %v125 = vld [vmem:[%s0 + $0x298] sm:$0xff]
    %v126 = vld [vmem:[%s0 + $0x2a0] sm:$0xff]
    %v127 = vld [vmem:[%s0 + $0x2a8] sm:$0xff]
    %v128 = vld [vmem:[%s0 + $0x2b0] sm:$0xff]
    %v129 = vld [vmem:[%s0 + $0x2b8] sm:$0xff]
    %v130 = vld [vmem:[%s0 + $0x2c0] sm:$0xff]
    %v131 = vld [vmem:[%s0 + $0x2c8] sm:$0xff]
    %v132 = vld [vmem:[%s0 + $0x2d0] sm:$0xff]
    %v133 = vld [vmem:[%s0 + $0x2d8] sm:$0xff]
    %v134 = vld [vmem:[%s0 + $0x2e0] sm:$0xff]
    %v135 = vld [vmem:[%s0 + $0x2e8] sm:$0xff]
    %v136 = vld [vmem:[%s0 + $0x2f0] sm:$0xff]
    %v137 = vld [vmem:[%s0 + $0x2f8] sm:$0xff]
    %v138 = vld [vmem:[%s0 + $0x300] sm:$0xff]
    %v139 = vld [vmem:[%s0 + $0x308] sm:$0xff]
    %v140 = vld [vmem:[%s0 + $0x310] sm:$0xff]
    %v141 = vld [vmem:[%s0 + $0x318] sm:$0xff]
    %v142 = vld [vmem:[%s0 + $0x320] sm:$0xff]
    %v143 = vld [vmem:[%s0 + $0x328] sm:$0xff]
    %v144 = vld [vmem:[%s0 + $0x330] sm:$0xff]
    %v145 = vld [vmem:[%s0 + $0x338] sm:$0xff]
    %v146 = vld [vmem:[%s0 + $0x340] sm:$0xff]
    %v147 = vld [vmem:[%s0 + $0x348] sm:$0xff]
    %v148 = vld [vmem:[%s0 + $0x350] sm:$0xff]
    %v149 = vld [vmem:[%s0 + $0x358] sm:$0xff]
    %v150 = vld [vmem:[%s0 + $0x360] sm:$0xff]
    %v151 = vld [vmem:[%s0 + $0x368] sm:$0xff]
    %v152 = vld [vmem:[%s0 + $0x370] sm:$0xff]
    %v153 = vld [vmem:[%s0 + $0x378] sm:$0xff]
    %v154 = vld [vmem:[%s0 + $0x380] sm:$0xff]
    %v155 = vld [vmem:[%s0 + $0x388] sm:$0xff]
    %v156 = vld [vmem:[%s0 + $0x390] sm:$0xff]
    %v157 = vld [vmem:[%s0 + $0x398] sm:$0xff]
    %v158 = vld [vmem:[%s0 + $0x3a0] sm:$0xff]
    %v159 = vld [vmem:[%s0 + $0x3a8] sm:$0xff]
    %v160 = vld [vmem:[%s0 + $0x3b0] sm:$0xff]
    %v161 = vld [vmem:[%s0 + $0x3b8] sm:$0xff]
    %v162 = vld [vmem:[%s0 + $0x3c0] sm:$0xff]
    %v163 = vld [vmem:[%s0 + $0x3c8] sm:$0xff]
    %v164 = vld [vmem:[%s0 + $0x3d0] sm:$0xff]
    %v165 = vld [vmem:[%s0 + $0x3d8] sm:$0xff]
    %v166 = vld [vmem:[%s0 + $0x3e0] sm:$0xff]
    %v167 = vld [vmem:[%s0 + $0x3e8] sm:$0xff]
    %v168 = vld [vmem:[%s0 + $0x3f0] sm:$0xff]
    %v169 = vld [vmem:[%s0 + $0x3f8] sm:$0xff]
    %v170 = vld [vmem:[%s0 + $0x400] sm:$0xff]
    %v171 = vld [vmem:[%s0 + $0x408] sm:$0xff]
    %v172 = vld [vmem:[%s0 + $0x410] sm:$0xff]
    %v173 = vld [vmem:[%s0 + $0x418] sm:$0xff]
    %v174 = vld [vmem:[%s0 + $0x420] sm:$0xff]
    %v175 = vld [vmem:[%s0 + $0x428] sm:$0xff]
    %v176 = vld [vmem:[%s0 + $0x430] sm:$0xff]
    %v177 = vld [vmem:[%s0 + $0x438] sm:$0xff]
    %v178 = vld [vmem:[%s0 + $0x440] sm:$0xff]
    %v179 = vld [vmem:[%s0 + $0x448] sm:$0xff]
    %v180 = vld [vmem:[%s0 + $0x450] sm:$0xff]
    %v181 = vld [vmem:[%s0 + $0x458] sm:$0xff]
    %v182 = vld [vmem:[%s0 + $0x460] sm:$0xff]
    %v183 = vld [vmem:[%s0 + $0x468] sm:$0xff]
    %v184 = vld [vmem:[%s0 + $0x470] sm:$0xff]
    %v185 = vld [vmem:[%s0 + $0x478] sm:$0xff]
    %v186 = vld [vmem:[%s0 + $0x480] sm:$0xff]
    %v187 = vld [vmem:[%s0 + $0x488] sm:$0xff]
    %v188 = vld [vmem:[%s0 + $0x490] sm:$0xff]
    %v189 = vld [vmem:[%s0 + $0x498] sm:$0xff]
    %v190 = vld [vmem:[%s0 + $0x4a0] sm:$0xff]
    %v191 = vld [vmem:[%s0 + $0x4a8] sm:$0xff]
    %v192 = vld [vmem:[%s0 + $0x4b0] sm:$0xff]
    %v193 = vld [vmem:[%s0 + $0x4b8] sm:$0xff]
    %v194 = vld [vmem:[%s0 + $0x4c0] sm:$0xff]
    %v195 = vld [vmem:[%s0 + $0x4c8] sm:$0xff]
    %v196 = vld [vmem:[%s0 + $0x4d0] sm:$0xff]
    %v197 = vld [vmem:[%s0 + $0x4d8] sm:$0xff]
    %v198 = vld [vmem:[%s0 + $0x4e0] sm:$0xff]
    %v199 = vld [vmem:[%s0 + $0x4e8] sm:$0xff]
    %v200 = vld [vmem:[%s0 + $0x4f0] sm:$0xff]
    %v201 = vld [vmem:[%s0 + $0x4f8] sm:$0xff]
    %v202 = vld [vmem:[%s0 + $0x500] sm:$0xff]
    %v203 = vld [vmem:[%s0 + $0x508] sm:$0xff]
    %v204 = vld [vmem:[%s0 + $0x510] sm:$0xff]
    %v205 = vld [vmem:[%s0 + $0x518] sm:$0xff]
    %v206 = vld [vmem:[%s0 + $0x520] sm:$0xff]
    %v207 = vld [vmem:[%s0 + $0x528] sm:$0xff]
    %v208 = vld [vmem:[%s0 + $0x530] sm:$0xff]
    %v209 = vld [vmem:[%s0 + $0x538] sm:$0xff]
    %v210 = vld [vmem:[%s0 + $0x540] sm:$0xff]
    %v211 = vld [vmem:[%s0 + $0x548] sm:$0xff]
    %v212 = vld [vmem:[%s0 + $0x550] sm:$0xff]
    %v213 = vld [vmem:[%s0 + $0x558] sm:$0xff]
    %v214 = vld [vmem:[%s0 + $0x560] sm:$0xff]
    %v215 = vld [vmem:[%s0 + $0x568] sm:$0xff]
    %v216 = vld [vmem:[%s0 + $0x570] sm:$0xff]
    %v217 = vld [vmem:[%s0 + $0x578] sm:$0xff]
    %v218 = vld [vmem:[%s0 + $0x580] sm:$0xff]
    %v219 = vld [vmem:[%s0 + $0x588] sm:$0xff]
    %v220 = vld [vmem:[%s0 + $0x590] sm:$0xff]
    %v221 = vld [vmem:[%s0 + $0x598] sm:$0xff]
    %v222 = vld [vmem:[%s0 + $0x5a0] sm:$0xff]
    %v223 = vld [vmem:[%s0 + $0x5a8] sm:$0xff]
    %v224 = vld [vmem:[%s0 + $0x5b0] sm:$0xff]
    %v225 = vld [vmem:[%s0 + $0x5b8] sm:$0xff]
    %v226 = vld [vmem:[%s0 + $0x5c0] sm:$0xff]
    %v227 = vld [vmem:[%s0 + $0x5c8] sm:$0xff]
    %v228 = vld [vmem:[%s0 + $0x5d0] sm:$0xff]
    %v229 = vld [vmem:[%s0 + $0x5d8] sm:$0xff]
    %v230 = vld [vmem:[%s0 + $0x5e0] sm:$0xff]
    %v231 = vld [vmem:[%s0 + $0x5e8] sm:$0xff]
    %v232 = vld [vmem:[%s0 + $0x5f0] sm:$0xff]
    %v233 = vld [vmem:[%s0 + $0x5f8] sm:$0xff]
    %v234 = vld [vmem:[#allocation3] sm:$0xf]
    %v235 = vld [vmem:[#allocation3 + $0x4] sm:$0xf]
    %v236 = vld [vmem:[#allocation3 + $0x8] sm:$0xf]
    %v237 = vld [vmem:[#allocation3 + $0xc] sm:$0xf]
    %v238 = vld [vmem:[#allocation3 + $0x10] sm:$0xf]
    %v239 = vld [vmem:[#allocation3 + $0x14] sm:$0xf]
    %v240 = vld [vmem:[#allocation3 + $0x18] sm:$0xf]
    %v241 = vld [vmem:[#allocation3 + $0x1c] sm:$0xf]
    %v242 = vld [vmem:[#allocation3 + $0x20] sm:$0xf]
    %v243 = vld [vmem:[#allocation3 + $0x24] sm:$0xf]
    %v244 = vld [vmem:[#allocation3 + $0x28] sm:$0xf]
    %v245 = vld [vmem:[#allocation3 + $0x2c] sm:$0xf]
    %v246 = vld [vmem:[#allocation3 + $0x30] sm:$0xf]
    %v247 = vld [vmem:[#allocation3 + $0x34] sm:$0xf]
    %v248 = vld [vmem:[#allocation3 + $0x38] sm:$0xf]
    %v249 = vld [vmem:[#allocation3 + $0x3c] sm:$0xf]
    %v250 = vld [vmem:[#allocation3 + $0x40] sm:$0xf]
    %v251 = vld [vmem:[#allocation3 + $0x44] sm:$0xf]
    %v252 = vld [vmem:[#allocation3 + $0x48] sm:$0xf]
    %v253 = vld [vmem:[#allocation3 + $0x4c] sm:$0xf]
    %v254 = vld [vmem:[#allocation3 + $0x50] sm:$0xf]
    %v255 = vld [vmem:[#allocation3 + $0x54] sm:$0xf]
    %v256 = vld [vmem:[#allocation3 + $0x58] sm:$0xf]
    %v257 = vld [vmem:[#allocation3 + $0x5c] sm:$0xf]
    %v258 = vld [vmem:[#allocation3 + $0x60] sm:$0xf]
    %v259 = vld [vmem:[#allocation3 + $0x64] sm:$0xf]
    %v260 = vld [vmem:[#allocation3 + $0x68] sm:$0xf]
    %v261 = vld [vmem:[#allocation3 + $0x6c] sm:$0xf]
    %v262 = vld [vmem:[#allocation3 + $0x70] sm:$0xf]
    %v263 = vld [vmem:[#allocation3 + $0x74] sm:$0xf]
    %v264 = vld [vmem:[#allocation3 + $0x78] sm:$0xf]
    %v265 = vld [vmem:[#allocation3 + $0x7c] sm:$0xf]
    %v266 = vld [vmem:[#allocation3 + $0x80] sm:$0xf]
    %v267 = vld [vmem:[#allocation3 + $0x84] sm:$0xf]
    %v268 = vld [vmem:[#allocation3 + $0x88] sm:$0xf]
    %v269 = vld [vmem:[#allocation3 + $0x8c] sm:$0xf]
    %v270 = vld [vmem:[#allocation3 + $0x90] sm:$0xf]
    %v271 = vld [vmem:[#allocation3 + $0x94] sm:$0xf]
    %v272 = vld [vmem:[#allocation3 + $0x98] sm:$0xf]
    %v273 = vld [vmem:[#allocation3 + $0x9c] sm:$0xf]
    %v274 = vld [vmem:[#allocation3 + $0xa0] sm:$0xf]
    %v275 = vld [vmem:[#allocation3 + $0xa4] sm:$0xf]
    %v276 = vld [vmem:[#allocation3 + $0xa8] sm:$0xf]
    %v277 = vld [vmem:[#allocation3 + $0xac] sm:$0xf]
    %v278 = vld [vmem:[#allocation3 + $0xb0] sm:$0xf]
    %v279 = vld [vmem:[#allocation3 + $0xb4] sm:$0xf]
    %v280 = vld [vmem:[#allocation3 + $0xb8] sm:$0xf]
    %v281 = vld [vmem:[#allocation3 + $0xbc] sm:$0xf]
    %v282 = vld [vmem:[#allocation3 + $0xc0] sm:$0xf]
    %v283 = vld [vmem:[#allocation3 + $0xc4] sm:$0xf]
    %v284 = vld [vmem:[#allocation3 + $0xc8] sm:$0xf]
    %v285 = vld [vmem:[#allocation3 + $0xcc] sm:$0xf]
    %v286 = vld [vmem:[#allocation3 + $0xd0] sm:$0xf]
    %v287 = vld [vmem:[#allocation3 + $0xd4] sm:$0xf]
    %v288 = vld [vmem:[#allocation3 + $0xd8] sm:$0xf]
    %v289 = vld [vmem:[#allocation3 + $0xdc] sm:$0xf]
    %v290 = vld [vmem:[#allocation3 + $0xe0] sm:$0xf]
    %v291 = vld [vmem:[#allocation3 + $0xe4] sm:$0xf]
    %v292 = vld [vmem:[#allocation3 + $0xe8] sm:$0xf]
    %v293 = vld [vmem:[#allocation3 + $0xec] sm:$0xf]
    %v294 = vld [vmem:[#allocation3 + $0xf0] sm:$0xf]
    %v295 = vld [vmem:[#allocation3 + $0xf4] sm:$0xf]
    %v296 = vld [vmem:[#allocation3 + $0xf8] sm:$0xf]
    %v297 = vld [vmem:[#allocation3 + $0xfc] sm:$0xf]
    %v298 = vld [vmem:[#allocation3 + $0x100] sm:$0xf]
    %v299 = vld [vmem:[#allocation3 + $0x104] sm:$0xf]
    %v300 = vld [vmem:[#allocation3 + $0x108] sm:$0xf]
    %v301 = vld [vmem:[#allocation3 + $0x10c] sm:$0xf]
    %v302 = vld [vmem:[#allocation3 + $0x110] sm:$0xf]
    %v303 = vld [vmem:[#allocation3 + $0x114] sm:$0xf]
    %v304 = vld [vmem:[#allocation3 + $0x118] sm:$0xf]
    %v305 = vld [vmem:[#allocation3 + $0x11c] sm:$0xf]
    %v306 = vld [vmem:[#allocation3 + $0x120] sm:$0xf]
    %v307 = vld [vmem:[#allocation3 + $0x124] sm:$0xf]
    %v308 = vld [vmem:[#allocation3 + $0x128] sm:$0xf]
    %v309 = vld [vmem:[#allocation3 + $0x12c] sm:$0xf]
    %v310 = vld [vmem:[#allocation3 + $0x130] sm:$0xf]
    %v311 = vld [vmem:[#allocation3 + $0x134] sm:$0xf]
    %v312 = vld [vmem:[#allocation3 + $0x138] sm:$0xf]
    %v313 = vld [vmem:[#allocation3 + $0x13c] sm:$0xf]
    %v314 = vld [vmem:[#allocation3 + $0x140] sm:$0xf]
    %v315 = vld [vmem:[#allocation3 + $0x144] sm:$0xf]
    %v316 = vld [vmem:[#allocation3 + $0x148] sm:$0xf]
    %v317 = vld [vmem:[#allocation3 + $0x14c] sm:$0xf]
    %v318 = vld [vmem:[#allocation3 + $0x150] sm:$0xf]
    %v319 = vld [vmem:[#allocation3 + $0x154] sm:$0xf]
    %v320 = vld [vmem:[#allocation3 + $0x158] sm:$0xf]
    %v321 = vld [vmem:[#allocation3 + $0x15c] sm:$0xf]
    %v322 = vld [vmem:[#allocation3 + $0x160] sm:$0xf]
    %v323 = vld [vmem:[#allocation3 + $0x164] sm:$0xf]
    %v324 = vld [vmem:[#allocation3 + $0x168] sm:$0xf]
    %v325 = vld [vmem:[#allocation3 + $0x16c] sm:$0xf]
    %v326 = vld [vmem:[#allocation3 + $0x170] sm:$0xf]
    %v327 = vld [vmem:[#allocation3 + $0x174] sm:$0xf]
    %v328 = vld [vmem:[#allocation3 + $0x178] sm:$0xf]
    %v329 = vld [vmem:[#allocation3 + $0x17c] sm:$0xf]
    %v330 = vld [vmem:[#allocation3 + $0x180] sm:$0xf]
    %v331 = vld [vmem:[#allocation3 + $0x184] sm:$0xf]
    %v332 = vld [vmem:[#allocation3 + $0x188] sm:$0xf]
    %v333 = vld [vmem:[#allocation3 + $0x18c] sm:$0xf]
    %v334 = vld [vmem:[#allocation3 + $0x190] sm:$0xf]
    %v335 = vld [vmem:[#allocation3 + $0x194] sm:$0xf]
    %v336 = vld [vmem:[#allocation3 + $0x198] sm:$0xf]
    %v337 = vld [vmem:[#allocation3 + $0x19c] sm:$0xf]
    %v338 = vld [vmem:[#allocation3 + $0x1a0] sm:$0xf]
    %v339 = vld [vmem:[#allocation3 + $0x1a4] sm:$0xf]
    %v340 = vld [vmem:[#allocation3 + $0x1a8] sm:$0xf]
    %v341 = vld [vmem:[#allocation3 + $0x1ac] sm:$0xf]
    %v342 = vld [vmem:[#allocation3 + $0x1b0] sm:$0xf]
    %v343 = vld [vmem:[#allocation3 + $0x1b4] sm:$0xf]
    %v344 = vld [vmem:[#allocation3 + $0x1b8] sm:$0xf]
    %v345 = vld [vmem:[#allocation3 + $0x1bc] sm:$0xf]
    %v346 = vld [vmem:[#allocation3 + $0x1c0] sm:$0xf]
    %v347 = vld [vmem:[#allocation3 + $0x1c4] sm:$0xf]
    %v348 = vld [vmem:[#allocation3 + $0x1c8] sm:$0xf]
    %v349 = vld [vmem:[#allocation3 + $0x1cc] sm:$0xf]
    %v350 = vld [vmem:[#allocation3 + $0x1d0] sm:$0xf]
    %v351 = vld [vmem:[#allocation3 + $0x1d4] sm:$0xf]
    %v352 = vld [vmem:[#allocation3 + $0x1d8] sm:$0xf]
    %v353 = vld [vmem:[#allocation3 + $0x1dc] sm:$0xf]
    %v354 = vld [vmem:[#allocation3 + $0x1e0] sm:$0xf]
    %v355 = vld [vmem:[#allocation3 + $0x1e4] sm:$0xf]
    %v356 = vld [vmem:[#allocation3 + $0x1e8] sm:$0xf]
    %v357 = vld [vmem:[#allocation3 + $0x1ec] sm:$0xf]
    %v358 = vld [vmem:[#allocation3 + $0x1f0] sm:$0xf]
    %v359 = vld [vmem:[#allocation3 + $0x1f4] sm:$0xf]
    %v360 = vld [vmem:[#allocation3 + $0x1f8] sm:$0xf]
    %v361 = vld [vmem:[#allocation3 + $0x1fc] sm:$0xf]
    %v362 = vld [vmem:[#allocation3 + $0x200] sm:$0xf]
    %v363 = vld [vmem:[#allocation3 + $0x204] sm:$0xf]
    %v364 = vld [vmem:[#allocation3 + $0x208] sm:$0xf]
    %v365 = vld [vmem:[#allocation3 + $0x20c] sm:$0xf]
    %v366 = vld [vmem:[#allocation3 + $0x210] sm:$0xf]
    %v367 = vld [vmem:[#allocation3 + $0x214] sm:$0xf]
    %v368 = vld [vmem:[#allocation3 + $0x218] sm:$0xf]
    %v369 = vld [vmem:[#allocation3 + $0x21c] sm:$0xf]
    %v370 = vld [vmem:[#allocation3 + $0x220] sm:$0xf]
    %v371 = vld [vmem:[#allocation3 + $0x224] sm:$0xf]
    %v372 = vld [vmem:[#allocation3 + $0x228] sm:$0xf]
    %v373 = vld [vmem:[#allocation3 + $0x22c] sm:$0xf]
    %v374 = vld [vmem:[#allocation3 + $0x230] sm:$0xf]
    %v375 = vld [vmem:[#allocation3 + $0x234] sm:$0xf]
    %v376 = vld [vmem:[#allocation3 + $0x238] sm:$0xf]
    %v377 = vld [vmem:[#allocation3 + $0x23c] sm:$0xf]
    %v378 = vld [vmem:[#allocation3 + $0x240] sm:$0xf]
    %v379 = vld [vmem:[#allocation3 + $0x244] sm:$0xf]
    %v380 = vld [vmem:[#allocation3 + $0x248] sm:$0xf]
    %v381 = vld [vmem:[#allocation3 + $0x24c] sm:$0xf]
    %v382 = vld [vmem:[#allocation3 + $0x250] sm:$0xf]
    %v383 = vld [vmem:[#allocation3 + $0x254] sm:$0xf]
    %v384 = vld [vmem:[#allocation3 + $0x258] sm:$0xf]
    %v385 = vld [vmem:[#allocation3 + $0x25c] sm:$0xf]
    %v386 = vld [vmem:[#allocation3 + $0x260] sm:$0xf]
    %v387 = vld [vmem:[#allocation3 + $0x264] sm:$0xf]
    %v388 = vld [vmem:[#allocation3 + $0x268] sm:$0xf]
    %v389 = vld [vmem:[#allocation3 + $0x26c] sm:$0xf]
    %v390 = vld [vmem:[#allocation3 + $0x270] sm:$0xf]
    %v391 = vld [vmem:[#allocation3 + $0x274] sm:$0xf]
    %v392 = vld [vmem:[#allocation3 + $0x278] sm:$0xf]
    %v393 = vld [vmem:[#allocation3 + $0x27c] sm:$0xf]
    %v394 = vld [vmem:[#allocation3 + $0x280] sm:$0xf]
    %v395 = vld [vmem:[#allocation3 + $0x284] sm:$0xf]
    %v396 = vld [vmem:[#allocation3 + $0x288] sm:$0xf]
    %v397 = vld [vmem:[#allocation3 + $0x28c] sm:$0xf]
    %v398 = vld [vmem:[#allocation3 + $0x290] sm:$0xf]
    %v399 = vld [vmem:[#allocation3 + $0x294] sm:$0xf]
    %v400 = vld [vmem:[#allocation3 + $0x298] sm:$0xf]
    %v401 = vld [vmem:[#allocation3 + $0x29c] sm:$0xf]
    %v402 = vld [vmem:[#allocation3 + $0x2a0] sm:$0xf]
    %v403 = vld [vmem:[#allocation3 + $0x2a4] sm:$0xf]
    %v404 = vld [vmem:[#allocation3 + $0x2a8] sm:$0xf]
    %v405 = vld [vmem:[#allocation3 + $0x2ac] sm:$0xf]
    %v406 = vld [vmem:[#allocation3 + $0x2b0] sm:$0xf]
    %v407 = vld [vmem:[#allocation3 + $0x2b4] sm:$0xf]
    %v408 = vld [vmem:[#allocation3 + $0x2b8] sm:$0xf]
    %v409 = vld [vmem:[#allocation3 + $0x2bc] sm:$0xf]
    %v410 = vld [vmem:[#allocation3 + $0x2c0] sm:$0xf]
    %v411 = vld [vmem:[#allocation3 + $0x2c4] sm:$0xf]
    %v412 = vld [vmem:[#allocation3 + $0x2c8] sm:$0xf]
    %v413 = vld [vmem:[#allocation3 + $0x2cc] sm:$0xf]
    %v414 = vld [vmem:[#allocation3 + $0x2d0] sm:$0xf]
    %v415 = vld [vmem:[#allocation3 + $0x2d4] sm:$0xf]
    %v416 = vld [vmem:[#allocation3 + $0x2d8] sm:$0xf]
    %v417 = vld [vmem:[#allocation3 + $0x2dc] sm:$0xf]
    %v418 = vld [vmem:[#allocation3 + $0x2e0] sm:$0xf]
    %v419 = vld [vmem:[#allocation3 + $0x2e4] sm:$0xf]
    %v420 = vld [vmem:[#allocation3 + $0x2e8] sm:$0xf]
    %v421 = vld [vmem:[#allocation3 + $0x2ec] sm:$0xf]
    %v422 = vld [vmem:[#allocation3 + $0x2f0] sm:$0xf]
    %v423 = vld [vmem:[#allocation3 + $0x2f4] sm:$0xf]
    %v424 = vld [vmem:[#allocation3 + $0x2f8] sm:$0xf]
    %v425 = vld [vmem:[#allocation3 + $0x2fc] sm:$0xf]
    %v426 = vld [vmem:[#allocation3 + $0x300] sm:$0xf]
    %v427 = vld [vmem:[#allocation3 + $0x304] sm:$0xf]
    %v428 = vld [vmem:[#allocation3 + $0x308] sm:$0xf]
    %v429 = vld [vmem:[#allocation3 + $0x30c] sm:$0xf]
    %v430 = vld [vmem:[#allocation3 + $0x310] sm:$0xf]
    %v431 = vld [vmem:[#allocation3 + $0x314] sm:$0xf]
    %v432 = vld [vmem:[#allocation3 + $0x318] sm:$0xf]
    %v433 = vld [vmem:[#allocation3 + $0x31c] sm:$0xf]
    %v434 = vld [vmem:[#allocation3 + $0x320] sm:$0xf]
    %v435 = vld [vmem:[#allocation3 + $0x324] sm:$0xf]
    %v436 = vld [vmem:[#allocation3 + $0x328] sm:$0xf]
    %v437 = vld [vmem:[#allocation3 + $0x32c] sm:$0xf]
    %v438 = vld [vmem:[#allocation3 + $0x330] sm:$0xf]
    %v439 = vld [vmem:[#allocation3 + $0x334] sm:$0xf]
    %v440 = vld [vmem:[#allocation3 + $0x338] sm:$0xf]
    %v441 = vld [vmem:[#allocation3 + $0x33c] sm:$0xf]
    %v442 = vld [vmem:[#allocation3 + $0x340] sm:$0xf]
    %v443 = vld [vmem:[#allocation3 + $0x344] sm:$0xf]
    %v444 = vld [vmem:[#allocation3 + $0x348] sm:$0xf]
    %v445 = vld [vmem:[#allocation3 + $0x34c] sm:$0xf]
    %v446 = vld [vmem:[#allocation3 + $0x350] sm:$0xf]
    %v447 = vld [vmem:[#allocation3 + $0x354] sm:$0xf]
    %v448 = vld [vmem:[#allocation3 + $0x358] sm:$0xf]
    %v449 = vld [vmem:[#allocation3 + $0x35c] sm:$0xf]
    %v450 = vld [vmem:[#allocation3 + $0x360] sm:$0xf]
    %v451 = vld [vmem:[#allocation3 + $0x364] sm:$0xf]
    %v452 = vld [vmem:[#allocation3 + $0x368] sm:$0xf]
    %v453 = vld [vmem:[#allocation3 + $0x36c] sm:$0xf]
    %v454 = vld [vmem:[#allocation3 + $0x370] sm:$0xf]
    %v455 = vld [vmem:[#allocation3 + $0x374] sm:$0xf]
    %v456 = vld [vmem:[#allocation3 + $0x378] sm:$0xf]
    %v457 = vld [vmem:[#allocation3 + $0x37c] sm:$0xf]
    %v458 = vld [vmem:[#allocation3 + $0x380] sm:$0xf]
    %v459 = vld [vmem:[#allocation3 + $0x384] sm:$0xf]
    %v460 = vld [vmem:[#allocation3 + $0x388] sm:$0xf]
    %v461 = vld [vmem:[#allocation3 + $0x38c] sm:$0xf]
    %v462 = vld [vmem:[#allocation3 + $0x390] sm:$0xf]
    %v463 = vld [vmem:[#allocation3 + $0x394] sm:$0xf]
    %v464 = vld [vmem:[#allocation3 + $0x398] sm:$0xf]
    %v465 = vld [vmem:[#allocation3 + $0x39c] sm:$0xf]
    %v466 = vld [vmem:[#allocation3 + $0x3a0] sm:$0xf]
    %v467 = vld [vmem:[#allocation3 + $0x3a4] sm:$0xf]
    %v468 = vld [vmem:[#allocation3 + $0x3a8] sm:$0xf]
    %v469 = vld [vmem:[#allocation3 + $0x3ac] sm:$0xf]
    %v470 = vld [vmem:[#allocation3 + $0x3b0] sm:$0xf]
    %v471 = vld [vmem:[#allocation3 + $0x3b4] sm:$0xf]
    %v472 = vld [vmem:[#allocation3 + $0x3b8] sm:$0xf]
    %v473 = vld [vmem:[#allocation3 + $0x3bc] sm:$0xf]
    %v474 = vld [vmem:[#allocation3 + $0x3c0] sm:$0xf]
    %v475 = vld [vmem:[#allocation3 + $0x3c4] sm:$0xf]
    %v476 = vld [vmem:[#allocation3 + $0x3c8] sm:$0xf]
    %v477 = vld [vmem:[#allocation3 + $0x3cc] sm:$0xf]
    %v478 = vld [vmem:[#allocation3 + $0x3d0] sm:$0xf]
    %v479 = vld [vmem:[#allocation3 + $0x3d4] sm:$0xf]
    %v480 = vld [vmem:[#allocation3 + $0x3d8] sm:$0xf]
    %v481 = vld [vmem:[#allocation3 + $0x3dc] sm:$0xf]
    %v482 = vld [vmem:[#allocation3 + $0x3e0] sm:$0xf]
    %v483 = vld [vmem:[#allocation3 + $0x3e4] sm:$0xf]
    %v484 = vld [vmem:[#allocation3 + $0x3e8] sm:$0xf]
    %v485 = vld [vmem:[#allocation3 + $0x3ec] sm:$0xf]
    %v486 = vld [vmem:[#allocation3 + $0x3f0] sm:$0xf]
    %v487 = vld [vmem:[#allocation3 + $0x3f4] sm:$0xf]
    %v488 = vld [vmem:[#allocation3 + $0x3f8] sm:$0xf]
    %v489 = vld [vmem:[#allocation3 + $0x3fc] sm:$0xf]
    %v490 = vld [vmem:[#allocation3 + $0x400] sm:$0xf]
    %v491 = vld [vmem:[#allocation3 + $0x404] sm:$0xf]
    %v492 = vld [vmem:[#allocation3 + $0x408] sm:$0xf]
    %v493 = vld [vmem:[#allocation3 + $0x40c] sm:$0xf]
    %v494 = vld [vmem:[#allocation3 + $0x410] sm:$0xf]
    %v495 = vld [vmem:[#allocation3 + $0x414] sm:$0xf]
    %v496 = vld [vmem:[#allocation3 + $0x418] sm:$0xf]
    %v497 = vld [vmem:[#allocation3 + $0x41c] sm:$0xf]
    %v498 = vld [vmem:[#allocation3 + $0x420] sm:$0xf]
    %v499 = vld [vmem:[#allocation3 + $0x424] sm:$0xf]
    %v500 = vld [vmem:[#allocation3 + $0x428] sm:$0xf]
    %v501 = vld [vmem:[#allocation3 + $0x42c] sm:$0xf]
    %v502 = vld [vmem:[#allocation3 + $0x430] sm:$0xf]
    %v503 = vld [vmem:[#allocation3 + $0x434] sm:$0xf]
    %v504 = vld [vmem:[#allocation3 + $0x438] sm:$0xf]
    %v505 = vld [vmem:[#allocation3 + $0x43c] sm:$0xf]
    %v506 = vld [vmem:[#allocation3 + $0x440] sm:$0xf]
    %v507 = vld [vmem:[#allocation3 + $0x444] sm:$0xf]
    %v508 = vld [vmem:[#allocation3 + $0x448] sm:$0xf]
    %v509 = vld [vmem:[#allocation3 + $0x44c] sm:$0xf]
    %v510 = vld [vmem:[#allocation3 + $0x450] sm:$0xf]
    %v511 = vld [vmem:[#allocation3 + $0x454] sm:$0xf]
    %v512 = vld [vmem:[#allocation3 + $0x458] sm:$0xf]
    %v513 = vld [vmem:[#allocation3 + $0x45c] sm:$0xf]
    %v514 = vld [vmem:[#allocation3 + $0x460] sm:$0xf]
    %v515 = vld [vmem:[#allocation3 + $0x464] sm:$0xf]
    %v516 = vld [vmem:[#allocation3 + $0x468] sm:$0xf]
    %v517 = vld [vmem:[#allocation3 + $0x46c] sm:$0xf]
    %v518 = vld [vmem:[#allocation3 + $0x470] sm:$0xf]
    %v519 = vld [vmem:[#allocation3 + $0x474] sm:$0xf]
    %v520 = vld [vmem:[#allocation3 + $0x478] sm:$0xf]
    %v521 = vld [vmem:[#allocation3 + $0x47c] sm:$0xf]
    %v522 = vld [vmem:[#allocation3 + $0x480] sm:$0xf]
    %v523 = vld [vmem:[#allocation3 + $0x484] sm:$0xf]
    %v524 = vld [vmem:[#allocation3 + $0x488] sm:$0xf]
    %v525 = vld [vmem:[#allocation3 + $0x48c] sm:$0xf]
    %v526 = vld [vmem:[#allocation3 + $0x490] sm:$0xf]
    %v527 = vld [vmem:[#allocation3 + $0x494] sm:$0xf]
    %v528 = vld [vmem:[#allocation3 + $0x498] sm:$0xf]
    %v529 = vld [vmem:[#allocation3 + $0x49c] sm:$0xf]
    %v530 = vld [vmem:[#allocation3 + $0x4a0] sm:$0xf]
    %v531 = vld [vmem:[#allocation3 + $0x4a4] sm:$0xf]
    %v532 = vld [vmem:[#allocation3 + $0x4a8] sm:$0xf]
    %v533 = vld [vmem:[#allocation3 + $0x4ac] sm:$0xf]
    %v534 = vld [vmem:[#allocation3 + $0x4b0] sm:$0xf]
    %v535 = vld [vmem:[#allocation3 + $0x4b4] sm:$0xf]
    %v536 = vld [vmem:[#allocation3 + $0x4b8] sm:$0xf]
    %v537 = vld [vmem:[#allocation3 + $0x4bc] sm:$0xf]
    %v538 = vld [vmem:[#allocation3 + $0x4c0] sm:$0xf]
    %v539 = vld [vmem:[#allocation3 + $0x4c4] sm:$0xf]
    %v540 = vld [vmem:[#allocation3 + $0x4c8] sm:$0xf]
    %v541 = vld [vmem:[#allocation3 + $0x4cc] sm:$0xf]
    %v542 = vld [vmem:[#allocation3 + $0x4d0] sm:$0xf]
    %v543 = vld [vmem:[#allocation3 + $0x4d4] sm:$0xf]
    %v544 = vld [vmem:[#allocation3 + $0x4d8] sm:$0xf]
    %v545 = vld [vmem:[#allocation3 + $0x4dc] sm:$0xf]
    %v546 = vld [vmem:[#allocation3 + $0x4e0] sm:$0xf]
    %v547 = vld [vmem:[#allocation3 + $0x4e4] sm:$0xf]
    %v548 = vld [vmem:[#allocation3 + $0x4e8] sm:$0xf]
    %v549 = vld [vmem:[#allocation3 + $0x4ec] sm:$0xf]
    %v550 = vld [vmem:[#allocation3 + $0x4f0] sm:$0xf]
    %v551 = vld [vmem:[#allocation3 + $0x4f4] sm:$0xf]
    %v552 = vld [vmem:[#allocation3 + $0x4f8] sm:$0xf]
    %v553 = vld [vmem:[#allocation3 + $0x4fc] sm:$0xf]
    %v554 = vld [vmem:[#allocation3 + $0x500] sm:$0xf]
    %v555 = vld [vmem:[#allocation3 + $0x504] sm:$0xf]
    %v556 = vld [vmem:[#allocation3 + $0x508] sm:$0xf]
    %v557 = vld [vmem:[#allocation3 + $0x50c] sm:$0xf]
    %v558 = vld [vmem:[#allocation3 + $0x510] sm:$0xf]
    %v559 = vld [vmem:[#allocation3 + $0x514] sm:$0xf]
    %v560 = vld [vmem:[#allocation3 + $0x518] sm:$0xf]
    %v561 = vld [vmem:[#allocation3 + $0x51c] sm:$0xf]
    %v562 = vld [vmem:[#allocation3 + $0x520] sm:$0xf]
    %v563 = vld [vmem:[#allocation3 + $0x524] sm:$0xf]
    %v564 = vld [vmem:[#allocation3 + $0x528] sm:$0xf]
    %v565 = vld [vmem:[#allocation3 + $0x52c] sm:$0xf]
    %v566 = vld [vmem:[#allocation3 + $0x530] sm:$0xf]
    %v567 = vld [vmem:[#allocation3 + $0x534] sm:$0xf]
    %v568 = vld [vmem:[#allocation3 + $0x538] sm:$0xf]
    %v569 = vld [vmem:[#allocation3 + $0x53c] sm:$0xf]
    %v570 = vld [vmem:[#allocation3 + $0x540] sm:$0xf]
    %v571 = vld [vmem:[#allocation3 + $0x544] sm:$0xf]
    %v572 = vld [vmem:[#allocation3 + $0x548] sm:$0xf]
    %v573 = vld [vmem:[#allocation3 + $0x54c] sm:$0xf]
    %v574 = vld [vmem:[#allocation3 + $0x550] sm:$0xf]
    %v575 = vld [vmem:[#allocation3 + $0x554] sm:$0xf]
    %v576 = vld [vmem:[#allocation3 + $0x558] sm:$0xf]
    %v577 = vld [vmem:[#allocation3 + $0x55c] sm:$0xf]
    %v578 = vld [vmem:[#allocation3 + $0x560] sm:$0xf]
    %v579 = vld [vmem:[#allocation3 + $0x564] sm:$0xf]
    %v580 = vld [vmem:[#allocation3 + $0x568] sm:$0xf]
    %v581 = vld [vmem:[#allocation3 + $0x56c] sm:$0xf]
    %v582 = vld [vmem:[#allocation3 + $0x570] sm:$0xf]
    %v583 = vld [vmem:[#allocation3 + $0x574] sm:$0xf]
    %v584 = vld [vmem:[#allocation3 + $0x578] sm:$0xf]
    %v585 = vld [vmem:[#allocation3 + $0x57c] sm:$0xf]
    %v586 = vld [vmem:[#allocation3 + $0x580] sm:$0xf]
    %v587 = vld [vmem:[#allocation3 + $0x584] sm:$0xf]
    %v588 = vld [vmem:[#allocation3 + $0x588] sm:$0xf]
    %v589 = vld [vmem:[#allocation3 + $0x58c] sm:$0xf]
    %v590 = vld [vmem:[#allocation3 + $0x590] sm:$0xf]
    %v591 = vld [vmem:[#allocation3 + $0x594] sm:$0xf]
    %v592 = vld [vmem:[#allocation3 + $0x598] sm:$0xf]
    %v593 = vld [vmem:[#allocation3 + $0x59c] sm:$0xf]
    %v594 = vld [vmem:[#allocation3 + $0x5a0] sm:$0xf]
    %v595 = vld [vmem:[#allocation3 + $0x5a4] sm:$0xf]
    %v596 = vld [vmem:[#allocation3 + $0x5a8] sm:$0xf]
    %v597 = vld [vmem:[#allocation3 + $0x5ac] sm:$0xf]
    %v598 = vld [vmem:[#allocation3 + $0x5b0] sm:$0xf]
    %v599 = vld [vmem:[#allocation3 + $0x5b4] sm:$0xf]
    %v600 = vld [vmem:[#allocation3 + $0x5b8] sm:$0xf]
    %v601 = vld [vmem:[#allocation3 + $0x5bc] sm:$0xf]
    %v602 = vld [vmem:[#allocation3 + $0x5c0] sm:$0xf]
    %v603 = vld [vmem:[#allocation3 + $0x5c4] sm:$0xf]
    %v604 = vld [vmem:[#allocation3 + $0x5c8] sm:$0xf]
    %v605 = vld [vmem:[#allocation3 + $0x5cc] sm:$0xf]
    %v606 = vld [vmem:[#allocation3 + $0x5d0] sm:$0xf]
    %v607 = vld [vmem:[#allocation3 + $0x5d4] sm:$0xf]
    %v608 = vld [vmem:[#allocation3 + $0x5d8] sm:$0xf]
    %v609 = vld [vmem:[#allocation3 + $0x5dc] sm:$0xf]
    %v610 = vld [vmem:[#allocation3 + $0x5e0] sm:$0xf]
    %v611 = vld [vmem:[#allocation3 + $0x5e4] sm:$0xf]
    %v612 = vld [vmem:[#allocation3 + $0x5e8] sm:$0xf]
    %v613 = vld [vmem:[#allocation3 + $0x5ec] sm:$0xf]
    %v614 = vld [vmem:[#allocation3 + $0x5f0] sm:$0xf]
    %v615 = vld [vmem:[#allocation3 + $0x5f4] sm:$0xf]
    %v616 = vld [vmem:[#allocation3 + $0x5f8] sm:$0xf]
    %v617 = vld [vmem:[#allocation3 + $0x5fc] sm:$0xf]
    %v618 = vld [vmem:[#allocation3 + $0x600] sm:$0xf]
    %v619 = vld [vmem:[#allocation3 + $0x604] sm:$0xf]
    %v620 = vld [vmem:[#allocation3 + $0x608] sm:$0xf]
    %v621 = vld [vmem:[#allocation3 + $0x60c] sm:$0xf]
    %v622 = vld [vmem:[#allocation3 + $0x610] sm:$0xf]
    %v623 = vld [vmem:[#allocation3 + $0x614] sm:$0xf]
    %v624 = vld [vmem:[#allocation3 + $0x618] sm:$0xf]
    %v625 = vld [vmem:[#allocation3 + $0x61c] sm:$0xf]
    %v626 = vld [vmem:[#allocation3 + $0x620] sm:$0xf]
    %v627 = vld [vmem:[#allocation3 + $0x624] sm:$0xf]
    %v628 = vld [vmem:[#allocation3 + $0x628] sm:$0xf]
    %v629 = vld [vmem:[#allocation3 + $0x62c] sm:$0xf]
    %v630 = vld [vmem:[#allocation3 + $0x630] sm:$0xf]
    %v631 = vld [vmem:[#allocation3 + $0x634] sm:$0xf]
    %v632 = vld [vmem:[#allocation3 + $0x638] sm:$0xf]
    %v633 = vld [vmem:[#allocation3 + $0x63c] sm:$0xf]
    %v634 = vld [vmem:[#allocation3 + $0x640] sm:$0xf]
    %v635 = vld [vmem:[#allocation3 + $0x644] sm:$0xf]
    %v636 = vld [vmem:[#allocation3 + $0x648] sm:$0xf]
    %v637 = vld [vmem:[#allocation3 + $0x64c] sm:$0xf]
    %v638 = vld [vmem:[#allocation3 + $0x650] sm:$0xf]
    %v639 = vld [vmem:[#allocation3 + $0x654] sm:$0xf]
    %v640 = vld [vmem:[#allocation3 + $0x658] sm:$0xf]
    %v641 = vld [vmem:[#allocation3 + $0x65c] sm:$0xf]
    %v642 = vld [vmem:[#allocation3 + $0x660] sm:$0xf]
    %v643 = vld [vmem:[#allocation3 + $0x664] sm:$0xf]
    %v644 = vld [vmem:[#allocation3 + $0x668] sm:$0xf]
    %v645 = vld [vmem:[#allocation3 + $0x66c] sm:$0xf]
    %v646 = vld [vmem:[#allocation3 + $0x670] sm:$0xf]
    %v647 = vld [vmem:[#allocation3 + $0x674] sm:$0xf]
    %v648 = vld [vmem:[#allocation3 + $0x678] sm:$0xf]
    %v649 = vld [vmem:[#allocation3 + $0x67c] sm:$0xf]
    %v650 = vld [vmem:[#allocation3 + $0x680] sm:$0xf]
    %v651 = vld [vmem:[#allocation3 + $0x684] sm:$0xf]
    %v652 = vld [vmem:[#allocation3 + $0x688] sm:$0xf]
    %v653 = vld [vmem:[#allocation3 + $0x68c] sm:$0xf]
    %v654 = vld [vmem:[#allocation3 + $0x690] sm:$0xf]
    %v655 = vld [vmem:[#allocation3 + $0x694] sm:$0xf]
    %v656 = vld [vmem:[#allocation3 + $0x698] sm:$0xf]
    %v657 = vld [vmem:[#allocation3 + $0x69c] sm:$0xf]
    %v658 = vld [vmem:[#allocation3 + $0x6a0] sm:$0xf]
    %v659 = vld [vmem:[#allocation3 + $0x6a4] sm:$0xf]
    %v660 = vld [vmem:[#allocation3 + $0x6a8] sm:$0xf]
    %v661 = vld [vmem:[#allocation3 + $0x6ac] sm:$0xf]
    %v662 = vld [vmem:[#allocation3 + $0x6b0] sm:$0xf]
    %v663 = vld [vmem:[#allocation3 + $0x6b4] sm:$0xf]
    %v664 = vld [vmem:[#allocation3 + $0x6b8] sm:$0xf]
    %v665 = vld [vmem:[#allocation3 + $0x6bc] sm:$0xf]
    %v666 = vld [vmem:[#allocation3 + $0x6c0] sm:$0xf]
    %v667 = vld [vmem:[#allocation3 + $0x6c4] sm:$0xf]
    %v668 = vld [vmem:[#allocation3 + $0x6c8] sm:$0xf]
    %v669 = vld [vmem:[#allocation3 + $0x6cc] sm:$0xf]
    %v670 = vld [vmem:[#allocation3 + $0x6d0] sm:$0xf]
    %v671 = vld [vmem:[#allocation3 + $0x6d4] sm:$0xf]
    %v672 = vld [vmem:[#allocation3 + $0x6d8] sm:$0xf]
    %v673 = vld [vmem:[#allocation3 + $0x6dc] sm:$0xf]
    %v674 = vld [vmem:[#allocation3 + $0x6e0] sm:$0xf]
    %v675 = vld [vmem:[#allocation3 + $0x6e4] sm:$0xf]
    %v676 = vld [vmem:[#allocation3 + $0x6e8] sm:$0xf]
    %v677 = vld [vmem:[#allocation3 + $0x6ec] sm:$0xf]
    %v678 = vld [vmem:[#allocation3 + $0x6f0] sm:$0xf]
    %v679 = vld [vmem:[#allocation3 + $0x6f4] sm:$0xf]
    %v680 = vld [vmem:[#allocation3 + $0x6f8] sm:$0xf]
    %v681 = vld [vmem:[#allocation3 + $0x6fc] sm:$0xf]
    %v682 = vld [vmem:[#allocation3 + $0x700] sm:$0xf]
    %v683 = vld [vmem:[#allocation3 + $0x704] sm:$0xf]
    %v684 = vld [vmem:[#allocation3 + $0x708] sm:$0xf]
    %v685 = vld [vmem:[#allocation3 + $0x70c] sm:$0xf]
    %v686 = vld [vmem:[#allocation3 + $0x710] sm:$0xf]
    %v687 = vld [vmem:[#allocation3 + $0x714] sm:$0xf]
    %v688 = vld [vmem:[#allocation3 + $0x718] sm:$0xf]
    %v689 = vld [vmem:[#allocation3 + $0x71c] sm:$0xf]
    %v690 = vld [vmem:[#allocation3 + $0x720] sm:$0xf]
    %v691 = vld [vmem:[#allocation3 + $0x724] sm:$0xf]
    %v692 = vld [vmem:[#allocation3 + $0x728] sm:$0xf]
    %v693 = vld [vmem:[#allocation3 + $0x72c] sm:$0xf]
    %v694 = vld [vmem:[#allocation3 + $0x730] sm:$0xf]
    %v695 = vld [vmem:[#allocation3 + $0x734] sm:$0xf]
    %v696 = vld [vmem:[#allocation3 + $0x738] sm:$0xf]
    %v697 = vld [vmem:[#allocation3 + $0x73c] sm:$0xf]
    %v698 = vld [vmem:[#allocation3 + $0x740] sm:$0xf]
    %v699 = vld [vmem:[#allocation3 + $0x744] sm:$0xf]
    %v700 = vld [vmem:[#allocation3 + $0x748] sm:$0xf]
    %v701 = vld [vmem:[#allocation3 + $0x74c] sm:$0xf]
    %v702 = vld [vmem:[#allocation3 + $0x750] sm:$0xf]
    %v703 = vld [vmem:[#allocation3 + $0x754] sm:$0xf]
    %v704 = vld [vmem:[#allocation3 + $0x758] sm:$0xf]
    %v705 = vld [vmem:[#allocation3 + $0x75c] sm:$0xf]
    %v706 = vld [vmem:[#allocation3 + $0x760] sm:$0xf]
    %v707 = vld [vmem:[#allocation3 + $0x764] sm:$0xf]
    %v708 = vld [vmem:[#allocation3 + $0x768] sm:$0xf]
    %v709 = vld [vmem:[#allocation3 + $0x76c] sm:$0xf]
    %v710 = vld [vmem:[#allocation3 + $0x770] sm:$0xf]
    %v711 = vld [vmem:[#allocation3 + $0x774] sm:$0xf]
    %v712 = vld [vmem:[#allocation3 + $0x778] sm:$0xf]
    %v713 = vld [vmem:[#allocation3 + $0x77c] sm:$0xf]
    %v714 = vld [vmem:[#allocation3 + $0x780] sm:$0xf]
    %v715 = vld [vmem:[#allocation3 + $0x784] sm:$0xf]
    %v716 = vld [vmem:[#allocation3 + $0x788] sm:$0xf]
    %v717 = vld [vmem:[#allocation3 + $0x78c] sm:$0xf]
    %v718 = vld [vmem:[#allocation3 + $0x790] sm:$0xf]
    %v719 = vld [vmem:[#allocation3 + $0x794] sm:$0xf]
    %v720 = vld [vmem:[#allocation3 + $0x798] sm:$0xf]
    %v721 = vld [vmem:[#allocation3 + $0x79c] sm:$0xf]
    %v722 = vld [vmem:[#allocation3 + $0x7a0] sm:$0xf]
    %v723 = vld [vmem:[#allocation3 + $0x7a4] sm:$0xf]
    %v724 = vld [vmem:[#allocation3 + $0x7a8] sm:$0xf]
    %v725 = vld [vmem:[#allocation3 + $0x7ac] sm:$0xf]
    %v726 = vld [vmem:[#allocation3 + $0x7b0] sm:$0xf]
    %v727 = vld [vmem:[#allocation3 + $0x7b4] sm:$0xf]
    %v728 = vld [vmem:[#allocation3 + $0x7b8] sm:$0xf]
    %v729 = vld [vmem:[#allocation3 + $0x7bc] sm:$0xf]
    %v730 = vld [vmem:[#allocation3 + $0x7c0] sm:$0xf]
    %v731 = vld [vmem:[#allocation3 + $0x7c4] sm:$0xf]
    %v732 = vld [vmem:[#allocation3 + $0x7c8] sm:$0xf]
    %v733 = vld [vmem:[#allocation3 + $0x7cc] sm:$0xf]
    %v734 = vld [vmem:[#allocation3 + $0x7d0] sm:$0xf]
    %v735 = vld [vmem:[#allocation3 + $0x7d4] sm:$0xf]
    %v736 = vld [vmem:[#allocation3 + $0x7d8] sm:$0xf]
    %v737 = vld [vmem:[#allocation3 + $0x7dc] sm:$0xf]
    %v738 = vld [vmem:[#allocation3 + $0x7e0] sm:$0xf]
    %v739 = vld [vmem:[#allocation3 + $0x7e4] sm:$0xf]
    %v740 = vld [vmem:[#allocation3 + $0x7e8] sm:$0xf]
    %v741 = vld [vmem:[#allocation3 + $0x7ec] sm:$0xf]
    %v742 = vld [vmem:[#allocation3 + $0x7f0] sm:$0xf]
    %v743 = vld [vmem:[#allocation3 + $0x7f4] sm:$0xf]
    %v744 = vld [vmem:[#allocation3 + $0x7f8] sm:$0xf]
    %v745 = vld [vmem:[#allocation3 + $0x7fc] sm:$0xf]
    %v746 = vld [vmem:[#allocation3 + $0x800] sm:$0xf]
    %v747 = vld [vmem:[#allocation3 + $0x804] sm:$0xf]
    %v748 = vld [vmem:[#allocation3 + $0x808] sm:$0xf]
    %v749 = vld [vmem:[#allocation3 + $0x80c] sm:$0xf]
    %v750 = vld [vmem:[#allocation3 + $0x810] sm:$0xf]
    %v751 = vld [vmem:[#allocation3 + $0x814] sm:$0xf]
    %v752 = vld [vmem:[#allocation3 + $0x818] sm:$0xf]
    %v753 = vld [vmem:[#allocation3 + $0x81c] sm:$0xf]
    %v754 = vld [vmem:[#allocation3 + $0x820] sm:$0xf]
    %v755 = vld [vmem:[#allocation3 + $0x824] sm:$0xf]
    %v756 = vld [vmem:[#allocation3 + $0x828] sm:$0xf]
    %v757 = vld [vmem:[#allocation3 + $0x82c] sm:$0xf]
    %v758 = vld [vmem:[#allocation3 + $0x830] sm:$0xf]
    %v759 = vld [vmem:[#allocation3 + $0x834] sm:$0xf]
    %v760 = vld [vmem:[#allocation3 + $0x838] sm:$0xf]
    %v761 = vld [vmem:[#allocation3 + $0x83c] sm:$0xf]
    %v762 = vld [vmem:[#allocation3 + $0x840] sm:$0xf]
    %v763 = vld [vmem:[#allocation3 + $0x844] sm:$0xf]
    %v764 = vld [vmem:[#allocation3 + $0x848] sm:$0xf]
    %v765 = vld [vmem:[#allocation3 + $0x84c] sm:$0xf]
    %v766 = vld [vmem:[#allocation3 + $0x850] sm:$0xf]
    %v767 = vld [vmem:[#allocation3 + $0x854] sm:$0xf]
    %v768 = vld [vmem:[#allocation3 + $0x858] sm:$0xf]
    %v769 = vld [vmem:[#allocation3 + $0x85c] sm:$0xf]
    %v770 = vld [vmem:[#allocation3 + $0x860] sm:$0xf]
    %v771 = vld [vmem:[#allocation3 + $0x864] sm:$0xf]
    %v772 = vld [vmem:[#allocation3 + $0x868] sm:$0xf]
    %v773 = vld [vmem:[#allocation3 + $0x86c] sm:$0xf]
    %v774 = vld [vmem:[#allocation3 + $0x870] sm:$0xf]
    %v775 = vld [vmem:[#allocation3 + $0x874] sm:$0xf]
    %v776 = vld [vmem:[#allocation3 + $0x878] sm:$0xf]
    %v777 = vld [vmem:[#allocation3 + $0x87c] sm:$0xf]
    %v778 = vld [vmem:[#allocation3 + $0x880] sm:$0xf]
    %v779 = vld [vmem:[#allocation3 + $0x884] sm:$0xf]
    %v780 = vld [vmem:[#allocation3 + $0x888] sm:$0xf]
    %v781 = vld [vmem:[#allocation3 + $0x88c] sm:$0xf]
    %v782 = vld [vmem:[#allocation3 + $0x890] sm:$0xf]
    %v783 = vld [vmem:[#allocation3 + $0x894] sm:$0xf]
    %v784 = vld [vmem:[#allocation3 + $0x898] sm:$0xf]
    %v785 = vld [vmem:[#allocation3 + $0x89c] sm:$0xf]
    %v786 = vld [vmem:[#allocation3 + $0x8a0] sm:$0xf]
    %v787 = vld [vmem:[#allocation3 + $0x8a4] sm:$0xf]
    %v788 = vld [vmem:[#allocation3 + $0x8a8] sm:$0xf]
    %v789 = vld [vmem:[#allocation3 + $0x8ac] sm:$0xf]
    %v790 = vld [vmem:[#allocation3 + $0x8b0] sm:$0xf]
    %v791 = vld [vmem:[#allocation3 + $0x8b4] sm:$0xf]
    %v792 = vld [vmem:[#allocation3 + $0x8b8] sm:$0xf]
    %v793 = vld [vmem:[#allocation3 + $0x8bc] sm:$0xf]
    %v794 = vld [vmem:[#allocation3 + $0x8c0] sm:$0xf]
    %v795 = vld [vmem:[#allocation3 + $0x8c4] sm:$0xf]
    %v796 = vld [vmem:[#allocation3 + $0x8c8] sm:$0xf]
    %v797 = vld [vmem:[#allocation3 + $0x8cc] sm:$0xf]
    %v798 = vld [vmem:[#allocation3 + $0x8d0] sm:$0xf]
    %v799 = vld [vmem:[#allocation3 + $0x8d4] sm:$0xf]
    %v800 = vld [vmem:[#allocation3 + $0x8d8] sm:$0xf]
    %v801 = vld [vmem:[#allocation3 + $0x8dc] sm:$0xf]
    %v802 = vld [vmem:[#allocation3 + $0x8e0] sm:$0xf]
    %v803 = vld [vmem:[#allocation3 + $0x8e4] sm:$0xf]
    %v804 = vld [vmem:[#allocation3 + $0x8e8] sm:$0xf]
    %v805 = vld [vmem:[#allocation3 + $0x8ec] sm:$0xf]
    %v806 = vld [vmem:[#allocation3 + $0x8f0] sm:$0xf]
    %v807 = vld [vmem:[#allocation3 + $0x8f4] sm:$0xf]
    %v808 = vld [vmem:[#allocation3 + $0x8f8] sm:$0xf]
    %v809 = vld [vmem:[#allocation3 + $0x8fc] sm:$0xf]
    %v810 = vld [vmem:[#allocation3 + $0x900] sm:$0xf]
    %v811 = vld [vmem:[#allocation3 + $0x904] sm:$0xf]
    %v812 = vld [vmem:[#allocation3 + $0x908] sm:$0xf]
    %v813 = vld [vmem:[#allocation3 + $0x90c] sm:$0xf]
    %v814 = vld [vmem:[#allocation3 + $0x910] sm:$0xf]
    %v815 = vld [vmem:[#allocation3 + $0x914] sm:$0xf]
    %v816 = vld [vmem:[#allocation3 + $0x918] sm:$0xf]
    %v817 = vld [vmem:[#allocation3 + $0x91c] sm:$0xf]
    %v818 = vld [vmem:[#allocation3 + $0x920] sm:$0xf]
    %v819 = vld [vmem:[#allocation3 + $0x924] sm:$0xf]
    %v820 = vld [vmem:[#allocation3 + $0x928] sm:$0xf]
    %v821 = vld [vmem:[#allocation3 + $0x92c] sm:$0xf]
    %v822 = vld [vmem:[#allocation3 + $0x930] sm:$0xf]
    %v823 = vld [vmem:[#allocation3 + $0x934] sm:$0xf]
    %v824 = vld [vmem:[#allocation3 + $0x938] sm:$0xf]
    %v825 = vld [vmem:[#allocation3 + $0x93c] sm:$0xf]
    %v826 = vld [vmem:[#allocation3 + $0x940] sm:$0xf]
    %v827 = vld [vmem:[#allocation3 + $0x944] sm:$0xf]
    %v828 = vld [vmem:[#allocation3 + $0x948] sm:$0xf]
    %v829 = vld [vmem:[#allocation3 + $0x94c] sm:$0xf]
    %v830 = vld [vmem:[#allocation3 + $0x950] sm:$0xf]
    %v831 = vld [vmem:[#allocation3 + $0x954] sm:$0xf]
    %v832 = vld [vmem:[#allocation3 + $0x958] sm:$0xf]
    %v833 = vld [vmem:[#allocation3 + $0x95c] sm:$0xf]
    %v834 = vld [vmem:[#allocation3 + $0x960] sm:$0xf]
    %v835 = vld [vmem:[#allocation3 + $0x964] sm:$0xf]
    %v836 = vld [vmem:[#allocation3 + $0x968] sm:$0xf]
    %v837 = vld [vmem:[#allocation3 + $0x96c] sm:$0xf]
    %v838 = vld [vmem:[#allocation3 + $0x970] sm:$0xf]
    %v839 = vld [vmem:[#allocation3 + $0x974] sm:$0xf]
    %v840 = vld [vmem:[#allocation3 + $0x978] sm:$0xf]
    %v841 = vld [vmem:[#allocation3 + $0x97c] sm:$0xf]
    %v842 = vld [vmem:[#allocation3 + $0x980] sm:$0xf]
    %v843 = vld [vmem:[#allocation3 + $0x984] sm:$0xf]
    %v844 = vld [vmem:[#allocation3 + $0x988] sm:$0xf]
    %v845 = vld [vmem:[#allocation3 + $0x98c] sm:$0xf]
    %v846 = vld [vmem:[#allocation3 + $0x990] sm:$0xf]
    %v847 = vld [vmem:[#allocation3 + $0x994] sm:$0xf]
    %v848 = vld [vmem:[#allocation3 + $0x998] sm:$0xf]
    %v849 = vld [vmem:[#allocation3 + $0x99c] sm:$0xf]
    %v850 = vld [vmem:[#allocation3 + $0x9a0] sm:$0xf]
    %v851 = vld [vmem:[#allocation3 + $0x9a4] sm:$0xf]
    %v852 = vld [vmem:[#allocation3 + $0x9a8] sm:$0xf]
    %v853 = vld [vmem:[#allocation3 + $0x9ac] sm:$0xf]
    %v854 = vld [vmem:[#allocation3 + $0x9b0] sm:$0xf]
    %v855 = vld [vmem:[#allocation3 + $0x9b4] sm:$0xf]
    %v856 = vld [vmem:[#allocation3 + $0x9b8] sm:$0xf]
    %v857 = vld [vmem:[#allocation3 + $0x9bc] sm:$0xf]
    %v858 = vld [vmem:[#allocation3 + $0x9c0] sm:$0xf]
    %v859 = vld [vmem:[#allocation3 + $0x9c4] sm:$0xf]
    %v860 = vld [vmem:[#allocation3 + $0x9c8] sm:$0xf]
    %v861 = vld [vmem:[#allocation3 + $0x9cc] sm:$0xf]
    %v862 = vld [vmem:[#allocation3 + $0x9d0] sm:$0xf]
    %v863 = vld [vmem:[#allocation3 + $0x9d4] sm:$0xf]
    %v864 = vld [vmem:[#allocation3 + $0x9d8] sm:$0xf]
    %v865 = vld [vmem:[#allocation3 + $0x9dc] sm:$0xf]
    %v866 = vld [vmem:[#allocation3 + $0x9e0] sm:$0xf]
    %v867 = vld [vmem:[#allocation3 + $0x9e4] sm:$0xf]
    %v868 = vld [vmem:[#allocation3 + $0x9e8] sm:$0xf]
    %v869 = vld [vmem:[#allocation3 + $0x9ec] sm:$0xf]
    %v870 = vld [vmem:[#allocation3 + $0x9f0] sm:$0xf]
    %v871 = vld [vmem:[#allocation3 + $0x9f4] sm:$0xf]
    %v872 = vld [vmem:[#allocation3 + $0x9f8] sm:$0xf]
    %v873 = vld [vmem:[#allocation3 + $0x9fc] sm:$0xf]
    %v874 = vld [vmem:[#allocation3 + $0xa00] sm:$0xf]
    %v875 = vld [vmem:[#allocation3 + $0xa04] sm:$0xf]
    %v876 = vld [vmem:[#allocation3 + $0xa08] sm:$0xf]
    %v877 = vld [vmem:[#allocation3 + $0xa0c] sm:$0xf]
    %v878 = vld [vmem:[#allocation3 + $0xa10] sm:$0xf]
    %v879 = vld [vmem:[#allocation3 + $0xa14] sm:$0xf]
    %v880 = vld [vmem:[#allocation3 + $0xa18] sm:$0xf]
    %v881 = vld [vmem:[#allocation3 + $0xa1c] sm:$0xf]
    %v882 = vld [vmem:[#allocation3 + $0xa20] sm:$0xf]
    %v883 = vld [vmem:[#allocation3 + $0xa24] sm:$0xf]
    %v884 = vld [vmem:[#allocation3 + $0xa28] sm:$0xf]
    %v885 = vld [vmem:[#allocation3 + $0xa2c] sm:$0xf]
    %v886 = vld [vmem:[#allocation3 + $0xa30] sm:$0xf]
    %v887 = vld [vmem:[#allocation3 + $0xa34] sm:$0xf]
    %v888 = vld [vmem:[#allocation3 + $0xa38] sm:$0xf]
    %v889 = vld [vmem:[#allocation3 + $0xa3c] sm:$0xf]
    %v890 = vld [vmem:[#allocation3 + $0xa40] sm:$0xf]
    %v891 = vld [vmem:[#allocation3 + $0xa44] sm:$0xf]
    %v892 = vld [vmem:[#allocation3 + $0xa48] sm:$0xf]
    %v893 = vld [vmem:[#allocation3 + $0xa4c] sm:$0xf]
    %v894 = vld [vmem:[#allocation3 + $0xa50] sm:$0xf]
    %v895 = vld [vmem:[#allocation3 + $0xa54] sm:$0xf]
    %v896 = vld [vmem:[#allocation3 + $0xa58] sm:$0xf]
    %v897 = vld [vmem:[#allocation3 + $0xa5c] sm:$0xf]
    %v898 = vld [vmem:[#allocation3 + $0xa60] sm:$0xf]
    %v899 = vld [vmem:[#allocation3 + $0xa64] sm:$0xf]
    %v900 = vld [vmem:[#allocation3 + $0xa68] sm:$0xf]
    %v901 = vld [vmem:[#allocation3 + $0xa6c] sm:$0xf]
    %v902 = vld [vmem:[#allocation3 + $0xa70] sm:$0xf]
    %v903 = vld [vmem:[#allocation3 + $0xa74] sm:$0xf]
    %v904 = vld [vmem:[#allocation3 + $0xa78] sm:$0xf]
    %v905 = vld [vmem:[#allocation3 + $0xa7c] sm:$0xf]
    %v906 = vld [vmem:[#allocation3 + $0xa80] sm:$0xf]
    %v907 = vld [vmem:[#allocation3 + $0xa84] sm:$0xf]
    %v908 = vld [vmem:[#allocation3 + $0xa88] sm:$0xf]
    %v909 = vld [vmem:[#allocation3 + $0xa8c] sm:$0xf]
    %v910 = vld [vmem:[#allocation3 + $0xa90] sm:$0xf]
    %v911 = vld [vmem:[#allocation3 + $0xa94] sm:$0xf]
    %v912 = vld [vmem:[#allocation3 + $0xa98] sm:$0xf]
    %v913 = vld [vmem:[#allocation3 + $0xa9c] sm:$0xf]
    %v914 = vld [vmem:[#allocation3 + $0xaa0] sm:$0xf]
    %v915 = vld [vmem:[#allocation3 + $0xaa4] sm:$0xf]
    %v916 = vld [vmem:[#allocation3 + $0xaa8] sm:$0xf]
    %v917 = vld [vmem:[#allocation3 + $0xaac] sm:$0xf]
    %v918 = vld [vmem:[#allocation3 + $0xab0] sm:$0xf]
    %v919 = vld [vmem:[#allocation3 + $0xab4] sm:$0xf]
    %v920 = vld [vmem:[#allocation3 + $0xab8] sm:$0xf]
    %v921 = vld [vmem:[#allocation3 + $0xabc] sm:$0xf]
    %v922 = vld [vmem:[#allocation3 + $0xac0] sm:$0xf]
    %v923 = vld [vmem:[#allocation3 + $0xac4] sm:$0xf]
    %v924 = vld [vmem:[#allocation3 + $0xac8] sm:$0xf]
    %v925 = vld [vmem:[#allocation3 + $0xacc] sm:$0xf]
    %v926 = vld [vmem:[#allocation3 + $0xad0] sm:$0xf]
    %v927 = vld [vmem:[#allocation3 + $0xad4] sm:$0xf]
    %v928 = vld [vmem:[#allocation3 + $0xad8] sm:$0xf]
    %v929 = vld [vmem:[#allocation3 + $0xadc] sm:$0xf]
    %v930 = vld [vmem:[#allocation3 + $0xae0] sm:$0xf]
    %v931 = vld [vmem:[#allocation3 + $0xae4] sm:$0xf]
    %v932 = vld [vmem:[#allocation3 + $0xae8] sm:$0xf]
    %v933 = vld [vmem:[#allocation3 + $0xaec] sm:$0xf]
    %v934 = vld [vmem:[#allocation3 + $0xaf0] sm:$0xf]
    %v935 = vld [vmem:[#allocation3 + $0xaf4] sm:$0xf]
    %v936 = vld [vmem:[#allocation3 + $0xaf8] sm:$0xf]
    %v937 = vld [vmem:[#allocation3 + $0xafc] sm:$0xf]
    %v938 = vld [vmem:[#allocation3 + $0xb00] sm:$0xf]
    %v939 = vld [vmem:[#allocation3 + $0xb04] sm:$0xf]
    %v940 = vld [vmem:[#allocation3 + $0xb08] sm:$0xf]
    %v941 = vld [vmem:[#allocation3 + $0xb0c] sm:$0xf]
    %v942 = vld [vmem:[#allocation3 + $0xb10] sm:$0xf]
    %v943 = vld [vmem:[#allocation3 + $0xb14] sm:$0xf]
    %v944 = vld [vmem:[#allocation3 + $0xb18] sm:$0xf]
    %v945 = vld [vmem:[#allocation3 + $0xb1c] sm:$0xf]
    %v946 = vld [vmem:[#allocation3 + $0xb20] sm:$0xf]
    %v947 = vld [vmem:[#allocation3 + $0xb24] sm:$0xf]
    %v948 = vld [vmem:[#allocation3 + $0xb28] sm:$0xf]
    %v949 = vld [vmem:[#allocation3 + $0xb2c] sm:$0xf]
    %v950 = vld [vmem:[#allocation3 + $0xb30] sm:$0xf]
    %v951 = vld [vmem:[#allocation3 + $0xb34] sm:$0xf]
    %v952 = vld [vmem:[#allocation3 + $0xb38] sm:$0xf]
    %v953 = vld [vmem:[#allocation3 + $0xb3c] sm:$0xf]
    %v954 = vld [vmem:[#allocation3 + $0xb40] sm:$0xf]
    %v955 = vld [vmem:[#allocation3 + $0xb44] sm:$0xf]
    %v956 = vld [vmem:[#allocation3 + $0xb48] sm:$0xf]
    %v957 = vld [vmem:[#allocation3 + $0xb4c] sm:$0xf]
    %v958 = vld [vmem:[#allocation3 + $0xb50] sm:$0xf]
    %v959 = vld [vmem:[#allocation3 + $0xb54] sm:$0xf]
    %v960 = vld [vmem:[#allocation3 + $0xb58] sm:$0xf]
    %v961 = vld [vmem:[#allocation3 + $0xb5c] sm:$0xf]
    %v962 = vld [vmem:[#allocation3 + $0xb60] sm:$0xf]
    %v963 = vld [vmem:[#allocation3 + $0xb64] sm:$0xf]
    %v964 = vld [vmem:[#allocation3 + $0xb68] sm:$0xf]
    %v965 = vld [vmem:[#allocation3 + $0xb6c] sm:$0xf]
    %v966 = vld [vmem:[#allocation3 + $0xb70] sm:$0xf]
    %v967 = vld [vmem:[#allocation3 + $0xb74] sm:$0xf]
    %v968 = vld [vmem:[#allocation3 + $0xb78] sm:$0xf]
    %v969 = vld [vmem:[#allocation3 + $0xb7c] sm:$0xf]
    %v970 = vld [vmem:[#allocation3 + $0xb80] sm:$0xf]
    %v971 = vld [vmem:[#allocation3 + $0xb84] sm:$0xf]
    %v972 = vld [vmem:[#allocation3 + $0xb88] sm:$0xf]
    %v973 = vld [vmem:[#allocation3 + $0xb8c] sm:$0xf]
    %v974 = vld [vmem:[#allocation3 + $0xb90] sm:$0xf]
    %v975 = vld [vmem:[#allocation3 + $0xb94] sm:$0xf]
    %v976 = vld [vmem:[#allocation3 + $0xb98] sm:$0xf]
    %v977 = vld [vmem:[#allocation3 + $0xb9c] sm:$0xf]
    %v978 = vld [vmem:[#allocation3 + $0xba0] sm:$0xf]
    %v979 = vld [vmem:[#allocation3 + $0xba4] sm:$0xf]
    %v980 = vld [vmem:[#allocation3 + $0xba8] sm:$0xf]
    %v981 = vld [vmem:[#allocation3 + $0xbac] sm:$0xf]
    %v982 = vld [vmem:[#allocation3 + $0xbb0] sm:$0xf]
    %v983 = vld [vmem:[#allocation3 + $0xbb4] sm:$0xf]
    %v984 = vld [vmem:[#allocation3 + $0xbb8] sm:$0xf]
    %v985 = vld [vmem:[#allocation3 + $0xbbc] sm:$0xf]
    %v986 = vld [vmem:[#allocation3 + $0xbc0] sm:$0xf]
    %v987 = vld [vmem:[#allocation3 + $0xbc4] sm:$0xf]
    %v988 = vld [vmem:[#allocation3 + $0xbc8] sm:$0xf]
    %v989 = vld [vmem:[#allocation3 + $0xbcc] sm:$0xf]
    %v990 = vld [vmem:[#allocation3 + $0xbd0] sm:$0xf]
    %v991 = vld [vmem:[#allocation3 + $0xbd4] sm:$0xf]
    %v992 = vld [vmem:[#allocation3 + $0xbd8] sm:$0xf]
    %v993 = vld [vmem:[#allocation3 + $0xbdc] sm:$0xf]
    %v994 = vld [vmem:[#allocation3 + $0xbe0] sm:$0xf]
    %v995 = vld [vmem:[#allocation3 + $0xbe4] sm:$0xf]
    %v996 = vld [vmem:[#allocation3 + $0xbe8] sm:$0xf]
    %v997 = vld [vmem:[#allocation3 + $0xbec] sm:$0xf]
    %v998 = vld [vmem:[#allocation3 + $0xbf0] sm:$0xf]
    %v999 = vld [vmem:[#allocation3 + $0xbf4] sm:$0xf]
    %v1000 = vld [vmem:[#allocation3 + $0xbf8] sm:$0xf]
    %v1001 = vld [vmem:[#allocation3 + $0xbfc] sm:$0xf]
    %v1002 = vld [vmem:[#allocation3 + $0xc00] sm:$0xf]
    %v1003 = vld [vmem:[#allocation3 + $0xc04] sm:$0xf]
    %v1004 = vld [vmem:[#allocation3 + $0xc08] sm:$0xf]
    %v1005 = vld [vmem:[#allocation3 + $0xc0c] sm:$0xf]
    %v1006 = vld [vmem:[#allocation3 + $0xc10] sm:$0xf]
    %v1007 = vld [vmem:[#allocation3 + $0xc14] sm:$0xf]
    %v1008 = vld [vmem:[#allocation3 + $0xc18] sm:$0xf]
    %v1009 = vld [vmem:[#allocation3 + $0xc1c] sm:$0xf]
    %v1010 = vld [vmem:[#allocation3 + $0xc20] sm:$0xf]
    %v1011 = vld [vmem:[#allocation3 + $0xc24] sm:$0xf]
    %v1012 = vld [vmem:[#allocation3 + $0xc28] sm:$0xf]
    %v1013 = vld [vmem:[#allocation3 + $0xc2c] sm:$0xf]
    %v1014 = vld [vmem:[#allocation3 + $0xc30] sm:$0xf]
    %v1015 = vld [vmem:[#allocation3 + $0xc34] sm:$0xf]
    %v1016 = vld [vmem:[#allocation3 + $0xc38] sm:$0xf]
    %v1017 = vld [vmem:[#allocation3 + $0xc3c] sm:$0xf]
    %v1018 = vld [vmem:[#allocation3 + $0xc40] sm:$0xf]
    %v1019 = vld [vmem:[#allocation3 + $0xc44] sm:$0xf]
    %v1020 = vld [vmem:[#allocation3 + $0xc48] sm:$0xf]
    %v1021 = vld [vmem:[#allocation3 + $0xc4c] sm:$0xf]
    %v1022 = vld [vmem:[#allocation3 + $0xc50] sm:$0xf]
    %v1023 = vld [vmem:[#allocation3 + $0xc54] sm:$0xf]
    %v1024 = vld [vmem:[#allocation3 + $0xc58] sm:$0xf]
    %v1025 = vld [vmem:[#allocation3 + $0xc5c] sm:$0xf]
    %v1026 = vld [vmem:[#allocation3 + $0xc60] sm:$0xf]
    %v1027 = vld [vmem:[#allocation3 + $0xc64] sm:$0xf]
    %v1028 = vld [vmem:[#allocation3 + $0xc68] sm:$0xf]
    %v1029 = vld [vmem:[#allocation3 + $0xc6c] sm:$0xf]
    %v1030 = vld [vmem:[#allocation3 + $0xc70] sm:$0xf]
    %v1031 = vld [vmem:[#allocation3 + $0xc74] sm:$0xf]
    %v1032 = vld [vmem:[#allocation3 + $0xc78] sm:$0xf]
    %v1033 = vld [vmem:[#allocation3 + $0xc7c] sm:$0xf]
    %v1034 = vld [vmem:[#allocation3 + $0xc80] sm:$0xf]
    %v1035 = vld [vmem:[#allocation3 + $0xc84] sm:$0xf]
    %v1036 = vld [vmem:[#allocation3 + $0xc88] sm:$0xf]
    %v1037 = vld [vmem:[#allocation3 + $0xc8c] sm:$0xf]
    %v1038 = vld [vmem:[#allocation3 + $0xc90] sm:$0xf]
    %v1039 = vld [vmem:[#allocation3 + $0xc94] sm:$0xf]
    %v1040 = vld [vmem:[#allocation3 + $0xc98] sm:$0xf]
    %v1041 = vld [vmem:[#allocation3 + $0xc9c] sm:$0xf]
    %v1042 = vld [vmem:[#allocation3 + $0xca0] sm:$0xf]
    %v1043 = vld [vmem:[#allocation3 + $0xca4] sm:$0xf]
    %v1044 = vld [vmem:[#allocation3 + $0xca8] sm:$0xf]
    %v1045 = vld [vmem:[#allocation3 + $0xcac] sm:$0xf]
    %v1046 = vld [vmem:[#allocation3 + $0xcb0] sm:$0xf]
    %v1047 = vld [vmem:[#allocation3 + $0xcb4] sm:$0xf]
    %v1048 = vld [vmem:[#allocation3 + $0xcb8] sm:$0xf]
    %v1049 = vld [vmem:[#allocation3 + $0xcbc] sm:$0xf]
    %v1050 = vld [vmem:[#allocation3 + $0xcc0] sm:$0xf]
    %v1051 = vld [vmem:[#allocation3 + $0xcc4] sm:$0xf]
    %v1052 = vld [vmem:[#allocation3 + $0xcc8] sm:$0xf]
    %v1053 = vld [vmem:[#allocation3 + $0xccc] sm:$0xf]
    %v1054 = vld [vmem:[#allocation3 + $0xcd0] sm:$0xf]
    %v1055 = vld [vmem:[#allocation3 + $0xcd4] sm:$0xf]
    %v1056 = vld [vmem:[#allocation3 + $0xcd8] sm:$0xf]
    %v1057 = vld [vmem:[#allocation3 + $0xcdc] sm:$0xf]
    %v1058 = vld [vmem:[#allocation3 + $0xce0] sm:$0xf]
    %v1059 = vld [vmem:[#allocation3 + $0xce4] sm:$0xf]
    %v1060 = vld [vmem:[#allocation3 + $0xce8] sm:$0xf]
    %v1061 = vld [vmem:[#allocation3 + $0xcec] sm:$0xf]
    %v1062 = vld [vmem:[#allocation3 + $0xcf0] sm:$0xf]
    %v1063 = vld [vmem:[#allocation3 + $0xcf4] sm:$0xf]
    %v1064 = vld [vmem:[#allocation3 + $0xcf8] sm:$0xf]
    %v1065 = vld [vmem:[#allocation3 + $0xcfc] sm:$0xf]
    %v1066 = vld [vmem:[#allocation3 + $0xd00] sm:$0xf]
    %v1067 = vld [vmem:[#allocation3 + $0xd04] sm:$0xf]
    %v1068 = vld [vmem:[#allocation3 + $0xd08] sm:$0xf]
    %v1069 = vld [vmem:[#allocation3 + $0xd0c] sm:$0xf]
    %v1070 = vld [vmem:[#allocation3 + $0xd10] sm:$0xf]
    %v1071 = vld [vmem:[#allocation3 + $0xd14] sm:$0xf]
    %v1072 = vld [vmem:[#allocation3 + $0xd18] sm:$0xf]
    %v1073 = vld [vmem:[#allocation3 + $0xd1c] sm:$0xf]
    %v1074 = vld [vmem:[#allocation3 + $0xd20] sm:$0xf]
    %v1075 = vld [vmem:[#allocation3 + $0xd24] sm:$0xf]
    %v1076 = vld [vmem:[#allocation3 + $0xd28] sm:$0xf]
    %v1077 = vld [vmem:[#allocation3 + $0xd2c] sm:$0xf]
    %v1078 = vld [vmem:[#allocation3 + $0xd30] sm:$0xf]
    %v1079 = vld [vmem:[#allocation3 + $0xd34] sm:$0xf]
    %v1080 = vld [vmem:[#allocation3 + $0xd38] sm:$0xf]
    %v1081 = vld [vmem:[#allocation3 + $0xd3c] sm:$0xf]
    %v1082 = vld [vmem:[#allocation3 + $0xd40] sm:$0xf]
    %v1083 = vld [vmem:[#allocation3 + $0xd44] sm:$0xf]
    %v1084 = vld [vmem:[#allocation3 + $0xd48] sm:$0xf]
    %v1085 = vld [vmem:[#allocation3 + $0xd4c] sm:$0xf]
    %v1086 = vld [vmem:[#allocation3 + $0xd50] sm:$0xf]
    %v1087 = vld [vmem:[#allocation3 + $0xd54] sm:$0xf]
    %v1088 = vld [vmem:[#allocation3 + $0xd58] sm:$0xf]
    %v1089 = vld [vmem:[#allocation3 + $0xd5c] sm:$0xf]
    %v1090 = vld [vmem:[#allocation3 + $0xd60] sm:$0xf]
    %v1091 = vld [vmem:[#allocation3 + $0xd64] sm:$0xf]
    %v1092 = vld [vmem:[#allocation3 + $0xd68] sm:$0xf]
    %v1093 = vld [vmem:[#allocation3 + $0xd6c] sm:$0xf]
    %v1094 = vld [vmem:[#allocation3 + $0xd70] sm:$0xf]
    %v1095 = vld [vmem:[#allocation3 + $0xd74] sm:$0xf]
    %v1096 = vld [vmem:[#allocation3 + $0xd78] sm:$0xf]
    %v1097 = vld [vmem:[#allocation3 + $0xd7c] sm:$0xf]
    %v1098 = vld [vmem:[#allocation3 + $0xd80] sm:$0xf]
    %v1099 = vld [vmem:[#allocation3 + $0xd84] sm:$0xf]
    %v1100 = vld [vmem:[#allocation3 + $0xd88] sm:$0xf]
    %v1101 = vld [vmem:[#allocation3 + $0xd8c] sm:$0xf]
    %v1102 = vld [vmem:[#allocation3 + $0xd90] sm:$0xf]
    %v1103 = vld [vmem:[#allocation3 + $0xd94] sm:$0xf]
    %v1104 = vld [vmem:[#allocation3 + $0xd98] sm:$0xf]
    %v1105 = vld [vmem:[#allocation3 + $0xd9c] sm:$0xf]
    %v1106 = vld [vmem:[#allocation3 + $0xda0] sm:$0xf]
    %v1107 = vld [vmem:[#allocation3 + $0xda4] sm:$0xf]
    %v1108 = vld [vmem:[#allocation3 + $0xda8] sm:$0xf]
    %v1109 = vld [vmem:[#allocation3 + $0xdac] sm:$0xf]
    %v1110 = vld [vmem:[#allocation3 + $0xdb0] sm:$0xf]
    %v1111 = vld [vmem:[#allocation3 + $0xdb4] sm:$0xf]
    %v1112 = vld [vmem:[#allocation3 + $0xdb8] sm:$0xf]
    %v1113 = vld [vmem:[#allocation3 + $0xdbc] sm:$0xf]
    %v1114 = vld [vmem:[#allocation3 + $0xdc0] sm:$0xf]
    %v1115 = vld [vmem:[#allocation3 + $0xdc4] sm:$0xf]
    %v1116 = vld [vmem:[#allocation3 + $0xdc8] sm:$0xf]
    %v1117 = vld [vmem:[#allocation3 + $0xdcc] sm:$0xf]
    %v1118 = vld [vmem:[#allocation3 + $0xdd0] sm:$0xf]
    %v1119 = vld [vmem:[#allocation3 + $0xdd4] sm:$0xf]
    %v1120 = vld [vmem:[#allocation3 + $0xdd8] sm:$0xf]
    %v1121 = vld [vmem:[#allocation3 + $0xddc] sm:$0xf]
    %v1122 = vld [vmem:[#allocation3 + $0xde0] sm:$0xf]
    %v1123 = vld [vmem:[#allocation3 + $0xde4] sm:$0xf]
    %v1124 = vld [vmem:[#allocation3 + $0xde8] sm:$0xf]
    %v1125 = vld [vmem:[#allocation3 + $0xdec] sm:$0xf]
    %v1126 = vld [vmem:[#allocation3 + $0xdf0] sm:$0xf]
    %v1127 = vld [vmem:[#allocation3 + $0xdf4] sm:$0xf]
    %v1128 = vld [vmem:[#allocation3 + $0xdf8] sm:$0xf]
    %v1129 = vld [vmem:[#allocation3 + $0xdfc] sm:$0xf]
    %v1130 = vld [vmem:[#allocation3 + $0xe00] sm:$0xf]
    %v1131 = vld [vmem:[#allocation3 + $0xe04] sm:$0xf]
    %v1132 = vld [vmem:[#allocation3 + $0xe08] sm:$0xf]
    %v1133 = vld [vmem:[#allocation3 + $0xe0c] sm:$0xf]
    %v1134 = vld [vmem:[#allocation3 + $0xe10] sm:$0xf]
    %v1135 = vld [vmem:[#allocation3 + $0xe14] sm:$0xf]
    %v1136 = vld [vmem:[#allocation3 + $0xe18] sm:$0xf]
    %v1137 = vld [vmem:[#allocation3 + $0xe1c] sm:$0xf]
    %v1138 = vld [vmem:[#allocation3 + $0xe20] sm:$0xf]
    %v1139 = vld [vmem:[#allocation3 + $0xe24] sm:$0xf]
    %v1140 = vld [vmem:[#allocation3 + $0xe28] sm:$0xf]
    %v1141 = vld [vmem:[#allocation3 + $0xe2c] sm:$0xf]
    %v1142 = vld [vmem:[#allocation3 + $0xe30] sm:$0xf]
    %v1143 = vld [vmem:[#allocation3 + $0xe34] sm:$0xf]
    %v1144 = vld [vmem:[#allocation3 + $0xe38] sm:$0xf]
    %v1145 = vld [vmem:[#allocation3 + $0xe3c] sm:$0xf]
    %v1146 = vld [vmem:[#allocation3 + $0xe40] sm:$0xf]
    %v1147 = vld [vmem:[#allocation3 + $0xe44] sm:$0xf]
    %v1148 = vld [vmem:[#allocation3 + $0xe48] sm:$0xf]
    %v1149 = vld [vmem:[#allocation3 + $0xe4c] sm:$0xf]
    %v1150 = vld [vmem:[#allocation3 + $0xe50] sm:$0xf]
    %v1151 = vld [vmem:[#allocation3 + $0xe54] sm:$0xf]
    %v1152 = vld [vmem:[#allocation3 + $0xe58] sm:$0xf]
    %v1153 = vld [vmem:[#allocation3 + $0xe5c] sm:$0xf]
    %v1154 = vld [vmem:[#allocation3 + $0xe60] sm:$0xf]
    %v1155 = vld [vmem:[#allocation3 + $0xe64] sm:$0xf]
    %v1156 = vld [vmem:[#allocation3 + $0xe68] sm:$0xf]
    %v1157 = vld [vmem:[#allocation3 + $0xe6c] sm:$0xf]
    %v1158 = vld [vmem:[#allocation3 + $0xe70] sm:$0xf]
    %v1159 = vld [vmem:[#allocation3 + $0xe74] sm:$0xf]
    %v1160 = vld [vmem:[#allocation3 + $0xe78] sm:$0xf]
    %v1161 = vld [vmem:[#allocation3 + $0xe7c] sm:$0xf]
    %v1162 = vld [vmem:[#allocation3 + $0xe80] sm:$0xf]
    %v1163 = vld [vmem:[#allocation3 + $0xe84] sm:$0xf]
    %v1164 = vld [vmem:[#allocation3 + $0xe88] sm:$0xf]
    %v1165 = vld [vmem:[#allocation3 + $0xe8c] sm:$0xf]
    %v1166 = vld [vmem:[#allocation3 + $0xe90] sm:$0xf]
    %v1167 = vld [vmem:[#allocation3 + $0xe94] sm:$0xf]
    %v1168 = vld [vmem:[#allocation3 + $0xe98] sm:$0xf]
    %v1169 = vld [vmem:[#allocation3 + $0xe9c] sm:$0xf]
    %v1170 = vld [vmem:[#allocation3 + $0xea0] sm:$0xf]
    %v1171 = vld [vmem:[#allocation3 + $0xea4] sm:$0xf]
    %v1172 = vld [vmem:[#allocation3 + $0xea8] sm:$0xf]
    %v1173 = vld [vmem:[#allocation3 + $0xeac] sm:$0xf]
    %v1174 = vld [vmem:[#allocation3 + $0xeb0] sm:$0xf]
    %v1175 = vld [vmem:[#allocation3 + $0xeb4] sm:$0xf]
    %v1176 = vld [vmem:[#allocation3 + $0xeb8] sm:$0xf]
    %v1177 = vld [vmem:[#allocation3 + $0xebc] sm:$0xf]
    %v1178 = vld [vmem:[#allocation3 + $0xec0] sm:$0xf]
    %v1179 = vld [vmem:[#allocation3 + $0xec4] sm:$0xf]
    %v1180 = vld [vmem:[#allocation3 + $0xec8] sm:$0xf]
    %v1181 = vld [vmem:[#allocation3 + $0xecc] sm:$0xf]
    %v1182 = vld [vmem:[#allocation3 + $0xed0] sm:$0xf]
    %v1183 = vld [vmem:[#allocation3 + $0xed4] sm:$0xf]
    %v1184 = vld [vmem:[#allocation3 + $0xed8] sm:$0xf]
    %v1185 = vld [vmem:[#allocation3 + $0xedc] sm:$0xf]
    %v1186 = vld [vmem:[#allocation3 + $0xee0] sm:$0xf]
    %v1187 = vld [vmem:[#allocation3 + $0xee4] sm:$0xf]
    %v1188 = vld [vmem:[#allocation3 + $0xee8] sm:$0xf]
    %v1189 = vld [vmem:[#allocation3 + $0xeec] sm:$0xf]
    %v1190 = vld [vmem:[#allocation3 + $0xef0] sm:$0xf]
    %v1191 = vld [vmem:[#allocation3 + $0xef4] sm:$0xf]
    %v1192 = vld [vmem:[#allocation3 + $0xef8] sm:$0xf]
    %v1193 = vld [vmem:[#allocation3 + $0xefc] sm:$0xf]
    %v1194 = vld [vmem:[#allocation3 + $0xf00] sm:$0xf]
    %v1195 = vld [vmem:[#allocation3 + $0xf04] sm:$0xf]
    %v1196 = vld [vmem:[#allocation3 + $0xf08] sm:$0xf]
    %v1197 = vld [vmem:[#allocation3 + $0xf0c] sm:$0xf]
    %v1198 = vld [vmem:[#allocation3 + $0xf10] sm:$0xf]
    %v1199 = vld [vmem:[#allocation3 + $0xf14] sm:$0xf]
    %v1200 = vld [vmem:[#allocation3 + $0xf18] sm:$0xf]
    %v1201 = vld [vmem:[#allocation3 + $0xf1c] sm:$0xf]
    %v1202 = vld [vmem:[#allocation3 + $0xf20] sm:$0xf]
    %v1203 = vld [vmem:[#allocation3 + $0xf24] sm:$0xf]
    %v1204 = vld [vmem:[#allocation3 + $0xf28] sm:$0xf]
    %v1205 = vld [vmem:[#allocation3 + $0xf2c] sm:$0xf]
    %v1206 = vld [vmem:[#allocation3 + $0xf30] sm:$0xf]
    %v1207 = vld [vmem:[#allocation3 + $0xf34] sm:$0xf]
    %v1208 = vld [vmem:[#allocation3 + $0xf38] sm:$0xf]
    %v1209 = vld [vmem:[#allocation3 + $0xf3c] sm:$0xf]
    %v1210 = vld [vmem:[#allocation3 + $0xf40] sm:$0xf]
    %v1211 = vld [vmem:[#allocation3 + $0xf44] sm:$0xf]
    %v1212 = vld [vmem:[#allocation3 + $0xf48] sm:$0xf]
    %v1213 = vld [vmem:[#allocation3 + $0xf4c] sm:$0xf]
    %v1214 = vld [vmem:[#allocation3 + $0xf50] sm:$0xf]
    %v1215 = vld [vmem:[#allocation3 + $0xf54] sm:$0xf]
    %v1216 = vld [vmem:[#allocation3 + $0xf58] sm:$0xf]
    %v1217 = vld [vmem:[#allocation3 + $0xf5c] sm:$0xf]
    %v1218 = vld [vmem:[#allocation3 + $0xf60] sm:$0xf]
    %v1219 = vld [vmem:[#allocation3 + $0xf64] sm:$0xf]
    %v1220 = vld [vmem:[#allocation3 + $0xf68] sm:$0xf]
    %v1221 = vld [vmem:[#allocation3 + $0xf6c] sm:$0xf]
    %v1222 = vld [vmem:[#allocation3 + $0xf70] sm:$0xf]
    %v1223 = vld [vmem:[#allocation3 + $0xf74] sm:$0xf]
    %v1224 = vld [vmem:[#allocation3 + $0xf78] sm:$0xf]
    %v1225 = vld [vmem:[#allocation3 + $0xf7c] sm:$0xf]
    %v1226 = vld [vmem:[#allocation3 + $0xf80] sm:$0xf]
    %v1227 = vld [vmem:[#allocation3 + $0xf84] sm:$0xf]
    %v1228 = vld [vmem:[#allocation3 + $0xf88] sm:$0xf]
    %v1229 = vld [vmem:[#allocation3 + $0xf8c] sm:$0xf]
    %v1230 = vld [vmem:[#allocation3 + $0xf90] sm:$0xf]
    %v1231 = vld [vmem:[#allocation3 + $0xf94] sm:$0xf]
    %v1232 = vld [vmem:[#allocation3 + $0xf98] sm:$0xf]
    %v1233 = vld [vmem:[#allocation3 + $0xf9c] sm:$0xf]
    %v1234 = vld [vmem:[#allocation3 + $0xfa0] sm:$0xf]
    %v1235 = vld [vmem:[#allocation3 + $0xfa4] sm:$0xf]
    %v1236 = vld [vmem:[#allocation3 + $0xfa8] sm:$0xf]
    %v1237 = vld [vmem:[#allocation3 + $0xfac] sm:$0xf]
    %v1238 = vld [vmem:[#allocation3 + $0xfb0] sm:$0xf]
    %v1239 = vld [vmem:[#allocation3 + $0xfb4] sm:$0xf]
    %v1240 = vld [vmem:[#allocation3 + $0xfb8] sm:$0xf]
    %v1241 = vld [vmem:[#allocation3 + $0xfbc] sm:$0xf]
    %v1242 = vld [vmem:[#allocation3 + $0xfc0] sm:$0xf]
    %v1243 = vld [vmem:[#allocation3 + $0xfc4] sm:$0xf]
    %v1244 = vld [vmem:[#allocation3 + $0xfc8] sm:$0xf]
    %v1245 = vld [vmem:[#allocation3 + $0xfcc] sm:$0xf]
    %v1246 = vld [vmem:[#allocation3 + $0xfd0] sm:$0xf]
    %v1247 = vld [vmem:[#allocation3 + $0xfd4] sm:$0xf]
    %v1248 = vld [vmem:[#allocation3 + $0xfd8] sm:$0xf]
    %v1249 = vld [vmem:[#allocation3 + $0xfdc] sm:$0xf]
    %v1250 = vld [vmem:[#allocation3 + $0xfe0] sm:$0xf]
    %v1251 = vld [vmem:[#allocation3 + $0xfe4] sm:$0xf]
    %v1252 = vld [vmem:[#allocation3 + $0xfe8] sm:$0xf]
    %v1253 = vld [vmem:[#allocation3 + $0xfec] sm:$0xf]
    %v1254 = vld [vmem:[#allocation3 + $0xff0] sm:$0xf]
    %v1255 = vld [vmem:[#allocation3 + $0xff4] sm:$0xf]
    %v1256 = vld [vmem:[#allocation3 + $0xff8] sm:$0xf]
    %v1257 = vld [vmem:[#allocation3 + $0xffc] sm:$0xf]
    %v1258 = vld [vmem:[#allocation3 + $0x1000] sm:$0xf]
    %v1259 = vld [vmem:[#allocation3 + $0x1004] sm:$0xf]
    %v1260 = vld [vmem:[#allocation3 + $0x1008] sm:$0xf]
    %v1261 = vld [vmem:[#allocation3 + $0x100c] sm:$0xf]
    %v1262 = vld [vmem:[#allocation3 + $0x1010] sm:$0xf]
    %v1263 = vld [vmem:[#allocation3 + $0x1014] sm:$0xf]
    %v1264 = vld [vmem:[#allocation3 + $0x1018] sm:$0xf]
    %v1265 = vld [vmem:[#allocation3 + $0x101c] sm:$0xf]
    %v1266 = vld [vmem:[#allocation3 + $0x1020] sm:$0xf]
    %v1267 = vld [vmem:[#allocation3 + $0x1024] sm:$0xf]
    %v1268 = vld [vmem:[#allocation3 + $0x1028] sm:$0xf]
    %v1269 = vld [vmem:[#allocation3 + $0x102c] sm:$0xf]
    %v1270 = vld [vmem:[#allocation3 + $0x1030] sm:$0xf]
    %v1271 = vld [vmem:[#allocation3 + $0x1034] sm:$0xf]
    %v1272 = vld [vmem:[#allocation3 + $0x1038] sm:$0xf]
    %v1273 = vld [vmem:[#allocation3 + $0x103c] sm:$0xf]
    %v1274 = vld [vmem:[#allocation3 + $0x1040] sm:$0xf]
    %v1275 = vld [vmem:[#allocation3 + $0x1044] sm:$0xf]
    %v1276 = vld [vmem:[#allocation3 + $0x1048] sm:$0xf]
    %v1277 = vld [vmem:[#allocation3 + $0x104c] sm:$0xf]
    %v1278 = vld [vmem:[#allocation3 + $0x1050] sm:$0xf]
    %v1279 = vld [vmem:[#allocation3 + $0x1054] sm:$0xf]
    %v1280 = vld [vmem:[#allocation3 + $0x1058] sm:$0xf]
    %v1281 = vld [vmem:[#allocation3 + $0x105c] sm:$0xf]
    %v1282 = vld [vmem:[#allocation3 + $0x1060] sm:$0xf]
    %v1283 = vld [vmem:[#allocation3 + $0x1064] sm:$0xf]
    %v1284 = vld [vmem:[#allocation3 + $0x1068] sm:$0xf]
    %v1285 = vld [vmem:[#allocation3 + $0x106c] sm:$0xf]
    %v1286 = vld [vmem:[#allocation3 + $0x1070] sm:$0xf]
    %v1287 = vld [vmem:[#allocation3 + $0x1074] sm:$0xf]
    %v1288 = vld [vmem:[#allocation3 + $0x1078] sm:$0xf]
    %v1289 = vld [vmem:[#allocation3 + $0x107c] sm:$0xf]
    %v1290 = vld [vmem:[#allocation3 + $0x1080] sm:$0xf]
    %v1291 = vld [vmem:[#allocation3 + $0x1084] sm:$0xf]
    %v1292 = vld [vmem:[#allocation3 + $0x1088] sm:$0xf]
    %v1293 = vld [vmem:[#allocation3 + $0x108c] sm:$0xf]
    %v1294 = vld [vmem:[#allocation3 + $0x1090] sm:$0xf]
    %v1295 = vld [vmem:[#allocation3 + $0x1094] sm:$0xf]
    %v1296 = vld [vmem:[#allocation3 + $0x1098] sm:$0xf]
    %v1297 = vld [vmem:[#allocation3 + $0x109c] sm:$0xf]
    %v1298 = vld [vmem:[#allocation3 + $0x10a0] sm:$0xf]
    %v1299 = vld [vmem:[#allocation3 + $0x10a4] sm:$0xf]
    %v1300 = vld [vmem:[#allocation3 + $0x10a8] sm:$0xf]
    %v1301 = vld [vmem:[#allocation3 + $0x10ac] sm:$0xf]
    %v1302 = vld [vmem:[#allocation3 + $0x10b0] sm:$0xf]
    %v1303 = vld [vmem:[#allocation3 + $0x10b4] sm:$0xf]
    %v1304 = vld [vmem:[#allocation3 + $0x10b8] sm:$0xf]
    %v1305 = vld [vmem:[#allocation3 + $0x10bc] sm:$0xf]
    %v1306 = vld [vmem:[#allocation3 + $0x10c0] sm:$0xf]
    %v1307 = vld [vmem:[#allocation3 + $0x10c4] sm:$0xf]
    %v1308 = vld [vmem:[#allocation3 + $0x10c8] sm:$0xf]
    %v1309 = vld [vmem:[#allocation3 + $0x10cc] sm:$0xf]
    %v1310 = vld [vmem:[#allocation3 + $0x10d0] sm:$0xf]
    %v1311 = vld [vmem:[#allocation3 + $0x10d4] sm:$0xf]
    %v1312 = vld [vmem:[#allocation3 + $0x10d8] sm:$0xf]
    %v1313 = vld [vmem:[#allocation3 + $0x10dc] sm:$0xf]
    %v1314 = vld [vmem:[#allocation3 + $0x10e0] sm:$0xf]
    %v1315 = vld [vmem:[#allocation3 + $0x10e4] sm:$0xf]
    %v1316 = vld [vmem:[#allocation3 + $0x10e8] sm:$0xf]
    %v1317 = vld [vmem:[#allocation3 + $0x10ec] sm:$0xf]
    %v1318 = vld [vmem:[#allocation3 + $0x10f0] sm:$0xf]
    %v1319 = vld [vmem:[#allocation3 + $0x10f4] sm:$0xf]
    %v1320 = vld [vmem:[#allocation3 + $0x10f8] sm:$0xf]
    %v1321 = vld [vmem:[#allocation3 + $0x10fc] sm:$0xf]
    %v1322 = vld [vmem:[#allocation3 + $0x1100] sm:$0xf]
    %v1323 = vld [vmem:[#allocation3 + $0x1104] sm:$0xf]
    %v1324 = vld [vmem:[#allocation3 + $0x1108] sm:$0xf]
    %v1325 = vld [vmem:[#allocation3 + $0x110c] sm:$0xf]
    %v1326 = vld [vmem:[#allocation3 + $0x1110] sm:$0xf]
    %v1327 = vld [vmem:[#allocation3 + $0x1114] sm:$0xf]
    %v1328 = vld [vmem:[#allocation3 + $0x1118] sm:$0xf]
    %v1329 = vld [vmem:[#allocation3 + $0x111c] sm:$0xf]
    %v1330 = vld [vmem:[#allocation3 + $0x1120] sm:$0xf]
    %v1331 = vld [vmem:[#allocation3 + $0x1124] sm:$0xf]
    %v1332 = vld [vmem:[#allocation3 + $0x1128] sm:$0xf]
    %v1333 = vld [vmem:[#allocation3 + $0x112c] sm:$0xf]
    %v1334 = vld [vmem:[#allocation3 + $0x1130] sm:$0xf]
    %v1335 = vld [vmem:[#allocation3 + $0x1134] sm:$0xf]
    %v1336 = vld [vmem:[#allocation3 + $0x1138] sm:$0xf]
    %v1337 = vld [vmem:[#allocation3 + $0x113c] sm:$0xf]
    %v1338 = vld [vmem:[#allocation3 + $0x1140] sm:$0xf]
    %v1339 = vld [vmem:[#allocation3 + $0x1144] sm:$0xf]
    %v1340 = vld [vmem:[#allocation3 + $0x1148] sm:$0xf]
    %v1341 = vld [vmem:[#allocation3 + $0x114c] sm:$0xf]
    %v1342 = vld [vmem:[#allocation3 + $0x1150] sm:$0xf]
    %v1343 = vld [vmem:[#allocation3 + $0x1154] sm:$0xf]
    %v1344 = vld [vmem:[#allocation3 + $0x1158] sm:$0xf]
    %v1345 = vld [vmem:[#allocation3 + $0x115c] sm:$0xf]
    %v1346 = vld [vmem:[#allocation3 + $0x1160] sm:$0xf]
    %v1347 = vld [vmem:[#allocation3 + $0x1164] sm:$0xf]
    %v1348 = vld [vmem:[#allocation3 + $0x1168] sm:$0xf]
    %v1349 = vld [vmem:[#allocation3 + $0x116c] sm:$0xf]
    %v1350 = vld [vmem:[#allocation3 + $0x1170] sm:$0xf]
    %v1351 = vld [vmem:[#allocation3 + $0x1174] sm:$0xf]
    %v1352 = vld [vmem:[#allocation3 + $0x1178] sm:$0xf]
    %v1353 = vld [vmem:[#allocation3 + $0x117c] sm:$0xf]
    %v1354 = vld [vmem:[#allocation3 + $0x1180] sm:$0xf]
    %v1355 = vld [vmem:[#allocation3 + $0x1184] sm:$0xf]
    %v1356 = vld [vmem:[#allocation3 + $0x1188] sm:$0xf]
    %v1357 = vld [vmem:[#allocation3 + $0x118c] sm:$0xf]
    %v1358 = vld [vmem:[#allocation3 + $0x1190] sm:$0xf]
    %v1359 = vld [vmem:[#allocation3 + $0x1194] sm:$0xf]
    %v1360 = vld [vmem:[#allocation3 + $0x1198] sm:$0xf]
    %v1361 = vld [vmem:[#allocation3 + $0x119c] sm:$0xf]
    %v1362 = vld [vmem:[#allocation3 + $0x11a0] sm:$0xf]
    %v1363 = vld [vmem:[#allocation3 + $0x11a4] sm:$0xf]
    %v1364 = vld [vmem:[#allocation3 + $0x11a8] sm:$0xf]
    %v1365 = vld [vmem:[#allocation3 + $0x11ac] sm:$0xf]
    %v1366 = vld [vmem:[#allocation3 + $0x11b0] sm:$0xf]
    %v1367 = vld [vmem:[#allocation3 + $0x11b4] sm:$0xf]
    %v1368 = vld [vmem:[#allocation3 + $0x11b8] sm:$0xf]
    %v1369 = vld [vmem:[#allocation3 + $0x11bc] sm:$0xf]
    %v1370 = vld [vmem:[#allocation3 + $0x11c0] sm:$0xf]
    %v1371 = vld [vmem:[#allocation3 + $0x11c4] sm:$0xf]
    %v1372 = vld [vmem:[#allocation3 + $0x11c8] sm:$0xf]
    %v1373 = vld [vmem:[#allocation3 + $0x11cc] sm:$0xf]
    %v1374 = vld [vmem:[#allocation3 + $0x11d0] sm:$0xf]
    %v1375 = vld [vmem:[#allocation3 + $0x11d4] sm:$0xf]
    %v1376 = vld [vmem:[#allocation3 + $0x11d8] sm:$0xf]
    %v1377 = vld [vmem:[#allocation3 + $0x11dc] sm:$0xf]
    %v1378 = vld [vmem:[#allocation3 + $0x11e0] sm:$0xf]
    %v1379 = vld [vmem:[#allocation3 + $0x11e4] sm:$0xf]
    %v1380 = vld [vmem:[#allocation3 + $0x11e8] sm:$0xf]
    %v1381 = vld [vmem:[#allocation3 + $0x11ec] sm:$0xf]
    %v1382 = vld [vmem:[#allocation3 + $0x11f0] sm:$0xf]
    %v1383 = vld [vmem:[#allocation3 + $0x11f4] sm:$0xf]
    %v1384 = vld [vmem:[#allocation3 + $0x11f8] sm:$0xf]
    %v1385 = vld [vmem:[#allocation3 + $0x11fc] sm:$0xf]
    %v1386 = vld [vmem:[#allocation3 + $0x1200] sm:$0xf]
    %v1387 = vld [vmem:[#allocation3 + $0x1204] sm:$0xf]
    %v1388 = vld [vmem:[#allocation3 + $0x1208] sm:$0xf]
    %v1389 = vld [vmem:[#allocation3 + $0x120c] sm:$0xf]
    %v1390 = vld [vmem:[#allocation3 + $0x1210] sm:$0xf]
    %v1391 = vld [vmem:[#allocation3 + $0x1214] sm:$0xf]
    %v1392 = vld [vmem:[#allocation3 + $0x1218] sm:$0xf]
    %v1393 = vld [vmem:[#allocation3 + $0x121c] sm:$0xf]
    %v1394 = vld [vmem:[#allocation3 + $0x1220] sm:$0xf]
    %v1395 = vld [vmem:[#allocation3 + $0x1224] sm:$0xf]
    %v1396 = vld [vmem:[#allocation3 + $0x1228] sm:$0xf]
    %v1397 = vld [vmem:[#allocation3 + $0x122c] sm:$0xf]
    %v1398 = vld [vmem:[#allocation3 + $0x1230] sm:$0xf]
    %v1399 = vld [vmem:[#allocation3 + $0x1234] sm:$0xf]
    %v1400 = vld [vmem:[#allocation3 + $0x1238] sm:$0xf]
    %v1401 = vld [vmem:[#allocation3 + $0x123c] sm:$0xf]
    %v1402 = vld [vmem:[#allocation3 + $0x1240] sm:$0xf]
    %v1403 = vld [vmem:[#allocation3 + $0x1244] sm:$0xf]
    %v1404 = vld [vmem:[#allocation3 + $0x1248] sm:$0xf]
    %v1405 = vld [vmem:[#allocation3 + $0x124c] sm:$0xf]
    %v1406 = vld [vmem:[#allocation3 + $0x1250] sm:$0xf]
    %v1407 = vld [vmem:[#allocation3 + $0x1254] sm:$0xf]
    %v1408 = vld [vmem:[#allocation3 + $0x1258] sm:$0xf]
    %v1409 = vld [vmem:[#allocation3 + $0x125c] sm:$0xf]
    %v1410 = vld [vmem:[#allocation3 + $0x1260] sm:$0xf]
    %v1411 = vld [vmem:[#allocation3 + $0x1264] sm:$0xf]
    %v1412 = vld [vmem:[#allocation3 + $0x1268] sm:$0xf]
    %v1413 = vld [vmem:[#allocation3 + $0x126c] sm:$0xf]
    %v1414 = vld [vmem:[#allocation3 + $0x1270] sm:$0xf]
    %v1415 = vld [vmem:[#allocation3 + $0x1274] sm:$0xf]
    %v1416 = vld [vmem:[#allocation3 + $0x1278] sm:$0xf]
    %v1417 = vld [vmem:[#allocation3 + $0x127c] sm:$0xf]
    %v1418 = vld [vmem:[#allocation3 + $0x1280] sm:$0xf]
    %v1419 = vld [vmem:[#allocation3 + $0x1284] sm:$0xf]
    %v1420 = vld [vmem:[#allocation3 + $0x1288] sm:$0xf]
    %v1421 = vld [vmem:[#allocation3 + $0x128c] sm:$0xf]
    %v1422 = vld [vmem:[#allocation3 + $0x1290] sm:$0xf]
    %v1423 = vld [vmem:[#allocation3 + $0x1294] sm:$0xf]
    %v1424 = vld [vmem:[#allocation3 + $0x1298] sm:$0xf]
    %v1425 = vld [vmem:[#allocation3 + $0x129c] sm:$0xf]
    %v1426 = vld [vmem:[#allocation3 + $0x12a0] sm:$0xf]
    %v1427 = vld [vmem:[#allocation3 + $0x12a4] sm:$0xf]
    %v1428 = vld [vmem:[#allocation3 + $0x12a8] sm:$0xf]
    %v1429 = vld [vmem:[#allocation3 + $0x12ac] sm:$0xf]
    %v1430 = vld [vmem:[#allocation3 + $0x12b0] sm:$0xf]
    %v1431 = vld [vmem:[#allocation3 + $0x12b4] sm:$0xf]
    %v1432 = vld [vmem:[#allocation3 + $0x12b8] sm:$0xf]
    %v1433 = vld [vmem:[#allocation3 + $0x12bc] sm:$0xf]
    %v1434 = vld [vmem:[#allocation3 + $0x12c0] sm:$0xf]
    %v1435 = vld [vmem:[#allocation3 + $0x12c4] sm:$0xf]
    %v1436 = vld [vmem:[#allocation3 + $0x12c8] sm:$0xf]
    %v1437 = vld [vmem:[#allocation3 + $0x12cc] sm:$0xf]
    %v1438 = vld [vmem:[#allocation3 + $0x12d0] sm:$0xf]
    %v1439 = vld [vmem:[#allocation3 + $0x12d4] sm:$0xf]
    %v1440 = vld [vmem:[#allocation3 + $0x12d8] sm:$0xf]
    %v1441 = vld [vmem:[#allocation3 + $0x12dc] sm:$0xf]
    %v1442 = vld [vmem:[#allocation3 + $0x12e0] sm:$0xf]
    %v1443 = vld [vmem:[#allocation3 + $0x12e4] sm:$0xf]
    %v1444 = vld [vmem:[#allocation3 + $0x12e8] sm:$0xf]
    %v1445 = vld [vmem:[#allocation3 + $0x12ec] sm:$0xf]
    %v1446 = vld [vmem:[#allocation3 + $0x12f0] sm:$0xf]
    %v1447 = vld [vmem:[#allocation3 + $0x12f4] sm:$0xf]
    %v1448 = vld [vmem:[#allocation3 + $0x12f8] sm:$0xf]
    %v1449 = vld [vmem:[#allocation3 + $0x12fc] sm:$0xf]
    %v1450 = vld [vmem:[#allocation3 + $0x1300] sm:$0xf]
    %v1451 = vld [vmem:[#allocation3 + $0x1304] sm:$0xf]
    %v1452 = vld [vmem:[#allocation3 + $0x1308] sm:$0xf]
    %v1453 = vld [vmem:[#allocation3 + $0x130c] sm:$0xf]
    %v1454 = vld [vmem:[#allocation3 + $0x1310] sm:$0xf]
    %v1455 = vld [vmem:[#allocation3 + $0x1314] sm:$0xf]
    %v1456 = vld [vmem:[#allocation3 + $0x1318] sm:$0xf]
    %v1457 = vld [vmem:[#allocation3 + $0x131c] sm:$0xf]
    %v1458 = vld [vmem:[#allocation3 + $0x1320] sm:$0xf]
    %v1459 = vld [vmem:[#allocation3 + $0x1324] sm:$0xf]
    %v1460 = vld [vmem:[#allocation3 + $0x1328] sm:$0xf]
    %v1461 = vld [vmem:[#allocation3 + $0x132c] sm:$0xf]
    %v1462 = vld [vmem:[#allocation3 + $0x1330] sm:$0xf]
    %v1463 = vld [vmem:[#allocation3 + $0x1334] sm:$0xf]
    %v1464 = vld [vmem:[#allocation3 + $0x1338] sm:$0xf]
    %v1465 = vld [vmem:[#allocation3 + $0x133c] sm:$0xf]
    %v1466 = vld [vmem:[#allocation3 + $0x1340] sm:$0xf]
    %v1467 = vld [vmem:[#allocation3 + $0x1344] sm:$0xf]
    %v1468 = vld [vmem:[#allocation3 + $0x1348] sm:$0xf]
    %v1469 = vld [vmem:[#allocation3 + $0x134c] sm:$0xf]
    %v1470 = vld [vmem:[#allocation3 + $0x1350] sm:$0xf]
    %v1471 = vld [vmem:[#allocation3 + $0x1354] sm:$0xf]
    %v1472 = vld [vmem:[#allocation3 + $0x1358] sm:$0xf]
    %v1473 = vld [vmem:[#allocation3 + $0x135c] sm:$0xf]
    %v1474 = vld [vmem:[#allocation3 + $0x1360] sm:$0xf]
    %v1475 = vld [vmem:[#allocation3 + $0x1364] sm:$0xf]
    %v1476 = vld [vmem:[#allocation3 + $0x1368] sm:$0xf]
    %v1477 = vld [vmem:[#allocation3 + $0x136c] sm:$0xf]
    %v1478 = vld [vmem:[#allocation3 + $0x1370] sm:$0xf]
    %v1479 = vld [vmem:[#allocation3 + $0x1374] sm:$0xf]
    %v1480 = vld [vmem:[#allocation3 + $0x1378] sm:$0xf]
    %v1481 = vld [vmem:[#allocation3 + $0x137c] sm:$0xf]
    %v1482 = vld [vmem:[#allocation3 + $0x1380] sm:$0xf]
    %v1483 = vld [vmem:[#allocation3 + $0x1384] sm:$0xf]
    %v1484 = vld [vmem:[#allocation3 + $0x1388] sm:$0xf]
    %v1485 = vld [vmem:[#allocation3 + $0x138c] sm:$0xf]
    %v1486 = vld [vmem:[#allocation3 + $0x1390] sm:$0xf]
    %v1487 = vld [vmem:[#allocation3 + $0x1394] sm:$0xf]
    %v1488 = vld [vmem:[#allocation3 + $0x1398] sm:$0xf]
    %v1489 = vld [vmem:[#allocation3 + $0x139c] sm:$0xf]
    %v1490 = vld [vmem:[#allocation3 + $0x13a0] sm:$0xf]
    %v1491 = vld [vmem:[#allocation3 + $0x13a4] sm:$0xf]
    %v1492 = vld [vmem:[#allocation3 + $0x13a8] sm:$0xf]
    %v1493 = vld [vmem:[#allocation3 + $0x13ac] sm:$0xf]
    %v1494 = vld [vmem:[#allocation3 + $0x13b0] sm:$0xf]
    %v1495 = vld [vmem:[#allocation3 + $0x13b4] sm:$0xf]
    %v1496 = vld [vmem:[#allocation3 + $0x13b8] sm:$0xf]
    %v1497 = vld [vmem:[#allocation3 + $0x13bc] sm:$0xf]
    %v1498 = vld [vmem:[#allocation3 + $0x13c0] sm:$0xf]
    %v1499 = vld [vmem:[#allocation3 + $0x13c4] sm:$0xf]
    %v1500 = vld [vmem:[#allocation3 + $0x13c8] sm:$0xf]
    %v1501 = vld [vmem:[#allocation3 + $0x13cc] sm:$0xf]
    %v1502 = vld [vmem:[#allocation3 + $0x13d0] sm:$0xf]
    %v1503 = vld [vmem:[#allocation3 + $0x13d4] sm:$0xf]
    %v1504 = vld [vmem:[#allocation3 + $0x13d8] sm:$0xf]
    %v1505 = vld [vmem:[#allocation3 + $0x13dc] sm:$0xf]
    %v1506 = vld [vmem:[#allocation3 + $0x13e0] sm:$0xf]
    %v1507 = vld [vmem:[#allocation3 + $0x13e4] sm:$0xf]
    %v1508 = vld [vmem:[#allocation3 + $0x13e8] sm:$0xf]
    %v1509 = vld [vmem:[#allocation3 + $0x13ec] sm:$0xf]
    %v1510 = vld [vmem:[#allocation3 + $0x13f0] sm:$0xf]
    %v1511 = vld [vmem:[#allocation3 + $0x13f4] sm:$0xf]
    %v1512 = vld [vmem:[#allocation3 + $0x13f8] sm:$0xf]
    %v1513 = vld [vmem:[#allocation3 + $0x13fc] sm:$0xf]
    %v1514 = vld [vmem:[#allocation3 + $0x1400] sm:$0xf]
    %v1515 = vld [vmem:[#allocation3 + $0x1404] sm:$0xf]
    %v1516 = vld [vmem:[#allocation3 + $0x1408] sm:$0xf]
    %v1517 = vld [vmem:[#allocation3 + $0x140c] sm:$0xf]
    %v1518 = vld [vmem:[#allocation3 + $0x1410] sm:$0xf]
    %v1519 = vld [vmem:[#allocation3 + $0x1414] sm:$0xf]
    %v1520 = vld [vmem:[#allocation3 + $0x1418] sm:$0xf]
    %v1521 = vld [vmem:[#allocation3 + $0x141c] sm:$0xf]
    %v1522 = vld [vmem:[#allocation3 + $0x1420] sm:$0xf]
    %v1523 = vld [vmem:[#allocation3 + $0x1424] sm:$0xf]
    %v1524 = vld [vmem:[#allocation3 + $0x1428] sm:$0xf]
    %v1525 = vld [vmem:[#allocation3 + $0x142c] sm:$0xf]
    %v1526 = vld [vmem:[#allocation3 + $0x1430] sm:$0xf]
    %v1527 = vld [vmem:[#allocation3 + $0x1434] sm:$0xf]
    %v1528 = vld [vmem:[#allocation3 + $0x1438] sm:$0xf]
    %v1529 = vld [vmem:[#allocation3 + $0x143c] sm:$0xf]
    %v1530 = vld [vmem:[#allocation3 + $0x1440] sm:$0xf]
    %v1531 = vld [vmem:[#allocation3 + $0x1444] sm:$0xf]
    %v1532 = vld [vmem:[#allocation3 + $0x1448] sm:$0xf]
    %v1533 = vld [vmem:[#allocation3 + $0x144c] sm:$0xf]
    %v1534 = vld [vmem:[#allocation3 + $0x1450] sm:$0xf]
    %v1535 = vld [vmem:[#allocation3 + $0x1454] sm:$0xf]
    %v1536 = vld [vmem:[#allocation3 + $0x1458] sm:$0xf]
    %v1537 = vld [vmem:[#allocation3 + $0x145c] sm:$0xf]
    %v1538 = vld [vmem:[#allocation3 + $0x1460] sm:$0xf]
    %v1539 = vld [vmem:[#allocation3 + $0x1464] sm:$0xf]
    %v1540 = vld [vmem:[#allocation3 + $0x1468] sm:$0xf]
    %v1541 = vld [vmem:[#allocation3 + $0x146c] sm:$0xf]
    %v1542 = vld [vmem:[#allocation3 + $0x1470] sm:$0xf]
    %v1543 = vld [vmem:[#allocation3 + $0x1474] sm:$0xf]
    %v1544 = vld [vmem:[#allocation3 + $0x1478] sm:$0xf]
    %v1545 = vld [vmem:[#allocation3 + $0x147c] sm:$0xf]
    %v1546 = vld [vmem:[#allocation3 + $0x1480] sm:$0xf]
    %v1547 = vld [vmem:[#allocation3 + $0x1484] sm:$0xf]
    %v1548 = vld [vmem:[#allocation3 + $0x1488] sm:$0xf]
    %v1549 = vld [vmem:[#allocation3 + $0x148c] sm:$0xf]
    %v1550 = vld [vmem:[#allocation3 + $0x1490] sm:$0xf]
    %v1551 = vld [vmem:[#allocation3 + $0x1494] sm:$0xf]
    %v1552 = vld [vmem:[#allocation3 + $0x1498] sm:$0xf]
    %v1553 = vld [vmem:[#allocation3 + $0x149c] sm:$0xf]
    %v1554 = vld [vmem:[#allocation3 + $0x14a0] sm:$0xf]
    %v1555 = vld [vmem:[#allocation3 + $0x14a4] sm:$0xf]
    %v1556 = vld [vmem:[#allocation3 + $0x14a8] sm:$0xf]
    %v1557 = vld [vmem:[#allocation3 + $0x14ac] sm:$0xf]
    %v1558 = vld [vmem:[#allocation3 + $0x14b0] sm:$0xf]
    %v1559 = vld [vmem:[#allocation3 + $0x14b4] sm:$0xf]
    %v1560 = vld [vmem:[#allocation3 + $0x14b8] sm:$0xf]
    %v1561 = vld [vmem:[#allocation3 + $0x14bc] sm:$0xf]
    %v1562 = vld [vmem:[#allocation3 + $0x14c0] sm:$0xf]
    %v1563 = vld [vmem:[#allocation3 + $0x14c4] sm:$0xf]
    %v1564 = vld [vmem:[#allocation3 + $0x14c8] sm:$0xf]
    %v1565 = vld [vmem:[#allocation3 + $0x14cc] sm:$0xf]
    %v1566 = vld [vmem:[#allocation3 + $0x14d0] sm:$0xf]
    %v1567 = vld [vmem:[#allocation3 + $0x14d4] sm:$0xf]
    %v1568 = vld [vmem:[#allocation3 + $0x14d8] sm:$0xf]
    %v1569 = vld [vmem:[#allocation3 + $0x14dc] sm:$0xf]
    %v1570 = vld [vmem:[#allocation3 + $0x14e0] sm:$0xf]
    %v1571 = vld [vmem:[#allocation3 + $0x14e4] sm:$0xf]
    %v1572 = vld [vmem:[#allocation3 + $0x14e8] sm:$0xf]
    %v1573 = vld [vmem:[#allocation3 + $0x14ec] sm:$0xf]
    %v1574 = vld [vmem:[#allocation3 + $0x14f0] sm:$0xf]
    %v1575 = vld [vmem:[#allocation3 + $0x14f4] sm:$0xf]
    %v1576 = vld [vmem:[#allocation3 + $0x14f8] sm:$0xf]
    %v1577 = vld [vmem:[#allocation3 + $0x14fc] sm:$0xf]
    %v1578 = vld [vmem:[#allocation3 + $0x1500] sm:$0xf]
    %v1579 = vld [vmem:[#allocation3 + $0x1504] sm:$0xf]
    %v1580 = vld [vmem:[#allocation3 + $0x1508] sm:$0xf]
    %v1581 = vld [vmem:[#allocation3 + $0x150c] sm:$0xf]
    %v1582 = vld [vmem:[#allocation3 + $0x1510] sm:$0xf]
    %v1583 = vld [vmem:[#allocation3 + $0x1514] sm:$0xf]
    %v1584 = vld [vmem:[#allocation3 + $0x1518] sm:$0xf]
    %v1585 = vld [vmem:[#allocation3 + $0x151c] sm:$0xf]
    %v1586 = vld [vmem:[#allocation3 + $0x1520] sm:$0xf]
    %v1587 = vld [vmem:[#allocation3 + $0x1524] sm:$0xf]
    %v1588 = vld [vmem:[#allocation3 + $0x1528] sm:$0xf]
    %v1589 = vld [vmem:[#allocation3 + $0x152c] sm:$0xf]
    %v1590 = vld [vmem:[#allocation3 + $0x1530] sm:$0xf]
    %v1591 = vld [vmem:[#allocation3 + $0x1534] sm:$0xf]
    %v1592 = vld [vmem:[#allocation3 + $0x1538] sm:$0xf]
    %v1593 = vld [vmem:[#allocation3 + $0x153c] sm:$0xf]
    %v1594 = vld [vmem:[#allocation3 + $0x1540] sm:$0xf]
    %v1595 = vld [vmem:[#allocation3 + $0x1544] sm:$0xf]
    %v1596 = vld [vmem:[#allocation3 + $0x1548] sm:$0xf]
    %v1597 = vld [vmem:[#allocation3 + $0x154c] sm:$0xf]
    %v1598 = vld [vmem:[#allocation3 + $0x1550] sm:$0xf]
    %v1599 = vld [vmem:[#allocation3 + $0x1554] sm:$0xf]
    %v1600 = vld [vmem:[#allocation3 + $0x1558] sm:$0xf]
    %v1601 = vld [vmem:[#allocation3 + $0x155c] sm:$0xf]
    %v1602 = vld [vmem:[#allocation3 + $0x1560] sm:$0xf]
    %v1603 = vld [vmem:[#allocation3 + $0x1564] sm:$0xf]
    %v1604 = vld [vmem:[#allocation3 + $0x1568] sm:$0xf]
    %v1605 = vld [vmem:[#allocation3 + $0x156c] sm:$0xf]
    %v1606 = vld [vmem:[#allocation3 + $0x1570] sm:$0xf]
    %v1607 = vld [vmem:[#allocation3 + $0x1574] sm:$0xf]
    %v1608 = vld [vmem:[#allocation3 + $0x1578] sm:$0xf]
    %v1609 = vld [vmem:[#allocation3 + $0x157c] sm:$0xf]
    %v1610 = vld [vmem:[#allocation3 + $0x1580] sm:$0xf]
    %v1611 = vld [vmem:[#allocation3 + $0x1584] sm:$0xf]
    %v1612 = vld [vmem:[#allocation3 + $0x1588] sm:$0xf]
    %v1613 = vld [vmem:[#allocation3 + $0x158c] sm:$0xf]
    %v1614 = vld [vmem:[#allocation3 + $0x1590] sm:$0xf]
    %v1615 = vld [vmem:[#allocation3 + $0x1594] sm:$0xf]
    %v1616 = vld [vmem:[#allocation3 + $0x1598] sm:$0xf]
    %v1617 = vld [vmem:[#allocation3 + $0x159c] sm:$0xf]
    %v1618 = vld [vmem:[#allocation3 + $0x15a0] sm:$0xf]
    %v1619 = vld [vmem:[#allocation3 + $0x15a4] sm:$0xf]
    %v1620 = vld [vmem:[#allocation3 + $0x15a8] sm:$0xf]
    %v1621 = vld [vmem:[#allocation3 + $0x15ac] sm:$0xf]
    %v1622 = vld [vmem:[#allocation3 + $0x15b0] sm:$0xf]
    %v1623 = vld [vmem:[#allocation3 + $0x15b4] sm:$0xf]
    %v1624 = vld [vmem:[#allocation3 + $0x15b8] sm:$0xf]
    %v1625 = vld [vmem:[#allocation3 + $0x15bc] sm:$0xf]
    %v1626 = vld [vmem:[#allocation3 + $0x15c0] sm:$0xf]
    %v1627 = vld [vmem:[#allocation3 + $0x15c4] sm:$0xf]
    %v1628 = vld [vmem:[#allocation3 + $0x15c8] sm:$0xf]
    %v1629 = vld [vmem:[#allocation3 + $0x15cc] sm:$0xf]
    %v1630 = vld [vmem:[#allocation3 + $0x15d0] sm:$0xf]
    %v1631 = vld [vmem:[#allocation3 + $0x15d4] sm:$0xf]
    %v1632 = vld [vmem:[#allocation3 + $0x15d8] sm:$0xf]
    %v1633 = vld [vmem:[#allocation3 + $0x15dc] sm:$0xf]
    %v1634 = vld [vmem:[#allocation3 + $0x15e0] sm:$0xf]
    %v1635 = vld [vmem:[#allocation3 + $0x15e4] sm:$0xf]
    %v1636 = vld [vmem:[#allocation3 + $0x15e8] sm:$0xf]
    %v1637 = vld [vmem:[#allocation3 + $0x15ec] sm:$0xf]
    %v1638 = vld [vmem:[#allocation3 + $0x15f0] sm:$0xf]
    %v1639 = vld [vmem:[#allocation3 + $0x15f4] sm:$0xf]
    %v1640 = vld [vmem:[#allocation3 + $0x15f8] sm:$0xf]
    %v1641 = vld [vmem:[#allocation3 + $0x15fc] sm:$0xf]
    %v1642 = vld [vmem:[#allocation3 + $0x1600] sm:$0xf]
    %v1643 = vld [vmem:[#allocation3 + $0x1604] sm:$0xf]
    %v1644 = vld [vmem:[#allocation3 + $0x1608] sm:$0xf]
    %v1645 = vld [vmem:[#allocation3 + $0x160c] sm:$0xf]
    %v1646 = vld [vmem:[#allocation3 + $0x1610] sm:$0xf]
    %v1647 = vld [vmem:[#allocation3 + $0x1614] sm:$0xf]
    %v1648 = vld [vmem:[#allocation3 + $0x1618] sm:$0xf]
    %v1649 = vld [vmem:[#allocation3 + $0x161c] sm:$0xf]
    %v1650 = vld [vmem:[#allocation3 + $0x1620] sm:$0xf]
    %v1651 = vld [vmem:[#allocation3 + $0x1624] sm:$0xf]
    %v1652 = vld [vmem:[#allocation3 + $0x1628] sm:$0xf]
    %v1653 = vld [vmem:[#allocation3 + $0x162c] sm:$0xf]
    %v1654 = vld [vmem:[#allocation3 + $0x1630] sm:$0xf]
    %v1655 = vld [vmem:[#allocation3 + $0x1634] sm:$0xf]
    %v1656 = vld [vmem:[#allocation3 + $0x1638] sm:$0xf]
    %v1657 = vld [vmem:[#allocation3 + $0x163c] sm:$0xf]
    %v1658 = vld [vmem:[#allocation3 + $0x1640] sm:$0xf]
    %v1659 = vld [vmem:[#allocation3 + $0x1644] sm:$0xf]
    %v1660 = vld [vmem:[#allocation3 + $0x1648] sm:$0xf]
    %v1661 = vld [vmem:[#allocation3 + $0x164c] sm:$0xf]
    %v1662 = vld [vmem:[#allocation3 + $0x1650] sm:$0xf]
    %v1663 = vld [vmem:[#allocation3 + $0x1654] sm:$0xf]
    %v1664 = vld [vmem:[#allocation3 + $0x1658] sm:$0xf]
    %v1665 = vld [vmem:[#allocation3 + $0x165c] sm:$0xf]
    %v1666 = vld [vmem:[#allocation3 + $0x1660] sm:$0xf]
    %v1667 = vld [vmem:[#allocation3 + $0x1664] sm:$0xf]
    %v1668 = vld [vmem:[#allocation3 + $0x1668] sm:$0xf]
    %v1669 = vld [vmem:[#allocation3 + $0x166c] sm:$0xf]
    %v1670 = vld [vmem:[#allocation3 + $0x1670] sm:$0xf]
    %v1671 = vld [vmem:[#allocation3 + $0x1674] sm:$0xf]
    %v1672 = vld [vmem:[#allocation3 + $0x1678] sm:$0xf]
    %v1673 = vld [vmem:[#allocation3 + $0x167c] sm:$0xf]
    %v1674 = vld [vmem:[#allocation3 + $0x1680] sm:$0xf]
    %v1675 = vld [vmem:[#allocation3 + $0x1684] sm:$0xf]
    %v1676 = vld [vmem:[#allocation3 + $0x1688] sm:$0xf]
    %v1677 = vld [vmem:[#allocation3 + $0x168c] sm:$0xf]
    %v1678 = vld [vmem:[#allocation3 + $0x1690] sm:$0xf]
    %v1679 = vld [vmem:[#allocation3 + $0x1694] sm:$0xf]
    %v1680 = vld [vmem:[#allocation3 + $0x1698] sm:$0xf]
    %v1681 = vld [vmem:[#allocation3 + $0x169c] sm:$0xf]
    %v1682 = vld [vmem:[#allocation3 + $0x16a0] sm:$0xf]
    %v1683 = vld [vmem:[#allocation3 + $0x16a4] sm:$0xf]
    %v1684 = vld [vmem:[#allocation3 + $0x16a8] sm:$0xf]
    %v1685 = vld [vmem:[#allocation3 + $0x16ac] sm:$0xf]
    %v1686 = vld [vmem:[#allocation3 + $0x16b0] sm:$0xf]
    %v1687 = vld [vmem:[#allocation3 + $0x16b4] sm:$0xf]
    %v1688 = vld [vmem:[#allocation3 + $0x16b8] sm:$0xf]
    %v1689 = vld [vmem:[#allocation3 + $0x16bc] sm:$0xf]
    %v1690 = vld [vmem:[#allocation3 + $0x16c0] sm:$0xf]
    %v1691 = vld [vmem:[#allocation3 + $0x16c4] sm:$0xf]
    %v1692 = vld [vmem:[#allocation3 + $0x16c8] sm:$0xf]
    %v1693 = vld [vmem:[#allocation3 + $0x16cc] sm:$0xf]
    %v1694 = vld [vmem:[#allocation3 + $0x16d0] sm:$0xf]
    %v1695 = vld [vmem:[#allocation3 + $0x16d4] sm:$0xf]
    %v1696 = vld [vmem:[#allocation3 + $0x16d8] sm:$0xf]
    %v1697 = vld [vmem:[#allocation3 + $0x16dc] sm:$0xf]
    %v1698 = vld [vmem:[#allocation3 + $0x16e0] sm:$0xf]
    %v1699 = vld [vmem:[#allocation3 + $0x16e4] sm:$0xf]
    %v1700 = vld [vmem:[#allocation3 + $0x16e8] sm:$0xf]
    %v1701 = vld [vmem:[#allocation3 + $0x16ec] sm:$0xf]
    %v1702 = vld [vmem:[#allocation3 + $0x16f0] sm:$0xf]
    %v1703 = vld [vmem:[#allocation3 + $0x16f4] sm:$0xf]
    %v1704 = vld [vmem:[#allocation3 + $0x16f8] sm:$0xf]
    %v1705 = vld [vmem:[#allocation3 + $0x16fc] sm:$0xf]
    %v1706 = vld [vmem:[#allocation3 + $0x1700] sm:$0xf]
    %v1707 = vld [vmem:[#allocation3 + $0x1704] sm:$0xf]
    %v1708 = vld [vmem:[#allocation3 + $0x1708] sm:$0xf]
    %v1709 = vld [vmem:[#allocation3 + $0x170c] sm:$0xf]
    %v1710 = vld [vmem:[#allocation3 + $0x1710] sm:$0xf]
    %v1711 = vld [vmem:[#allocation3 + $0x1714] sm:$0xf]
    %v1712 = vld [vmem:[#allocation3 + $0x1718] sm:$0xf]
    %v1713 = vld [vmem:[#allocation3 + $0x171c] sm:$0xf]
    %v1714 = vld [vmem:[#allocation3 + $0x1720] sm:$0xf]
    %v1715 = vld [vmem:[#allocation3 + $0x1724] sm:$0xf]
    %v1716 = vld [vmem:[#allocation3 + $0x1728] sm:$0xf]
    %v1717 = vld [vmem:[#allocation3 + $0x172c] sm:$0xf]
    %v1718 = vld [vmem:[#allocation3 + $0x1730] sm:$0xf]
    %v1719 = vld [vmem:[#allocation3 + $0x1734] sm:$0xf]
    %v1720 = vld [vmem:[#allocation3 + $0x1738] sm:$0xf]
    %v1721 = vld [vmem:[#allocation3 + $0x173c] sm:$0xf]
    %v1722 = vld [vmem:[#allocation3 + $0x1740] sm:$0xf]
    %v1723 = vld [vmem:[#allocation3 + $0x1744] sm:$0xf]
    %v1724 = vld [vmem:[#allocation3 + $0x1748] sm:$0xf]
    %v1725 = vld [vmem:[#allocation3 + $0x174c] sm:$0xf]
    %v1726 = vld [vmem:[#allocation3 + $0x1750] sm:$0xf]
    %v1727 = vld [vmem:[#allocation3 + $0x1754] sm:$0xf]
    %v1728 = vld [vmem:[#allocation3 + $0x1758] sm:$0xf]
    %v1729 = vld [vmem:[#allocation3 + $0x175c] sm:$0xf]
    %v1730 = vld [vmem:[#allocation3 + $0x1760] sm:$0xf]
    %v1731 = vld [vmem:[#allocation3 + $0x1764] sm:$0xf]
    %v1732 = vld [vmem:[#allocation3 + $0x1768] sm:$0xf]
    %v1733 = vld [vmem:[#allocation3 + $0x176c] sm:$0xf]
    %v1734 = vld [vmem:[#allocation3 + $0x1770] sm:$0xf]
    %v1735 = vld [vmem:[#allocation3 + $0x1774] sm:$0xf]
    %v1736 = vld [vmem:[#allocation3 + $0x1778] sm:$0xf]
    %v1737 = vld [vmem:[#allocation3 + $0x177c] sm:$0xf]
    %v1738 = vld [vmem:[#allocation3 + $0x1780] sm:$0xf]
    %v1739 = vld [vmem:[#allocation3 + $0x1784] sm:$0xf]
    %v1740 = vld [vmem:[#allocation3 + $0x1788] sm:$0xf]
    %v1741 = vld [vmem:[#allocation3 + $0x178c] sm:$0xf]
    %v1742 = vld [vmem:[#allocation3 + $0x1790] sm:$0xf]
    %v1743 = vld [vmem:[#allocation3 + $0x1794] sm:$0xf]
    %v1744 = vld [vmem:[#allocation3 + $0x1798] sm:$0xf]
    %v1745 = vld [vmem:[#allocation3 + $0x179c] sm:$0xf]
    %v1746 = vld [vmem:[#allocation3 + $0x17a0] sm:$0xf]
    %v1747 = vld [vmem:[#allocation3 + $0x17a4] sm:$0xf]
    %v1748 = vld [vmem:[#allocation3 + $0x17a8] sm:$0xf]
    %v1749 = vld [vmem:[#allocation3 + $0x17ac] sm:$0xf]
    %v1750 = vld [vmem:[#allocation3 + $0x17b0] sm:$0xf]
    %v1751 = vld [vmem:[#allocation3 + $0x17b4] sm:$0xf]
    %v1752 = vld [vmem:[#allocation3 + $0x17b8] sm:$0xf]
    %v1753 = vld [vmem:[#allocation3 + $0x17bc] sm:$0xf]
    %v1754 = vld [vmem:[#allocation3 + $0x17c0] sm:$0xf]
    %v1755 = vld [vmem:[#allocation3 + $0x17c4] sm:$0xf]
    %v1756 = vld [vmem:[#allocation3 + $0x17c8] sm:$0xf]
    %v1757 = vld [vmem:[#allocation3 + $0x17cc] sm:$0xf]
    %v1758 = vld [vmem:[#allocation3 + $0x17d0] sm:$0xf]
    %v1759 = vld [vmem:[#allocation3 + $0x17d4] sm:$0xf]
    %v1760 = vld [vmem:[#allocation3 + $0x17d8] sm:$0xf]
    %v1761 = vld [vmem:[#allocation3 + $0x17dc] sm:$0xf]
    %v1762 = vld [vmem:[#allocation3 + $0x17e0] sm:$0xf]
    %v1763 = vld [vmem:[#allocation3 + $0x17e4] sm:$0xf]
    %v1764 = vld [vmem:[#allocation3 + $0x17e8] sm:$0xf]
    %v1765 = vld [vmem:[#allocation3 + $0x17ec] sm:$0xf]
    %v1766 = vld [vmem:[#allocation3 + $0x17f0] sm:$0xf]
    %v1767 = vld [vmem:[#allocation3 + $0x17f4] sm:$0xf]
    %v1768 = vld [vmem:[#allocation3 + $0x17f8] sm:$0xf]
    %v1769 = vld [vmem:[#allocation3 + $0x17fc] sm:$0xf]
    %v1962 = vunpack.c.l.b16 %v42
    %v1963 = vunpack.c.h.b16 %v42
    %v1964 = vunpack.c.l.b16 %v43
    %v1965 = vunpack.c.h.b16 %v43
    %v1966 = vunpack.c.l.b16 %v44
    %v1967 = vunpack.c.h.b16 %v44
    %v1968 = vunpack.c.l.b16 %v45
    %v1969 = vunpack.c.h.b16 %v45
    %v1970 = vunpack.c.l.b16 %v46
    %v1971 = vunpack.c.h.b16 %v46
    %v1972 = vunpack.c.l.b16 %v47
    %v1973 = vunpack.c.h.b16 %v47
    %v1974 = vunpack.c.l.b16 %v48
    %v1975 = vunpack.c.h.b16 %v48
    %v1976 = vunpack.c.l.b16 %v49
    %v1977 = vunpack.c.h.b16 %v49
    %v1978 = vunpack.c.l.b16 %v50
    %v1979 = vunpack.c.h.b16 %v50
    %v1980 = vunpack.c.l.b16 %v51
    %v1981 = vunpack.c.h.b16 %v51
    %v1982 = vunpack.c.l.b16 %v52
    %v1983 = vunpack.c.h.b16 %v52
    %v1984 = vunpack.c.l.b16 %v53
    %v1985 = vunpack.c.h.b16 %v53
    %v1986 = vunpack.c.l.b16 %v54
    %v1987 = vunpack.c.h.b16 %v54
    %v1988 = vunpack.c.l.b16 %v55
    %v1989 = vunpack.c.h.b16 %v55
    %v1990 = vunpack.c.l.b16 %v56
    %v1991 = vunpack.c.h.b16 %v56
    %v1992 = vunpack.c.l.b16 %v57
    %v1993 = vunpack.c.h.b16 %v57
    %v1994 = vunpack.c.l.b16 %v58
    %v1995 = vunpack.c.h.b16 %v58
    %v1996 = vunpack.c.l.b16 %v59
    %v1997 = vunpack.c.h.b16 %v59
    %v1998 = vunpack.c.l.b16 %v60
    %v1999 = vunpack.c.h.b16 %v60
    %v2000 = vunpack.c.l.b16 %v61
    %v2001 = vunpack.c.h.b16 %v61
    %v2002 = vunpack.c.l.b16 %v62
    %v2003 = vunpack.c.h.b16 %v62
    %v2004 = vunpack.c.l.b16 %v63
    %v2005 = vunpack.c.h.b16 %v63
    %v2006 = vunpack.c.l.b16 %v64
    %v2007 = vunpack.c.h.b16 %v64
    %v2008 = vunpack.c.l.b16 %v65
    %v2009 = vunpack.c.h.b16 %v65
    %v2010 = vunpack.c.l.b16 %v66
    %v2011 = vunpack.c.h.b16 %v66
    %v2012 = vunpack.c.l.b16 %v67
    %v2013 = vunpack.c.h.b16 %v67
    %v2014 = vunpack.c.l.b16 %v68
    %v2015 = vunpack.c.h.b16 %v68
    %v2016 = vunpack.c.l.b16 %v69
    %v2017 = vunpack.c.h.b16 %v69
    %v2018 = vunpack.c.l.b16 %v70
    %v2019 = vunpack.c.h.b16 %v70
    %v2020 = vunpack.c.l.b16 %v71
    %v2021 = vunpack.c.h.b16 %v71
    %v2022 = vunpack.c.l.b16 %v72
    %v2023 = vunpack.c.h.b16 %v72
    %v2024 = vunpack.c.l.b16 %v73
    %v2025 = vunpack.c.h.b16 %v73
    %v2026 = vunpack.c.l.b16 %v74
    %v2027 = vunpack.c.h.b16 %v74
    %v2028 = vunpack.c.l.b16 %v75
    %v2029 = vunpack.c.h.b16 %v75
    %v2030 = vunpack.c.l.b16 %v76
    %v2031 = vunpack.c.h.b16 %v76
    %v2032 = vunpack.c.l.b16 %v77
    %v2033 = vunpack.c.h.b16 %v77
    %v2034 = vunpack.c.l.b16 %v78
    %v2035 = vunpack.c.h.b16 %v78
    %v2036 = vunpack.c.l.b16 %v79
    %v2037 = vunpack.c.h.b16 %v79
    %v2038 = vunpack.c.l.b16 %v80
    %v2039 = vunpack.c.h.b16 %v80
    %v2040 = vunpack.c.l.b16 %v81
    %v2041 = vunpack.c.h.b16 %v81
    %v2042 = vunpack.c.l.b16 %v82
    %v2043 = vunpack.c.h.b16 %v82
    %v2044 = vunpack.c.l.b16 %v83
    %v2045 = vunpack.c.h.b16 %v83
    %v2046 = vunpack.c.l.b16 %v84
    %v2047 = vunpack.c.h.b16 %v84
    %v2048 = vunpack.c.l.b16 %v85
    %v2049 = vunpack.c.h.b16 %v85
    %v2050 = vunpack.c.l.b16 %v86
    %v2051 = vunpack.c.h.b16 %v86
    %v2052 = vunpack.c.l.b16 %v87
    %v2053 = vunpack.c.h.b16 %v87
    %v2054 = vunpack.c.l.b16 %v88
    %v2055 = vunpack.c.h.b16 %v88
    %v2056 = vunpack.c.l.b16 %v89
    %v2057 = vunpack.c.h.b16 %v89
    %v2058 = vunpack.c.l.b16 %v90
    %v2059 = vunpack.c.h.b16 %v90
    %v2060 = vunpack.c.l.b16 %v91
    %v2061 = vunpack.c.h.b16 %v91
    %v2062 = vunpack.c.l.b16 %v92
    %v2063 = vunpack.c.h.b16 %v92
    %v2064 = vunpack.c.l.b16 %v93
    %v2065 = vunpack.c.h.b16 %v93
    %v2066 = vunpack.c.l.b16 %v94
    %v2067 = vunpack.c.h.b16 %v94
    %v2068 = vunpack.c.l.b16 %v95
    %v2069 = vunpack.c.h.b16 %v95
    %v2070 = vunpack.c.l.b16 %v96
    %v2071 = vunpack.c.h.b16 %v96
    %v2072 = vunpack.c.l.b16 %v97
    %v2073 = vunpack.c.h.b16 %v97
    %v2074 = vunpack.c.l.b16 %v98
    %v2075 = vunpack.c.h.b16 %v98
    %v2076 = vunpack.c.l.b16 %v99
    %v2077 = vunpack.c.h.b16 %v99
    %v2078 = vunpack.c.l.b16 %v100
    %v2079 = vunpack.c.h.b16 %v100
    %v2080 = vunpack.c.l.b16 %v101
    %v2081 = vunpack.c.h.b16 %v101
    %v2082 = vunpack.c.l.b16 %v102
    %v2083 = vunpack.c.h.b16 %v102
    %v2084 = vunpack.c.l.b16 %v103
    %v2085 = vunpack.c.h.b16 %v103
    %v2086 = vunpack.c.l.b16 %v104
    %v2087 = vunpack.c.h.b16 %v104
    %v2088 = vunpack.c.l.b16 %v105
    %v2089 = vunpack.c.h.b16 %v105
    %v2090 = vunpack.c.l.b16 %v106
    %v2091 = vunpack.c.h.b16 %v106
    %v2092 = vunpack.c.l.b16 %v107
    %v2093 = vunpack.c.h.b16 %v107
    %v2094 = vunpack.c.l.b16 %v108
    %v2095 = vunpack.c.h.b16 %v108
    %v2096 = vunpack.c.l.b16 %v109
    %v2097 = vunpack.c.h.b16 %v109
    %v2098 = vunpack.c.l.b16 %v110
    %v2099 = vunpack.c.h.b16 %v110
    %v2100 = vunpack.c.l.b16 %v111
    %v2101 = vunpack.c.h.b16 %v111
    %v2102 = vunpack.c.l.b16 %v112
    %v2103 = vunpack.c.h.b16 %v112
    %v2104 = vunpack.c.l.b16 %v113
    %v2105 = vunpack.c.h.b16 %v113
    %v2106 = vunpack.c.l.b16 %v114
    %v2107 = vunpack.c.h.b16 %v114
    %v2108 = vunpack.c.l.b16 %v115
    %v2109 = vunpack.c.h.b16 %v115
    %v2110 = vunpack.c.l.b16 %v116
    %v2111 = vunpack.c.h.b16 %v116
    %v2112 = vunpack.c.l.b16 %v117
    %v2113 = vunpack.c.h.b16 %v117
    %v2114 = vunpack.c.l.b16 %v118
    %v2115 = vunpack.c.h.b16 %v118
    %v2116 = vunpack.c.l.b16 %v119
    %v2117 = vunpack.c.h.b16 %v119
    %v2118 = vunpack.c.l.b16 %v120
    %v2119 = vunpack.c.h.b16 %v120
    %v2120 = vunpack.c.l.b16 %v121
    %v2121 = vunpack.c.h.b16 %v121
    %v2122 = vunpack.c.l.b16 %v122
    %v2123 = vunpack.c.h.b16 %v122
    %v2124 = vunpack.c.l.b16 %v123
    %v2125 = vunpack.c.h.b16 %v123
    %v2126 = vunpack.c.l.b16 %v124
    %v2127 = vunpack.c.h.b16 %v124
    %v2128 = vunpack.c.l.b16 %v125
    %v2129 = vunpack.c.h.b16 %v125
    %v2130 = vunpack.c.l.b16 %v126
    %v2131 = vunpack.c.h.b16 %v126
    %v2132 = vunpack.c.l.b16 %v127
    %v2133 = vunpack.c.h.b16 %v127
    %v2134 = vunpack.c.l.b16 %v128
    %v2135 = vunpack.c.h.b16 %v128
    %v2136 = vunpack.c.l.b16 %v129
    %v2137 = vunpack.c.h.b16 %v129
    %v2138 = vunpack.c.l.b16 %v130
    %v2139 = vunpack.c.h.b16 %v130
    %v2140 = vunpack.c.l.b16 %v131
    %v2141 = vunpack.c.h.b16 %v131
    %v2142 = vunpack.c.l.b16 %v132
    %v2143 = vunpack.c.h.b16 %v132
    %v2144 = vunpack.c.l.b16 %v133
    %v2145 = vunpack.c.h.b16 %v133
    %v2146 = vunpack.c.l.b16 %v134
    %v2147 = vunpack.c.h.b16 %v134
    %v2148 = vunpack.c.l.b16 %v135
    %v2149 = vunpack.c.h.b16 %v135
    %v2150 = vunpack.c.l.b16 %v136
    %v2151 = vunpack.c.h.b16 %v136
    %v2152 = vunpack.c.l.b16 %v137
    %v2153 = vunpack.c.h.b16 %v137
    %v2154 = vunpack.c.l.b16 %v138
    %v2155 = vunpack.c.h.b16 %v138
    %v2156 = vunpack.c.l.b16 %v139
    %v2157 = vunpack.c.h.b16 %v139
    %v2158 = vunpack.c.l.b16 %v140
    %v2159 = vunpack.c.h.b16 %v140
    %v2160 = vunpack.c.l.b16 %v141
    %v2161 = vunpack.c.h.b16 %v141
    %v2162 = vunpack.c.l.b16 %v142
    %v2163 = vunpack.c.h.b16 %v142
    %v2164 = vunpack.c.l.b16 %v143
    %v2165 = vunpack.c.h.b16 %v143
    %v2166 = vunpack.c.l.b16 %v144
    %v2167 = vunpack.c.h.b16 %v144
    %v2168 = vunpack.c.l.b16 %v145
    %v2169 = vunpack.c.h.b16 %v145
    %v2170 = vunpack.c.l.b16 %v146
    %v2171 = vunpack.c.h.b16 %v146
    %v2172 = vunpack.c.l.b16 %v147
    %v2173 = vunpack.c.h.b16 %v147
    %v2174 = vunpack.c.l.b16 %v148
    %v2175 = vunpack.c.h.b16 %v148
    %v2176 = vunpack.c.l.b16 %v149
    %v2177 = vunpack.c.h.b16 %v149
    %v2178 = vunpack.c.l.b16 %v150
    %v2179 = vunpack.c.h.b16 %v150
    %v2180 = vunpack.c.l.b16 %v151
    %v2181 = vunpack.c.h.b16 %v151
    %v2182 = vunpack.c.l.b16 %v152
    %v2183 = vunpack.c.h.b16 %v152
    %v2184 = vunpack.c.l.b16 %v153
    %v2185 = vunpack.c.h.b16 %v153
    %v2186 = vunpack.c.l.b16 %v154
    %v2187 = vunpack.c.h.b16 %v154
    %v2188 = vunpack.c.l.b16 %v155
    %v2189 = vunpack.c.h.b16 %v155
    %v2190 = vunpack.c.l.b16 %v156
    %v2191 = vunpack.c.h.b16 %v156
    %v2192 = vunpack.c.l.b16 %v157
    %v2193 = vunpack.c.h.b16 %v157
    %v2194 = vunpack.c.l.b16 %v158
    %v2195 = vunpack.c.h.b16 %v158
    %v2196 = vunpack.c.l.b16 %v159
    %v2197 = vunpack.c.h.b16 %v159
    %v2198 = vunpack.c.l.b16 %v160
    %v2199 = vunpack.c.h.b16 %v160
    %v2200 = vunpack.c.l.b16 %v161
    %v2201 = vunpack.c.h.b16 %v161
    %v2202 = vunpack.c.l.b16 %v162
    %v2203 = vunpack.c.h.b16 %v162
    %v2204 = vunpack.c.l.b16 %v163
    %v2205 = vunpack.c.h.b16 %v163
    %v2206 = vunpack.c.l.b16 %v164
    %v2207 = vunpack.c.h.b16 %v164
    %v2208 = vunpack.c.l.b16 %v165
    %v2209 = vunpack.c.h.b16 %v165
    %v2210 = vunpack.c.l.b16 %v166
    %v2211 = vunpack.c.h.b16 %v166
    %v2212 = vunpack.c.l.b16 %v167
    %v2213 = vunpack.c.h.b16 %v167
    %v2214 = vunpack.c.l.b16 %v168
    %v2215 = vunpack.c.h.b16 %v168
    %v2216 = vunpack.c.l.b16 %v169
    %v2217 = vunpack.c.h.b16 %v169
    %v2218 = vunpack.c.l.b16 %v170
    %v2219 = vunpack.c.h.b16 %v170
    %v2220 = vunpack.c.l.b16 %v171
    %v2221 = vunpack.c.h.b16 %v171
    %v2222 = vunpack.c.l.b16 %v172
    %v2223 = vunpack.c.h.b16 %v172
    %v2224 = vunpack.c.l.b16 %v173
    %v2225 = vunpack.c.h.b16 %v173
    %v2226 = vunpack.c.l.b16 %v174
    %v2227 = vunpack.c.h.b16 %v174
    %v2228 = vunpack.c.l.b16 %v175
    %v2229 = vunpack.c.h.b16 %v175
    %v2230 = vunpack.c.l.b16 %v176
    %v2231 = vunpack.c.h.b16 %v176
    %v2232 = vunpack.c.l.b16 %v177
    %v2233 = vunpack.c.h.b16 %v177
    %v2234 = vunpack.c.l.b16 %v178
    %v2235 = vunpack.c.h.b16 %v178
    %v2236 = vunpack.c.l.b16 %v179
    %v2237 = vunpack.c.h.b16 %v179
    %v2238 = vunpack.c.l.b16 %v180
    %v2239 = vunpack.c.h.b16 %v180
    %v2240 = vunpack.c.l.b16 %v181
    %v2241 = vunpack.c.h.b16 %v181
    %v2242 = vunpack.c.l.b16 %v182
    %v2243 = vunpack.c.h.b16 %v182
    %v2244 = vunpack.c.l.b16 %v183
    %v2245 = vunpack.c.h.b16 %v183
    %v2246 = vunpack.c.l.b16 %v184
    %v2247 = vunpack.c.h.b16 %v184
    %v2248 = vunpack.c.l.b16 %v185
    %v2249 = vunpack.c.h.b16 %v185
    %v2250 = vunpack.c.l.b16 %v186
    %v2251 = vunpack.c.h.b16 %v186
    %v2252 = vunpack.c.l.b16 %v187
    %v2253 = vunpack.c.h.b16 %v187
    %v2254 = vunpack.c.l.b16 %v188
    %v2255 = vunpack.c.h.b16 %v188
    %v2256 = vunpack.c.l.b16 %v189
    %v2257 = vunpack.c.h.b16 %v189
    %v2258 = vunpack.c.l.b16 %v190
    %v2259 = vunpack.c.h.b16 %v190
    %v2260 = vunpack.c.l.b16 %v191
    %v2261 = vunpack.c.h.b16 %v191
    %v2262 = vunpack.c.l.b16 %v192
    %v2263 = vunpack.c.h.b16 %v192
    %v2264 = vunpack.c.l.b16 %v193
    %v2265 = vunpack.c.h.b16 %v193
    %v2266 = vunpack.c.l.b16 %v194
    %v2267 = vunpack.c.h.b16 %v194
    %v2268 = vunpack.c.l.b16 %v195
    %v2269 = vunpack.c.h.b16 %v195
    %v2270 = vunpack.c.l.b16 %v196
    %v2271 = vunpack.c.h.b16 %v196
    %v2272 = vunpack.c.l.b16 %v197
    %v2273 = vunpack.c.h.b16 %v197
    %v2274 = vunpack.c.l.b16 %v198
    %v2275 = vunpack.c.h.b16 %v198
    %v2276 = vunpack.c.l.b16 %v199
    %v2277 = vunpack.c.h.b16 %v199
    %v2278 = vunpack.c.l.b16 %v200
    %v2279 = vunpack.c.h.b16 %v200
    %v2280 = vunpack.c.l.b16 %v201
    %v2281 = vunpack.c.h.b16 %v201
    %v2282 = vunpack.c.l.b16 %v202
    %v2283 = vunpack.c.h.b16 %v202
    %v2284 = vunpack.c.l.b16 %v203
    %v2285 = vunpack.c.h.b16 %v203
    %v2286 = vunpack.c.l.b16 %v204
    %v2287 = vunpack.c.h.b16 %v204
    %v2288 = vunpack.c.l.b16 %v205
    %v2289 = vunpack.c.h.b16 %v205
    %v2290 = vunpack.c.l.b16 %v206
    %v2291 = vunpack.c.h.b16 %v206
    %v2292 = vunpack.c.l.b16 %v207
    %v2293 = vunpack.c.h.b16 %v207
    %v2294 = vunpack.c.l.b16 %v208
    %v2295 = vunpack.c.h.b16 %v208
    %v2296 = vunpack.c.l.b16 %v209
    %v2297 = vunpack.c.h.b16 %v209
    %v2298 = vunpack.c.l.b16 %v210
    %v2299 = vunpack.c.h.b16 %v210
    %v2300 = vunpack.c.l.b16 %v211
    %v2301 = vunpack.c.h.b16 %v211
    %v2302 = vunpack.c.l.b16 %v212
    %v2303 = vunpack.c.h.b16 %v212
    %v2304 = vunpack.c.l.b16 %v213
    %v2305 = vunpack.c.h.b16 %v213
    %v2306 = vunpack.c.l.b16 %v214
    %v2307 = vunpack.c.h.b16 %v214
    %v2308 = vunpack.c.l.b16 %v215
    %v2309 = vunpack.c.h.b16 %v215
    %v2310 = vunpack.c.l.b16 %v216
    %v2311 = vunpack.c.h.b16 %v216
    %v2312 = vunpack.c.l.b16 %v217
    %v2313 = vunpack.c.h.b16 %v217
    %v2314 = vunpack.c.l.b16 %v218
    %v2315 = vunpack.c.h.b16 %v218
    %v2316 = vunpack.c.l.b16 %v219
    %v2317 = vunpack.c.h.b16 %v219
    %v2318 = vunpack.c.l.b16 %v220
    %v2319 = vunpack.c.h.b16 %v220
    %v2320 = vunpack.c.l.b16 %v221
    %v2321 = vunpack.c.h.b16 %v221
    %v2322 = vunpack.c.l.b16 %v222
    %v2323 = vunpack.c.h.b16 %v222
    %v2324 = vunpack.c.l.b16 %v223
    %v2325 = vunpack.c.h.b16 %v223
    %v2326 = vunpack.c.l.b16 %v224
    %v2327 = vunpack.c.h.b16 %v224
    %v2328 = vunpack.c.l.b16 %v225
    %v2329 = vunpack.c.h.b16 %v225
    %v2330 = vunpack.c.l.b16 %v226
    %v2331 = vunpack.c.h.b16 %v226
    %v2332 = vunpack.c.l.b16 %v227
    %v2333 = vunpack.c.h.b16 %v227
    %v2334 = vunpack.c.l.b16 %v228
    %v2335 = vunpack.c.h.b16 %v228
    %v2336 = vunpack.c.l.b16 %v229
    %v2337 = vunpack.c.h.b16 %v229
    %v2338 = vunpack.c.l.b16 %v230
    %v2339 = vunpack.c.h.b16 %v230
    %v2340 = vunpack.c.l.b16 %v231
    %v2341 = vunpack.c.h.b16 %v231
    %v2342 = vunpack.c.l.b16 %v232
    %v2343 = vunpack.c.h.b16 %v232
    %v2344 = vunpack.c.l.b16 %v233
    %v2345 = vunpack.c.h.b16 %v233
    %v2346 = vpack.c.b16 %v2058, %v1962
    %v2347 = vpack.c.b16 %v2059, %v1963
    %v2348 = vpack.c.b16 %v2060, %v1964
    %v2349 = vpack.c.b16 %v2061, %v1965
    %v2350 = vpack.c.b16 %v2062, %v1966
    %v2351 = vpack.c.b16 %v2063, %v1967
    %v2352 = vpack.c.b16 %v2064, %v1968
    %v2353 = vpack.c.b16 %v2065, %v1969
    %v2354 = vpack.c.b16 %v2066, %v1970
    %v2355 = vpack.c.b16 %v2067, %v1971
    %v2356 = vpack.c.b16 %v2068, %v1972
    %v2357 = vpack.c.b16 %v2069, %v1973
    %v2358 = vpack.c.b16 %v2070, %v1974
    %v2359 = vpack.c.b16 %v2071, %v1975
    %v2360 = vpack.c.b16 %v2072, %v1976
    %v2361 = vpack.c.b16 %v2073, %v1977
    %v2362 = vpack.c.b16 %v2074, %v1978
    %v2363 = vpack.c.b16 %v2075, %v1979
    %v2364 = vpack.c.b16 %v2076, %v1980
    %v2365 = vpack.c.b16 %v2077, %v1981
    %v2366 = vpack.c.b16 %v2078, %v1982
    %v2367 = vpack.c.b16 %v2079, %v1983
    %v2368 = vpack.c.b16 %v2080, %v1984
    %v2369 = vpack.c.b16 %v2081, %v1985
    %v2370 = vpack.c.b16 %v2082, %v1986
    %v2371 = vpack.c.b16 %v2083, %v1987
    %v2372 = vpack.c.b16 %v2084, %v1988
    %v2373 = vpack.c.b16 %v2085, %v1989
    %v2374 = vpack.c.b16 %v2086, %v1990
    %v2375 = vpack.c.b16 %v2087, %v1991
    %v2376 = vpack.c.b16 %v2088, %v1992
    %v2377 = vpack.c.b16 %v2089, %v1993
    %v2378 = vpack.c.b16 %v2090, %v1994
    %v2379 = vpack.c.b16 %v2091, %v1995
    %v2380 = vpack.c.b16 %v2092, %v1996
    %v2381 = vpack.c.b16 %v2093, %v1997
    %v2382 = vpack.c.b16 %v2094, %v1998
    %v2383 = vpack.c.b16 %v2095, %v1999
    %v2384 = vpack.c.b16 %v2096, %v2000
    %v2385 = vpack.c.b16 %v2097, %v2001
    %v2386 = vpack.c.b16 %v2098, %v2002
    %v2387 = vpack.c.b16 %v2099, %v2003
    %v2388 = vpack.c.b16 %v2100, %v2004
    %v2389 = vpack.c.b16 %v2101, %v2005
    %v2390 = vpack.c.b16 %v2102, %v2006
    %v2391 = vpack.c.b16 %v2103, %v2007
    %v2392 = vpack.c.b16 %v2104, %v2008
    %v2393 = vpack.c.b16 %v2105, %v2009
    %v2394 = vpack.c.b16 %v2106, %v2010
    %v2395 = vpack.c.b16 %v2107, %v2011
    %v2396 = vpack.c.b16 %v2108, %v2012
    %v2397 = vpack.c.b16 %v2109, %v2013
    %v2398 = vpack.c.b16 %v2110, %v2014
    %v2399 = vpack.c.b16 %v2111, %v2015
    %v2400 = vpack.c.b16 %v2112, %v2016
    %v2401 = vpack.c.b16 %v2113, %v2017
    %v2402 = vpack.c.b16 %v2114, %v2018
    %v2403 = vpack.c.b16 %v2115, %v2019
    %v2404 = vpack.c.b16 %v2116, %v2020
    %v2405 = vpack.c.b16 %v2117, %v2021
    %v2406 = vpack.c.b16 %v2118, %v2022
    %v2407 = vpack.c.b16 %v2119, %v2023
    %v2408 = vpack.c.b16 %v2120, %v2024
    %v2409 = vpack.c.b16 %v2121, %v2025
    %v2410 = vpack.c.b16 %v2122, %v2026
    %v2411 = vpack.c.b16 %v2123, %v2027
    %v2412 = vpack.c.b16 %v2124, %v2028
    %v2413 = vpack.c.b16 %v2125, %v2029
    %v2414 = vpack.c.b16 %v2126, %v2030
    %v2415 = vpack.c.b16 %v2127, %v2031
    %v2416 = vpack.c.b16 %v2128, %v2032
    %v2417 = vpack.c.b16 %v2129, %v2033
    %v2418 = vpack.c.b16 %v2130, %v2034
    %v2419 = vpack.c.b16 %v2131, %v2035
    %v2420 = vpack.c.b16 %v2132, %v2036
    %v2421 = vpack.c.b16 %v2133, %v2037
    %v2422 = vpack.c.b16 %v2134, %v2038
    %v2423 = vpack.c.b16 %v2135, %v2039
    %v2424 = vpack.c.b16 %v2136, %v2040
    %v2425 = vpack.c.b16 %v2137, %v2041
    %v2426 = vpack.c.b16 %v2138, %v2042
    %v2427 = vpack.c.b16 %v2139, %v2043
    %v2428 = vpack.c.b16 %v2140, %v2044
    %v2429 = vpack.c.b16 %v2141, %v2045
    %v2430 = vpack.c.b16 %v2142, %v2046
    %v2431 = vpack.c.b16 %v2143, %v2047
    %v2432 = vpack.c.b16 %v2144, %v2048
    %v2433 = vpack.c.b16 %v2145, %v2049
    %v2434 = vpack.c.b16 %v2146, %v2050
    %v2435 = vpack.c.b16 %v2147, %v2051
    %v2436 = vpack.c.b16 %v2148, %v2052
    %v2437 = vpack.c.b16 %v2149, %v2053
    %v2438 = vpack.c.b16 %v2150, %v2054
    %v2439 = vpack.c.b16 %v2151, %v2055
    %v2440 = vpack.c.b16 %v2152, %v2056
    %v2441 = vpack.c.b16 %v2153, %v2057
    %v2442 = vpack.c.b16 %v2250, %v2154
    %v2443 = vpack.c.b16 %v2251, %v2155
    %v2444 = vpack.c.b16 %v2252, %v2156
    %v2445 = vpack.c.b16 %v2253, %v2157
    %v2446 = vpack.c.b16 %v2254, %v2158
    %v2447 = vpack.c.b16 %v2255, %v2159
    %v2448 = vpack.c.b16 %v2256, %v2160
    %v2449 = vpack.c.b16 %v2257, %v2161
    %v2450 = vpack.c.b16 %v2258, %v2162
    %v2451 = vpack.c.b16 %v2259, %v2163
    %v2452 = vpack.c.b16 %v2260, %v2164
    %v2453 = vpack.c.b16 %v2261, %v2165
    %v2454 = vpack.c.b16 %v2262, %v2166
    %v2455 = vpack.c.b16 %v2263, %v2167
    %v2456 = vpack.c.b16 %v2264, %v2168
    %v2457 = vpack.c.b16 %v2265, %v2169
    %v2458 = vpack.c.b16 %v2266, %v2170
    %v2459 = vpack.c.b16 %v2267, %v2171
    %v2460 = vpack.c.b16 %v2268, %v2172
    %v2461 = vpack.c.b16 %v2269, %v2173
    %v2462 = vpack.c.b16 %v2270, %v2174
    %v2463 = vpack.c.b16 %v2271, %v2175
    %v2464 = vpack.c.b16 %v2272, %v2176
    %v2465 = vpack.c.b16 %v2273, %v2177
    %v2466 = vpack.c.b16 %v2274, %v2178
    %v2467 = vpack.c.b16 %v2275, %v2179
    %v2468 = vpack.c.b16 %v2276, %v2180
    %v2469 = vpack.c.b16 %v2277, %v2181
    %v2470 = vpack.c.b16 %v2278, %v2182
    %v2471 = vpack.c.b16 %v2279, %v2183
    %v2472 = vpack.c.b16 %v2280, %v2184
    %v2473 = vpack.c.b16 %v2281, %v2185
    %v2474 = vpack.c.b16 %v2282, %v2186
    %v2475 = vpack.c.b16 %v2283, %v2187
    %v2476 = vpack.c.b16 %v2284, %v2188
    %v2477 = vpack.c.b16 %v2285, %v2189
    %v2478 = vpack.c.b16 %v2286, %v2190
    %v2479 = vpack.c.b16 %v2287, %v2191
    %v2480 = vpack.c.b16 %v2288, %v2192
    %v2481 = vpack.c.b16 %v2289, %v2193
    %v2482 = vpack.c.b16 %v2290, %v2194
    %v2483 = vpack.c.b16 %v2291, %v2195
    %v2484 = vpack.c.b16 %v2292, %v2196
    %v2485 = vpack.c.b16 %v2293, %v2197
    %v2486 = vpack.c.b16 %v2294, %v2198
    %v2487 = vpack.c.b16 %v2295, %v2199
    %v2488 = vpack.c.b16 %v2296, %v2200
    %v2489 = vpack.c.b16 %v2297, %v2201
    %v2490 = vpack.c.b16 %v2298, %v2202
    %v2491 = vpack.c.b16 %v2299, %v2203
    %v2492 = vpack.c.b16 %v2300, %v2204
    %v2493 = vpack.c.b16 %v2301, %v2205
    %v2494 = vpack.c.b16 %v2302, %v2206
    %v2495 = vpack.c.b16 %v2303, %v2207
    %v2496 = vpack.c.b16 %v2304, %v2208
    %v2497 = vpack.c.b16 %v2305, %v2209
    %v2498 = vpack.c.b16 %v2306, %v2210
    %v2499 = vpack.c.b16 %v2307, %v2211
    %v2500 = vpack.c.b16 %v2308, %v2212
    %v2501 = vpack.c.b16 %v2309, %v2213
    %v2502 = vpack.c.b16 %v2310, %v2214
    %v2503 = vpack.c.b16 %v2311, %v2215
    %v2504 = vpack.c.b16 %v2312, %v2216
    %v2505 = vpack.c.b16 %v2313, %v2217
    %v2506 = vpack.c.b16 %v2314, %v2218
    %v2507 = vpack.c.b16 %v2315, %v2219
    %v2508 = vpack.c.b16 %v2316, %v2220
    %v2509 = vpack.c.b16 %v2317, %v2221
    %v2510 = vpack.c.b16 %v2318, %v2222
    %v2511 = vpack.c.b16 %v2319, %v2223
    %v2512 = vpack.c.b16 %v2320, %v2224
    %v2513 = vpack.c.b16 %v2321, %v2225
    %v2514 = vpack.c.b16 %v2322, %v2226
    %v2515 = vpack.c.b16 %v2323, %v2227
    %v2516 = vpack.c.b16 %v2324, %v2228
    %v2517 = vpack.c.b16 %v2325, %v2229
    %v2518 = vpack.c.b16 %v2326, %v2230
    %v2519 = vpack.c.b16 %v2327, %v2231
    %v2520 = vpack.c.b16 %v2328, %v2232
    %v2521 = vpack.c.b16 %v2329, %v2233
    %v2522 = vpack.c.b16 %v2330, %v2234
    %v2523 = vpack.c.b16 %v2331, %v2235
    %v2524 = vpack.c.b16 %v2332, %v2236
    %v2525 = vpack.c.b16 %v2333, %v2237
    %v2526 = vpack.c.b16 %v2334, %v2238
    %v2527 = vpack.c.b16 %v2335, %v2239
    %v2528 = vpack.c.b16 %v2336, %v2240
    %v2529 = vpack.c.b16 %v2337, %v2241
    %v2530 = vpack.c.b16 %v2338, %v2242
    %v2531 = vpack.c.b16 %v2339, %v2243
    %v2532 = vpack.c.b16 %v2340, %v2244
    %v2533 = vpack.c.b16 %v2341, %v2245
    %v2534 = vpack.c.b16 %v2342, %v2246
    %v2535 = vpack.c.b16 %v2343, %v2247
    %v2536 = vpack.c.b16 %v2344, %v2248
    %v2537 = vpack.c.b16 %v2345, %v2249
    %v4266 = vunpack.c.l.b16 %v234
    %v4267 = vunpack.c.l.b16 %v235
    %v4268 = vunpack.c.l.b16 %v236
    %v4269 = vunpack.c.l.b16 %v237
    %v4270 = vunpack.c.l.b16 %v238
    %v4271 = vunpack.c.l.b16 %v239
    %v4272 = vunpack.c.l.b16 %v240
    %v4273 = vunpack.c.l.b16 %v241
    %v4274 = vunpack.c.l.b16 %v242
    %v4275 = vunpack.c.l.b16 %v243
    %v4276 = vunpack.c.l.b16 %v244
    %v4277 = vunpack.c.l.b16 %v245
    %v4278 = vunpack.c.l.b16 %v246
    %v4279 = vunpack.c.l.b16 %v247
    %v4280 = vunpack.c.l.b16 %v248
    %v4281 = vunpack.c.l.b16 %v249
    %v4282 = vunpack.c.l.b16 %v250
    %v4283 = vunpack.c.l.b16 %v251
    %v4284 = vunpack.c.l.b16 %v252
    %v4285 = vunpack.c.l.b16 %v253
    %v4286 = vunpack.c.l.b16 %v254
    %v4287 = vunpack.c.l.b16 %v255
    %v4288 = vunpack.c.l.b16 %v256
    %v4289 = vunpack.c.l.b16 %v257
    %v4290 = vunpack.c.l.b16 %v258
    %v4291 = vunpack.c.l.b16 %v259
    %v4292 = vunpack.c.l.b16 %v260
    %v4293 = vunpack.c.l.b16 %v261
    %v4294 = vunpack.c.l.b16 %v262
    %v4295 = vunpack.c.l.b16 %v263
    %v4296 = vunpack.c.l.b16 %v264
    %v4297 = vunpack.c.l.b16 %v265
    %v4298 = vunpack.c.l.b16 %v266
    %v4299 = vunpack.c.l.b16 %v267
    %v4300 = vunpack.c.l.b16 %v268
    %v4301 = vunpack.c.l.b16 %v269
    %v4302 = vunpack.c.l.b16 %v270
    %v4303 = vunpack.c.l.b16 %v271
    %v4304 = vunpack.c.l.b16 %v272
    %v4305 = vunpack.c.l.b16 %v273
    %v4306 = vunpack.c.l.b16 %v274
    %v4307 = vunpack.c.l.b16 %v275
    %v4308 = vunpack.c.l.b16 %v276
    %v4309 = vunpack.c.l.b16 %v277
    %v4310 = vunpack.c.l.b16 %v278
    %v4311 = vunpack.c.l.b16 %v279
    %v4312 = vunpack.c.l.b16 %v280
    %v4313 = vunpack.c.l.b16 %v281
    %v4314 = vunpack.c.l.b16 %v282
    %v4315 = vunpack.c.l.b16 %v283
    %v4316 = vunpack.c.l.b16 %v284
    %v4317 = vunpack.c.l.b16 %v285
    %v4318 = vunpack.c.l.b16 %v286
    %v4319 = vunpack.c.l.b16 %v287
    %v4320 = vunpack.c.l.b16 %v288
    %v4321 = vunpack.c.l.b16 %v289
    %v4322 = vunpack.c.l.b16 %v290
    %v4323 = vunpack.c.l.b16 %v291
    %v4324 = vunpack.c.l.b16 %v292
    %v4325 = vunpack.c.l.b16 %v293
    %v4326 = vunpack.c.l.b16 %v294
    %v4327 = vunpack.c.l.b16 %v295
    %v4328 = vunpack.c.l.b16 %v296
    %v4329 = vunpack.c.l.b16 %v297
    %v4330 = vunpack.c.l.b16 %v298
    %v4331 = vunpack.c.l.b16 %v299
    %v4332 = vunpack.c.l.b16 %v300
    %v4333 = vunpack.c.l.b16 %v301
    %v4334 = vunpack.c.l.b16 %v302
    %v4335 = vunpack.c.l.b16 %v303
    %v4336 = vunpack.c.l.b16 %v304
    %v4337 = vunpack.c.l.b16 %v305
    %v4338 = vunpack.c.l.b16 %v306
    %v4339 = vunpack.c.l.b16 %v307
    %v4340 = vunpack.c.l.b16 %v308
    %v4341 = vunpack.c.l.b16 %v309
    %v4342 = vunpack.c.l.b16 %v310
    %v4343 = vunpack.c.l.b16 %v311
    %v4344 = vunpack.c.l.b16 %v312
    %v4345 = vunpack.c.l.b16 %v313
    %v4346 = vunpack.c.l.b16 %v314
    %v4347 = vunpack.c.l.b16 %v315
    %v4348 = vunpack.c.l.b16 %v316
    %v4349 = vunpack.c.l.b16 %v317
    %v4350 = vunpack.c.l.b16 %v318
    %v4351 = vunpack.c.l.b16 %v319
    %v4352 = vunpack.c.l.b16 %v320
    %v4353 = vunpack.c.l.b16 %v321
    %v4354 = vunpack.c.l.b16 %v322
    %v4355 = vunpack.c.l.b16 %v323
    %v4356 = vunpack.c.l.b16 %v324
    %v4357 = vunpack.c.l.b16 %v325
    %v4358 = vunpack.c.l.b16 %v326
    %v4359 = vunpack.c.l.b16 %v327
    %v4360 = vunpack.c.l.b16 %v328
    %v4361 = vunpack.c.l.b16 %v329
    %v4362 = vunpack.c.l.b16 %v330
    %v4363 = vunpack.c.l.b16 %v331
    %v4364 = vunpack.c.l.b16 %v332
    %v4365 = vunpack.c.l.b16 %v333
    %v4366 = vunpack.c.l.b16 %v334
    %v4367 = vunpack.c.l.b16 %v335
    %v4368 = vunpack.c.l.b16 %v336
    %v4369 = vunpack.c.l.b16 %v337
    %v4370 = vunpack.c.l.b16 %v338
    %v4371 = vunpack.c.l.b16 %v339
    %v4372 = vunpack.c.l.b16 %v340
    %v4373 = vunpack.c.l.b16 %v341
    %v4374 = vunpack.c.l.b16 %v342
    %v4375 = vunpack.c.l.b16 %v343
    %v4376 = vunpack.c.l.b16 %v344
    %v4377 = vunpack.c.l.b16 %v345
    %v4378 = vunpack.c.l.b16 %v346
    %v4379 = vunpack.c.l.b16 %v347
    %v4380 = vunpack.c.l.b16 %v348
    %v4381 = vunpack.c.l.b16 %v349
    %v4382 = vunpack.c.l.b16 %v350
    %v4383 = vunpack.c.l.b16 %v351
    %v4384 = vunpack.c.l.b16 %v352
    %v4385 = vunpack.c.l.b16 %v353
    %v4386 = vunpack.c.l.b16 %v354
    %v4387 = vunpack.c.l.b16 %v355
    %v4388 = vunpack.c.l.b16 %v356
    %v4389 = vunpack.c.l.b16 %v357
    %v4390 = vunpack.c.l.b16 %v358
    %v4391 = vunpack.c.l.b16 %v359
    %v4392 = vunpack.c.l.b16 %v360
    %v4393 = vunpack.c.l.b16 %v361
    %v4394 = vunpack.c.l.b16 %v362
    %v4395 = vunpack.c.l.b16 %v363
    %v4396 = vunpack.c.l.b16 %v364
    %v4397 = vunpack.c.l.b16 %v365
    %v4398 = vunpack.c.l.b16 %v366
    %v4399 = vunpack.c.l.b16 %v367
    %v4400 = vunpack.c.l.b16 %v368
    %v4401 = vunpack.c.l.b16 %v369
    %v4402 = vunpack.c.l.b16 %v370
    %v4403 = vunpack.c.l.b16 %v371
    %v4404 = vunpack.c.l.b16 %v372
    %v4405 = vunpack.c.l.b16 %v373
    %v4406 = vunpack.c.l.b16 %v374
    %v4407 = vunpack.c.l.b16 %v375
    %v4408 = vunpack.c.l.b16 %v376
    %v4409 = vunpack.c.l.b16 %v377
    %v4410 = vunpack.c.l.b16 %v378
    %v4411 = vunpack.c.l.b16 %v379
    %v4412 = vunpack.c.l.b16 %v380
    %v4413 = vunpack.c.l.b16 %v381
    %v4414 = vunpack.c.l.b16 %v382
    %v4415 = vunpack.c.l.b16 %v383
    %v4416 = vunpack.c.l.b16 %v384
    %v4417 = vunpack.c.l.b16 %v385
    %v4418 = vunpack.c.l.b16 %v386
    %v4419 = vunpack.c.l.b16 %v387
    %v4420 = vunpack.c.l.b16 %v388
    %v4421 = vunpack.c.l.b16 %v389
    %v4422 = vunpack.c.l.b16 %v390
    %v4423 = vunpack.c.l.b16 %v391
    %v4424 = vunpack.c.l.b16 %v392
    %v4425 = vunpack.c.l.b16 %v393
    %v4426 = vunpack.c.l.b16 %v394
    %v4427 = vunpack.c.l.b16 %v395
    %v4428 = vunpack.c.l.b16 %v396
    %v4429 = vunpack.c.l.b16 %v397
    %v4430 = vunpack.c.l.b16 %v398
    %v4431 = vunpack.c.l.b16 %v399
    %v4432 = vunpack.c.l.b16 %v400
    %v4433 = vunpack.c.l.b16 %v401
    %v4434 = vunpack.c.l.b16 %v402
    %v4435 = vunpack.c.l.b16 %v403
    %v4436 = vunpack.c.l.b16 %v404
    %v4437 = vunpack.c.l.b16 %v405
    %v4438 = vunpack.c.l.b16 %v406
    %v4439 = vunpack.c.l.b16 %v407
    %v4440 = vunpack.c.l.b16 %v408
    %v4441 = vunpack.c.l.b16 %v409
    %v4442 = vunpack.c.l.b16 %v410
    %v4443 = vunpack.c.l.b16 %v411
    %v4444 = vunpack.c.l.b16 %v412
    %v4445 = vunpack.c.l.b16 %v413
    %v4446 = vunpack.c.l.b16 %v414
    %v4447 = vunpack.c.l.b16 %v415
    %v4448 = vunpack.c.l.b16 %v416
    %v4449 = vunpack.c.l.b16 %v417
    %v4450 = vunpack.c.l.b16 %v418
    %v4451 = vunpack.c.l.b16 %v419
    %v4452 = vunpack.c.l.b16 %v420
    %v4453 = vunpack.c.l.b16 %v421
    %v4454 = vunpack.c.l.b16 %v422
    %v4455 = vunpack.c.l.b16 %v423
    %v4456 = vunpack.c.l.b16 %v424
    %v4457 = vunpack.c.l.b16 %v425
    %v4458 = vunpack.c.l.b16 %v426
    %v4459 = vunpack.c.l.b16 %v427
    %v4460 = vunpack.c.l.b16 %v428
    %v4461 = vunpack.c.l.b16 %v429
    %v4462 = vunpack.c.l.b16 %v430
    %v4463 = vunpack.c.l.b16 %v431
    %v4464 = vunpack.c.l.b16 %v432
    %v4465 = vunpack.c.l.b16 %v433
    %v4466 = vunpack.c.l.b16 %v434
    %v4467 = vunpack.c.l.b16 %v435
    %v4468 = vunpack.c.l.b16 %v436
    %v4469 = vunpack.c.l.b16 %v437
    %v4470 = vunpack.c.l.b16 %v438
    %v4471 = vunpack.c.l.b16 %v439
    %v4472 = vunpack.c.l.b16 %v440
    %v4473 = vunpack.c.l.b16 %v441
    %v4474 = vunpack.c.l.b16 %v442
    %v4475 = vunpack.c.l.b16 %v443
    %v4476 = vunpack.c.l.b16 %v444
    %v4477 = vunpack.c.l.b16 %v445
    %v4478 = vunpack.c.l.b16 %v446
    %v4479 = vunpack.c.l.b16 %v447
    %v4480 = vunpack.c.l.b16 %v448
    %v4481 = vunpack.c.l.b16 %v449
    %v4482 = vunpack.c.l.b16 %v450
    %v4483 = vunpack.c.l.b16 %v451
    %v4484 = vunpack.c.l.b16 %v452
    %v4485 = vunpack.c.l.b16 %v453
    %v4486 = vunpack.c.l.b16 %v454
    %v4487 = vunpack.c.l.b16 %v455
    %v4488 = vunpack.c.l.b16 %v456
    %v4489 = vunpack.c.l.b16 %v457
    %v4490 = vunpack.c.l.b16 %v458
    %v4491 = vunpack.c.l.b16 %v459
    %v4492 = vunpack.c.l.b16 %v460
    %v4493 = vunpack.c.l.b16 %v461
    %v4494 = vunpack.c.l.b16 %v462
    %v4495 = vunpack.c.l.b16 %v463
    %v4496 = vunpack.c.l.b16 %v464
    %v4497 = vunpack.c.l.b16 %v465
    %v4498 = vunpack.c.l.b16 %v466
    %v4499 = vunpack.c.l.b16 %v467
    %v4500 = vunpack.c.l.b16 %v468
    %v4501 = vunpack.c.l.b16 %v469
    %v4502 = vunpack.c.l.b16 %v470
    %v4503 = vunpack.c.l.b16 %v471
    %v4504 = vunpack.c.l.b16 %v472
    %v4505 = vunpack.c.l.b16 %v473
    %v4506 = vunpack.c.l.b16 %v474
    %v4507 = vunpack.c.l.b16 %v475
    %v4508 = vunpack.c.l.b16 %v476
    %v4509 = vunpack.c.l.b16 %v477
    %v4510 = vunpack.c.l.b16 %v478
    %v4511 = vunpack.c.l.b16 %v479
    %v4512 = vunpack.c.l.b16 %v480
    %v4513 = vunpack.c.l.b16 %v481
    %v4514 = vunpack.c.l.b16 %v482
    %v4515 = vunpack.c.l.b16 %v483
    %v4516 = vunpack.c.l.b16 %v484
    %v4517 = vunpack.c.l.b16 %v485
    %v4518 = vunpack.c.l.b16 %v486
    %v4519 = vunpack.c.l.b16 %v487
    %v4520 = vunpack.c.l.b16 %v488
    %v4521 = vunpack.c.l.b16 %v489
    %v4522 = vunpack.c.l.b16 %v490
    %v4523 = vunpack.c.l.b16 %v491
    %v4524 = vunpack.c.l.b16 %v492
    %v4525 = vunpack.c.l.b16 %v493
    %v4526 = vunpack.c.l.b16 %v494
    %v4527 = vunpack.c.l.b16 %v495
    %v4528 = vunpack.c.l.b16 %v496
    %v4529 = vunpack.c.l.b16 %v497
    %v4530 = vunpack.c.l.b16 %v498
    %v4531 = vunpack.c.l.b16 %v499
    %v4532 = vunpack.c.l.b16 %v500
    %v4533 = vunpack.c.l.b16 %v501
    %v4534 = vunpack.c.l.b16 %v502
    %v4535 = vunpack.c.l.b16 %v503
    %v4536 = vunpack.c.l.b16 %v504
    %v4537 = vunpack.c.l.b16 %v505
    %v4538 = vunpack.c.l.b16 %v506
    %v4539 = vunpack.c.l.b16 %v507
    %v4540 = vunpack.c.l.b16 %v508
    %v4541 = vunpack.c.l.b16 %v509
    %v4542 = vunpack.c.l.b16 %v510
    %v4543 = vunpack.c.l.b16 %v511
    %v4544 = vunpack.c.l.b16 %v512
    %v4545 = vunpack.c.l.b16 %v513
    %v4546 = vunpack.c.l.b16 %v514
    %v4547 = vunpack.c.l.b16 %v515
    %v4548 = vunpack.c.l.b16 %v516
    %v4549 = vunpack.c.l.b16 %v517
    %v4550 = vunpack.c.l.b16 %v518
    %v4551 = vunpack.c.l.b16 %v519
    %v4552 = vunpack.c.l.b16 %v520
    %v4553 = vunpack.c.l.b16 %v521
    %v4554 = vunpack.c.l.b16 %v522
    %v4555 = vunpack.c.l.b16 %v523
    %v4556 = vunpack.c.l.b16 %v524
    %v4557 = vunpack.c.l.b16 %v525
    %v4558 = vunpack.c.l.b16 %v526
    %v4559 = vunpack.c.l.b16 %v527
    %v4560 = vunpack.c.l.b16 %v528
    %v4561 = vunpack.c.l.b16 %v529
    %v4562 = vunpack.c.l.b16 %v530
    %v4563 = vunpack.c.l.b16 %v531
    %v4564 = vunpack.c.l.b16 %v532
    %v4565 = vunpack.c.l.b16 %v533
    %v4566 = vunpack.c.l.b16 %v534
    %v4567 = vunpack.c.l.b16 %v535
    %v4568 = vunpack.c.l.b16 %v536
    %v4569 = vunpack.c.l.b16 %v537
    %v4570 = vunpack.c.l.b16 %v538
    %v4571 = vunpack.c.l.b16 %v539
    %v4572 = vunpack.c.l.b16 %v540
    %v4573 = vunpack.c.l.b16 %v541
    %v4574 = vunpack.c.l.b16 %v542
    %v4575 = vunpack.c.l.b16 %v543
    %v4576 = vunpack.c.l.b16 %v544
    %v4577 = vunpack.c.l.b16 %v545
    %v4578 = vunpack.c.l.b16 %v546
    %v4579 = vunpack.c.l.b16 %v547
    %v4580 = vunpack.c.l.b16 %v548
    %v4581 = vunpack.c.l.b16 %v549
    %v4582 = vunpack.c.l.b16 %v550
    %v4583 = vunpack.c.l.b16 %v551
    %v4584 = vunpack.c.l.b16 %v552
    %v4585 = vunpack.c.l.b16 %v553
    %v4586 = vunpack.c.l.b16 %v554
    %v4587 = vunpack.c.l.b16 %v555
    %v4588 = vunpack.c.l.b16 %v556
    %v4589 = vunpack.c.l.b16 %v557
    %v4590 = vunpack.c.l.b16 %v558
    %v4591 = vunpack.c.l.b16 %v559
    %v4592 = vunpack.c.l.b16 %v560
    %v4593 = vunpack.c.l.b16 %v561
    %v4594 = vunpack.c.l.b16 %v562
    %v4595 = vunpack.c.l.b16 %v563
    %v4596 = vunpack.c.l.b16 %v564
    %v4597 = vunpack.c.l.b16 %v565
    %v4598 = vunpack.c.l.b16 %v566
    %v4599 = vunpack.c.l.b16 %v567
    %v4600 = vunpack.c.l.b16 %v568
    %v4601 = vunpack.c.l.b16 %v569
    %v4602 = vunpack.c.l.b16 %v570
    %v4603 = vunpack.c.l.b16 %v571
    %v4604 = vunpack.c.l.b16 %v572
    %v4605 = vunpack.c.l.b16 %v573
    %v4606 = vunpack.c.l.b16 %v574
    %v4607 = vunpack.c.l.b16 %v575
    %v4608 = vunpack.c.l.b16 %v576
    %v4609 = vunpack.c.l.b16 %v577
    %v4610 = vunpack.c.l.b16 %v578
    %v4611 = vunpack.c.l.b16 %v579
    %v4612 = vunpack.c.l.b16 %v580
    %v4613 = vunpack.c.l.b16 %v581
    %v4614 = vunpack.c.l.b16 %v582
    %v4615 = vunpack.c.l.b16 %v583
    %v4616 = vunpack.c.l.b16 %v584
    %v4617 = vunpack.c.l.b16 %v585
    %v4618 = vunpack.c.l.b16 %v586
    %v4619 = vunpack.c.l.b16 %v587
    %v4620 = vunpack.c.l.b16 %v588
    %v4621 = vunpack.c.l.b16 %v589
    %v4622 = vunpack.c.l.b16 %v590
    %v4623 = vunpack.c.l.b16 %v591
    %v4624 = vunpack.c.l.b16 %v592
    %v4625 = vunpack.c.l.b16 %v593
    %v4626 = vunpack.c.l.b16 %v594
    %v4627 = vunpack.c.l.b16 %v595
    %v4628 = vunpack.c.l.b16 %v596
    %v4629 = vunpack.c.l.b16 %v597
    %v4630 = vunpack.c.l.b16 %v598
    %v4631 = vunpack.c.l.b16 %v599
    %v4632 = vunpack.c.l.b16 %v600
    %v4633 = vunpack.c.l.b16 %v601
    %v4634 = vunpack.c.l.b16 %v602
    %v4635 = vunpack.c.l.b16 %v603
    %v4636 = vunpack.c.l.b16 %v604
    %v4637 = vunpack.c.l.b16 %v605
    %v4638 = vunpack.c.l.b16 %v606
    %v4639 = vunpack.c.l.b16 %v607
    %v4640 = vunpack.c.l.b16 %v608
    %v4641 = vunpack.c.l.b16 %v609
    %v4642 = vunpack.c.l.b16 %v610
    %v4643 = vunpack.c.l.b16 %v611
    %v4644 = vunpack.c.l.b16 %v612
    %v4645 = vunpack.c.l.b16 %v613
    %v4646 = vunpack.c.l.b16 %v614
    %v4647 = vunpack.c.l.b16 %v615
    %v4648 = vunpack.c.l.b16 %v616
    %v4649 = vunpack.c.l.b16 %v617
    %v4650 = vunpack.c.l.b16 %v618
    %v4651 = vunpack.c.l.b16 %v619
    %v4652 = vunpack.c.l.b16 %v620
    %v4653 = vunpack.c.l.b16 %v621
    %v4654 = vunpack.c.l.b16 %v622
    %v4655 = vunpack.c.l.b16 %v623
    %v4656 = vunpack.c.l.b16 %v624
    %v4657 = vunpack.c.l.b16 %v625
    %v4658 = vunpack.c.l.b16 %v626
    %v4659 = vunpack.c.l.b16 %v627
    %v4660 = vunpack.c.l.b16 %v628
    %v4661 = vunpack.c.l.b16 %v629
    %v4662 = vunpack.c.l.b16 %v630
    %v4663 = vunpack.c.l.b16 %v631
    %v4664 = vunpack.c.l.b16 %v632
    %v4665 = vunpack.c.l.b16 %v633
    %v4666 = vunpack.c.l.b16 %v634
    %v4667 = vunpack.c.l.b16 %v635
    %v4668 = vunpack.c.l.b16 %v636
    %v4669 = vunpack.c.l.b16 %v637
    %v4670 = vunpack.c.l.b16 %v638
    %v4671 = vunpack.c.l.b16 %v639
    %v4672 = vunpack.c.l.b16 %v640
    %v4673 = vunpack.c.l.b16 %v641
    %v4674 = vunpack.c.l.b16 %v642
    %v4675 = vunpack.c.l.b16 %v643
    %v4676 = vunpack.c.l.b16 %v644
    %v4677 = vunpack.c.l.b16 %v645
    %v4678 = vunpack.c.l.b16 %v646
    %v4679 = vunpack.c.l.b16 %v647
    %v4680 = vunpack.c.l.b16 %v648
    %v4681 = vunpack.c.l.b16 %v649
    %v4682 = vunpack.c.l.b16 %v650
    %v4683 = vunpack.c.l.b16 %v651
    %v4684 = vunpack.c.l.b16 %v652
    %v4685 = vunpack.c.l.b16 %v653
    %v4686 = vunpack.c.l.b16 %v654
    %v4687 = vunpack.c.l.b16 %v655
    %v4688 = vunpack.c.l.b16 %v656
    %v4689 = vunpack.c.l.b16 %v657
    %v4690 = vunpack.c.l.b16 %v658
    %v4691 = vunpack.c.l.b16 %v659
    %v4692 = vunpack.c.l.b16 %v660
    %v4693 = vunpack.c.l.b16 %v661
    %v4694 = vunpack.c.l.b16 %v662
    %v4695 = vunpack.c.l.b16 %v663
    %v4696 = vunpack.c.l.b16 %v664
    %v4697 = vunpack.c.l.b16 %v665
    %v4698 = vunpack.c.l.b16 %v666
    %v4699 = vunpack.c.l.b16 %v667
    %v4700 = vunpack.c.l.b16 %v668
    %v4701 = vunpack.c.l.b16 %v669
    %v4702 = vunpack.c.l.b16 %v670
    %v4703 = vunpack.c.l.b16 %v671
    %v4704 = vunpack.c.l.b16 %v672
    %v4705 = vunpack.c.l.b16 %v673
    %v4706 = vunpack.c.l.b16 %v674
    %v4707 = vunpack.c.l.b16 %v675
    %v4708 = vunpack.c.l.b16 %v676
    %v4709 = vunpack.c.l.b16 %v677
    %v4710 = vunpack.c.l.b16 %v678
    %v4711 = vunpack.c.l.b16 %v679
    %v4712 = vunpack.c.l.b16 %v680
    %v4713 = vunpack.c.l.b16 %v681
    %v4714 = vunpack.c.l.b16 %v682
    %v4715 = vunpack.c.l.b16 %v683
    %v4716 = vunpack.c.l.b16 %v684
    %v4717 = vunpack.c.l.b16 %v685
    %v4718 = vunpack.c.l.b16 %v686
    %v4719 = vunpack.c.l.b16 %v687
    %v4720 = vunpack.c.l.b16 %v688
    %v4721 = vunpack.c.l.b16 %v689
    %v4722 = vunpack.c.l.b16 %v690
    %v4723 = vunpack.c.l.b16 %v691
    %v4724 = vunpack.c.l.b16 %v692
    %v4725 = vunpack.c.l.b16 %v693
    %v4726 = vunpack.c.l.b16 %v694
    %v4727 = vunpack.c.l.b16 %v695
    %v4728 = vunpack.c.l.b16 %v696
    %v4729 = vunpack.c.l.b16 %v697
    %v4730 = vunpack.c.l.b16 %v698
    %v4731 = vunpack.c.l.b16 %v699
    %v4732 = vunpack.c.l.b16 %v700
    %v4733 = vunpack.c.l.b16 %v701
    %v4734 = vunpack.c.l.b16 %v702
    %v4735 = vunpack.c.l.b16 %v703
    %v4736 = vunpack.c.l.b16 %v704
    %v4737 = vunpack.c.l.b16 %v705
    %v4738 = vunpack.c.l.b16 %v706
    %v4739 = vunpack.c.l.b16 %v707
    %v4740 = vunpack.c.l.b16 %v708
    %v4741 = vunpack.c.l.b16 %v709
    %v4742 = vunpack.c.l.b16 %v710
    %v4743 = vunpack.c.l.b16 %v711
    %v4744 = vunpack.c.l.b16 %v712
    %v4745 = vunpack.c.l.b16 %v713
    %v4746 = vunpack.c.l.b16 %v714
    %v4747 = vunpack.c.l.b16 %v715
    %v4748 = vunpack.c.l.b16 %v716
    %v4749 = vunpack.c.l.b16 %v717
    %v4750 = vunpack.c.l.b16 %v718
    %v4751 = vunpack.c.l.b16 %v719
    %v4752 = vunpack.c.l.b16 %v720
    %v4753 = vunpack.c.l.b16 %v721
    %v4754 = vunpack.c.l.b16 %v722
    %v4755 = vunpack.c.l.b16 %v723
    %v4756 = vunpack.c.l.b16 %v724
    %v4757 = vunpack.c.l.b16 %v725
    %v4758 = vunpack.c.l.b16 %v726
    %v4759 = vunpack.c.l.b16 %v727
    %v4760 = vunpack.c.l.b16 %v728
    %v4761 = vunpack.c.l.b16 %v729
    %v4762 = vunpack.c.l.b16 %v730
    %v4763 = vunpack.c.l.b16 %v731
    %v4764 = vunpack.c.l.b16 %v732
    %v4765 = vunpack.c.l.b16 %v733
    %v4766 = vunpack.c.l.b16 %v734
    %v4767 = vunpack.c.l.b16 %v735
    %v4768 = vunpack.c.l.b16 %v736
    %v4769 = vunpack.c.l.b16 %v737
    %v4770 = vunpack.c.l.b16 %v738
    %v4771 = vunpack.c.l.b16 %v739
    %v4772 = vunpack.c.l.b16 %v740
    %v4773 = vunpack.c.l.b16 %v741
    %v4774 = vunpack.c.l.b16 %v742
    %v4775 = vunpack.c.l.b16 %v743
    %v4776 = vunpack.c.l.b16 %v744
    %v4777 = vunpack.c.l.b16 %v745
    %v4778 = vunpack.c.l.b16 %v746
    %v4779 = vunpack.c.l.b16 %v747
    %v4780 = vunpack.c.l.b16 %v748
    %v4781 = vunpack.c.l.b16 %v749
    %v4782 = vunpack.c.l.b16 %v750
    %v4783 = vunpack.c.l.b16 %v751
    %v4784 = vunpack.c.l.b16 %v752
    %v4785 = vunpack.c.l.b16 %v753
    %v4786 = vunpack.c.l.b16 %v754
    %v4787 = vunpack.c.l.b16 %v755
    %v4788 = vunpack.c.l.b16 %v756
    %v4789 = vunpack.c.l.b16 %v757
    %v4790 = vunpack.c.l.b16 %v758
    %v4791 = vunpack.c.l.b16 %v759
    %v4792 = vunpack.c.l.b16 %v760
    %v4793 = vunpack.c.l.b16 %v761
    %v4794 = vunpack.c.l.b16 %v762
    %v4795 = vunpack.c.l.b16 %v763
    %v4796 = vunpack.c.l.b16 %v764
    %v4797 = vunpack.c.l.b16 %v765
    %v4798 = vunpack.c.l.b16 %v766
    %v4799 = vunpack.c.l.b16 %v767
    %v4800 = vunpack.c.l.b16 %v768
    %v4801 = vunpack.c.l.b16 %v769
    %v4802 = vunpack.c.l.b16 %v770
    %v4803 = vunpack.c.l.b16 %v771
    %v4804 = vunpack.c.l.b16 %v772
    %v4805 = vunpack.c.l.b16 %v773
    %v4806 = vunpack.c.l.b16 %v774
    %v4807 = vunpack.c.l.b16 %v775
    %v4808 = vunpack.c.l.b16 %v776
    %v4809 = vunpack.c.l.b16 %v777
    %v4810 = vunpack.c.l.b16 %v778
    %v4811 = vunpack.c.l.b16 %v779
    %v4812 = vunpack.c.l.b16 %v780
    %v4813 = vunpack.c.l.b16 %v781
    %v4814 = vunpack.c.l.b16 %v782
    %v4815 = vunpack.c.l.b16 %v783
    %v4816 = vunpack.c.l.b16 %v784
    %v4817 = vunpack.c.l.b16 %v785
    %v4818 = vunpack.c.l.b16 %v786
    %v4819 = vunpack.c.l.b16 %v787
    %v4820 = vunpack.c.l.b16 %v788
    %v4821 = vunpack.c.l.b16 %v789
    %v4822 = vunpack.c.l.b16 %v790
    %v4823 = vunpack.c.l.b16 %v791
    %v4824 = vunpack.c.l.b16 %v792
    %v4825 = vunpack.c.l.b16 %v793
    %v4826 = vunpack.c.l.b16 %v794
    %v4827 = vunpack.c.l.b16 %v795
    %v4828 = vunpack.c.l.b16 %v796
    %v4829 = vunpack.c.l.b16 %v797
    %v4830 = vunpack.c.l.b16 %v798
    %v4831 = vunpack.c.l.b16 %v799
    %v4832 = vunpack.c.l.b16 %v800
    %v4833 = vunpack.c.l.b16 %v801
    %v4834 = vunpack.c.l.b16 %v802
    %v4835 = vunpack.c.l.b16 %v803
    %v4836 = vunpack.c.l.b16 %v804
    %v4837 = vunpack.c.l.b16 %v805
    %v4838 = vunpack.c.l.b16 %v806
    %v4839 = vunpack.c.l.b16 %v807
    %v4840 = vunpack.c.l.b16 %v808
    %v4841 = vunpack.c.l.b16 %v809
    %v4842 = vunpack.c.l.b16 %v810
    %v4843 = vunpack.c.l.b16 %v811
    %v4844 = vunpack.c.l.b16 %v812
    %v4845 = vunpack.c.l.b16 %v813
    %v4846 = vunpack.c.l.b16 %v814
    %v4847 = vunpack.c.l.b16 %v815
    %v4848 = vunpack.c.l.b16 %v816
    %v4849 = vunpack.c.l.b16 %v817
    %v4850 = vunpack.c.l.b16 %v818
    %v4851 = vunpack.c.l.b16 %v819
    %v4852 = vunpack.c.l.b16 %v820
    %v4853 = vunpack.c.l.b16 %v821
    %v4854 = vunpack.c.l.b16 %v822
    %v4855 = vunpack.c.l.b16 %v823
    %v4856 = vunpack.c.l.b16 %v824
    %v4857 = vunpack.c.l.b16 %v825
    %v4858 = vunpack.c.l.b16 %v826
    %v4859 = vunpack.c.l.b16 %v827
    %v4860 = vunpack.c.l.b16 %v828
    %v4861 = vunpack.c.l.b16 %v829
    %v4862 = vunpack.c.l.b16 %v830
    %v4863 = vunpack.c.l.b16 %v831
    %v4864 = vunpack.c.l.b16 %v832
    %v4865 = vunpack.c.l.b16 %v833
    %v4866 = vunpack.c.l.b16 %v834
    %v4867 = vunpack.c.l.b16 %v835
    %v4868 = vunpack.c.l.b16 %v836
    %v4869 = vunpack.c.l.b16 %v837
    %v4870 = vunpack.c.l.b16 %v838
    %v4871 = vunpack.c.l.b16 %v839
    %v4872 = vunpack.c.l.b16 %v840
    %v4873 = vunpack.c.l.b16 %v841
    %v4874 = vunpack.c.l.b16 %v842
    %v4875 = vunpack.c.l.b16 %v843
    %v4876 = vunpack.c.l.b16 %v844
    %v4877 = vunpack.c.l.b16 %v845
    %v4878 = vunpack.c.l.b16 %v846
    %v4879 = vunpack.c.l.b16 %v847
    %v4880 = vunpack.c.l.b16 %v848
    %v4881 = vunpack.c.l.b16 %v849
    %v4882 = vunpack.c.l.b16 %v850
    %v4883 = vunpack.c.l.b16 %v851
    %v4884 = vunpack.c.l.b16 %v852
    %v4885 = vunpack.c.l.b16 %v853
    %v4886 = vunpack.c.l.b16 %v854
    %v4887 = vunpack.c.l.b16 %v855
    %v4888 = vunpack.c.l.b16 %v856
    %v4889 = vunpack.c.l.b16 %v857
    %v4890 = vunpack.c.l.b16 %v858
    %v4891 = vunpack.c.l.b16 %v859
    %v4892 = vunpack.c.l.b16 %v860
    %v4893 = vunpack.c.l.b16 %v861
    %v4894 = vunpack.c.l.b16 %v862
    %v4895 = vunpack.c.l.b16 %v863
    %v4896 = vunpack.c.l.b16 %v864
    %v4897 = vunpack.c.l.b16 %v865
    %v4898 = vunpack.c.l.b16 %v866
    %v4899 = vunpack.c.l.b16 %v867
    %v4900 = vunpack.c.l.b16 %v868
    %v4901 = vunpack.c.l.b16 %v869
    %v4902 = vunpack.c.l.b16 %v870
    %v4903 = vunpack.c.l.b16 %v871
    %v4904 = vunpack.c.l.b16 %v872
    %v4905 = vunpack.c.l.b16 %v873
    %v4906 = vunpack.c.l.b16 %v874
    %v4907 = vunpack.c.l.b16 %v875
    %v4908 = vunpack.c.l.b16 %v876
    %v4909 = vunpack.c.l.b16 %v877
    %v4910 = vunpack.c.l.b16 %v878
    %v4911 = vunpack.c.l.b16 %v879
    %v4912 = vunpack.c.l.b16 %v880
    %v4913 = vunpack.c.l.b16 %v881
    %v4914 = vunpack.c.l.b16 %v882
    %v4915 = vunpack.c.l.b16 %v883
    %v4916 = vunpack.c.l.b16 %v884
    %v4917 = vunpack.c.l.b16 %v885
    %v4918 = vunpack.c.l.b16 %v886
    %v4919 = vunpack.c.l.b16 %v887
    %v4920 = vunpack.c.l.b16 %v888
    %v4921 = vunpack.c.l.b16 %v889
    %v4922 = vunpack.c.l.b16 %v890
    %v4923 = vunpack.c.l.b16 %v891
    %v4924 = vunpack.c.l.b16 %v892
    %v4925 = vunpack.c.l.b16 %v893
    %v4926 = vunpack.c.l.b16 %v894
    %v4927 = vunpack.c.l.b16 %v895
    %v4928 = vunpack.c.l.b16 %v896
    %v4929 = vunpack.c.l.b16 %v897
    %v4930 = vunpack.c.l.b16 %v898
    %v4931 = vunpack.c.l.b16 %v899
    %v4932 = vunpack.c.l.b16 %v900
    %v4933 = vunpack.c.l.b16 %v901
    %v4934 = vunpack.c.l.b16 %v902
    %v4935 = vunpack.c.l.b16 %v903
    %v4936 = vunpack.c.l.b16 %v904
    %v4937 = vunpack.c.l.b16 %v905
    %v4938 = vunpack.c.l.b16 %v906
    %v4939 = vunpack.c.l.b16 %v907
    %v4940 = vunpack.c.l.b16 %v908
    %v4941 = vunpack.c.l.b16 %v909
    %v4942 = vunpack.c.l.b16 %v910
    %v4943 = vunpack.c.l.b16 %v911
    %v4944 = vunpack.c.l.b16 %v912
    %v4945 = vunpack.c.l.b16 %v913
    %v4946 = vunpack.c.l.b16 %v914
    %v4947 = vunpack.c.l.b16 %v915
    %v4948 = vunpack.c.l.b16 %v916
    %v4949 = vunpack.c.l.b16 %v917
    %v4950 = vunpack.c.l.b16 %v918
    %v4951 = vunpack.c.l.b16 %v919
    %v4952 = vunpack.c.l.b16 %v920
    %v4953 = vunpack.c.l.b16 %v921
    %v4954 = vunpack.c.l.b16 %v922
    %v4955 = vunpack.c.l.b16 %v923
    %v4956 = vunpack.c.l.b16 %v924
    %v4957 = vunpack.c.l.b16 %v925
    %v4958 = vunpack.c.l.b16 %v926
    %v4959 = vunpack.c.l.b16 %v927
    %v4960 = vunpack.c.l.b16 %v928
    %v4961 = vunpack.c.l.b16 %v929
    %v4962 = vunpack.c.l.b16 %v930
    %v4963 = vunpack.c.l.b16 %v931
    %v4964 = vunpack.c.l.b16 %v932
    %v4965 = vunpack.c.l.b16 %v933
    %v4966 = vunpack.c.l.b16 %v934
    %v4967 = vunpack.c.l.b16 %v935
    %v4968 = vunpack.c.l.b16 %v936
    %v4969 = vunpack.c.l.b16 %v937
    %v4970 = vunpack.c.l.b16 %v938
    %v4971 = vunpack.c.l.b16 %v939
    %v4972 = vunpack.c.l.b16 %v940
    %v4973 = vunpack.c.l.b16 %v941
    %v4974 = vunpack.c.l.b16 %v942
    %v4975 = vunpack.c.l.b16 %v943
    %v4976 = vunpack.c.l.b16 %v944
    %v4977 = vunpack.c.l.b16 %v945
    %v4978 = vunpack.c.l.b16 %v946
    %v4979 = vunpack.c.l.b16 %v947
    %v4980 = vunpack.c.l.b16 %v948
    %v4981 = vunpack.c.l.b16 %v949
    %v4982 = vunpack.c.l.b16 %v950
    %v4983 = vunpack.c.l.b16 %v951
    %v4984 = vunpack.c.l.b16 %v952
    %v4985 = vunpack.c.l.b16 %v953
    %v4986 = vunpack.c.l.b16 %v954
    %v4987 = vunpack.c.l.b16 %v955
    %v4988 = vunpack.c.l.b16 %v956
    %v4989 = vunpack.c.l.b16 %v957
    %v4990 = vunpack.c.l.b16 %v958
    %v4991 = vunpack.c.l.b16 %v959
    %v4992 = vunpack.c.l.b16 %v960
    %v4993 = vunpack.c.l.b16 %v961
    %v4994 = vunpack.c.l.b16 %v962
    %v4995 = vunpack.c.l.b16 %v963
    %v4996 = vunpack.c.l.b16 %v964
    %v4997 = vunpack.c.l.b16 %v965
    %v4998 = vunpack.c.l.b16 %v966
    %v4999 = vunpack.c.l.b16 %v967
    %v5000 = vunpack.c.l.b16 %v968
    %v5001 = vunpack.c.l.b16 %v969
    %v5002 = vunpack.c.l.b16 %v970
    %v5003 = vunpack.c.l.b16 %v971
    %v5004 = vunpack.c.l.b16 %v972
    %v5005 = vunpack.c.l.b16 %v973
    %v5006 = vunpack.c.l.b16 %v974
    %v5007 = vunpack.c.l.b16 %v975
    %v5008 = vunpack.c.l.b16 %v976
    %v5009 = vunpack.c.l.b16 %v977
    %v5010 = vunpack.c.l.b16 %v978
    %v5011 = vunpack.c.l.b16 %v979
    %v5012 = vunpack.c.l.b16 %v980
    %v5013 = vunpack.c.l.b16 %v981
    %v5014 = vunpack.c.l.b16 %v982
    %v5015 = vunpack.c.l.b16 %v983
    %v5016 = vunpack.c.l.b16 %v984
    %v5017 = vunpack.c.l.b16 %v985
    %v5018 = vunpack.c.l.b16 %v986
    %v5019 = vunpack.c.l.b16 %v987
    %v5020 = vunpack.c.l.b16 %v988
    %v5021 = vunpack.c.l.b16 %v989
    %v5022 = vunpack.c.l.b16 %v990
    %v5023 = vunpack.c.l.b16 %v991
    %v5024 = vunpack.c.l.b16 %v992
    %v5025 = vunpack.c.l.b16 %v993
    %v5026 = vunpack.c.l.b16 %v994
    %v5027 = vunpack.c.l.b16 %v995
    %v5028 = vunpack.c.l.b16 %v996
    %v5029 = vunpack.c.l.b16 %v997
    %v5030 = vunpack.c.l.b16 %v998
    %v5031 = vunpack.c.l.b16 %v999
    %v5032 = vunpack.c.l.b16 %v1000
    %v5033 = vunpack.c.l.b16 %v1001
    %v5034 = vunpack.c.l.b16 %v1002
    %v5035 = vunpack.c.l.b16 %v1003
    %v5036 = vunpack.c.l.b16 %v1004
    %v5037 = vunpack.c.l.b16 %v1005
    %v5038 = vunpack.c.l.b16 %v1006
    %v5039 = vunpack.c.l.b16 %v1007
    %v5040 = vunpack.c.l.b16 %v1008
    %v5041 = vunpack.c.l.b16 %v1009
    %v5042 = vunpack.c.l.b16 %v1010
    %v5043 = vunpack.c.l.b16 %v1011
    %v5044 = vunpack.c.l.b16 %v1012
    %v5045 = vunpack.c.l.b16 %v1013
    %v5046 = vunpack.c.l.b16 %v1014
    %v5047 = vunpack.c.l.b16 %v1015
    %v5048 = vunpack.c.l.b16 %v1016
    %v5049 = vunpack.c.l.b16 %v1017
    %v5050 = vunpack.c.l.b16 %v1018
    %v5051 = vunpack.c.l.b16 %v1019
    %v5052 = vunpack.c.l.b16 %v1020
    %v5053 = vunpack.c.l.b16 %v1021
    %v5054 = vunpack.c.l.b16 %v1022
    %v5055 = vunpack.c.l.b16 %v1023
    %v5056 = vunpack.c.l.b16 %v1024
    %v5057 = vunpack.c.l.b16 %v1025
    %v5058 = vunpack.c.l.b16 %v1026
    %v5059 = vunpack.c.l.b16 %v1027
    %v5060 = vunpack.c.l.b16 %v1028
    %v5061 = vunpack.c.l.b16 %v1029
    %v5062 = vunpack.c.l.b16 %v1030
    %v5063 = vunpack.c.l.b16 %v1031
    %v5064 = vunpack.c.l.b16 %v1032
    %v5065 = vunpack.c.l.b16 %v1033
    %v5066 = vunpack.c.l.b16 %v1034
    %v5067 = vunpack.c.l.b16 %v1035
    %v5068 = vunpack.c.l.b16 %v1036
    %v5069 = vunpack.c.l.b16 %v1037
    %v5070 = vunpack.c.l.b16 %v1038
    %v5071 = vunpack.c.l.b16 %v1039
    %v5072 = vunpack.c.l.b16 %v1040
    %v5073 = vunpack.c.l.b16 %v1041
    %v5074 = vunpack.c.l.b16 %v1042
    %v5075 = vunpack.c.l.b16 %v1043
    %v5076 = vunpack.c.l.b16 %v1044
    %v5077 = vunpack.c.l.b16 %v1045
    %v5078 = vunpack.c.l.b16 %v1046
    %v5079 = vunpack.c.l.b16 %v1047
    %v5080 = vunpack.c.l.b16 %v1048
    %v5081 = vunpack.c.l.b16 %v1049
    %v5082 = vunpack.c.l.b16 %v1050
    %v5083 = vunpack.c.l.b16 %v1051
    %v5084 = vunpack.c.l.b16 %v1052
    %v5085 = vunpack.c.l.b16 %v1053
    %v5086 = vunpack.c.l.b16 %v1054
    %v5087 = vunpack.c.l.b16 %v1055
    %v5088 = vunpack.c.l.b16 %v1056
    %v5089 = vunpack.c.l.b16 %v1057
    %v5090 = vunpack.c.l.b16 %v1058
    %v5091 = vunpack.c.l.b16 %v1059
    %v5092 = vunpack.c.l.b16 %v1060
    %v5093 = vunpack.c.l.b16 %v1061
    %v5094 = vunpack.c.l.b16 %v1062
    %v5095 = vunpack.c.l.b16 %v1063
    %v5096 = vunpack.c.l.b16 %v1064
    %v5097 = vunpack.c.l.b16 %v1065
    %v5098 = vunpack.c.l.b16 %v1066
    %v5099 = vunpack.c.l.b16 %v1067
    %v5100 = vunpack.c.l.b16 %v1068
    %v5101 = vunpack.c.l.b16 %v1069
    %v5102 = vunpack.c.l.b16 %v1070
    %v5103 = vunpack.c.l.b16 %v1071
    %v5104 = vunpack.c.l.b16 %v1072
    %v5105 = vunpack.c.l.b16 %v1073
    %v5106 = vunpack.c.l.b16 %v1074
    %v5107 = vunpack.c.l.b16 %v1075
    %v5108 = vunpack.c.l.b16 %v1076
    %v5109 = vunpack.c.l.b16 %v1077
    %v5110 = vunpack.c.l.b16 %v1078
    %v5111 = vunpack.c.l.b16 %v1079
    %v5112 = vunpack.c.l.b16 %v1080
    %v5113 = vunpack.c.l.b16 %v1081
    %v5114 = vunpack.c.l.b16 %v1082
    %v5115 = vunpack.c.l.b16 %v1083
    %v5116 = vunpack.c.l.b16 %v1084
    %v5117 = vunpack.c.l.b16 %v1085
    %v5118 = vunpack.c.l.b16 %v1086
    %v5119 = vunpack.c.l.b16 %v1087
    %v5120 = vunpack.c.l.b16 %v1088
    %v5121 = vunpack.c.l.b16 %v1089
    %v5122 = vunpack.c.l.b16 %v1090
    %v5123 = vunpack.c.l.b16 %v1091
    %v5124 = vunpack.c.l.b16 %v1092
    %v5125 = vunpack.c.l.b16 %v1093
    %v5126 = vunpack.c.l.b16 %v1094
    %v5127 = vunpack.c.l.b16 %v1095
    %v5128 = vunpack.c.l.b16 %v1096
    %v5129 = vunpack.c.l.b16 %v1097
    %v5130 = vunpack.c.l.b16 %v1098
    %v5131 = vunpack.c.l.b16 %v1099
    %v5132 = vunpack.c.l.b16 %v1100
    %v5133 = vunpack.c.l.b16 %v1101
    %v5134 = vunpack.c.l.b16 %v1102
    %v5135 = vunpack.c.l.b16 %v1103
    %v5136 = vunpack.c.l.b16 %v1104
    %v5137 = vunpack.c.l.b16 %v1105
    %v5138 = vunpack.c.l.b16 %v1106
    %v5139 = vunpack.c.l.b16 %v1107
    %v5140 = vunpack.c.l.b16 %v1108
    %v5141 = vunpack.c.l.b16 %v1109
    %v5142 = vunpack.c.l.b16 %v1110
    %v5143 = vunpack.c.l.b16 %v1111
    %v5144 = vunpack.c.l.b16 %v1112
    %v5145 = vunpack.c.l.b16 %v1113
    %v5146 = vunpack.c.l.b16 %v1114
    %v5147 = vunpack.c.l.b16 %v1115
    %v5148 = vunpack.c.l.b16 %v1116
    %v5149 = vunpack.c.l.b16 %v1117
    %v5150 = vunpack.c.l.b16 %v1118
    %v5151 = vunpack.c.l.b16 %v1119
    %v5152 = vunpack.c.l.b16 %v1120
    %v5153 = vunpack.c.l.b16 %v1121
    %v5154 = vunpack.c.l.b16 %v1122
    %v5155 = vunpack.c.l.b16 %v1123
    %v5156 = vunpack.c.l.b16 %v1124
    %v5157 = vunpack.c.l.b16 %v1125
    %v5158 = vunpack.c.l.b16 %v1126
    %v5159 = vunpack.c.l.b16 %v1127
    %v5160 = vunpack.c.l.b16 %v1128
    %v5161 = vunpack.c.l.b16 %v1129
    %v5162 = vunpack.c.l.b16 %v1130
    %v5163 = vunpack.c.l.b16 %v1131
    %v5164 = vunpack.c.l.b16 %v1132
    %v5165 = vunpack.c.l.b16 %v1133
    %v5166 = vunpack.c.l.b16 %v1134
    %v5167 = vunpack.c.l.b16 %v1135
    %v5168 = vunpack.c.l.b16 %v1136
    %v5169 = vunpack.c.l.b16 %v1137
    %v5170 = vunpack.c.l.b16 %v1138
    %v5171 = vunpack.c.l.b16 %v1139
    %v5172 = vunpack.c.l.b16 %v1140
    %v5173 = vunpack.c.l.b16 %v1141
    %v5174 = vunpack.c.l.b16 %v1142
    %v5175 = vunpack.c.l.b16 %v1143
    %v5176 = vunpack.c.l.b16 %v1144
    %v5177 = vunpack.c.l.b16 %v1145
    %v5178 = vunpack.c.l.b16 %v1146
    %v5179 = vunpack.c.l.b16 %v1147
    %v5180 = vunpack.c.l.b16 %v1148
    %v5181 = vunpack.c.l.b16 %v1149
    %v5182 = vunpack.c.l.b16 %v1150
    %v5183 = vunpack.c.l.b16 %v1151
    %v5184 = vunpack.c.l.b16 %v1152
    %v5185 = vunpack.c.l.b16 %v1153
    %v5186 = vunpack.c.l.b16 %v1154
    %v5187 = vunpack.c.l.b16 %v1155
    %v5188 = vunpack.c.l.b16 %v1156
    %v5189 = vunpack.c.l.b16 %v1157
    %v5190 = vunpack.c.l.b16 %v1158
    %v5191 = vunpack.c.l.b16 %v1159
    %v5192 = vunpack.c.l.b16 %v1160
    %v5193 = vunpack.c.l.b16 %v1161
    %v5194 = vunpack.c.l.b16 %v1162
    %v5195 = vunpack.c.l.b16 %v1163
    %v5196 = vunpack.c.l.b16 %v1164
    %v5197 = vunpack.c.l.b16 %v1165
    %v5198 = vunpack.c.l.b16 %v1166
    %v5199 = vunpack.c.l.b16 %v1167
    %v5200 = vunpack.c.l.b16 %v1168
    %v5201 = vunpack.c.l.b16 %v1169
    %v5202 = vunpack.c.l.b16 %v1170
    %v5203 = vunpack.c.l.b16 %v1171
    %v5204 = vunpack.c.l.b16 %v1172
    %v5205 = vunpack.c.l.b16 %v1173
    %v5206 = vunpack.c.l.b16 %v1174
    %v5207 = vunpack.c.l.b16 %v1175
    %v5208 = vunpack.c.l.b16 %v1176
    %v5209 = vunpack.c.l.b16 %v1177
    %v5210 = vunpack.c.l.b16 %v1178
    %v5211 = vunpack.c.l.b16 %v1179
    %v5212 = vunpack.c.l.b16 %v1180
    %v5213 = vunpack.c.l.b16 %v1181
    %v5214 = vunpack.c.l.b16 %v1182
    %v5215 = vunpack.c.l.b16 %v1183
    %v5216 = vunpack.c.l.b16 %v1184
    %v5217 = vunpack.c.l.b16 %v1185
    %v5218 = vunpack.c.l.b16 %v1186
    %v5219 = vunpack.c.l.b16 %v1187
    %v5220 = vunpack.c.l.b16 %v1188
    %v5221 = vunpack.c.l.b16 %v1189
    %v5222 = vunpack.c.l.b16 %v1190
    %v5223 = vunpack.c.l.b16 %v1191
    %v5224 = vunpack.c.l.b16 %v1192
    %v5225 = vunpack.c.l.b16 %v1193
    %v5226 = vunpack.c.l.b16 %v1194
    %v5227 = vunpack.c.l.b16 %v1195
    %v5228 = vunpack.c.l.b16 %v1196
    %v5229 = vunpack.c.l.b16 %v1197
    %v5230 = vunpack.c.l.b16 %v1198
    %v5231 = vunpack.c.l.b16 %v1199
    %v5232 = vunpack.c.l.b16 %v1200
    %v5233 = vunpack.c.l.b16 %v1201
    %v5234 = vunpack.c.l.b16 %v1202
    %v5235 = vunpack.c.l.b16 %v1203
    %v5236 = vunpack.c.l.b16 %v1204
    %v5237 = vunpack.c.l.b16 %v1205
    %v5238 = vunpack.c.l.b16 %v1206
    %v5239 = vunpack.c.l.b16 %v1207
    %v5240 = vunpack.c.l.b16 %v1208
    %v5241 = vunpack.c.l.b16 %v1209
    %v5242 = vunpack.c.l.b16 %v1210
    %v5243 = vunpack.c.l.b16 %v1211
    %v5244 = vunpack.c.l.b16 %v1212
    %v5245 = vunpack.c.l.b16 %v1213
    %v5246 = vunpack.c.l.b16 %v1214
    %v5247 = vunpack.c.l.b16 %v1215
    %v5248 = vunpack.c.l.b16 %v1216
    %v5249 = vunpack.c.l.b16 %v1217
    %v5250 = vunpack.c.l.b16 %v1218
    %v5251 = vunpack.c.l.b16 %v1219
    %v5252 = vunpack.c.l.b16 %v1220
    %v5253 = vunpack.c.l.b16 %v1221
    %v5254 = vunpack.c.l.b16 %v1222
    %v5255 = vunpack.c.l.b16 %v1223
    %v5256 = vunpack.c.l.b16 %v1224
    %v5257 = vunpack.c.l.b16 %v1225
    %v5258 = vunpack.c.l.b16 %v1226
    %v5259 = vunpack.c.l.b16 %v1227
    %v5260 = vunpack.c.l.b16 %v1228
    %v5261 = vunpack.c.l.b16 %v1229
    %v5262 = vunpack.c.l.b16 %v1230
    %v5263 = vunpack.c.l.b16 %v1231
    %v5264 = vunpack.c.l.b16 %v1232
    %v5265 = vunpack.c.l.b16 %v1233
    %v5266 = vunpack.c.l.b16 %v1234
    %v5267 = vunpack.c.l.b16 %v1235
    %v5268 = vunpack.c.l.b16 %v1236
    %v5269 = vunpack.c.l.b16 %v1237
    %v5270 = vunpack.c.l.b16 %v1238
    %v5271 = vunpack.c.l.b16 %v1239
    %v5272 = vunpack.c.l.b16 %v1240
    %v5273 = vunpack.c.l.b16 %v1241
    %v5274 = vunpack.c.l.b16 %v1242
    %v5275 = vunpack.c.l.b16 %v1243
    %v5276 = vunpack.c.l.b16 %v1244
    %v5277 = vunpack.c.l.b16 %v1245
    %v5278 = vunpack.c.l.b16 %v1246
    %v5279 = vunpack.c.l.b16 %v1247
    %v5280 = vunpack.c.l.b16 %v1248
    %v5281 = vunpack.c.l.b16 %v1249
    %v5282 = vunpack.c.l.b16 %v1250
    %v5283 = vunpack.c.l.b16 %v1251
    %v5284 = vunpack.c.l.b16 %v1252
    %v5285 = vunpack.c.l.b16 %v1253
    %v5286 = vunpack.c.l.b16 %v1254
    %v5287 = vunpack.c.l.b16 %v1255
    %v5288 = vunpack.c.l.b16 %v1256
    %v5289 = vunpack.c.l.b16 %v1257
    %v5290 = vunpack.c.l.b16 %v1258
    %v5291 = vunpack.c.l.b16 %v1259
    %v5292 = vunpack.c.l.b16 %v1260
    %v5293 = vunpack.c.l.b16 %v1261
    %v5294 = vunpack.c.l.b16 %v1262
    %v5295 = vunpack.c.l.b16 %v1263
    %v5296 = vunpack.c.l.b16 %v1264
    %v5297 = vunpack.c.l.b16 %v1265
    %v5298 = vunpack.c.l.b16 %v1266
    %v5299 = vunpack.c.l.b16 %v1267
    %v5300 = vunpack.c.l.b16 %v1268
    %v5301 = vunpack.c.l.b16 %v1269
    %v5302 = vunpack.c.l.b16 %v1270
    %v5303 = vunpack.c.l.b16 %v1271
    %v5304 = vunpack.c.l.b16 %v1272
    %v5305 = vunpack.c.l.b16 %v1273
    %v5306 = vunpack.c.l.b16 %v1274
    %v5307 = vunpack.c.l.b16 %v1275
    %v5308 = vunpack.c.l.b16 %v1276
    %v5309 = vunpack.c.l.b16 %v1277
    %v5310 = vunpack.c.l.b16 %v1278
    %v5311 = vunpack.c.l.b16 %v1279
    %v5312 = vunpack.c.l.b16 %v1280
    %v5313 = vunpack.c.l.b16 %v1281
    %v5314 = vunpack.c.l.b16 %v1282
    %v5315 = vunpack.c.l.b16 %v1283
    %v5316 = vunpack.c.l.b16 %v1284
    %v5317 = vunpack.c.l.b16 %v1285
    %v5318 = vunpack.c.l.b16 %v1286
    %v5319 = vunpack.c.l.b16 %v1287
    %v5320 = vunpack.c.l.b16 %v1288
    %v5321 = vunpack.c.l.b16 %v1289
    %v5322 = vunpack.c.l.b16 %v1290
    %v5323 = vunpack.c.l.b16 %v1291
    %v5324 = vunpack.c.l.b16 %v1292
    %v5325 = vunpack.c.l.b16 %v1293
    %v5326 = vunpack.c.l.b16 %v1294
    %v5327 = vunpack.c.l.b16 %v1295
    %v5328 = vunpack.c.l.b16 %v1296
    %v5329 = vunpack.c.l.b16 %v1297
    %v5330 = vunpack.c.l.b16 %v1298
    %v5331 = vunpack.c.l.b16 %v1299
    %v5332 = vunpack.c.l.b16 %v1300
    %v5333 = vunpack.c.l.b16 %v1301
    %v5334 = vunpack.c.l.b16 %v1302
    %v5335 = vunpack.c.l.b16 %v1303
    %v5336 = vunpack.c.l.b16 %v1304
    %v5337 = vunpack.c.l.b16 %v1305
    %v5338 = vunpack.c.l.b16 %v1306
    %v5339 = vunpack.c.l.b16 %v1307
    %v5340 = vunpack.c.l.b16 %v1308
    %v5341 = vunpack.c.l.b16 %v1309
    %v5342 = vunpack.c.l.b16 %v1310
    %v5343 = vunpack.c.l.b16 %v1311
    %v5344 = vunpack.c.l.b16 %v1312
    %v5345 = vunpack.c.l.b16 %v1313
    %v5346 = vunpack.c.l.b16 %v1314
    %v5347 = vunpack.c.l.b16 %v1315
    %v5348 = vunpack.c.l.b16 %v1316
    %v5349 = vunpack.c.l.b16 %v1317
    %v5350 = vunpack.c.l.b16 %v1318
    %v5351 = vunpack.c.l.b16 %v1319
    %v5352 = vunpack.c.l.b16 %v1320
    %v5353 = vunpack.c.l.b16 %v1321
    %v5354 = vunpack.c.l.b16 %v1322
    %v5355 = vunpack.c.l.b16 %v1323
    %v5356 = vunpack.c.l.b16 %v1324
    %v5357 = vunpack.c.l.b16 %v1325
    %v5358 = vunpack.c.l.b16 %v1326
    %v5359 = vunpack.c.l.b16 %v1327
    %v5360 = vunpack.c.l.b16 %v1328
    %v5361 = vunpack.c.l.b16 %v1329
    %v5362 = vunpack.c.l.b16 %v1330
    %v5363 = vunpack.c.l.b16 %v1331
    %v5364 = vunpack.c.l.b16 %v1332
    %v5365 = vunpack.c.l.b16 %v1333
    %v5366 = vunpack.c.l.b16 %v1334
    %v5367 = vunpack.c.l.b16 %v1335
    %v5368 = vunpack.c.l.b16 %v1336
    %v5369 = vunpack.c.l.b16 %v1337
    %v5370 = vunpack.c.l.b16 %v1338
    %v5371 = vunpack.c.l.b16 %v1339
    %v5372 = vunpack.c.l.b16 %v1340
    %v5373 = vunpack.c.l.b16 %v1341
    %v5374 = vunpack.c.l.b16 %v1342
    %v5375 = vunpack.c.l.b16 %v1343
    %v5376 = vunpack.c.l.b16 %v1344
    %v5377 = vunpack.c.l.b16 %v1345
    %v5378 = vunpack.c.l.b16 %v1346
    %v5379 = vunpack.c.l.b16 %v1347
    %v5380 = vunpack.c.l.b16 %v1348
    %v5381 = vunpack.c.l.b16 %v1349
    %v5382 = vunpack.c.l.b16 %v1350
    %v5383 = vunpack.c.l.b16 %v1351
    %v5384 = vunpack.c.l.b16 %v1352
    %v5385 = vunpack.c.l.b16 %v1353
    %v5386 = vunpack.c.l.b16 %v1354
    %v5387 = vunpack.c.l.b16 %v1355
    %v5388 = vunpack.c.l.b16 %v1356
    %v5389 = vunpack.c.l.b16 %v1357
    %v5390 = vunpack.c.l.b16 %v1358
    %v5391 = vunpack.c.l.b16 %v1359
    %v5392 = vunpack.c.l.b16 %v1360
    %v5393 = vunpack.c.l.b16 %v1361
    %v5394 = vunpack.c.l.b16 %v1362
    %v5395 = vunpack.c.l.b16 %v1363
    %v5396 = vunpack.c.l.b16 %v1364
    %v5397 = vunpack.c.l.b16 %v1365
    %v5398 = vunpack.c.l.b16 %v1366
    %v5399 = vunpack.c.l.b16 %v1367
    %v5400 = vunpack.c.l.b16 %v1368
    %v5401 = vunpack.c.l.b16 %v1369
    %v5402 = vunpack.c.l.b16 %v1370
    %v5403 = vunpack.c.l.b16 %v1371
    %v5404 = vunpack.c.l.b16 %v1372
    %v5405 = vunpack.c.l.b16 %v1373
    %v5406 = vunpack.c.l.b16 %v1374
    %v5407 = vunpack.c.l.b16 %v1375
    %v5408 = vunpack.c.l.b16 %v1376
    %v5409 = vunpack.c.l.b16 %v1377
    %v5410 = vunpack.c.l.b16 %v1378
    %v5411 = vunpack.c.l.b16 %v1379
    %v5412 = vunpack.c.l.b16 %v1380
    %v5413 = vunpack.c.l.b16 %v1381
    %v5414 = vunpack.c.l.b16 %v1382
    %v5415 = vunpack.c.l.b16 %v1383
    %v5416 = vunpack.c.l.b16 %v1384
    %v5417 = vunpack.c.l.b16 %v1385
    %v5418 = vunpack.c.l.b16 %v1386
    %v5419 = vunpack.c.l.b16 %v1387
    %v5420 = vunpack.c.l.b16 %v1388
    %v5421 = vunpack.c.l.b16 %v1389
    %v5422 = vunpack.c.l.b16 %v1390
    %v5423 = vunpack.c.l.b16 %v1391
    %v5424 = vunpack.c.l.b16 %v1392
    %v5425 = vunpack.c.l.b16 %v1393
    %v5426 = vunpack.c.l.b16 %v1394
    %v5427 = vunpack.c.l.b16 %v1395
    %v5428 = vunpack.c.l.b16 %v1396
    %v5429 = vunpack.c.l.b16 %v1397
    %v5430 = vunpack.c.l.b16 %v1398
    %v5431 = vunpack.c.l.b16 %v1399
    %v5432 = vunpack.c.l.b16 %v1400
    %v5433 = vunpack.c.l.b16 %v1401
    %v5434 = vunpack.c.l.b16 %v1402
    %v5435 = vunpack.c.l.b16 %v1403
    %v5436 = vunpack.c.l.b16 %v1404
    %v5437 = vunpack.c.l.b16 %v1405
    %v5438 = vunpack.c.l.b16 %v1406
    %v5439 = vunpack.c.l.b16 %v1407
    %v5440 = vunpack.c.l.b16 %v1408
    %v5441 = vunpack.c.l.b16 %v1409
    %v5442 = vunpack.c.l.b16 %v1410
    %v5443 = vunpack.c.l.b16 %v1411
    %v5444 = vunpack.c.l.b16 %v1412
    %v5445 = vunpack.c.l.b16 %v1413
    %v5446 = vunpack.c.l.b16 %v1414
    %v5447 = vunpack.c.l.b16 %v1415
    %v5448 = vunpack.c.l.b16 %v1416
    %v5449 = vunpack.c.l.b16 %v1417
    %v5450 = vunpack.c.l.b16 %v1418
    %v5451 = vunpack.c.l.b16 %v1419
    %v5452 = vunpack.c.l.b16 %v1420
    %v5453 = vunpack.c.l.b16 %v1421
    %v5454 = vunpack.c.l.b16 %v1422
    %v5455 = vunpack.c.l.b16 %v1423
    %v5456 = vunpack.c.l.b16 %v1424
    %v5457 = vunpack.c.l.b16 %v1425
    %v5458 = vunpack.c.l.b16 %v1426
    %v5459 = vunpack.c.l.b16 %v1427
    %v5460 = vunpack.c.l.b16 %v1428
    %v5461 = vunpack.c.l.b16 %v1429
    %v5462 = vunpack.c.l.b16 %v1430
    %v5463 = vunpack.c.l.b16 %v1431
    %v5464 = vunpack.c.l.b16 %v1432
    %v5465 = vunpack.c.l.b16 %v1433
    %v5466 = vunpack.c.l.b16 %v1434
    %v5467 = vunpack.c.l.b16 %v1435
    %v5468 = vunpack.c.l.b16 %v1436
    %v5469 = vunpack.c.l.b16 %v1437
    %v5470 = vunpack.c.l.b16 %v1438
    %v5471 = vunpack.c.l.b16 %v1439
    %v5472 = vunpack.c.l.b16 %v1440
    %v5473 = vunpack.c.l.b16 %v1441
    %v5474 = vunpack.c.l.b16 %v1442
    %v5475 = vunpack.c.l.b16 %v1443
    %v5476 = vunpack.c.l.b16 %v1444
    %v5477 = vunpack.c.l.b16 %v1445
    %v5478 = vunpack.c.l.b16 %v1446
    %v5479 = vunpack.c.l.b16 %v1447
    %v5480 = vunpack.c.l.b16 %v1448
    %v5481 = vunpack.c.l.b16 %v1449
    %v5482 = vunpack.c.l.b16 %v1450
    %v5483 = vunpack.c.l.b16 %v1451
    %v5484 = vunpack.c.l.b16 %v1452
    %v5485 = vunpack.c.l.b16 %v1453
    %v5486 = vunpack.c.l.b16 %v1454
    %v5487 = vunpack.c.l.b16 %v1455
    %v5488 = vunpack.c.l.b16 %v1456
    %v5489 = vunpack.c.l.b16 %v1457
    %v5490 = vunpack.c.l.b16 %v1458
    %v5491 = vunpack.c.l.b16 %v1459
    %v5492 = vunpack.c.l.b16 %v1460
    %v5493 = vunpack.c.l.b16 %v1461
    %v5494 = vunpack.c.l.b16 %v1462
    %v5495 = vunpack.c.l.b16 %v1463
    %v5496 = vunpack.c.l.b16 %v1464
    %v5497 = vunpack.c.l.b16 %v1465
    %v5498 = vunpack.c.l.b16 %v1466
    %v5499 = vunpack.c.l.b16 %v1467
    %v5500 = vunpack.c.l.b16 %v1468
    %v5501 = vunpack.c.l.b16 %v1469
    %v5502 = vunpack.c.l.b16 %v1470
    %v5503 = vunpack.c.l.b16 %v1471
    %v5504 = vunpack.c.l.b16 %v1472
    %v5505 = vunpack.c.l.b16 %v1473
    %v5506 = vunpack.c.l.b16 %v1474
    %v5507 = vunpack.c.l.b16 %v1475
    %v5508 = vunpack.c.l.b16 %v1476
    %v5509 = vunpack.c.l.b16 %v1477
    %v5510 = vunpack.c.l.b16 %v1478
    %v5511 = vunpack.c.l.b16 %v1479
    %v5512 = vunpack.c.l.b16 %v1480
    %v5513 = vunpack.c.l.b16 %v1481
    %v5514 = vunpack.c.l.b16 %v1482
    %v5515 = vunpack.c.l.b16 %v1483
    %v5516 = vunpack.c.l.b16 %v1484
    %v5517 = vunpack.c.l.b16 %v1485
    %v5518 = vunpack.c.l.b16 %v1486
    %v5519 = vunpack.c.l.b16 %v1487
    %v5520 = vunpack.c.l.b16 %v1488
    %v5521 = vunpack.c.l.b16 %v1489
    %v5522 = vunpack.c.l.b16 %v1490
    %v5523 = vunpack.c.l.b16 %v1491
    %v5524 = vunpack.c.l.b16 %v1492
    %v5525 = vunpack.c.l.b16 %v1493
    %v5526 = vunpack.c.l.b16 %v1494
    %v5527 = vunpack.c.l.b16 %v1495
    %v5528 = vunpack.c.l.b16 %v1496
    %v5529 = vunpack.c.l.b16 %v1497
    %v5530 = vunpack.c.l.b16 %v1498
    %v5531 = vunpack.c.l.b16 %v1499
    %v5532 = vunpack.c.l.b16 %v1500
    %v5533 = vunpack.c.l.b16 %v1501
    %v5534 = vunpack.c.l.b16 %v1502
    %v5535 = vunpack.c.l.b16 %v1503
    %v5536 = vunpack.c.l.b16 %v1504
    %v5537 = vunpack.c.l.b16 %v1505
    %v5538 = vunpack.c.l.b16 %v1506
    %v5539 = vunpack.c.l.b16 %v1507
    %v5540 = vunpack.c.l.b16 %v1508
    %v5541 = vunpack.c.l.b16 %v1509
    %v5542 = vunpack.c.l.b16 %v1510
    %v5543 = vunpack.c.l.b16 %v1511
    %v5544 = vunpack.c.l.b16 %v1512
    %v5545 = vunpack.c.l.b16 %v1513
    %v5546 = vunpack.c.l.b16 %v1514
    %v5547 = vunpack.c.l.b16 %v1515
    %v5548 = vunpack.c.l.b16 %v1516
    %v5549 = vunpack.c.l.b16 %v1517
    %v5550 = vunpack.c.l.b16 %v1518
    %v5551 = vunpack.c.l.b16 %v1519
    %v5552 = vunpack.c.l.b16 %v1520
    %v5553 = vunpack.c.l.b16 %v1521
    %v5554 = vunpack.c.l.b16 %v1522
    %v5555 = vunpack.c.l.b16 %v1523
    %v5556 = vunpack.c.l.b16 %v1524
    %v5557 = vunpack.c.l.b16 %v1525
    %v5558 = vunpack.c.l.b16 %v1526
    %v5559 = vunpack.c.l.b16 %v1527
    %v5560 = vunpack.c.l.b16 %v1528
    %v5561 = vunpack.c.l.b16 %v1529
    %v5562 = vunpack.c.l.b16 %v1530
    %v5563 = vunpack.c.l.b16 %v1531
    %v5564 = vunpack.c.l.b16 %v1532
    %v5565 = vunpack.c.l.b16 %v1533
    %v5566 = vunpack.c.l.b16 %v1534
    %v5567 = vunpack.c.l.b16 %v1535
    %v5568 = vunpack.c.l.b16 %v1536
    %v5569 = vunpack.c.l.b16 %v1537
    %v5570 = vunpack.c.l.b16 %v1538
    %v5571 = vunpack.c.l.b16 %v1539
    %v5572 = vunpack.c.l.b16 %v1540
    %v5573 = vunpack.c.l.b16 %v1541
    %v5574 = vunpack.c.l.b16 %v1542
    %v5575 = vunpack.c.l.b16 %v1543
    %v5576 = vunpack.c.l.b16 %v1544
    %v5577 = vunpack.c.l.b16 %v1545
    %v5578 = vunpack.c.l.b16 %v1546
    %v5579 = vunpack.c.l.b16 %v1547
    %v5580 = vunpack.c.l.b16 %v1548
    %v5581 = vunpack.c.l.b16 %v1549
    %v5582 = vunpack.c.l.b16 %v1550
    %v5583 = vunpack.c.l.b16 %v1551
    %v5584 = vunpack.c.l.b16 %v1552
    %v5585 = vunpack.c.l.b16 %v1553
    %v5586 = vunpack.c.l.b16 %v1554
    %v5587 = vunpack.c.l.b16 %v1555
    %v5588 = vunpack.c.l.b16 %v1556
    %v5589 = vunpack.c.l.b16 %v1557
    %v5590 = vunpack.c.l.b16 %v1558
    %v5591 = vunpack.c.l.b16 %v1559
    %v5592 = vunpack.c.l.b16 %v1560
    %v5593 = vunpack.c.l.b16 %v1561
    %v5594 = vunpack.c.l.b16 %v1562
    %v5595 = vunpack.c.l.b16 %v1563
    %v5596 = vunpack.c.l.b16 %v1564
    %v5597 = vunpack.c.l.b16 %v1565
    %v5598 = vunpack.c.l.b16 %v1566
    %v5599 = vunpack.c.l.b16 %v1567
    %v5600 = vunpack.c.l.b16 %v1568
    %v5601 = vunpack.c.l.b16 %v1569
    %v5602 = vunpack.c.l.b16 %v1570
    %v5603 = vunpack.c.l.b16 %v1571
    %v5604 = vunpack.c.l.b16 %v1572
    %v5605 = vunpack.c.l.b16 %v1573
    %v5606 = vunpack.c.l.b16 %v1574
    %v5607 = vunpack.c.l.b16 %v1575
    %v5608 = vunpack.c.l.b16 %v1576
    %v5609 = vunpack.c.l.b16 %v1577
    %v5610 = vunpack.c.l.b16 %v1578
    %v5611 = vunpack.c.l.b16 %v1579
    %v5612 = vunpack.c.l.b16 %v1580
    %v5613 = vunpack.c.l.b16 %v1581
    %v5614 = vunpack.c.l.b16 %v1582
    %v5615 = vunpack.c.l.b16 %v1583
    %v5616 = vunpack.c.l.b16 %v1584
    %v5617 = vunpack.c.l.b16 %v1585
    %v5618 = vunpack.c.l.b16 %v1586
    %v5619 = vunpack.c.l.b16 %v1587
    %v5620 = vunpack.c.l.b16 %v1588
    %v5621 = vunpack.c.l.b16 %v1589
    %v5622 = vunpack.c.l.b16 %v1590
    %v5623 = vunpack.c.l.b16 %v1591
    %v5624 = vunpack.c.l.b16 %v1592
    %v5625 = vunpack.c.l.b16 %v1593
    %v5626 = vunpack.c.l.b16 %v1594
    %v5627 = vunpack.c.l.b16 %v1595
    %v5628 = vunpack.c.l.b16 %v1596
    %v5629 = vunpack.c.l.b16 %v1597
    %v5630 = vunpack.c.l.b16 %v1598
    %v5631 = vunpack.c.l.b16 %v1599
    %v5632 = vunpack.c.l.b16 %v1600
    %v5633 = vunpack.c.l.b16 %v1601
    %v5634 = vunpack.c.l.b16 %v1602
    %v5635 = vunpack.c.l.b16 %v1603
    %v5636 = vunpack.c.l.b16 %v1604
    %v5637 = vunpack.c.l.b16 %v1605
    %v5638 = vunpack.c.l.b16 %v1606
    %v5639 = vunpack.c.l.b16 %v1607
    %v5640 = vunpack.c.l.b16 %v1608
    %v5641 = vunpack.c.l.b16 %v1609
    %v5642 = vunpack.c.l.b16 %v1610
    %v5643 = vunpack.c.l.b16 %v1611
    %v5644 = vunpack.c.l.b16 %v1612
    %v5645 = vunpack.c.l.b16 %v1613
    %v5646 = vunpack.c.l.b16 %v1614
    %v5647 = vunpack.c.l.b16 %v1615
    %v5648 = vunpack.c.l.b16 %v1616
    %v5649 = vunpack.c.l.b16 %v1617
    %v5650 = vunpack.c.l.b16 %v1618
    %v5651 = vunpack.c.l.b16 %v1619
    %v5652 = vunpack.c.l.b16 %v1620
    %v5653 = vunpack.c.l.b16 %v1621
    %v5654 = vunpack.c.l.b16 %v1622
    %v5655 = vunpack.c.l.b16 %v1623
    %v5656 = vunpack.c.l.b16 %v1624
    %v5657 = vunpack.c.l.b16 %v1625
    %v5658 = vunpack.c.l.b16 %v1626
    %v5659 = vunpack.c.l.b16 %v1627
    %v5660 = vunpack.c.l.b16 %v1628
    %v5661 = vunpack.c.l.b16 %v1629
    %v5662 = vunpack.c.l.b16 %v1630
    %v5663 = vunpack.c.l.b16 %v1631
    %v5664 = vunpack.c.l.b16 %v1632
    %v5665 = vunpack.c.l.b16 %v1633
    %v5666 = vunpack.c.l.b16 %v1634
    %v5667 = vunpack.c.l.b16 %v1635
    %v5668 = vunpack.c.l.b16 %v1636
    %v5669 = vunpack.c.l.b16 %v1637
    %v5670 = vunpack.c.l.b16 %v1638
    %v5671 = vunpack.c.l.b16 %v1639
    %v5672 = vunpack.c.l.b16 %v1640
    %v5673 = vunpack.c.l.b16 %v1641
    %v5674 = vunpack.c.l.b16 %v1642
    %v5675 = vunpack.c.l.b16 %v1643
    %v5676 = vunpack.c.l.b16 %v1644
    %v5677 = vunpack.c.l.b16 %v1645
    %v5678 = vunpack.c.l.b16 %v1646
    %v5679 = vunpack.c.l.b16 %v1647
    %v5680 = vunpack.c.l.b16 %v1648
    %v5681 = vunpack.c.l.b16 %v1649
    %v5682 = vunpack.c.l.b16 %v1650
    %v5683 = vunpack.c.l.b16 %v1651
    %v5684 = vunpack.c.l.b16 %v1652
    %v5685 = vunpack.c.l.b16 %v1653
    %v5686 = vunpack.c.l.b16 %v1654
    %v5687 = vunpack.c.l.b16 %v1655
    %v5688 = vunpack.c.l.b16 %v1656
    %v5689 = vunpack.c.l.b16 %v1657
    %v5690 = vunpack.c.l.b16 %v1658
    %v5691 = vunpack.c.l.b16 %v1659
    %v5692 = vunpack.c.l.b16 %v1660
    %v5693 = vunpack.c.l.b16 %v1661
    %v5694 = vunpack.c.l.b16 %v1662
    %v5695 = vunpack.c.l.b16 %v1663
    %v5696 = vunpack.c.l.b16 %v1664
    %v5697 = vunpack.c.l.b16 %v1665
    %v5698 = vunpack.c.l.b16 %v1666
    %v5699 = vunpack.c.l.b16 %v1667
    %v5700 = vunpack.c.l.b16 %v1668
    %v5701 = vunpack.c.l.b16 %v1669
    %v5702 = vunpack.c.l.b16 %v1670
    %v5703 = vunpack.c.l.b16 %v1671
    %v5704 = vunpack.c.l.b16 %v1672
    %v5705 = vunpack.c.l.b16 %v1673
    %v5706 = vunpack.c.l.b16 %v1674
    %v5707 = vunpack.c.l.b16 %v1675
    %v5708 = vunpack.c.l.b16 %v1676
    %v5709 = vunpack.c.l.b16 %v1677
    %v5710 = vunpack.c.l.b16 %v1678
    %v5711 = vunpack.c.l.b16 %v1679
    %v5712 = vunpack.c.l.b16 %v1680
    %v5713 = vunpack.c.l.b16 %v1681
    %v5714 = vunpack.c.l.b16 %v1682
    %v5715 = vunpack.c.l.b16 %v1683
    %v5716 = vunpack.c.l.b16 %v1684
    %v5717 = vunpack.c.l.b16 %v1685
    %v5718 = vunpack.c.l.b16 %v1686
    %v5719 = vunpack.c.l.b16 %v1687
    %v5720 = vunpack.c.l.b16 %v1688
    %v5721 = vunpack.c.l.b16 %v1689
    %v5722 = vunpack.c.l.b16 %v1690
    %v5723 = vunpack.c.l.b16 %v1691
    %v5724 = vunpack.c.l.b16 %v1692
    %v5725 = vunpack.c.l.b16 %v1693
    %v5726 = vunpack.c.l.b16 %v1694
    %v5727 = vunpack.c.l.b16 %v1695
    %v5728 = vunpack.c.l.b16 %v1696
    %v5729 = vunpack.c.l.b16 %v1697
    %v5730 = vunpack.c.l.b16 %v1698
    %v5731 = vunpack.c.l.b16 %v1699
    %v5732 = vunpack.c.l.b16 %v1700
    %v5733 = vunpack.c.l.b16 %v1701
    %v5734 = vunpack.c.l.b16 %v1702
    %v5735 = vunpack.c.l.b16 %v1703
    %v5736 = vunpack.c.l.b16 %v1704
    %v5737 = vunpack.c.l.b16 %v1705
    %v5738 = vunpack.c.l.b16 %v1706
    %v5739 = vunpack.c.l.b16 %v1707
    %v5740 = vunpack.c.l.b16 %v1708
    %v5741 = vunpack.c.l.b16 %v1709
    %v5742 = vunpack.c.l.b16 %v1710
    %v5743 = vunpack.c.l.b16 %v1711
    %v5744 = vunpack.c.l.b16 %v1712
    %v5745 = vunpack.c.l.b16 %v1713
    %v5746 = vunpack.c.l.b16 %v1714
    %v5747 = vunpack.c.l.b16 %v1715
    %v5748 = vunpack.c.l.b16 %v1716
    %v5749 = vunpack.c.l.b16 %v1717
    %v5750 = vunpack.c.l.b16 %v1718
    %v5751 = vunpack.c.l.b16 %v1719
    %v5752 = vunpack.c.l.b16 %v1720
    %v5753 = vunpack.c.l.b16 %v1721
    %v5754 = vunpack.c.l.b16 %v1722
    %v5755 = vunpack.c.l.b16 %v1723
    %v5756 = vunpack.c.l.b16 %v1724
    %v5757 = vunpack.c.l.b16 %v1725
    %v5758 = vunpack.c.l.b16 %v1726
    %v5759 = vunpack.c.l.b16 %v1727
    %v5760 = vunpack.c.l.b16 %v1728
    %v5761 = vunpack.c.l.b16 %v1729
    %v5762 = vunpack.c.l.b16 %v1730
    %v5763 = vunpack.c.l.b16 %v1731
    %v5764 = vunpack.c.l.b16 %v1732
    %v5765 = vunpack.c.l.b16 %v1733
    %v5766 = vunpack.c.l.b16 %v1734
    %v5767 = vunpack.c.l.b16 %v1735
    %v5768 = vunpack.c.l.b16 %v1736
    %v5769 = vunpack.c.l.b16 %v1737
    %v5770 = vunpack.c.l.b16 %v1738
    %v5771 = vunpack.c.l.b16 %v1739
    %v5772 = vunpack.c.l.b16 %v1740
    %v5773 = vunpack.c.l.b16 %v1741
    %v5774 = vunpack.c.l.b16 %v1742
    %v5775 = vunpack.c.l.b16 %v1743
    %v5776 = vunpack.c.l.b16 %v1744
    %v5777 = vunpack.c.l.b16 %v1745
    %v5778 = vunpack.c.l.b16 %v1746
    %v5779 = vunpack.c.l.b16 %v1747
    %v5780 = vunpack.c.l.b16 %v1748
    %v5781 = vunpack.c.l.b16 %v1749
    %v5782 = vunpack.c.l.b16 %v1750
    %v5783 = vunpack.c.l.b16 %v1751
    %v5784 = vunpack.c.l.b16 %v1752
    %v5785 = vunpack.c.l.b16 %v1753
    %v5786 = vunpack.c.l.b16 %v1754
    %v5787 = vunpack.c.l.b16 %v1755
    %v5788 = vunpack.c.l.b16 %v1756
    %v5789 = vunpack.c.l.b16 %v1757
    %v5790 = vunpack.c.l.b16 %v1758
    %v5791 = vunpack.c.l.b16 %v1759
    %v5792 = vunpack.c.l.b16 %v1760
    %v5793 = vunpack.c.l.b16 %v1761
    %v5794 = vunpack.c.l.b16 %v1762
    %v5795 = vunpack.c.l.b16 %v1763
    %v5796 = vunpack.c.l.b16 %v1764
    %v5797 = vunpack.c.l.b16 %v1765
    %v5798 = vunpack.c.l.b16 %v1766
    %v5799 = vunpack.c.l.b16 %v1767
    %v5800 = vunpack.c.l.b16 %v1768
    %v5801 = vunpack.c.l.b16 %v1769
    %v5802 = vpack.c.b16 %v4267, %v4266
    %v5803 = vpack.c.b16 %v4269, %v4268
    %v5804 = vpack.c.b16 %v4271, %v4270
    %v5805 = vpack.c.b16 %v4273, %v4272
    %v5806 = vpack.c.b16 %v4275, %v4274
    %v5807 = vpack.c.b16 %v4277, %v4276
    %v5808 = vpack.c.b16 %v4279, %v4278
    %v5809 = vpack.c.b16 %v4281, %v4280
    %v5810 = vpack.c.b16 %v4283, %v4282
    %v5811 = vpack.c.b16 %v4285, %v4284
    %v5812 = vpack.c.b16 %v4287, %v4286
    %v5813 = vpack.c.b16 %v4289, %v4288
    %v5814 = vpack.c.b16 %v4291, %v4290
    %v5815 = vpack.c.b16 %v4293, %v4292
    %v5816 = vpack.c.b16 %v4295, %v4294
    %v5817 = vpack.c.b16 %v4297, %v4296
    %v5818 = vpack.c.b16 %v4299, %v4298
    %v5819 = vpack.c.b16 %v4301, %v4300
    %v5820 = vpack.c.b16 %v4303, %v4302
    %v5821 = vpack.c.b16 %v4305, %v4304
    %v5822 = vpack.c.b16 %v4307, %v4306
    %v5823 = vpack.c.b16 %v4309, %v4308
    %v5824 = vpack.c.b16 %v4311, %v4310
    %v5825 = vpack.c.b16 %v4313, %v4312
    %v5826 = vpack.c.b16 %v4315, %v4314
    %v5827 = vpack.c.b16 %v4317, %v4316
    %v5828 = vpack.c.b16 %v4319, %v4318
    %v5829 = vpack.c.b16 %v4321, %v4320
    %v5830 = vpack.c.b16 %v4323, %v4322
    %v5831 = vpack.c.b16 %v4325, %v4324
    %v5832 = vpack.c.b16 %v4327, %v4326
    %v5833 = vpack.c.b16 %v4329, %v4328
    %v5834 = vpack.c.b16 %v4331, %v4330
    %v5835 = vpack.c.b16 %v4333, %v4332
    %v5836 = vpack.c.b16 %v4335, %v4334
    %v5837 = vpack.c.b16 %v4337, %v4336
    %v5838 = vpack.c.b16 %v4339, %v4338
    %v5839 = vpack.c.b16 %v4341, %v4340
    %v5840 = vpack.c.b16 %v4343, %v4342
    %v5841 = vpack.c.b16 %v4345, %v4344
    %v5842 = vpack.c.b16 %v4347, %v4346
    %v5843 = vpack.c.b16 %v4349, %v4348
    %v5844 = vpack.c.b16 %v4351, %v4350
    %v5845 = vpack.c.b16 %v4353, %v4352
    %v5846 = vpack.c.b16 %v4355, %v4354
    %v5847 = vpack.c.b16 %v4357, %v4356
    %v5848 = vpack.c.b16 %v4359, %v4358
    %v5849 = vpack.c.b16 %v4361, %v4360
    %v5850 = vpack.c.b16 %v4363, %v4362
    %v5851 = vpack.c.b16 %v4365, %v4364
    %v5852 = vpack.c.b16 %v4367, %v4366
    %v5853 = vpack.c.b16 %v4369, %v4368
    %v5854 = vpack.c.b16 %v4371, %v4370
    %v5855 = vpack.c.b16 %v4373, %v4372
    %v5856 = vpack.c.b16 %v4375, %v4374
    %v5857 = vpack.c.b16 %v4377, %v4376
    %v5858 = vpack.c.b16 %v4379, %v4378
    %v5859 = vpack.c.b16 %v4381, %v4380
    %v5860 = vpack.c.b16 %v4383, %v4382
    %v5861 = vpack.c.b16 %v4385, %v4384
    %v5862 = vpack.c.b16 %v4387, %v4386
    %v5863 = vpack.c.b16 %v4389, %v4388
    %v5864 = vpack.c.b16 %v4391, %v4390
    %v5865 = vpack.c.b16 %v4393, %v4392
    %v5866 = vpack.c.b16 %v4395, %v4394
    %v5867 = vpack.c.b16 %v4397, %v4396
    %v5868 = vpack.c.b16 %v4399, %v4398
    %v5869 = vpack.c.b16 %v4401, %v4400
    %v5870 = vpack.c.b16 %v4403, %v4402
    %v5871 = vpack.c.b16 %v4405, %v4404
    %v5872 = vpack.c.b16 %v4407, %v4406
    %v5873 = vpack.c.b16 %v4409, %v4408
    %v5874 = vpack.c.b16 %v4411, %v4410
    %v5875 = vpack.c.b16 %v4413, %v4412
    %v5876 = vpack.c.b16 %v4415, %v4414
    %v5877 = vpack.c.b16 %v4417, %v4416
    %v5878 = vpack.c.b16 %v4419, %v4418
    %v5879 = vpack.c.b16 %v4421, %v4420
    %v5880 = vpack.c.b16 %v4423, %v4422
    %v5881 = vpack.c.b16 %v4425, %v4424
    %v5882 = vpack.c.b16 %v4427, %v4426
    %v5883 = vpack.c.b16 %v4429, %v4428
    %v5884 = vpack.c.b16 %v4431, %v4430
    %v5885 = vpack.c.b16 %v4433, %v4432
    %v5886 = vpack.c.b16 %v4435, %v4434
    %v5887 = vpack.c.b16 %v4437, %v4436
    %v5888 = vpack.c.b16 %v4439, %v4438
    %v5889 = vpack.c.b16 %v4441, %v4440
    %v5890 = vpack.c.b16 %v4443, %v4442
    %v5891 = vpack.c.b16 %v4445, %v4444
    %v5892 = vpack.c.b16 %v4447, %v4446
    %v5893 = vpack.c.b16 %v4449, %v4448
    %v5894 = vpack.c.b16 %v4451, %v4450
    %v5895 = vpack.c.b16 %v4453, %v4452
    %v5896 = vpack.c.b16 %v4455, %v4454
    %v5897 = vpack.c.b16 %v4457, %v4456
    %v5898 = vpack.c.b16 %v4459, %v4458
    %v5899 = vpack.c.b16 %v4461, %v4460
    %v5900 = vpack.c.b16 %v4463, %v4462
    %v5901 = vpack.c.b16 %v4465, %v4464
    %v5902 = vpack.c.b16 %v4467, %v4466
    %v5903 = vpack.c.b16 %v4469, %v4468
    %v5904 = vpack.c.b16 %v4471, %v4470
    %v5905 = vpack.c.b16 %v4473, %v4472
    %v5906 = vpack.c.b16 %v4475, %v4474
    %v5907 = vpack.c.b16 %v4477, %v4476
    %v5908 = vpack.c.b16 %v4479, %v4478
    %v5909 = vpack.c.b16 %v4481, %v4480
    %v5910 = vpack.c.b16 %v4483, %v4482
    %v5911 = vpack.c.b16 %v4485, %v4484
    %v5912 = vpack.c.b16 %v4487, %v4486
    %v5913 = vpack.c.b16 %v4489, %v4488
    %v5914 = vpack.c.b16 %v4491, %v4490
    %v5915 = vpack.c.b16 %v4493, %v4492
    %v5916 = vpack.c.b16 %v4495, %v4494
    %v5917 = vpack.c.b16 %v4497, %v4496
    %v5918 = vpack.c.b16 %v4499, %v4498
    %v5919 = vpack.c.b16 %v4501, %v4500
    %v5920 = vpack.c.b16 %v4503, %v4502
    %v5921 = vpack.c.b16 %v4505, %v4504
    %v5922 = vpack.c.b16 %v4507, %v4506
    %v5923 = vpack.c.b16 %v4509, %v4508
    %v5924 = vpack.c.b16 %v4511, %v4510
    %v5925 = vpack.c.b16 %v4513, %v4512
    %v5926 = vpack.c.b16 %v4515, %v4514
    %v5927 = vpack.c.b16 %v4517, %v4516
    %v5928 = vpack.c.b16 %v4519, %v4518
    %v5929 = vpack.c.b16 %v4521, %v4520
    %v5930 = vpack.c.b16 %v4523, %v4522
    %v5931 = vpack.c.b16 %v4525, %v4524
    %v5932 = vpack.c.b16 %v4527, %v4526
    %v5933 = vpack.c.b16 %v4529, %v4528
    %v5934 = vpack.c.b16 %v4531, %v4530
    %v5935 = vpack.c.b16 %v4533, %v4532
    %v5936 = vpack.c.b16 %v4535, %v4534
    %v5937 = vpack.c.b16 %v4537, %v4536
    %v5938 = vpack.c.b16 %v4539, %v4538
    %v5939 = vpack.c.b16 %v4541, %v4540
    %v5940 = vpack.c.b16 %v4543, %v4542
    %v5941 = vpack.c.b16 %v4545, %v4544
    %v5942 = vpack.c.b16 %v4547, %v4546
    %v5943 = vpack.c.b16 %v4549, %v4548
    %v5944 = vpack.c.b16 %v4551, %v4550
    %v5945 = vpack.c.b16 %v4553, %v4552
    %v5946 = vpack.c.b16 %v4555, %v4554
    %v5947 = vpack.c.b16 %v4557, %v4556
    %v5948 = vpack.c.b16 %v4559, %v4558
    %v5949 = vpack.c.b16 %v4561, %v4560
    %v5950 = vpack.c.b16 %v4563, %v4562
    %v5951 = vpack.c.b16 %v4565, %v4564
    %v5952 = vpack.c.b16 %v4567, %v4566
    %v5953 = vpack.c.b16 %v4569, %v4568
    %v5954 = vpack.c.b16 %v4571, %v4570
    %v5955 = vpack.c.b16 %v4573, %v4572
    %v5956 = vpack.c.b16 %v4575, %v4574
    %v5957 = vpack.c.b16 %v4577, %v4576
    %v5958 = vpack.c.b16 %v4579, %v4578
    %v5959 = vpack.c.b16 %v4581, %v4580
    %v5960 = vpack.c.b16 %v4583, %v4582
    %v5961 = vpack.c.b16 %v4585, %v4584
    %v5962 = vpack.c.b16 %v4587, %v4586
    %v5963 = vpack.c.b16 %v4589, %v4588
    %v5964 = vpack.c.b16 %v4591, %v4590
    %v5965 = vpack.c.b16 %v4593, %v4592
    %v5966 = vpack.c.b16 %v4595, %v4594
    %v5967 = vpack.c.b16 %v4597, %v4596
    %v5968 = vpack.c.b16 %v4599, %v4598
    %v5969 = vpack.c.b16 %v4601, %v4600
    %v5970 = vpack.c.b16 %v4603, %v4602
    %v5971 = vpack.c.b16 %v4605, %v4604
    %v5972 = vpack.c.b16 %v4607, %v4606
    %v5973 = vpack.c.b16 %v4609, %v4608
    %v5974 = vpack.c.b16 %v4611, %v4610
    %v5975 = vpack.c.b16 %v4613, %v4612
    %v5976 = vpack.c.b16 %v4615, %v4614
    %v5977 = vpack.c.b16 %v4617, %v4616
    %v5978 = vpack.c.b16 %v4619, %v4618
    %v5979 = vpack.c.b16 %v4621, %v4620
    %v5980 = vpack.c.b16 %v4623, %v4622
    %v5981 = vpack.c.b16 %v4625, %v4624
    %v5982 = vpack.c.b16 %v4627, %v4626
    %v5983 = vpack.c.b16 %v4629, %v4628
    %v5984 = vpack.c.b16 %v4631, %v4630
    %v5985 = vpack.c.b16 %v4633, %v4632
    %v5986 = vpack.c.b16 %v4635, %v4634
    %v5987 = vpack.c.b16 %v4637, %v4636
    %v5988 = vpack.c.b16 %v4639, %v4638
    %v5989 = vpack.c.b16 %v4641, %v4640
    %v5990 = vpack.c.b16 %v4643, %v4642
    %v5991 = vpack.c.b16 %v4645, %v4644
    %v5992 = vpack.c.b16 %v4647, %v4646
    %v5993 = vpack.c.b16 %v4649, %v4648
    %v5994 = vpack.c.b16 %v4651, %v4650
    %v5995 = vpack.c.b16 %v4653, %v4652
    %v5996 = vpack.c.b16 %v4655, %v4654
    %v5997 = vpack.c.b16 %v4657, %v4656
    %v5998 = vpack.c.b16 %v4659, %v4658
    %v5999 = vpack.c.b16 %v4661, %v4660
    %v6000 = vpack.c.b16 %v4663, %v4662
    %v6001 = vpack.c.b16 %v4665, %v4664
    %v6002 = vpack.c.b16 %v4667, %v4666
    %v6003 = vpack.c.b16 %v4669, %v4668
    %v6004 = vpack.c.b16 %v4671, %v4670
    %v6005 = vpack.c.b16 %v4673, %v4672
    %v6006 = vpack.c.b16 %v4675, %v4674
    %v6007 = vpack.c.b16 %v4677, %v4676
    %v6008 = vpack.c.b16 %v4679, %v4678
    %v6009 = vpack.c.b16 %v4681, %v4680
    %v6010 = vpack.c.b16 %v4683, %v4682
    %v6011 = vpack.c.b16 %v4685, %v4684
    %v6012 = vpack.c.b16 %v4687, %v4686
    %v6013 = vpack.c.b16 %v4689, %v4688
    %v6014 = vpack.c.b16 %v4691, %v4690
    %v6015 = vpack.c.b16 %v4693, %v4692
    %v6016 = vpack.c.b16 %v4695, %v4694
    %v6017 = vpack.c.b16 %v4697, %v4696
    %v6018 = vpack.c.b16 %v4699, %v4698
    %v6019 = vpack.c.b16 %v4701, %v4700
    %v6020 = vpack.c.b16 %v4703, %v4702
    %v6021 = vpack.c.b16 %v4705, %v4704
    %v6022 = vpack.c.b16 %v4707, %v4706
    %v6023 = vpack.c.b16 %v4709, %v4708
    %v6024 = vpack.c.b16 %v4711, %v4710
    %v6025 = vpack.c.b16 %v4713, %v4712
    %v6026 = vpack.c.b16 %v4715, %v4714
    %v6027 = vpack.c.b16 %v4717, %v4716
    %v6028 = vpack.c.b16 %v4719, %v4718
    %v6029 = vpack.c.b16 %v4721, %v4720
    %v6030 = vpack.c.b16 %v4723, %v4722
    %v6031 = vpack.c.b16 %v4725, %v4724
    %v6032 = vpack.c.b16 %v4727, %v4726
    %v6033 = vpack.c.b16 %v4729, %v4728
    %v6034 = vpack.c.b16 %v4731, %v4730
    %v6035 = vpack.c.b16 %v4733, %v4732
    %v6036 = vpack.c.b16 %v4735, %v4734
    %v6037 = vpack.c.b16 %v4737, %v4736
    %v6038 = vpack.c.b16 %v4739, %v4738
    %v6039 = vpack.c.b16 %v4741, %v4740
    %v6040 = vpack.c.b16 %v4743, %v4742
    %v6041 = vpack.c.b16 %v4745, %v4744
    %v6042 = vpack.c.b16 %v4747, %v4746
    %v6043 = vpack.c.b16 %v4749, %v4748
    %v6044 = vpack.c.b16 %v4751, %v4750
    %v6045 = vpack.c.b16 %v4753, %v4752
    %v6046 = vpack.c.b16 %v4755, %v4754
    %v6047 = vpack.c.b16 %v4757, %v4756
    %v6048 = vpack.c.b16 %v4759, %v4758
    %v6049 = vpack.c.b16 %v4761, %v4760
    %v6050 = vpack.c.b16 %v4763, %v4762
    %v6051 = vpack.c.b16 %v4765, %v4764
    %v6052 = vpack.c.b16 %v4767, %v4766
    %v6053 = vpack.c.b16 %v4769, %v4768
    %v6054 = vpack.c.b16 %v4771, %v4770
    %v6055 = vpack.c.b16 %v4773, %v4772
    %v6056 = vpack.c.b16 %v4775, %v4774
    %v6057 = vpack.c.b16 %v4777, %v4776
    %v6058 = vpack.c.b16 %v4779, %v4778
    %v6059 = vpack.c.b16 %v4781, %v4780
    %v6060 = vpack.c.b16 %v4783, %v4782
    %v6061 = vpack.c.b16 %v4785, %v4784
    %v6062 = vpack.c.b16 %v4787, %v4786
    %v6063 = vpack.c.b16 %v4789, %v4788
    %v6064 = vpack.c.b16 %v4791, %v4790
    %v6065 = vpack.c.b16 %v4793, %v4792
    %v6066 = vpack.c.b16 %v4795, %v4794
    %v6067 = vpack.c.b16 %v4797, %v4796
    %v6068 = vpack.c.b16 %v4799, %v4798
    %v6069 = vpack.c.b16 %v4801, %v4800
    %v6070 = vpack.c.b16 %v4803, %v4802
    %v6071 = vpack.c.b16 %v4805, %v4804
    %v6072 = vpack.c.b16 %v4807, %v4806
    %v6073 = vpack.c.b16 %v4809, %v4808
    %v6074 = vpack.c.b16 %v4811, %v4810
    %v6075 = vpack.c.b16 %v4813, %v4812
    %v6076 = vpack.c.b16 %v4815, %v4814
    %v6077 = vpack.c.b16 %v4817, %v4816
    %v6078 = vpack.c.b16 %v4819, %v4818
    %v6079 = vpack.c.b16 %v4821, %v4820
    %v6080 = vpack.c.b16 %v4823, %v4822
    %v6081 = vpack.c.b16 %v4825, %v4824
    %v6082 = vpack.c.b16 %v4827, %v4826
    %v6083 = vpack.c.b16 %v4829, %v4828
    %v6084 = vpack.c.b16 %v4831, %v4830
    %v6085 = vpack.c.b16 %v4833, %v4832
    %v6086 = vpack.c.b16 %v4835, %v4834
    %v6087 = vpack.c.b16 %v4837, %v4836
    %v6088 = vpack.c.b16 %v4839, %v4838
    %v6089 = vpack.c.b16 %v4841, %v4840
    %v6090 = vpack.c.b16 %v4843, %v4842
    %v6091 = vpack.c.b16 %v4845, %v4844
    %v6092 = vpack.c.b16 %v4847, %v4846
    %v6093 = vpack.c.b16 %v4849, %v4848
    %v6094 = vpack.c.b16 %v4851, %v4850
    %v6095 = vpack.c.b16 %v4853, %v4852
    %v6096 = vpack.c.b16 %v4855, %v4854
    %v6097 = vpack.c.b16 %v4857, %v4856
    %v6098 = vpack.c.b16 %v4859, %v4858
    %v6099 = vpack.c.b16 %v4861, %v4860
    %v6100 = vpack.c.b16 %v4863, %v4862
    %v6101 = vpack.c.b16 %v4865, %v4864
    %v6102 = vpack.c.b16 %v4867, %v4866
    %v6103 = vpack.c.b16 %v4869, %v4868
    %v6104 = vpack.c.b16 %v4871, %v4870
    %v6105 = vpack.c.b16 %v4873, %v4872
    %v6106 = vpack.c.b16 %v4875, %v4874
    %v6107 = vpack.c.b16 %v4877, %v4876
    %v6108 = vpack.c.b16 %v4879, %v4878
    %v6109 = vpack.c.b16 %v4881, %v4880
    %v6110 = vpack.c.b16 %v4883, %v4882
    %v6111 = vpack.c.b16 %v4885, %v4884
    %v6112 = vpack.c.b16 %v4887, %v4886
    %v6113 = vpack.c.b16 %v4889, %v4888
    %v6114 = vpack.c.b16 %v4891, %v4890
    %v6115 = vpack.c.b16 %v4893, %v4892
    %v6116 = vpack.c.b16 %v4895, %v4894
    %v6117 = vpack.c.b16 %v4897, %v4896
    %v6118 = vpack.c.b16 %v4899, %v4898
    %v6119 = vpack.c.b16 %v4901, %v4900
    %v6120 = vpack.c.b16 %v4903, %v4902
    %v6121 = vpack.c.b16 %v4905, %v4904
    %v6122 = vpack.c.b16 %v4907, %v4906
    %v6123 = vpack.c.b16 %v4909, %v4908
    %v6124 = vpack.c.b16 %v4911, %v4910
    %v6125 = vpack.c.b16 %v4913, %v4912
    %v6126 = vpack.c.b16 %v4915, %v4914
    %v6127 = vpack.c.b16 %v4917, %v4916
    %v6128 = vpack.c.b16 %v4919, %v4918
    %v6129 = vpack.c.b16 %v4921, %v4920
    %v6130 = vpack.c.b16 %v4923, %v4922
    %v6131 = vpack.c.b16 %v4925, %v4924
    %v6132 = vpack.c.b16 %v4927, %v4926
    %v6133 = vpack.c.b16 %v4929, %v4928
    %v6134 = vpack.c.b16 %v4931, %v4930
    %v6135 = vpack.c.b16 %v4933, %v4932
    %v6136 = vpack.c.b16 %v4935, %v4934
    %v6137 = vpack.c.b16 %v4937, %v4936
    %v6138 = vpack.c.b16 %v4939, %v4938
    %v6139 = vpack.c.b16 %v4941, %v4940
    %v6140 = vpack.c.b16 %v4943, %v4942
    %v6141 = vpack.c.b16 %v4945, %v4944
    %v6142 = vpack.c.b16 %v4947, %v4946
    %v6143 = vpack.c.b16 %v4949, %v4948
    %v6144 = vpack.c.b16 %v4951, %v4950
    %v6145 = vpack.c.b16 %v4953, %v4952
    %v6146 = vpack.c.b16 %v4955, %v4954
    %v6147 = vpack.c.b16 %v4957, %v4956
    %v6148 = vpack.c.b16 %v4959, %v4958
    %v6149 = vpack.c.b16 %v4961, %v4960
    %v6150 = vpack.c.b16 %v4963, %v4962
    %v6151 = vpack.c.b16 %v4965, %v4964
    %v6152 = vpack.c.b16 %v4967, %v4966
    %v6153 = vpack.c.b16 %v4969, %v4968
    %v6154 = vpack.c.b16 %v4971, %v4970
    %v6155 = vpack.c.b16 %v4973, %v4972
    %v6156 = vpack.c.b16 %v4975, %v4974
    %v6157 = vpack.c.b16 %v4977, %v4976
    %v6158 = vpack.c.b16 %v4979, %v4978
    %v6159 = vpack.c.b16 %v4981, %v4980
    %v6160 = vpack.c.b16 %v4983, %v4982
    %v6161 = vpack.c.b16 %v4985, %v4984
    %v6162 = vpack.c.b16 %v4987, %v4986
    %v6163 = vpack.c.b16 %v4989, %v4988
    %v6164 = vpack.c.b16 %v4991, %v4990
    %v6165 = vpack.c.b16 %v4993, %v4992
    %v6166 = vpack.c.b16 %v4995, %v4994
    %v6167 = vpack.c.b16 %v4997, %v4996
    %v6168 = vpack.c.b16 %v4999, %v4998
    %v6169 = vpack.c.b16 %v5001, %v5000
    %v6170 = vpack.c.b16 %v5003, %v5002
    %v6171 = vpack.c.b16 %v5005, %v5004
    %v6172 = vpack.c.b16 %v5007, %v5006
    %v6173 = vpack.c.b16 %v5009, %v5008
    %v6174 = vpack.c.b16 %v5011, %v5010
    %v6175 = vpack.c.b16 %v5013, %v5012
    %v6176 = vpack.c.b16 %v5015, %v5014
    %v6177 = vpack.c.b16 %v5017, %v5016
    %v6178 = vpack.c.b16 %v5019, %v5018
    %v6179 = vpack.c.b16 %v5021, %v5020
    %v6180 = vpack.c.b16 %v5023, %v5022
    %v6181 = vpack.c.b16 %v5025, %v5024
    %v6182 = vpack.c.b16 %v5027, %v5026
    %v6183 = vpack.c.b16 %v5029, %v5028
    %v6184 = vpack.c.b16 %v5031, %v5030
    %v6185 = vpack.c.b16 %v5033, %v5032
    %v6186 = vpack.c.b16 %v5035, %v5034
    %v6187 = vpack.c.b16 %v5037, %v5036
    %v6188 = vpack.c.b16 %v5039, %v5038
    %v6189 = vpack.c.b16 %v5041, %v5040
    %v6190 = vpack.c.b16 %v5043, %v5042
    %v6191 = vpack.c.b16 %v5045, %v5044
    %v6192 = vpack.c.b16 %v5047, %v5046
    %v6193 = vpack.c.b16 %v5049, %v5048
    %v6194 = vpack.c.b16 %v5051, %v5050
    %v6195 = vpack.c.b16 %v5053, %v5052
    %v6196 = vpack.c.b16 %v5055, %v5054
    %v6197 = vpack.c.b16 %v5057, %v5056
    %v6198 = vpack.c.b16 %v5059, %v5058
    %v6199 = vpack.c.b16 %v5061, %v5060
    %v6200 = vpack.c.b16 %v5063, %v5062
    %v6201 = vpack.c.b16 %v5065, %v5064
    %v6202 = vpack.c.b16 %v5067, %v5066
    %v6203 = vpack.c.b16 %v5069, %v5068
    %v6204 = vpack.c.b16 %v5071, %v5070
    %v6205 = vpack.c.b16 %v5073, %v5072
    %v6206 = vpack.c.b16 %v5075, %v5074
    %v6207 = vpack.c.b16 %v5077, %v5076
    %v6208 = vpack.c.b16 %v5079, %v5078
    %v6209 = vpack.c.b16 %v5081, %v5080
    %v6210 = vpack.c.b16 %v5083, %v5082
    %v6211 = vpack.c.b16 %v5085, %v5084
    %v6212 = vpack.c.b16 %v5087, %v5086
    %v6213 = vpack.c.b16 %v5089, %v5088
    %v6214 = vpack.c.b16 %v5091, %v5090
    %v6215 = vpack.c.b16 %v5093, %v5092
    %v6216 = vpack.c.b16 %v5095, %v5094
    %v6217 = vpack.c.b16 %v5097, %v5096
    %v6218 = vpack.c.b16 %v5099, %v5098
    %v6219 = vpack.c.b16 %v5101, %v5100
    %v6220 = vpack.c.b16 %v5103, %v5102
    %v6221 = vpack.c.b16 %v5105, %v5104
    %v6222 = vpack.c.b16 %v5107, %v5106
    %v6223 = vpack.c.b16 %v5109, %v5108
    %v6224 = vpack.c.b16 %v5111, %v5110
    %v6225 = vpack.c.b16 %v5113, %v5112
    %v6226 = vpack.c.b16 %v5115, %v5114
    %v6227 = vpack.c.b16 %v5117, %v5116
    %v6228 = vpack.c.b16 %v5119, %v5118
    %v6229 = vpack.c.b16 %v5121, %v5120
    %v6230 = vpack.c.b16 %v5123, %v5122
    %v6231 = vpack.c.b16 %v5125, %v5124
    %v6232 = vpack.c.b16 %v5127, %v5126
    %v6233 = vpack.c.b16 %v5129, %v5128
    %v6234 = vpack.c.b16 %v5131, %v5130
    %v6235 = vpack.c.b16 %v5133, %v5132
    %v6236 = vpack.c.b16 %v5135, %v5134
    %v6237 = vpack.c.b16 %v5137, %v5136
    %v6238 = vpack.c.b16 %v5139, %v5138
    %v6239 = vpack.c.b16 %v5141, %v5140
    %v6240 = vpack.c.b16 %v5143, %v5142
    %v6241 = vpack.c.b16 %v5145, %v5144
    %v6242 = vpack.c.b16 %v5147, %v5146
    %v6243 = vpack.c.b16 %v5149, %v5148
    %v6244 = vpack.c.b16 %v5151, %v5150
    %v6245 = vpack.c.b16 %v5153, %v5152
    %v6246 = vpack.c.b16 %v5155, %v5154
    %v6247 = vpack.c.b16 %v5157, %v5156
    %v6248 = vpack.c.b16 %v5159, %v5158
    %v6249 = vpack.c.b16 %v5161, %v5160
    %v6250 = vpack.c.b16 %v5163, %v5162
    %v6251 = vpack.c.b16 %v5165, %v5164
    %v6252 = vpack.c.b16 %v5167, %v5166
    %v6253 = vpack.c.b16 %v5169, %v5168
    %v6254 = vpack.c.b16 %v5171, %v5170
    %v6255 = vpack.c.b16 %v5173, %v5172
    %v6256 = vpack.c.b16 %v5175, %v5174
    %v6257 = vpack.c.b16 %v5177, %v5176
    %v6258 = vpack.c.b16 %v5179, %v5178
    %v6259 = vpack.c.b16 %v5181, %v5180
    %v6260 = vpack.c.b16 %v5183, %v5182
    %v6261 = vpack.c.b16 %v5185, %v5184
    %v6262 = vpack.c.b16 %v5187, %v5186
    %v6263 = vpack.c.b16 %v5189, %v5188
    %v6264 = vpack.c.b16 %v5191, %v5190
    %v6265 = vpack.c.b16 %v5193, %v5192
    %v6266 = vpack.c.b16 %v5195, %v5194
    %v6267 = vpack.c.b16 %v5197, %v5196
    %v6268 = vpack.c.b16 %v5199, %v5198
    %v6269 = vpack.c.b16 %v5201, %v5200
    %v6270 = vpack.c.b16 %v5203, %v5202
    %v6271 = vpack.c.b16 %v5205, %v5204
    %v6272 = vpack.c.b16 %v5207, %v5206
    %v6273 = vpack.c.b16 %v5209, %v5208
    %v6274 = vpack.c.b16 %v5211, %v5210
    %v6275 = vpack.c.b16 %v5213, %v5212
    %v6276 = vpack.c.b16 %v5215, %v5214
    %v6277 = vpack.c.b16 %v5217, %v5216
    %v6278 = vpack.c.b16 %v5219, %v5218
    %v6279 = vpack.c.b16 %v5221, %v5220
    %v6280 = vpack.c.b16 %v5223, %v5222
    %v6281 = vpack.c.b16 %v5225, %v5224
    %v6282 = vpack.c.b16 %v5227, %v5226
    %v6283 = vpack.c.b16 %v5229, %v5228
    %v6284 = vpack.c.b16 %v5231, %v5230
    %v6285 = vpack.c.b16 %v5233, %v5232
    %v6286 = vpack.c.b16 %v5235, %v5234
    %v6287 = vpack.c.b16 %v5237, %v5236
    %v6288 = vpack.c.b16 %v5239, %v5238
    %v6289 = vpack.c.b16 %v5241, %v5240
    %v6290 = vpack.c.b16 %v5243, %v5242
    %v6291 = vpack.c.b16 %v5245, %v5244
    %v6292 = vpack.c.b16 %v5247, %v5246
    %v6293 = vpack.c.b16 %v5249, %v5248
    %v6294 = vpack.c.b16 %v5251, %v5250
    %v6295 = vpack.c.b16 %v5253, %v5252
    %v6296 = vpack.c.b16 %v5255, %v5254
    %v6297 = vpack.c.b16 %v5257, %v5256
    %v6298 = vpack.c.b16 %v5259, %v5258
    %v6299 = vpack.c.b16 %v5261, %v5260
    %v6300 = vpack.c.b16 %v5263, %v5262
    %v6301 = vpack.c.b16 %v5265, %v5264
    %v6302 = vpack.c.b16 %v5267, %v5266
    %v6303 = vpack.c.b16 %v5269, %v5268
    %v6304 = vpack.c.b16 %v5271, %v5270
    %v6305 = vpack.c.b16 %v5273, %v5272
    %v6306 = vpack.c.b16 %v5275, %v5274
    %v6307 = vpack.c.b16 %v5277, %v5276
    %v6308 = vpack.c.b16 %v5279, %v5278
    %v6309 = vpack.c.b16 %v5281, %v5280
    %v6310 = vpack.c.b16 %v5283, %v5282
    %v6311 = vpack.c.b16 %v5285, %v5284
    %v6312 = vpack.c.b16 %v5287, %v5286
    %v6313 = vpack.c.b16 %v5289, %v5288
    %v6314 = vpack.c.b16 %v5291, %v5290
    %v6315 = vpack.c.b16 %v5293, %v5292
    %v6316 = vpack.c.b16 %v5295, %v5294
    %v6317 = vpack.c.b16 %v5297, %v5296
    %v6318 = vpack.c.b16 %v5299, %v5298
    %v6319 = vpack.c.b16 %v5301, %v5300
    %v6320 = vpack.c.b16 %v5303, %v5302
    %v6321 = vpack.c.b16 %v5305, %v5304
    %v6322 = vpack.c.b16 %v5307, %v5306
    %v6323 = vpack.c.b16 %v5309, %v5308
    %v6324 = vpack.c.b16 %v5311, %v5310
    %v6325 = vpack.c.b16 %v5313, %v5312
    %v6326 = vpack.c.b16 %v5315, %v5314
    %v6327 = vpack.c.b16 %v5317, %v5316
    %v6328 = vpack.c.b16 %v5319, %v5318
    %v6329 = vpack.c.b16 %v5321, %v5320
    %v6330 = vpack.c.b16 %v5323, %v5322
    %v6331 = vpack.c.b16 %v5325, %v5324
    %v6332 = vpack.c.b16 %v5327, %v5326
    %v6333 = vpack.c.b16 %v5329, %v5328
    %v6334 = vpack.c.b16 %v5331, %v5330
    %v6335 = vpack.c.b16 %v5333, %v5332
    %v6336 = vpack.c.b16 %v5335, %v5334
    %v6337 = vpack.c.b16 %v5337, %v5336
    %v6338 = vpack.c.b16 %v5339, %v5338
    %v6339 = vpack.c.b16 %v5341, %v5340
    %v6340 = vpack.c.b16 %v5343, %v5342
    %v6341 = vpack.c.b16 %v5345, %v5344
    %v6342 = vpack.c.b16 %v5347, %v5346
    %v6343 = vpack.c.b16 %v5349, %v5348
    %v6344 = vpack.c.b16 %v5351, %v5350
    %v6345 = vpack.c.b16 %v5353, %v5352
    %v6346 = vpack.c.b16 %v5355, %v5354
    %v6347 = vpack.c.b16 %v5357, %v5356
    %v6348 = vpack.c.b16 %v5359, %v5358
    %v6349 = vpack.c.b16 %v5361, %v5360
    %v6350 = vpack.c.b16 %v5363, %v5362
    %v6351 = vpack.c.b16 %v5365, %v5364
    %v6352 = vpack.c.b16 %v5367, %v5366
    %v6353 = vpack.c.b16 %v5369, %v5368
    %v6354 = vpack.c.b16 %v5371, %v5370
    %v6355 = vpack.c.b16 %v5373, %v5372
    %v6356 = vpack.c.b16 %v5375, %v5374
    %v6357 = vpack.c.b16 %v5377, %v5376
    %v6358 = vpack.c.b16 %v5379, %v5378
    %v6359 = vpack.c.b16 %v5381, %v5380
    %v6360 = vpack.c.b16 %v5383, %v5382
    %v6361 = vpack.c.b16 %v5385, %v5384
    %v6362 = vpack.c.b16 %v5387, %v5386
    %v6363 = vpack.c.b16 %v5389, %v5388
    %v6364 = vpack.c.b16 %v5391, %v5390
    %v6365 = vpack.c.b16 %v5393, %v5392
    %v6366 = vpack.c.b16 %v5395, %v5394
    %v6367 = vpack.c.b16 %v5397, %v5396
    %v6368 = vpack.c.b16 %v5399, %v5398
    %v6369 = vpack.c.b16 %v5401, %v5400
    %v6370 = vpack.c.b16 %v5403, %v5402
    %v6371 = vpack.c.b16 %v5405, %v5404
    %v6372 = vpack.c.b16 %v5407, %v5406
    %v6373 = vpack.c.b16 %v5409, %v5408
    %v6374 = vpack.c.b16 %v5411, %v5410
    %v6375 = vpack.c.b16 %v5413, %v5412
    %v6376 = vpack.c.b16 %v5415, %v5414
    %v6377 = vpack.c.b16 %v5417, %v5416
    %v6378 = vpack.c.b16 %v5419, %v5418
    %v6379 = vpack.c.b16 %v5421, %v5420
    %v6380 = vpack.c.b16 %v5423, %v5422
    %v6381 = vpack.c.b16 %v5425, %v5424
    %v6382 = vpack.c.b16 %v5427, %v5426
    %v6383 = vpack.c.b16 %v5429, %v5428
    %v6384 = vpack.c.b16 %v5431, %v5430
    %v6385 = vpack.c.b16 %v5433, %v5432
    %v6386 = vpack.c.b16 %v5435, %v5434
    %v6387 = vpack.c.b16 %v5437, %v5436
    %v6388 = vpack.c.b16 %v5439, %v5438
    %v6389 = vpack.c.b16 %v5441, %v5440
    %v6390 = vpack.c.b16 %v5443, %v5442
    %v6391 = vpack.c.b16 %v5445, %v5444
    %v6392 = vpack.c.b16 %v5447, %v5446
    %v6393 = vpack.c.b16 %v5449, %v5448
    %v6394 = vpack.c.b16 %v5451, %v5450
    %v6395 = vpack.c.b16 %v5453, %v5452
    %v6396 = vpack.c.b16 %v5455, %v5454
    %v6397 = vpack.c.b16 %v5457, %v5456
    %v6398 = vpack.c.b16 %v5459, %v5458
    %v6399 = vpack.c.b16 %v5461, %v5460
    %v6400 = vpack.c.b16 %v5463, %v5462
    %v6401 = vpack.c.b16 %v5465, %v5464
    %v6402 = vpack.c.b16 %v5467, %v5466
    %v6403 = vpack.c.b16 %v5469, %v5468
    %v6404 = vpack.c.b16 %v5471, %v5470
    %v6405 = vpack.c.b16 %v5473, %v5472
    %v6406 = vpack.c.b16 %v5475, %v5474
    %v6407 = vpack.c.b16 %v5477, %v5476
    %v6408 = vpack.c.b16 %v5479, %v5478
    %v6409 = vpack.c.b16 %v5481, %v5480
    %v6410 = vpack.c.b16 %v5483, %v5482
    %v6411 = vpack.c.b16 %v5485, %v5484
    %v6412 = vpack.c.b16 %v5487, %v5486
    %v6413 = vpack.c.b16 %v5489, %v5488
    %v6414 = vpack.c.b16 %v5491, %v5490
    %v6415 = vpack.c.b16 %v5493, %v5492
    %v6416 = vpack.c.b16 %v5495, %v5494
    %v6417 = vpack.c.b16 %v5497, %v5496
    %v6418 = vpack.c.b16 %v5499, %v5498
    %v6419 = vpack.c.b16 %v5501, %v5500
    %v6420 = vpack.c.b16 %v5503, %v5502
    %v6421 = vpack.c.b16 %v5505, %v5504
    %v6422 = vpack.c.b16 %v5507, %v5506
    %v6423 = vpack.c.b16 %v5509, %v5508
    %v6424 = vpack.c.b16 %v5511, %v5510
    %v6425 = vpack.c.b16 %v5513, %v5512
    %v6426 = vpack.c.b16 %v5515, %v5514
    %v6427 = vpack.c.b16 %v5517, %v5516
    %v6428 = vpack.c.b16 %v5519, %v5518
    %v6429 = vpack.c.b16 %v5521, %v5520
    %v6430 = vpack.c.b16 %v5523, %v5522
    %v6431 = vpack.c.b16 %v5525, %v5524
    %v6432 = vpack.c.b16 %v5527, %v5526
    %v6433 = vpack.c.b16 %v5529, %v5528
    %v6434 = vpack.c.b16 %v5531, %v5530
    %v6435 = vpack.c.b16 %v5533, %v5532
    %v6436 = vpack.c.b16 %v5535, %v5534
    %v6437 = vpack.c.b16 %v5537, %v5536
    %v6438 = vpack.c.b16 %v5539, %v5538
    %v6439 = vpack.c.b16 %v5541, %v5540
    %v6440 = vpack.c.b16 %v5543, %v5542
    %v6441 = vpack.c.b16 %v5545, %v5544
    %v6442 = vpack.c.b16 %v5547, %v5546
    %v6443 = vpack.c.b16 %v5549, %v5548
    %v6444 = vpack.c.b16 %v5551, %v5550
    %v6445 = vpack.c.b16 %v5553, %v5552
    %v6446 = vpack.c.b16 %v5555, %v5554
    %v6447 = vpack.c.b16 %v5557, %v5556
    %v6448 = vpack.c.b16 %v5559, %v5558
    %v6449 = vpack.c.b16 %v5561, %v5560
    %v6450 = vpack.c.b16 %v5563, %v5562
    %v6451 = vpack.c.b16 %v5565, %v5564
    %v6452 = vpack.c.b16 %v5567, %v5566
    %v6453 = vpack.c.b16 %v5569, %v5568
    %v6454 = vpack.c.b16 %v5571, %v5570
    %v6455 = vpack.c.b16 %v5573, %v5572
    %v6456 = vpack.c.b16 %v5575, %v5574
    %v6457 = vpack.c.b16 %v5577, %v5576
    %v6458 = vpack.c.b16 %v5579, %v5578
    %v6459 = vpack.c.b16 %v5581, %v5580
    %v6460 = vpack.c.b16 %v5583, %v5582
    %v6461 = vpack.c.b16 %v5585, %v5584
    %v6462 = vpack.c.b16 %v5587, %v5586
    %v6463 = vpack.c.b16 %v5589, %v5588
    %v6464 = vpack.c.b16 %v5591, %v5590
    %v6465 = vpack.c.b16 %v5593, %v5592
    %v6466 = vpack.c.b16 %v5595, %v5594
    %v6467 = vpack.c.b16 %v5597, %v5596
    %v6468 = vpack.c.b16 %v5599, %v5598
    %v6469 = vpack.c.b16 %v5601, %v5600
    %v6470 = vpack.c.b16 %v5603, %v5602
    %v6471 = vpack.c.b16 %v5605, %v5604
    %v6472 = vpack.c.b16 %v5607, %v5606
    %v6473 = vpack.c.b16 %v5609, %v5608
    %v6474 = vpack.c.b16 %v5611, %v5610
    %v6475 = vpack.c.b16 %v5613, %v5612
    %v6476 = vpack.c.b16 %v5615, %v5614
    %v6477 = vpack.c.b16 %v5617, %v5616
    %v6478 = vpack.c.b16 %v5619, %v5618
    %v6479 = vpack.c.b16 %v5621, %v5620
    %v6480 = vpack.c.b16 %v5623, %v5622
    %v6481 = vpack.c.b16 %v5625, %v5624
    %v6482 = vpack.c.b16 %v5627, %v5626
    %v6483 = vpack.c.b16 %v5629, %v5628
    %v6484 = vpack.c.b16 %v5631, %v5630
    %v6485 = vpack.c.b16 %v5633, %v5632
    %v6486 = vpack.c.b16 %v5635, %v5634
    %v6487 = vpack.c.b16 %v5637, %v5636
    %v6488 = vpack.c.b16 %v5639, %v5638
    %v6489 = vpack.c.b16 %v5641, %v5640
    %v6490 = vpack.c.b16 %v5643, %v5642
    %v6491 = vpack.c.b16 %v5645, %v5644
    %v6492 = vpack.c.b16 %v5647, %v5646
    %v6493 = vpack.c.b16 %v5649, %v5648
    %v6494 = vpack.c.b16 %v5651, %v5650
    %v6495 = vpack.c.b16 %v5653, %v5652
    %v6496 = vpack.c.b16 %v5655, %v5654
    %v6497 = vpack.c.b16 %v5657, %v5656
    %v6498 = vpack.c.b16 %v5659, %v5658
    %v6499 = vpack.c.b16 %v5661, %v5660
    %v6500 = vpack.c.b16 %v5663, %v5662
    %v6501 = vpack.c.b16 %v5665, %v5664
    %v6502 = vpack.c.b16 %v5667, %v5666
    %v6503 = vpack.c.b16 %v5669, %v5668
    %v6504 = vpack.c.b16 %v5671, %v5670
    %v6505 = vpack.c.b16 %v5673, %v5672
    %v6506 = vpack.c.b16 %v5675, %v5674
    %v6507 = vpack.c.b16 %v5677, %v5676
    %v6508 = vpack.c.b16 %v5679, %v5678
    %v6509 = vpack.c.b16 %v5681, %v5680
    %v6510 = vpack.c.b16 %v5683, %v5682
    %v6511 = vpack.c.b16 %v5685, %v5684
    %v6512 = vpack.c.b16 %v5687, %v5686
    %v6513 = vpack.c.b16 %v5689, %v5688
    %v6514 = vpack.c.b16 %v5691, %v5690
    %v6515 = vpack.c.b16 %v5693, %v5692
    %v6516 = vpack.c.b16 %v5695, %v5694
    %v6517 = vpack.c.b16 %v5697, %v5696
    %v6518 = vpack.c.b16 %v5699, %v5698
    %v6519 = vpack.c.b16 %v5701, %v5700
    %v6520 = vpack.c.b16 %v5703, %v5702
    %v6521 = vpack.c.b16 %v5705, %v5704
    %v6522 = vpack.c.b16 %v5707, %v5706
    %v6523 = vpack.c.b16 %v5709, %v5708
    %v6524 = vpack.c.b16 %v5711, %v5710
    %v6525 = vpack.c.b16 %v5713, %v5712
    %v6526 = vpack.c.b16 %v5715, %v5714
    %v6527 = vpack.c.b16 %v5717, %v5716
    %v6528 = vpack.c.b16 %v5719, %v5718
    %v6529 = vpack.c.b16 %v5721, %v5720
    %v6530 = vpack.c.b16 %v5723, %v5722
    %v6531 = vpack.c.b16 %v5725, %v5724
    %v6532 = vpack.c.b16 %v5727, %v5726
    %v6533 = vpack.c.b16 %v5729, %v5728
    %v6534 = vpack.c.b16 %v5731, %v5730
    %v6535 = vpack.c.b16 %v5733, %v5732
    %v6536 = vpack.c.b16 %v5735, %v5734
    %v6537 = vpack.c.b16 %v5737, %v5736
    %v6538 = vpack.c.b16 %v5739, %v5738
    %v6539 = vpack.c.b16 %v5741, %v5740
    %v6540 = vpack.c.b16 %v5743, %v5742
    %v6541 = vpack.c.b16 %v5745, %v5744
    %v6542 = vpack.c.b16 %v5747, %v5746
    %v6543 = vpack.c.b16 %v5749, %v5748
    %v6544 = vpack.c.b16 %v5751, %v5750
    %v6545 = vpack.c.b16 %v5753, %v5752
    %v6546 = vpack.c.b16 %v5755, %v5754
    %v6547 = vpack.c.b16 %v5757, %v5756
    %v6548 = vpack.c.b16 %v5759, %v5758
    %v6549 = vpack.c.b16 %v5761, %v5760
    %v6550 = vpack.c.b16 %v5763, %v5762
    %v6551 = vpack.c.b16 %v5765, %v5764
    %v6552 = vpack.c.b16 %v5767, %v5766
    %v6553 = vpack.c.b16 %v5769, %v5768
    %v6554 = vpack.c.b16 %v5771, %v5770
    %v6555 = vpack.c.b16 %v5773, %v5772
    %v6556 = vpack.c.b16 %v5775, %v5774
    %v6557 = vpack.c.b16 %v5777, %v5776
    %v6558 = vpack.c.b16 %v5779, %v5778
    %v6559 = vpack.c.b16 %v5781, %v5780
    %v6560 = vpack.c.b16 %v5783, %v5782
    %v6561 = vpack.c.b16 %v5785, %v5784
    %v6562 = vpack.c.b16 %v5787, %v5786
    %v6563 = vpack.c.b16 %v5789, %v5788
    %v6564 = vpack.c.b16 %v5791, %v5790
    %v6565 = vpack.c.b16 %v5793, %v5792
    %v6566 = vpack.c.b16 %v5795, %v5794
    %v6567 = vpack.c.b16 %v5797, %v5796
    %v6568 = vpack.c.b16 %v5799, %v5798
    %v6569 = vpack.c.b16 %v5801, %v5800
    %7338 = vmatprep.subr.bf16.mxu0 0
    %7339 = vmatpush1.bf16.msra.mxu0 %v5802
    %7340 = vmatprep.subr.bf16.mxu0 0
    %7341 = vmatpush1.bf16.msra.mxu0 %v5803
    %7342 = vmatprep.subr.bf16.mxu0 0
    %7343 = vmatpush1.bf16.msra.mxu0 %v5804
    %7344 = vmatprep.subr.bf16.mxu0 0
    %7345 = vmatpush1.bf16.msra.mxu0 %v5805
    %7346 = vmatprep.subr.bf16.mxu0 0
    %7347 = vmatpush1.bf16.msra.mxu0 %v5806
    %7348 = vmatprep.subr.bf16.mxu0 0
    %7349 = vmatpush1.bf16.msra.mxu0 %v5807
    %7350 = vmatprep.subr.bf16.mxu0 0
    %7351 = vmatpush1.bf16.msra.mxu0 %v5808
    %7352 = vmatprep.subr.bf16.mxu0 0
    %7353 = vmatpush1.bf16.msra.mxu0 %v5809
    %7354 = vmatprep.subr.bf16.mxu0 0
    %7355 = vmatpush1.bf16.msra.mxu0 %v5810
    %7356 = vmatprep.subr.bf16.mxu0 0
    %7357 = vmatpush1.bf16.msra.mxu0 %v5811
    %7358 = vmatprep.subr.bf16.mxu0 0
    %7359 = vmatpush1.bf16.msra.mxu0 %v5812
    %7360 = vmatprep.subr.bf16.mxu0 0
    %7361 = vmatpush1.bf16.msra.mxu0 %v5813
    %7362 = vmatprep.subr.bf16.mxu0 0
    %7363 = vmatpush1.bf16.msra.mxu0 %v5814
    %7364 = vmatprep.subr.bf16.mxu0 0
    %7365 = vmatpush1.bf16.msra.mxu0 %v5815
    %7366 = vmatprep.subr.bf16.mxu0 0
    %7367 = vmatpush1.bf16.msra.mxu0 %v5816
    %7368 = vmatprep.subr.bf16.mxu0 0
    %7369 = vmatpush1.bf16.msra.mxu0 %v5817
    %7370 = vmatprep.mubr.bf16.mxu0 %v2347
    %7371 = vmatmul.mubr.bf16.gmra.mrb[0].mxu0 %v2346
    %v7372 = vpop.f32.mrb[0].mxu0
    %v7373 = vadd.f32 0.0, %v7372
    %v7374 = vpop.f32.mrb[0].mxu0
    %v7375 = vpop.f32.mrb[0].mxu0
    %v7376 = vadd.f32 0.0, %v7375
    %v7377 = vpop.f32.mrb[0].mxu0
    %7378 = vmatprep.mubr.bf16.mxu0 %v2443
    %7379 = vmatmul.mubr.bf16.gmra.mrb[0].mxu0 %v2442
    %v7380 = vpop.f32.mrb[0].mxu0
    %v7381 = vadd.f32 0.0, %v7380
    %v7382 = vpop.f32.mrb[0].mxu0
    %v7383 = vpop.f32.mrb[0].mxu0
    %v7384 = vadd.f32 0.0, %v7383
    %v7385 = vpop.f32.mrb[0].mxu0
    %7386 = vdwg.mxu0
    %7387 = vmatprep.subr.bf16.mxu0 0
    %7388 = vmatpush1.bf16.msra.mxu0 %v5818
    %7389 = vmatprep.subr.bf16.mxu0 0
    %7390 = vmatpush1.bf16.msra.mxu0 %v5819
    %7391 = vmatprep.subr.bf16.mxu0 0
    %7392 = vmatpush1.bf16.msra.mxu0 %v5820
    %7393 = vmatprep.subr.bf16.mxu0 0
    %7394 = vmatpush1.bf16.msra.mxu0 %v5821
    %7395 = vmatprep.subr.bf16.mxu0 0
    %7396 = vmatpush1.bf16.msra.mxu0 %v5822
    %7397 = vmatprep.subr.bf16.mxu0 0
    %7398 = vmatpush1.bf16.msra.mxu0 %v5823
    %7399 = vmatprep.subr.bf16.mxu0 0
    %7400 = vmatpush1.bf16.msra.mxu0 %v5824
    %7401 = vmatprep.subr.bf16.mxu0 0
    %7402 = vmatpush1.bf16.msra.mxu0 %v5825
    %7403 = vmatprep.subr.bf16.mxu0 0
    %7404 = vmatpush1.bf16.msra.mxu0 %v5826
    %7405 = vmatprep.subr.bf16.mxu0 0
    %7406 = vmatpush1.bf16.msra.mxu0 %v5827
    %7407 = vmatprep.subr.bf16.mxu0 0
    %7408 = vmatpush1.bf16.msra.mxu0 %v5828
    %7409 = vmatprep.subr.bf16.mxu0 0
    %7410 = vmatpush1.bf16.msra.mxu0 %v5829
    %7411 = vmatprep.subr.bf16.mxu0 0
    %7412 = vmatpush1.bf16.msra.mxu0 %v5830
    %7413 = vmatprep.subr.bf16.mxu0 0
    %7414 = vmatpush1.bf16.msra.mxu0 %v5831
    %7415 = vmatprep.subr.bf16.mxu0 0
    %7416 = vmatpush1.bf16.msra.mxu0 %v5832
    %7417 = vmatprep.subr.bf16.mxu0 0
    %7418 = vmatpush1.bf16.msra.mxu0 %v5833
    %7419 = vmatprep.mubr.bf16.mxu0 %v2349
    %7420 = vmatmul.mubr.bf16.gmra.mrb[0].mxu0 %v2348
    %v7421 = vpop.f32.mrb[0].mxu0
    %v7422 = vadd.f32 %v7373, %v7421
    %v7423 = vpop.f32.mrb[0].mxu0
    %v7424 = vpop.f32.mrb[0].mxu0
    %v7425 = vadd.f32 %v7376, %v7424
    %v7426 = vpop.f32.mrb[0].mxu0
    %7427 = vmatprep.mubr.bf16.mxu0 %v2445
    %7428 = vmatmul.mubr.bf16.gmra.mrb[0].mxu0 %v2444
    %v7429 = vpop.f32.mrb[0].mxu0
    %v7430 = vadd.f32 %v7381, %v7429
    %v7431 = vpop.f32.mrb[0].mxu0
    %v7432 = vpop.f32.mrb[0].mxu0
    %v7433 = vadd.f32 %v7384, %v7432
    %v7434 = vpop.f32.mrb[0].mxu0
    %7435 = vdwg.mxu0
    %7436 = vmatprep.subr.bf16.mxu0 0
    %7437 = vmatpush1.bf16.msra.mxu0 %v5834
    %7438 = vmatprep.subr.bf16.mxu0 0
    %7439 = vmatpush1.bf16.msra.mxu0 %v5835
    %7440 = vmatprep.subr.bf16.mxu0 0
    %7441 = vmatpush1.bf16.msra.mxu0 %v5836
    %7442 = vmatprep.subr.bf16.mxu0 0
    %7443 = vmatpush1.bf16.msra.mxu0 %v5837
    %7444 = vmatprep.subr.bf16.mxu0 0
    %7445 = vmatpush1.bf16.msra.mxu0 %v5838
    %7446 = vmatprep.subr.bf16.mxu0 0
    %7447 = vmatpush1.bf16.msra.mxu0 %v5839
    %7448 = vmatprep.subr.bf16.mxu0 0
    %7449 = vmatpush1.bf16.msra.mxu0 %v5840
    %7450 = vmatprep.subr.bf16.mxu0 0
    %7451 = vmatpush1.bf16.msra.mxu0 %v5841
    %7452 = vmatprep.subr.bf16.mxu0 0
    %7453 = vmatpush1.bf16.msra.mxu0 %v5842
    %7454 = vmatprep.subr.bf16.mxu0 0
    %7455 = vmatpush1.bf16.msra.mxu0 %v5843
    %7456 = vmatprep.subr.bf16.mxu0 0
    %7457 = vmatpush1.bf16.msra.mxu0 %v5844
    %7458 = vmatprep.subr.bf16.mxu0 0
    %7459 = vmatpush1.bf16.msra.mxu0 %v5845
    %7460 = vmatprep.subr.bf16.mxu0 0
    %7461 = vmatpush1.bf16.msra.mxu0 %v5846
    %7462 = vmatprep.subr.bf16.mxu0 0
    %7463 = vmatpush1.bf16.msra.mxu0 %v5847
    %7464 = vmatprep.subr.bf16.mxu0 0
    %7465 = vmatpush1.bf16.msra.mxu0 %v5848
    %7466 = vmatprep.subr.bf16.mxu0 0
    %7467 = vmatpush1.bf16.msra.mxu0 %v5849
    %7468 = vmatprep.mubr.bf16.mxu0 %v2351
    %7469 = vmatmul.mubr.bf16.gmra.mrb[0].mxu0 %v2350
    %v7470 = vpop.f32.mrb[0].mxu0
    %v7471 = vadd.f32 %v7422, %v7470
    %v7472 = vpop.f32.mrb[0].mxu0
    %v7473 = vpop.f32.mrb[0].mxu0
    %v7474 = vadd.f32 %v7425, %v7473
    %v7475 = vpop.f32.mrb[0].mxu0
    %7476 = vmatprep.mubr.bf16.mxu0 %v2447
    %7477 = vmatmul.mubr.bf16.gmra.mrb[0].mxu0 %v2446
    %v7478 = vpop.f32.mrb[0].mxu0
    %v7479 = vadd.f32 %v7430, %v7478
    %v7480 = vpop.f32.mrb[0].mxu0
    %v7481 = vpop.f32.mrb[0].mxu0
    %v7482 = vadd.f32 %v7433, %v7481
    %v7483 = vpop.f32.mrb[0].mxu0
    %7484 = vdwg.mxu0
    %7485 = vmatprep.subr.bf16.mxu0 0
    %7486 = vmatpush1.bf16.msra.mxu0 %v5850
    %7487 = vmatprep.subr.bf16.mxu0 0
    %7488 = vmatpush1.bf16.msra.mxu0 %v5851
    %7489 = vmatprep.subr.bf16.mxu0 0
    %7490 = vmatpush1.bf16.msra.mxu0 %v5852
    %7491 = vmatprep.subr.bf16.mxu0 0
    %7492 = vmatpush1.bf16.msra.mxu0 %v5853
    %7493 = vmatprep.subr.bf16.mxu0 0
    %7494 = vmatpush1.bf16.msra.mxu0 %v5854
    %7495 = vmatprep.subr.bf16.mxu0 0
    %7496 = vmatpush1.bf16.msra.mxu0 %v5855
    %7497 = vmatprep.subr.bf16.mxu0 0
    %7498 = vmatpush1.bf16.msra.mxu0 %v5856
    %7499 = vmatprep.subr.bf16.mxu0 0
    %7500 = vmatpush1.bf16.msra.mxu0 %v5857
    %7501 = vmatprep.subr.bf16.mxu0 0
    %7502 = vmatpush1.bf16.msra.mxu0 %v5858
    %7503 = vmatprep.subr.bf16.mxu0 0
    %7504 = vmatpush1.bf16.msra.mxu0 %v5859
    %7505 = vmatprep.subr.bf16.mxu0 0
    %7506 = vmatpush1.bf16.msra.mxu0 %v5860
    %7507 = vmatprep.subr.bf16.mxu0 0
    %7508 = vmatpush1.bf16.msra.mxu0 %v5861
    %7509 = vmatprep.subr.bf16.mxu0 0
    %7510 = vmatpush1.bf16.msra.mxu0 %v5862
    %7511 = vmatprep.subr.bf16.mxu0 0
    %7512 = vmatpush1.bf16.msra.mxu0 %v5863
    %7513 = vmatprep.subr.bf16.mxu0 0
    %7514 = vmatpush1.bf16.msra.mxu0 %v5864
    %7515 = vmatprep.subr.bf16.mxu0 0
    %7516 = vmatpush1.bf16.msra.mxu0 %v5865
    %7517 = vmatprep.mubr.bf16.mxu0 %v2353
    %7518 = vmatmul.mubr.bf16.gmra.mrb[0].mxu0 %v2352
    %v7519 = vpop.f32.mrb[0].mxu0
    %v7520 = vadd.f32 %v7471, %v7519
    %v7521 = vpop.f32.mrb[0].mxu0
    %v7522 = vpop.f32.mrb[0].mxu0
    %v7523 = vadd.f32 %v7474, %v7522
    %v7524 = vpop.f32.mrb[0].mxu0
    %7525 = vmatprep.mubr.bf16.mxu0 %v2449
    %7526 = vmatmul.mubr.bf16.gmra.mrb[0].mxu0 %v2448
    %v7527 = vpop.f32.mrb[0].mxu0
    %v7528 = vadd.f32 %v7479, %v7527
    %v7529 = vpop.f32.mrb[0].mxu0
    %v7530 = vpop.f32.mrb[0].mxu0
    %v7531 = vadd.f32 %v7482, %v7530
    %v7532 = vpop.f32.mrb[0].mxu0
    %7533 = vdwg.mxu0
    %7534 = vmatprep.subr.bf16.mxu0 0
    %7535 = vmatpush1.bf16.msra.mxu0 %v5866
    %7536 = vmatprep.subr.bf16.mxu0 0
    %7537 = vmatpush1.bf16.msra.mxu0 %v5867
    %7538 = vmatprep.subr.bf16.mxu0 0
    %7539 = vmatpush1.bf16.msra.mxu0 %v5868
    %7540 = vmatprep.subr.bf16.mxu0 0
    %7541 = vmatpush1.bf16.msra.mxu0 %v5869
    %7542 = vmatprep.subr.bf16.mxu0 0
    %7543 = vmatpush1.bf16.msra.mxu0 %v5870
    %7544 = vmatprep.subr.bf16.mxu0 0
    %7545 = vmatpush1.bf16.msra.mxu0 %v5871
    %7546 = vmatprep.subr.bf16.mxu0 0
    %7547 = vmatpush1.bf16.msra.mxu0 %v5872
    %7548 = vmatprep.subr.bf16.mxu0 0
    %7549 = vmatpush1.bf16.msra.mxu0 %v5873
    %7550 = vmatprep.subr.bf16.mxu0 0
    %7551 = vmatpush1.bf16.msra.mxu0 %v5874
    %7552 = vmatprep.subr.bf16.mxu0 0
    %7553 = vmatpush1.bf16.msra.mxu0 %v5875
    %7554 = vmatprep.subr.bf16.mxu0 0
    %7555 = vmatpush1.bf16.msra.mxu0 %v5876
    %7556 = vmatprep.subr.bf16.mxu0 0
    %7557 = vmatpush1.bf16.msra.mxu0 %v5877
    %7558 = vmatprep.subr.bf16.mxu0 0
    %7559 = vmatpush1.bf16.msra.mxu0 %v5878
    %7560 = vmatprep.subr.bf16.mxu0 0
    %7561 = vmatpush1.bf16.msra.mxu0 %v5879
    %7562 = vmatprep.subr.bf16.mxu0 0
    %7563 = vmatpush1.bf16.msra.mxu0 %v5880
    %7564 = vmatprep.subr.bf16.mxu0 0
    %7565 = vmatpush1.bf16.msra.mxu0 %v5881
    %7566 = vmatprep.mubr.bf16.mxu0 %v2355
    %7567 = vmatmul.mubr.bf16.gmra.mrb[0].mxu0 %v2354
    %v7568 = vpop.f32.mrb[0].mxu0
    %v7569 = vadd.f32 %v7520, %v7568
    %v7570 = vpop.f32.mrb[0].mxu0
    %v7571 = vpop.f32.mrb[0].mxu0
    %v7572 = vadd.f32 %v7523, %v7571
    %v7573 = vpop.f32.mrb[0].mxu0
    %7574 = vmatprep.mubr.bf16.mxu0 %v2451
    %7575 = vmatmul.mubr.bf16.gmra.mrb[0].mxu0 %v2450
    %v7576 = vpop.f32.mrb[0].mxu0
    %v7577 = vadd.f32 %v7528, %v7576
    %v7578 = vpop.f32.mrb[0].mxu0
    %v7579 = vpop.f32.mrb[0].mxu0
    %v7580 = vadd.f32 %v7531, %v7579
    %v7581 = vpop.f32.mrb[0].mxu0
    %7582 = vdwg.mxu0
    %7583 = vmatprep.subr.bf16.mxu0 0
    %7584 = vmatpush1.bf16.msra.mxu0 %v5882
    %7585 = vmatprep.subr.bf16.mxu0 0
    %7586 = vmatpush1.bf16.msra.mxu0 %v5883
    %7587 = vmatprep.subr.bf16.mxu0 0
    %7588 = vmatpush1.bf16.msra.mxu0 %v5884
    %7589 = vmatprep.subr.bf16.mxu0 0
    %7590 = vmatpush1.bf16.msra.mxu0 %v5885
    %7591 = vmatprep.subr.bf16.mxu0 0
    %7592 = vmatpush1.bf16.msra.mxu0 %v5886
    %7593 = vmatprep.subr.bf16.mxu0 0
    %7594 = vmatpush1.bf16.msra.mxu0 %v5887
    %7595 = vmatprep.subr.bf16.mxu0 0
    %7596 = vmatpush1.bf16.msra.mxu0 %v5888
    %7597 = vmatprep.subr.bf16.mxu0 0
    %7598 = vmatpush1.bf16.msra.mxu0 %v5889
    %7599 = vmatprep.subr.bf16.mxu0 0
    %7600 = vmatpush1.bf16.msra.mxu0 %v5890
    %7601 = vmatprep.subr.bf16.mxu0 0
    %7602 = vmatpush1.bf16.msra.mxu0 %v5891
    %7603 = vmatprep.subr.bf16.mxu0 0
    %7604 = vmatpush1.bf16.msra.mxu0 %v5892
    %7605 = vmatprep.subr.bf16.mxu0 0
    %7606 = vmatpush1.bf16.msra.mxu0 %v5893
    %7607 = vmatprep.subr.bf16.mxu0 0
    %7608 = vmatpush1.bf16.msra.mxu0 %v5894
    %7609 = vmatprep.subr.bf16.mxu0 0
    %7610 = vmatpush1.bf16.msra.mxu0 %v5895
    %7611 = vmatprep.subr.bf16.mxu0 0
    %7612 = vmatpush1.bf16.msra.mxu0 %v5896
    %7613 = vmatprep.subr.bf16.mxu0 0
    %7614 = vmatpush1.bf16.msra.mxu0 %v5897
    %7615 = vmatprep.mubr.bf16.mxu0 %v2357
    %7616 = vmatmul.mubr.bf16.gmra.mrb[0].mxu0 %v2356
    %v7617 = vpop.f32.mrb[0].mxu0
    %v7618 = vadd.f32 %v7569, %v7617
    %v7619 = vpop.f32.mrb[0].mxu0
    %v7620 = vpop.f32.mrb[0].mxu0
    %v7621 = vadd.f32 %v7572, %v7620
    %v7622 = vpop.f32.mrb[0].mxu0
    %7623 = vmatprep.mubr.bf16.mxu0 %v2453
    %7624 = vmatmul.mubr.bf16.gmra.mrb[0].mxu0 %v2452
    %v7625 = vpop.f32.mrb[0].mxu0
    %v7626 = vadd.f32 %v7577, %v7625
    %v7627 = vpop.f32.mrb[0].mxu0
    %v7628 = vpop.f32.mrb[0].mxu0
    %v7629 = vadd.f32 %v7580, %v7628
    %v7630 = vpop.f32.mrb[0].mxu0
    %7631 = vdwg.mxu0
    %7632 = vmatprep.subr.bf16.mxu0 0
    %7633 = vmatpush1.bf16.msra.mxu0 %v5898
    %7634 = vmatprep.subr.bf16.mxu0 0
    %7635 = vmatpush1.bf16.msra.mxu0 %v5899
    %7636 = vmatprep.subr.bf16.mxu0 0
    %7637 = vmatpush1.bf16.msra.mxu0 %v5900
    %7638 = vmatprep.subr.bf16.mxu0 0
    %7639 = vmatpush1.bf16.msra.mxu0 %v5901
    %7640 = vmatprep.subr.bf16.mxu0 0
    %7641 = vmatpush1.bf16.msra.mxu0 %v5902
    %7642 = vmatprep.subr.bf16.mxu0 0
    %7643 = vmatpush1.bf16.msra.mxu0 %v5903
    %7644 = vmatprep.subr.bf16.mxu0 0
    %7645 = vmatpush1.bf16.msra.mxu0 %v5904
    %7646 = vmatprep.subr.bf16.mxu0 0
    %7647 = vmatpush1.bf16.msra.mxu0 %v5905
    %7648 = vmatprep.subr.bf16.mxu0 0
    %7649 = vmatpush1.bf16.msra.mxu0 %v5906
    %7650 = vmatprep.subr.bf16.mxu0 0
    %7651 = vmatpush1.bf16.msra.mxu0 %v5907
    %7652 = vmatprep.subr.bf16.mxu0 0
    %7653 = vmatpush1.bf16.msra.mxu0 %v5908
    %7654 = vmatprep.subr.bf16.mxu0 0
    %7655 = vmatpush1.bf16.msra.mxu0 %v5909
    %7656 = vmatprep.subr.bf16.mxu0 0
    %7657 = vmatpush1.bf16.msra.mxu0 %v5910
    %7658 = vmatprep.subr.bf16.mxu0 0
    %7659 = vmatpush1.bf16.msra.mxu0 %v5911
    %7660 = vmatprep.subr.bf16.mxu0 0
    %7661 = vmatpush1.bf16.msra.mxu0 %v5912
    %7662 = vmatprep.subr.bf16.mxu0 0
    %7663 = vmatpush1.bf16.msra.mxu0 %v5913
    %7664 = vmatprep.mubr.bf16.mxu0 %v2359
    %7665 = vmatmul.mubr.bf16.gmra.mrb[0].mxu0 %v2358
    %v7666 = vpop.f32.mrb[0].mxu0
    %v7667 = vadd.f32 %v7618, %v7666
    %v7668 = vpop.f32.mrb[0].mxu0
    %v7669 = vpop.f32.mrb[0].mxu0
    %v7670 = vadd.f32 %v7621, %v7669
    %v7671 = vpop.f32.mrb[0].mxu0
    %7672 = vmatprep.mubr.bf16.mxu0 %v2455
    %7673 = vmatmul.mubr.bf16.gmra.mrb[0].mxu0 %v2454
    %v7674 = vpop.f32.mrb[0].mxu0
    %v7675 = vadd.f32 %v7626, %v7674
    %v7676 = vpop.f32.mrb[0].mxu0
    %v7677 = vpop.f32.mrb[0].mxu0
    %v7678 = vadd.f32 %v7629, %v7677
    %v7679 = vpop.f32.mrb[0].mxu0
    %7680 = vdwg.mxu0
    %7681 = vmatprep.subr.bf16.mxu0 0
    %7682 = vmatpush1.bf16.msra.mxu0 %v5914
    %7683 = vmatprep.subr.bf16.mxu0 0
    %7684 = vmatpush1.bf16.msra.mxu0 %v5915
    %7685 = vmatprep.subr.bf16.mxu0 0
    %7686 = vmatpush1.bf16.msra.mxu0 %v5916
    %7687 = vmatprep.subr.bf16.mxu0 0
    %7688 = vmatpush1.bf16.msra.mxu0 %v5917
    %7689 = vmatprep.subr.bf16.mxu0 0
    %7690 = vmatpush1.bf16.msra.mxu0 %v5918
    %7691 = vmatprep.subr.bf16.mxu0 0
    %7692 = vmatpush1.bf16.msra.mxu0 %v5919
    %7693 = vmatprep.subr.bf16.mxu0 0
    %7694 = vmatpush1.bf16.msra.mxu0 %v5920
    %7695 = vmatprep.subr.bf16.mxu0 0
    %7696 = vmatpush1.bf16.msra.mxu0 %v5921
    %7697 = vmatprep.subr.bf16.mxu0 0
    %7698 = vmatpush1.bf16.msra.mxu0 %v5922
    %7699 = vmatprep.subr.bf16.mxu0 0
    %7700 = vmatpush1.bf16.msra.mxu0 %v5923
    %7701 = vmatprep.subr.bf16.mxu0 0
    %7702 = vmatpush1.bf16.msra.mxu0 %v5924
    %7703 = vmatprep.subr.bf16.mxu0 0
    %7704 = vmatpush1.bf16.msra.mxu0 %v5925
    %7705 = vmatprep.subr.bf16.mxu0 0
    %7706 = vmatpush1.bf16.msra.mxu0 %v5926
    %7707 = vmatprep.subr.bf16.mxu0 0
    %7708 = vmatpush1.bf16.msra.mxu0 %v5927
    %7709 = vmatprep.subr.bf16.mxu0 0
    %7710 = vmatpush1.bf16.msra.mxu0 %v5928
    %7711 = vmatprep.subr.bf16.mxu0 0
    %7712 = vmatpush1.bf16.msra.mxu0 %v5929
    %7713 = vmatprep.mubr.bf16.mxu0 %v2361
    %7714 = vmatmul.mubr.bf16.gmra.mrb[0].mxu0 %v2360
    %v7715 = vpop.f32.mrb[0].mxu0
    %v7716 = vadd.f32 %v7667, %v7715
    %v7717 = vpop.f32.mrb[0].mxu0
    %v7718 = vpop.f32.mrb[0].mxu0
    %v7719 = vadd.f32 %v7670, %v7718
    %v7720 = vpop.f32.mrb[0].mxu0
    %7721 = vmatprep.mubr.bf16.mxu0 %v2457
    %7722 = vmatmul.mubr.bf16.gmra.mrb[0].mxu0 %v2456
    %v7723 = vpop.f32.mrb[0].mxu0
    %v7724 = vadd.f32 %v7675, %v7723
    %v7725 = vpop.f32.mrb[0].mxu0
    %v7726 = vpop.f32.mrb[0].mxu0
    %v7727 = vadd.f32 %v7678, %v7726
    %v7728 = vpop.f32.mrb[0].mxu0
    %7729 = vdwg.mxu0
    %7730 = vmatprep.subr.bf16.mxu0 0
    %7731 = vmatpush1.bf16.msra.mxu0 %v5930
    %7732 = vmatprep.subr.bf16.mxu0 0
    %7733 = vmatpush1.bf16.msra.mxu0 %v5931
    %7734 = vmatprep.subr.bf16.mxu0 0
    %7735 = vmatpush1.bf16.msra.mxu0 %v5932
    %7736 = vmatprep.subr.bf16.mxu0 0
    %7737 = vmatpush1.bf16.msra.mxu0 %v5933
    %7738 = vmatprep.subr.bf16.mxu0 0
    %7739 = vmatpush1.bf16.msra.mxu0 %v5934
    %7740 = vmatprep.subr.bf16.mxu0 0
    %7741 = vmatpush1.bf16.msra.mxu0 %v5935
    %7742 = vmatprep.subr.bf16.mxu0 0
    %7743 = vmatpush1.bf16.msra.mxu0 %v5936
    %7744 = vmatprep.subr.bf16.mxu0 0
    %7745 = vmatpush1.bf16.msra.mxu0 %v5937
    %7746 = vmatprep.subr.bf16.mxu0 0
    %7747 = vmatpush1.bf16.msra.mxu0 %v5938
    %7748 = vmatprep.subr.bf16.mxu0 0
    %7749 = vmatpush1.bf16.msra.mxu0 %v5939
    %7750 = vmatprep.subr.bf16.mxu0 0
    %7751 = vmatpush1.bf16.msra.mxu0 %v5940
    %7752 = vmatprep.subr.bf16.mxu0 0
    %7753 = vmatpush1.bf16.msra.mxu0 %v5941
    %7754 = vmatprep.subr.bf16.mxu0 0
    %7755 = vmatpush1.bf16.msra.mxu0 %v5942
    %7756 = vmatprep.subr.bf16.mxu0 0
    %7757 = vmatpush1.bf16.msra.mxu0 %v5943
    %7758 = vmatprep.subr.bf16.mxu0 0
    %7759 = vmatpush1.bf16.msra.mxu0 %v5944
    %7760 = vmatprep.subr.bf16.mxu0 0
    %7761 = vmatpush1.bf16.msra.mxu0 %v5945
    %7762 = vmatprep.mubr.bf16.mxu0 %v2363
    %7763 = vmatmul.mubr.bf16.gmra.mrb[0].mxu0 %v2362
    %v7764 = vpop.f32.mrb[0].mxu0
    %v7765 = vadd.f32 %v7716, %v7764
    %v7766 = vpop.f32.mrb[0].mxu0
    %v7767 = vpop.f32.mrb[0].mxu0
    %v7768 = vadd.f32 %v7719, %v7767
    %v7769 = vpop.f32.mrb[0].mxu0
    %7770 = vmatprep.mubr.bf16.mxu0 %v2459
    %7771 = vmatmul.mubr.bf16.gmra.mrb[0].mxu0 %v2458
    %v7772 = vpop.f32.mrb[0].mxu0
    %v7773 = vadd.f32 %v7724, %v7772
    %v7774 = vpop.f32.mrb[0].mxu0
    %v7775 = vpop.f32.mrb[0].mxu0
    %v7776 = vadd.f32 %v7727, %v7775
    %v7777 = vpop.f32.mrb[0].mxu0
    %7778 = vdwg.mxu0
    %7779 = vmatprep.subr.bf16.mxu0 0
    %7780 = vmatpush1.bf16.msra.mxu0 %v5946
    %7781 = vmatprep.subr.bf16.mxu0 0
    %7782 = vmatpush1.bf16.msra.mxu0 %v5947
    %7783 = vmatprep.subr.bf16.mxu0 0
    %7784 = vmatpush1.bf16.msra.mxu0 %v5948
    %7785 = vmatprep.subr.bf16.mxu0 0
    %7786 = vmatpush1.bf16.msra.mxu0 %v5949
    %7787 = vmatprep.subr.bf16.mxu0 0
    %7788 = vmatpush1.bf16.msra.mxu0 %v5950
    %7789 = vmatprep.subr.bf16.mxu0 0
    %7790 = vmatpush1.bf16.msra.mxu0 %v5951
    %7791 = vmatprep.subr.bf16.mxu0 0
    %7792 = vmatpush1.bf16.msra.mxu0 %v5952
    %7793 = vmatprep.subr.bf16.mxu0 0
    %7794 = vmatpush1.bf16.msra.mxu0 %v5953
    %7795 = vmatprep.subr.bf16.mxu0 0
    %7796 = vmatpush1.bf16.msra.mxu0 %v5954
    %7797 = vmatprep.subr.bf16.mxu0 0
    %7798 = vmatpush1.bf16.msra.mxu0 %v5955
    %7799 = vmatprep.subr.bf16.mxu0 0
    %7800 = vmatpush1.bf16.msra.mxu0 %v5956
    %7801 = vmatprep.subr.bf16.mxu0 0
    %7802 = vmatpush1.bf16.msra.mxu0 %v5957
    %7803 = vmatprep.subr.bf16.mxu0 0
    %7804 = vmatpush1.bf16.msra.mxu0 %v5958
    %7805 = vmatprep.subr.bf16.mxu0 0
    %7806 = vmatpush1.bf16.msra.mxu0 %v5959
    %7807 = vmatprep.subr.bf16.mxu0 0
    %7808 = vmatpush1.bf16.msra.mxu0 %v5960
    %7809 = vmatprep.subr.bf16.mxu0 0
    %7810 = vmatpush1.bf16.msra.mxu0 %v5961
    %7811 = vmatprep.mubr.bf16.mxu0 %v2365
    %7812 = vmatmul.mubr.bf16.gmra.mrb[0].mxu0 %v2364
    %v7813 = vpop.f32.mrb[0].mxu0
    %v7814 = vadd.f32 %v7765, %v7813
    %v7815 = vpop.f32.mrb[0].mxu0
    %v7816 = vpop.f32.mrb[0].mxu0
    %v7817 = vadd.f32 %v7768, %v7816
    %v7818 = vpop.f32.mrb[0].mxu0
    %7819 = vmatprep.mubr.bf16.mxu0 %v2461
    %7820 = vmatmul.mubr.bf16.gmra.mrb[0].mxu0 %v2460
    %v7821 = vpop.f32.mrb[0].mxu0
    %v7822 = vadd.f32 %v7773, %v7821
    %v7823 = vpop.f32.mrb[0].mxu0
    %v7824 = vpop.f32.mrb[0].mxu0
    %v7825 = vadd.f32 %v7776, %v7824
    %v7826 = vpop.f32.mrb[0].mxu0
    %7827 = vdwg.mxu0
    %7828 = vmatprep.subr.bf16.mxu0 0
    %7829 = vmatpush1.bf16.msra.mxu0 %v5962
    %7830 = vmatprep.subr.bf16.mxu0 0
    %7831 = vmatpush1.bf16.msra.mxu0 %v5963
    %7832 = vmatprep.subr.bf16.mxu0 0
    %7833 = vmatpush1.bf16.msra.mxu0 %v5964
    %7834 = vmatprep.subr.bf16.mxu0 0
    %7835 = vmatpush1.bf16.msra.mxu0 %v5965
    %7836 = vmatprep.subr.bf16.mxu0 0
    %7837 = vmatpush1.bf16.msra.mxu0 %v5966
    %7838 = vmatprep.subr.bf16.mxu0 0
    %7839 = vmatpush1.bf16.msra.mxu0 %v5967
    %7840 = vmatprep.subr.bf16.mxu0 0
    %7841 = vmatpush1.bf16.msra.mxu0 %v5968
    %7842 = vmatprep.subr.bf16.mxu0 0
    %7843 = vmatpush1.bf16.msra.mxu0 %v5969
    %7844 = vmatprep.subr.bf16.mxu0 0
    %7845 = vmatpush1.bf16.msra.mxu0 %v5970
    %7846 = vmatprep.subr.bf16.mxu0 0
    %7847 = vmatpush1.bf16.msra.mxu0 %v5971
    %7848 = vmatprep.subr.bf16.mxu0 0
    %7849 = vmatpush1.bf16.msra.mxu0 %v5972
    %7850 = vmatprep.subr.bf16.mxu0 0
    %7851 = vmatpush1.bf16.msra.mxu0 %v5973
    %7852 = vmatprep.subr.bf16.mxu0 0
    %7853 = vmatpush1.bf16.msra.mxu0 %v5974
    %7854 = vmatprep.subr.bf16.mxu0 0
    %7855 = vmatpush1.bf16.msra.mxu0 %v5975
    %7856 = vmatprep.subr.bf16.mxu0 0
    %7857 = vmatpush1.bf16.msra.mxu0 %v5976
    %7858 = vmatprep.subr.bf16.mxu0 0
    %7859 = vmatpush1.bf16.msra.mxu0 %v5977
    %7860 = vmatprep.mubr.bf16.mxu0 %v2367
    %7861 = vmatmul.mubr.bf16.gmra.mrb[0].mxu0 %v2366
    %v7862 = vpop.f32.mrb[0].mxu0
    %v7863 = vadd.f32 %v7814, %v7862
    %v7864 = vpop.f32.mrb[0].mxu0
    %v7865 = vpop.f32.mrb[0].mxu0
    %v7866 = vadd.f32 %v7817, %v7865
    %v7867 = vpop.f32.mrb[0].mxu0
    %7868 = vmatprep.mubr.bf16.mxu0 %v2463
    %7869 = vmatmul.mubr.bf16.gmra.mrb[0].mxu0 %v2462
    %v7870 = vpop.f32.mrb[0].mxu0
    %v7871 = vadd.f32 %v7822, %v7870
    %v7872 = vpop.f32.mrb[0].mxu0
    %v7873 = vpop.f32.mrb[0].mxu0
    %v7874 = vadd.f32 %v7825, %v7873
    %v7875 = vpop.f32.mrb[0].mxu0
    %7876 = vdwg.mxu0
    %7877 = vmatprep.subr.bf16.mxu0 0
    %7878 = vmatpush1.bf16.msra.mxu0 %v5978
    %7879 = vmatprep.subr.bf16.mxu0 0
    %7880 = vmatpush1.bf16.msra.mxu0 %v5979
    %7881 = vmatprep.subr.bf16.mxu0 0
    %7882 = vmatpush1.bf16.msra.mxu0 %v5980
    %7883 = vmatprep.subr.bf16.mxu0 0
    %7884 = vmatpush1.bf16.msra.mxu0 %v5981
    %7885 = vmatprep.subr.bf16.mxu0 0
    %7886 = vmatpush1.bf16.msra.mxu0 %v5982
    %7887 = vmatprep.subr.bf16.mxu0 0
    %7888 = vmatpush1.bf16.msra.mxu0 %v5983
    %7889 = vmatprep.subr.bf16.mxu0 0
    %7890 = vmatpush1.bf16.msra.mxu0 %v5984
    %7891 = vmatprep.subr.bf16.mxu0 0
    %7892 = vmatpush1.bf16.msra.mxu0 %v5985
    %7893 = vmatprep.subr.bf16.mxu0 0
    %7894 = vmatpush1.bf16.msra.mxu0 %v5986
    %7895 = vmatprep.subr.bf16.mxu0 0
    %7896 = vmatpush1.bf16.msra.mxu0 %v5987
    %7897 = vmatprep.subr.bf16.mxu0 0
    %7898 = vmatpush1.bf16.msra.mxu0 %v5988
    %7899 = vmatprep.subr.bf16.mxu0 0
    %7900 = vmatpush1.bf16.msra.mxu0 %v5989
    %7901 = vmatprep.subr.bf16.mxu0 0
    %7902 = vmatpush1.bf16.msra.mxu0 %v5990
    %7903 = vmatprep.subr.bf16.mxu0 0
    %7904 = vmatpush1.bf16.msra.mxu0 %v5991
    %7905 = vmatprep.subr.bf16.mxu0 0
    %7906 = vmatpush1.bf16.msra.mxu0 %v5992
    %7907 = vmatprep.subr.bf16.mxu0 0
    %7908 = vmatpush1.bf16.msra.mxu0 %v5993
    %7909 = vmatprep.mubr.bf16.mxu0 %v2369
    %7910 = vmatmul.mubr.bf16.gmra.mrb[0].mxu0 %v2368
    %v7911 = vpop.f32.mrb[0].mxu0
    %v7912 = vadd.f32 %v7863, %v7911
    %v7913 = vpop.f32.mrb[0].mxu0
    %v7914 = vpop.f32.mrb[0].mxu0
    %v7915 = vadd.f32 %v7866, %v7914
    %v7916 = vpop.f32.mrb[0].mxu0
    %7917 = vmatprep.mubr.bf16.mxu0 %v2465
    %7918 = vmatmul.mubr.bf16.gmra.mrb[0].mxu0 %v2464
    %v7919 = vpop.f32.mrb[0].mxu0
    %v7920 = vadd.f32 %v7871, %v7919
    %v7921 = vpop.f32.mrb[0].mxu0
    %v7922 = vpop.f32.mrb[0].mxu0
    %v7923 = vadd.f32 %v7874, %v7922
    %v7924 = vpop.f32.mrb[0].mxu0
    %7925 = vdwg.mxu0
    %7926 = vmatprep.subr.bf16.mxu0 0
    %7927 = vmatpush1.bf16.msra.mxu0 %v5994
    %7928 = vmatprep.subr.bf16.mxu0 0
    %7929 = vmatpush1.bf16.msra.mxu0 %v5995
    %7930 = vmatprep.subr.bf16.mxu0 0
    %7931 = vmatpush1.bf16.msra.mxu0 %v5996
    %7932 = vmatprep.subr.bf16.mxu0 0
    %7933 = vmatpush1.bf16.msra.mxu0 %v5997
    %7934 = vmatprep.subr.bf16.mxu0 0
    %7935 = vmatpush1.bf16.msra.mxu0 %v5998
    %7936 = vmatprep.subr.bf16.mxu0 0
    %7937 = vmatpush1.bf16.msra.mxu0 %v5999
    %7938 = vmatprep.subr.bf16.mxu0 0
    %7939 = vmatpush1.bf16.msra.mxu0 %v6000
    %7940 = vmatprep.subr.bf16.mxu0 0
    %7941 = vmatpush1.bf16.msra.mxu0 %v6001
    %7942 = vmatprep.subr.bf16.mxu0 0
    %7943 = vmatpush1.bf16.msra.mxu0 %v6002
    %7944 = vmatprep.subr.bf16.mxu0 0
    %7945 = vmatpush1.bf16.msra.mxu0 %v6003
    %7946 = vmatprep.subr.bf16.mxu0 0
    %7947 = vmatpush1.bf16.msra.mxu0 %v6004
    %7948 = vmatprep.subr.bf16.mxu0 0
    %7949 = vmatpush1.bf16.msra.mxu0 %v6005
    %7950 = vmatprep.subr.bf16.mxu0 0
    %7951 = vmatpush1.bf16.msra.mxu0 %v6006
    %7952 = vmatprep.subr.bf16.mxu0 0
    %7953 = vmatpush1.bf16.msra.mxu0 %v6007
    %7954 = vmatprep.subr.bf16.mxu0 0
    %7955 = vmatpush1.bf16.msra.mxu0 %v6008
    %7956 = vmatprep.subr.bf16.mxu0 0
    %7957 = vmatpush1.bf16.msra.mxu0 %v6009
    %7958 = vmatprep.mubr.bf16.mxu0 %v2371
    %7959 = vmatmul.mubr.bf16.gmra.mrb[0].mxu0 %v2370
    %v7960 = vpop.f32.mrb[0].mxu0
    %v7961 = vadd.f32 %v7912, %v7960
    %v7962 = vpop.f32.mrb[0].mxu0
    %v7963 = vpop.f32.mrb[0].mxu0
    %v7964 = vadd.f32 %v7915, %v7963
    %v7965 = vpop.f32.mrb[0].mxu0
    %7966 = vmatprep.mubr.bf16.mxu0 %v2467
    %7967 = vmatmul.mubr.bf16.gmra.mrb[0].mxu0 %v2466
    %v7968 = vpop.f32.mrb[0].mxu0
    %v7969 = vadd.f32 %v7920, %v7968
    %v7970 = vpop.f32.mrb[0].mxu0
    %v7971 = vpop.f32.mrb[0].mxu0
    %v7972 = vadd.f32 %v7923, %v7971
    %v7973 = vpop.f32.mrb[0].mxu0
    %7974 = vdwg.mxu0
    %7975 = vmatprep.subr.bf16.mxu0 0
    %7976 = vmatpush1.bf16.msra.mxu0 %v6010
    %7977 = vmatprep.subr.bf16.mxu0 0
    %7978 = vmatpush1.bf16.msra.mxu0 %v6011
    %7979 = vmatprep.subr.bf16.mxu0 0
    %7980 = vmatpush1.bf16.msra.mxu0 %v6012
    %7981 = vmatprep.subr.bf16.mxu0 0
    %7982 = vmatpush1.bf16.msra.mxu0 %v6013
    %7983 = vmatprep.subr.bf16.mxu0 0
    %7984 = vmatpush1.bf16.msra.mxu0 %v6014
    %7985 = vmatprep.subr.bf16.mxu0 0
    %7986 = vmatpush1.bf16.msra.mxu0 %v6015
    %7987 = vmatprep.subr.bf16.mxu0 0
    %7988 = vmatpush1.bf16.msra.mxu0 %v6016
    %7989 = vmatprep.subr.bf16.mxu0 0
    %7990 = vmatpush1.bf16.msra.mxu0 %v6017
    %7991 = vmatprep.subr.bf16.mxu0 0
    %7992 = vmatpush1.bf16.msra.mxu0 %v6018
    %7993 = vmatprep.subr.bf16.mxu0 0
    %7994 = vmatpush1.bf16.msra.mxu0 %v6019
    %7995 = vmatprep.subr.bf16.mxu0 0
    %7996 = vmatpush1.bf16.msra.mxu0 %v6020
    %7997 = vmatprep.subr.bf16.mxu0 0
    %7998 = vmatpush1.bf16.msra.mxu0 %v6021
    %7999 = vmatprep.subr.bf16.mxu0 0
    %8000 = vmatpush1.bf16.msra.mxu0 %v6022
    %8001 = vmatprep.subr.bf16.mxu0 0
    %8002 = vmatpush1.bf16.msra.mxu0 %v6023
    %8003 = vmatprep.subr.bf16.mxu0 0
    %8004 = vmatpush1.bf16.msra.mxu0 %v6024
    %8005 = vmatprep.subr.bf16.mxu0 0
    %8006 = vmatpush1.bf16.msra.mxu0 %v6025
    %8007 = vmatprep.mubr.bf16.mxu0 %v2373
    %8008 = vmatmul.mubr.bf16.gmra.mrb[0].mxu0 %v2372
    %v8009 = vpop.f32.mrb[0].mxu0
    %v8010 = vadd.f32 %v7961, %v8009
    %v8011 = vpop.f32.mrb[0].mxu0
    %v8012 = vpop.f32.mrb[0].mxu0
    %v8013 = vadd.f32 %v7964, %v8012
    %v8014 = vpop.f32.mrb[0].mxu0
    %8015 = vmatprep.mubr.bf16.mxu0 %v2469
    %8016 = vmatmul.mubr.bf16.gmra.mrb[0].mxu0 %v2468
    %v8017 = vpop.f32.mrb[0].mxu0
    %v8018 = vadd.f32 %v7969, %v8017
    %v8019 = vpop.f32.mrb[0].mxu0
    %v8020 = vpop.f32.mrb[0].mxu0
    %v8021 = vadd.f32 %v7972, %v8020
    %v8022 = vpop.f32.mrb[0].mxu0
    %8023 = vdwg.mxu0
    %8024 = vmatprep.subr.bf16.mxu0 0
    %8025 = vmatpush1.bf16.msra.mxu0 %v6026
    %8026 = vmatprep.subr.bf16.mxu0 0
    %8027 = vmatpush1.bf16.msra.mxu0 %v6027
    %8028 = vmatprep.subr.bf16.mxu0 0
    %8029 = vmatpush1.bf16.msra.mxu0 %v6028
    %8030 = vmatprep.subr.bf16.mxu0 0
    %8031 = vmatpush1.bf16.msra.mxu0 %v6029
    %8032 = vmatprep.subr.bf16.mxu0 0
    %8033 = vmatpush1.bf16.msra.mxu0 %v6030
    %8034 = vmatprep.subr.bf16.mxu0 0
    %8035 = vmatpush1.bf16.msra.mxu0 %v6031
    %8036 = vmatprep.subr.bf16.mxu0 0
    %8037 = vmatpush1.bf16.msra.mxu0 %v6032
    %8038 = vmatprep.subr.bf16.mxu0 0
    %8039 = vmatpush1.bf16.msra.mxu0 %v6033
    %8040 = vmatprep.subr.bf16.mxu0 0
    %8041 = vmatpush1.bf16.msra.mxu0 %v6034
    %8042 = vmatprep.subr.bf16.mxu0 0
    %8043 = vmatpush1.bf16.msra.mxu0 %v6035
    %8044 = vmatprep.subr.bf16.mxu0 0
    %8045 = vmatpush1.bf16.msra.mxu0 %v6036
    %8046 = vmatprep.subr.bf16.mxu0 0
    %8047 = vmatpush1.bf16.msra.mxu0 %v6037
    %8048 = vmatprep.subr.bf16.mxu0 0
    %8049 = vmatpush1.bf16.msra.mxu0 %v6038
    %8050 = vmatprep.subr.bf16.mxu0 0
    %8051 = vmatpush1.bf16.msra.mxu0 %v6039
    %8052 = vmatprep.subr.bf16.mxu0 0
    %8053 = vmatpush1.bf16.msra.mxu0 %v6040
    %8054 = vmatprep.subr.bf16.mxu0 0
    %8055 = vmatpush1.bf16.msra.mxu0 %v6041
    %8056 = vmatprep.mubr.bf16.mxu0 %v2375
    %8057 = vmatmul.mubr.bf16.gmra.mrb[0].mxu0 %v2374
    %v8058 = vpop.f32.mrb[0].mxu0
    %v8059 = vadd.f32 %v8010, %v8058
    %v8060 = vpop.f32.mrb[0].mxu0
    %v8061 = vpop.f32.mrb[0].mxu0
    %v8062 = vadd.f32 %v8013, %v8061
    %v8063 = vpop.f32.mrb[0].mxu0
    %8064 = vmatprep.mubr.bf16.mxu0 %v2471
    %8065 = vmatmul.mubr.bf16.gmra.mrb[0].mxu0 %v2470
    %v8066 = vpop.f32.mrb[0].mxu0
    %v8067 = vadd.f32 %v8018, %v8066
    %v8068 = vpop.f32.mrb[0].mxu0
    %v8069 = vpop.f32.mrb[0].mxu0
    %v8070 = vadd.f32 %v8021, %v8069
    %v8071 = vpop.f32.mrb[0].mxu0
    %8072 = vdwg.mxu0
    %8073 = vmatprep.subr.bf16.mxu0 0
    %8074 = vmatpush1.bf16.msra.mxu0 %v6042
    %8075 = vmatprep.subr.bf16.mxu0 0
    %8076 = vmatpush1.bf16.msra.mxu0 %v6043
    %8077 = vmatprep.subr.bf16.mxu0 0
    %8078 = vmatpush1.bf16.msra.mxu0 %v6044
    %8079 = vmatprep.subr.bf16.mxu0 0
    %8080 = vmatpush1.bf16.msra.mxu0 %v6045
    %8081 = vmatprep.subr.bf16.mxu0 0
    %8082 = vmatpush1.bf16.msra.mxu0 %v6046
    %8083 = vmatprep.subr.bf16.mxu0 0
    %8084 = vmatpush1.bf16.msra.mxu0 %v6047
    %8085 = vmatprep.subr.bf16.mxu0 0
    %8086 = vmatpush1.bf16.msra.mxu0 %v6048
    %8087 = vmatprep.subr.bf16.mxu0 0
    %8088 = vmatpush1.bf16.msra.mxu0 %v6049
    %8089 = vmatprep.subr.bf16.mxu0 0
    %8090 = vmatpush1.bf16.msra.mxu0 %v6050
    %8091 = vmatprep.subr.bf16.mxu0 0
    %8092 = vmatpush1.bf16.msra.mxu0 %v6051
    %8093 = vmatprep.subr.bf16.mxu0 0
    %8094 = vmatpush1.bf16.msra.mxu0 %v6052
    %8095 = vmatprep.subr.bf16.mxu0 0
    %8096 = vmatpush1.bf16.msra.mxu0 %v6053
    %8097 = vmatprep.subr.bf16.mxu0 0
    %8098 = vmatpush1.bf16.msra.mxu0 %v6054
    %8099 = vmatprep.subr.bf16.mxu0 0
    %8100 = vmatpush1.bf16.msra.mxu0 %v6055
    %8101 = vmatprep.subr.bf16.mxu0 0
    %8102 = vmatpush1.bf16.msra.mxu0 %v6056
    %8103 = vmatprep.subr.bf16.mxu0 0
    %8104 = vmatpush1.bf16.msra.mxu0 %v6057
    %8105 = vmatprep.mubr.bf16.mxu0 %v2377
    %8106 = vmatmul.mubr.bf16.gmra.mrb[0].mxu0 %v2376
    %v8107 = vpop.f32.mrb[0].mxu0
    %v8108 = vadd.f32 %v8059, %v8107
    %v8109 = vpop.f32.mrb[0].mxu0
    %v8110 = vpop.f32.mrb[0].mxu0
    %v8111 = vadd.f32 %v8062, %v8110
    %v8112 = vpop.f32.mrb[0].mxu0
    %8113 = vmatprep.mubr.bf16.mxu0 %v2473
    %8114 = vmatmul.mubr.bf16.gmra.mrb[0].mxu0 %v2472
    %v8115 = vpop.f32.mrb[0].mxu0
    %v8116 = vadd.f32 %v8067, %v8115
    %v8117 = vpop.f32.mrb[0].mxu0
    %v8118 = vpop.f32.mrb[0].mxu0
    %v8119 = vadd.f32 %v8070, %v8118
    %v8120 = vpop.f32.mrb[0].mxu0
    %8121 = vdwg.mxu0
    %8122 = vmatprep.subr.bf16.mxu0 0
    %8123 = vmatpush1.bf16.msra.mxu0 %v6058
    %8124 = vmatprep.subr.bf16.mxu0 0
    %8125 = vmatpush1.bf16.msra.mxu0 %v6059
    %8126 = vmatprep.subr.bf16.mxu0 0
    %8127 = vmatpush1.bf16.msra.mxu0 %v6060
    %8128 = vmatprep.subr.bf16.mxu0 0
    %8129 = vmatpush1.bf16.msra.mxu0 %v6061
    %8130 = vmatprep.subr.bf16.mxu0 0
    %8131 = vmatpush1.bf16.msra.mxu0 %v6062
    %8132 = vmatprep.subr.bf16.mxu0 0
    %8133 = vmatpush1.bf16.msra.mxu0 %v6063
    %8134 = vmatprep.subr.bf16.mxu0 0
    %8135 = vmatpush1.bf16.msra.mxu0 %v6064
    %8136 = vmatprep.subr.bf16.mxu0 0
    %8137 = vmatpush1.bf16.msra.mxu0 %v6065
    %8138 = vmatprep.subr.bf16.mxu0 0
    %8139 = vmatpush1.bf16.msra.mxu0 %v6066
    %8140 = vmatprep.subr.bf16.mxu0 0
    %8141 = vmatpush1.bf16.msra.mxu0 %v6067
    %8142 = vmatprep.subr.bf16.mxu0 0
    %8143 = vmatpush1.bf16.msra.mxu0 %v6068
    %8144 = vmatprep.subr.bf16.mxu0 0
    %8145 = vmatpush1.bf16.msra.mxu0 %v6069
    %8146 = vmatprep.subr.bf16.mxu0 0
    %8147 = vmatpush1.bf16.msra.mxu0 %v6070
    %8148 = vmatprep.subr.bf16.mxu0 0
    %8149 = vmatpush1.bf16.msra.mxu0 %v6071
    %8150 = vmatprep.subr.bf16.mxu0 0
    %8151 = vmatpush1.bf16.msra.mxu0 %v6072
    %8152 = vmatprep.subr.bf16.mxu0 0
    %8153 = vmatpush1.bf16.msra.mxu0 %v6073
    %8154 = vmatprep.mubr.bf16.mxu0 %v2379
    %8155 = vmatmul.mubr.bf16.gmra.mrb[0].mxu0 %v2378
    %v8156 = vpop.f32.mrb[0].mxu0
    %v8157 = vadd.f32 %v8108, %v8156
    %v8158 = vpop.f32.mrb[0].mxu0
    %v8159 = vpop.f32.mrb[0].mxu0
    %v8160 = vadd.f32 %v8111, %v8159
    %v8161 = vpop.f32.mrb[0].mxu0
    %8162 = vmatprep.mubr.bf16.mxu0 %v2475
    %8163 = vmatmul.mubr.bf16.gmra.mrb[0].mxu0 %v2474
    %v8164 = vpop.f32.mrb[0].mxu0
    %v8165 = vadd.f32 %v8116, %v8164
    %v8166 = vpop.f32.mrb[0].mxu0
    %v8167 = vpop.f32.mrb[0].mxu0
    %v8168 = vadd.f32 %v8119, %v8167
    %v8169 = vpop.f32.mrb[0].mxu0
    %8170 = vdwg.mxu0
    %8171 = vmatprep.subr.bf16.mxu0 0
    %8172 = vmatpush1.bf16.msra.mxu0 %v6074
    %8173 = vmatprep.subr.bf16.mxu0 0
    %8174 = vmatpush1.bf16.msra.mxu0 %v6075
    %8175 = vmatprep.subr.bf16.mxu0 0
    %8176 = vmatpush1.bf16.msra.mxu0 %v6076
    %8177 = vmatprep.subr.bf16.mxu0 0
    %8178 = vmatpush1.bf16.msra.mxu0 %v6077
    %8179 = vmatprep.subr.bf16.mxu0 0
    %8180 = vmatpush1.bf16.msra.mxu0 %v6078
    %8181 = vmatprep.subr.bf16.mxu0 0
    %8182 = vmatpush1.bf16.msra.mxu0 %v6079
    %8183 = vmatprep.subr.bf16.mxu0 0
    %8184 = vmatpush1.bf16.msra.mxu0 %v6080
    %8185 = vmatprep.subr.bf16.mxu0 0
    %8186 = vmatpush1.bf16.msra.mxu0 %v6081
    %8187 = vmatprep.subr.bf16.mxu0 0
    %8188 = vmatpush1.bf16.msra.mxu0 %v6082
    %8189 = vmatprep.subr.bf16.mxu0 0
    %8190 = vmatpush1.bf16.msra.mxu0 %v6083
    %8191 = vmatprep.subr.bf16.mxu0 0
    %8192 = vmatpush1.bf16.msra.mxu0 %v6084
    %8193 = vmatprep.subr.bf16.mxu0 0
    %8194 = vmatpush1.bf16.msra.mxu0 %v6085
    %8195 = vmatprep.subr.bf16.mxu0 0
    %8196 = vmatpush1.bf16.msra.mxu0 %v6086
    %8197 = vmatprep.subr.bf16.mxu0 0
    %8198 = vmatpush1.bf16.msra.mxu0 %v6087
    %8199 = vmatprep.subr.bf16.mxu0 0
    %8200 = vmatpush1.bf16.msra.mxu0 %v6088
    %8201 = vmatprep.subr.bf16.mxu0 0
    %8202 = vmatpush1.bf16.msra.mxu0 %v6089
    %8203 = vmatprep.mubr.bf16.mxu0 %v2381
    %8204 = vmatmul.mubr.bf16.gmra.mrb[0].mxu0 %v2380
    %v8205 = vpop.f32.mrb[0].mxu0
    %v8206 = vadd.f32 %v8157, %v8205
    %v8207 = vpop.f32.mrb[0].mxu0
    %v8208 = vpop.f32.mrb[0].mxu0
    %v8209 = vadd.f32 %v8160, %v8208
    %v8210 = vpop.f32.mrb[0].mxu0
    %8211 = vmatprep.mubr.bf16.mxu0 %v2477
    %8212 = vmatmul.mubr.bf16.gmra.mrb[0].mxu0 %v2476
    %v8213 = vpop.f32.mrb[0].mxu0
    %v8214 = vadd.f32 %v8165, %v8213
    %v8215 = vpop.f32.mrb[0].mxu0
    %v8216 = vpop.f32.mrb[0].mxu0
    %v8217 = vadd.f32 %v8168, %v8216
    %v8218 = vpop.f32.mrb[0].mxu0
    %8219 = vdwg.mxu0
    %8220 = vmatprep.subr.bf16.mxu0 0
    %8221 = vmatpush1.bf16.msra.mxu0 %v6090
    %8222 = vmatprep.subr.bf16.mxu0 0
    %8223 = vmatpush1.bf16.msra.mxu0 %v6091
    %8224 = vmatprep.subr.bf16.mxu0 0
    %8225 = vmatpush1.bf16.msra.mxu0 %v6092
    %8226 = vmatprep.subr.bf16.mxu0 0
    %8227 = vmatpush1.bf16.msra.mxu0 %v6093
    %8228 = vmatprep.subr.bf16.mxu0 0
    %8229 = vmatpush1.bf16.msra.mxu0 %v6094
    %8230 = vmatprep.subr.bf16.mxu0 0
    %8231 = vmatpush1.bf16.msra.mxu0 %v6095
    %8232 = vmatprep.subr.bf16.mxu0 0
    %8233 = vmatpush1.bf16.msra.mxu0 %v6096
    %8234 = vmatprep.subr.bf16.mxu0 0
    %8235 = vmatpush1.bf16.msra.mxu0 %v6097
    %8236 = vmatprep.subr.bf16.mxu0 0
    %8237 = vmatpush1.bf16.msra.mxu0 %v6098
    %8238 = vmatprep.subr.bf16.mxu0 0
    %8239 = vmatpush1.bf16.msra.mxu0 %v6099
    %8240 = vmatprep.subr.bf16.mxu0 0
    %8241 = vmatpush1.bf16.msra.mxu0 %v6100
    %8242 = vmatprep.subr.bf16.mxu0 0
    %8243 = vmatpush1.bf16.msra.mxu0 %v6101
    %8244 = vmatprep.subr.bf16.mxu0 0
    %8245 = vmatpush1.bf16.msra.mxu0 %v6102
    %8246 = vmatprep.subr.bf16.mxu0 0
    %8247 = vmatpush1.bf16.msra.mxu0 %v6103
    %8248 = vmatprep.subr.bf16.mxu0 0
    %8249 = vmatpush1.bf16.msra.mxu0 %v6104
    %8250 = vmatprep.subr.bf16.mxu0 0
    %8251 = vmatpush1.bf16.msra.mxu0 %v6105
    %8252 = vmatprep.mubr.bf16.mxu0 %v2383
    %8253 = vmatmul.mubr.bf16.gmra.mrb[0].mxu0 %v2382
    %v8254 = vpop.f32.mrb[0].mxu0
    %v8255 = vadd.f32 %v8206, %v8254
    %v8256 = vpop.f32.mrb[0].mxu0
    %v8257 = vpop.f32.mrb[0].mxu0
    %v8258 = vadd.f32 %v8209, %v8257
    %v8259 = vpop.f32.mrb[0].mxu0
    %8260 = vmatprep.mubr.bf16.mxu0 %v2479
    %8261 = vmatmul.mubr.bf16.gmra.mrb[0].mxu0 %v2478
    %v8262 = vpop.f32.mrb[0].mxu0
    %v8263 = vadd.f32 %v8214, %v8262
    %v8264 = vpop.f32.mrb[0].mxu0
    %v8265 = vpop.f32.mrb[0].mxu0
    %v8266 = vadd.f32 %v8217, %v8265
    %v8267 = vpop.f32.mrb[0].mxu0
    %8268 = vdwg.mxu0
    %8269 = vmatprep.subr.bf16.mxu0 0
    %8270 = vmatpush1.bf16.msra.mxu0 %v6106
    %8271 = vmatprep.subr.bf16.mxu0 0
    %8272 = vmatpush1.bf16.msra.mxu0 %v6107
    %8273 = vmatprep.subr.bf16.mxu0 0
    %8274 = vmatpush1.bf16.msra.mxu0 %v6108
    %8275 = vmatprep.subr.bf16.mxu0 0
    %8276 = vmatpush1.bf16.msra.mxu0 %v6109
    %8277 = vmatprep.subr.bf16.mxu0 0
    %8278 = vmatpush1.bf16.msra.mxu0 %v6110
    %8279 = vmatprep.subr.bf16.mxu0 0
    %8280 = vmatpush1.bf16.msra.mxu0 %v6111
    %8281 = vmatprep.subr.bf16.mxu0 0
    %8282 = vmatpush1.bf16.msra.mxu0 %v6112
    %8283 = vmatprep.subr.bf16.mxu0 0
    %8284 = vmatpush1.bf16.msra.mxu0 %v6113
    %8285 = vmatprep.subr.bf16.mxu0 0
    %8286 = vmatpush1.bf16.msra.mxu0 %v6114
    %8287 = vmatprep.subr.bf16.mxu0 0
    %8288 = vmatpush1.bf16.msra.mxu0 %v6115
    %8289 = vmatprep.subr.bf16.mxu0 0
    %8290 = vmatpush1.bf16.msra.mxu0 %v6116
    %8291 = vmatprep.subr.bf16.mxu0 0
    %8292 = vmatpush1.bf16.msra.mxu0 %v6117
    %8293 = vmatprep.subr.bf16.mxu0 0
    %8294 = vmatpush1.bf16.msra.mxu0 %v6118
    %8295 = vmatprep.subr.bf16.mxu0 0
    %8296 = vmatpush1.bf16.msra.mxu0 %v6119
    %8297 = vmatprep.subr.bf16.mxu0 0
    %8298 = vmatpush1.bf16.msra.mxu0 %v6120
    %8299 = vmatprep.subr.bf16.mxu0 0
    %8300 = vmatpush1.bf16.msra.mxu0 %v6121
    %8301 = vmatprep.mubr.bf16.mxu0 %v2385
    %8302 = vmatmul.mubr.bf16.gmra.mrb[0].mxu0 %v2384
    %v8303 = vpop.f32.mrb[0].mxu0
    %v8304 = vadd.f32 %v8255, %v8303
    %v8305 = vpop.f32.mrb[0].mxu0
    %v8306 = vpop.f32.mrb[0].mxu0
    %v8307 = vadd.f32 %v8258, %v8306
    %v8308 = vpop.f32.mrb[0].mxu0
    %8309 = vmatprep.mubr.bf16.mxu0 %v2481
    %8310 = vmatmul.mubr.bf16.gmra.mrb[0].mxu0 %v2480
    %v8311 = vpop.f32.mrb[0].mxu0
    %v8312 = vadd.f32 %v8263, %v8311
    %v8313 = vpop.f32.mrb[0].mxu0
    %v8314 = vpop.f32.mrb[0].mxu0
    %v8315 = vadd.f32 %v8266, %v8314
    %v8316 = vpop.f32.mrb[0].mxu0
    %8317 = vdwg.mxu0
    %8318 = vmatprep.subr.bf16.mxu0 0
    %8319 = vmatpush1.bf16.msra.mxu0 %v6122
    %8320 = vmatprep.subr.bf16.mxu0 0
    %8321 = vmatpush1.bf16.msra.mxu0 %v6123
    %8322 = vmatprep.subr.bf16.mxu0 0
    %8323 = vmatpush1.bf16.msra.mxu0 %v6124
    %8324 = vmatprep.subr.bf16.mxu0 0
    %8325 = vmatpush1.bf16.msra.mxu0 %v6125
    %8326 = vmatprep.subr.bf16.mxu0 0
    %8327 = vmatpush1.bf16.msra.mxu0 %v6126
    %8328 = vmatprep.subr.bf16.mxu0 0
    %8329 = vmatpush1.bf16.msra.mxu0 %v6127
    %8330 = vmatprep.subr.bf16.mxu0 0
    %8331 = vmatpush1.bf16.msra.mxu0 %v6128
    %8332 = vmatprep.subr.bf16.mxu0 0
    %8333 = vmatpush1.bf16.msra.mxu0 %v6129
    %8334 = vmatprep.subr.bf16.mxu0 0
    %8335 = vmatpush1.bf16.msra.mxu0 %v6130
    %8336 = vmatprep.subr.bf16.mxu0 0
    %8337 = vmatpush1.bf16.msra.mxu0 %v6131
    %8338 = vmatprep.subr.bf16.mxu0 0
    %8339 = vmatpush1.bf16.msra.mxu0 %v6132
    %8340 = vmatprep.subr.bf16.mxu0 0
    %8341 = vmatpush1.bf16.msra.mxu0 %v6133
    %8342 = vmatprep.subr.bf16.mxu0 0
    %8343 = vmatpush1.bf16.msra.mxu0 %v6134
    %8344 = vmatprep.subr.bf16.mxu0 0
    %8345 = vmatpush1.bf16.msra.mxu0 %v6135
    %8346 = vmatprep.subr.bf16.mxu0 0
    %8347 = vmatpush1.bf16.msra.mxu0 %v6136
    %8348 = vmatprep.subr.bf16.mxu0 0
    %8349 = vmatpush1.bf16.msra.mxu0 %v6137
    %8350 = vmatprep.mubr.bf16.mxu0 %v2387
    %8351 = vmatmul.mubr.bf16.gmra.mrb[0].mxu0 %v2386
    %v8352 = vpop.f32.mrb[0].mxu0
    %v8353 = vadd.f32 %v8304, %v8352
    %v8354 = vpop.f32.mrb[0].mxu0
    %v8355 = vpop.f32.mrb[0].mxu0
    %v8356 = vadd.f32 %v8307, %v8355
    %v8357 = vpop.f32.mrb[0].mxu0
    %8358 = vmatprep.mubr.bf16.mxu0 %v2483
    %8359 = vmatmul.mubr.bf16.gmra.mrb[0].mxu0 %v2482
    %v8360 = vpop.f32.mrb[0].mxu0
    %v8361 = vadd.f32 %v8312, %v8360
    %v8362 = vpop.f32.mrb[0].mxu0
    %v8363 = vpop.f32.mrb[0].mxu0
    %v8364 = vadd.f32 %v8315, %v8363
    %v8365 = vpop.f32.mrb[0].mxu0
    %8366 = vdwg.mxu0
    %8367 = vmatprep.subr.bf16.mxu0 0
    %8368 = vmatpush1.bf16.msra.mxu0 %v6138
    %8369 = vmatprep.subr.bf16.mxu0 0
    %8370 = vmatpush1.bf16.msra.mxu0 %v6139
    %8371 = vmatprep.subr.bf16.mxu0 0
    %8372 = vmatpush1.bf16.msra.mxu0 %v6140
    %8373 = vmatprep.subr.bf16.mxu0 0
    %8374 = vmatpush1.bf16.msra.mxu0 %v6141
    %8375 = vmatprep.subr.bf16.mxu0 0
    %8376 = vmatpush1.bf16.msra.mxu0 %v6142
    %8377 = vmatprep.subr.bf16.mxu0 0
    %8378 = vmatpush1.bf16.msra.mxu0 %v6143
    %8379 = vmatprep.subr.bf16.mxu0 0
    %8380 = vmatpush1.bf16.msra.mxu0 %v6144
    %8381 = vmatprep.subr.bf16.mxu0 0
    %8382 = vmatpush1.bf16.msra.mxu0 %v6145
    %8383 = vmatprep.subr.bf16.mxu0 0
    %8384 = vmatpush1.bf16.msra.mxu0 %v6146
    %8385 = vmatprep.subr.bf16.mxu0 0
    %8386 = vmatpush1.bf16.msra.mxu0 %v6147
    %8387 = vmatprep.subr.bf16.mxu0 0
    %8388 = vmatpush1.bf16.msra.mxu0 %v6148
    %8389 = vmatprep.subr.bf16.mxu0 0
    %8390 = vmatpush1.bf16.msra.mxu0 %v6149
    %8391 = vmatprep.subr.bf16.mxu0 0
    %8392 = vmatpush1.bf16.msra.mxu0 %v6150
    %8393 = vmatprep.subr.bf16.mxu0 0
    %8394 = vmatpush1.bf16.msra.mxu0 %v6151
    %8395 = vmatprep.subr.bf16.mxu0 0
    %8396 = vmatpush1.bf16.msra.mxu0 %v6152
    %8397 = vmatprep.subr.bf16.mxu0 0
    %8398 = vmatpush1.bf16.msra.mxu0 %v6153
    %8399 = vmatprep.mubr.bf16.mxu0 %v2389
    %8400 = vmatmul.mubr.bf16.gmra.mrb[0].mxu0 %v2388
    %v8401 = vpop.f32.mrb[0].mxu0
    %v8402 = vadd.f32 %v8353, %v8401
    %v8403 = vpop.f32.mrb[0].mxu0
    %v8404 = vpop.f32.mrb[0].mxu0
    %v8405 = vadd.f32 %v8356, %v8404
    %v8406 = vpop.f32.mrb[0].mxu0
    %8407 = vmatprep.mubr.bf16.mxu0 %v2485
    %8408 = vmatmul.mubr.bf16.gmra.mrb[0].mxu0 %v2484
    %v8409 = vpop.f32.mrb[0].mxu0
    %v8410 = vadd.f32 %v8361, %v8409
    %v8411 = vpop.f32.mrb[0].mxu0
    %v8412 = vpop.f32.mrb[0].mxu0
    %v8413 = vadd.f32 %v8364, %v8412
    %v8414 = vpop.f32.mrb[0].mxu0
    %8415 = vdwg.mxu0
    %8416 = vmatprep.subr.bf16.mxu0 0
    %8417 = vmatpush1.bf16.msra.mxu0 %v6154
    %8418 = vmatprep.subr.bf16.mxu0 0
    %8419 = vmatpush1.bf16.msra.mxu0 %v6155
    %8420 = vmatprep.subr.bf16.mxu0 0
    %8421 = vmatpush1.bf16.msra.mxu0 %v6156
    %8422 = vmatprep.subr.bf16.mxu0 0
    %8423 = vmatpush1.bf16.msra.mxu0 %v6157
    %8424 = vmatprep.subr.bf16.mxu0 0
    %8425 = vmatpush1.bf16.msra.mxu0 %v6158
    %8426 = vmatprep.subr.bf16.mxu0 0
    %8427 = vmatpush1.bf16.msra.mxu0 %v6159
    %8428 = vmatprep.subr.bf16.mxu0 0
    %8429 = vmatpush1.bf16.msra.mxu0 %v6160
    %8430 = vmatprep.subr.bf16.mxu0 0
    %8431 = vmatpush1.bf16.msra.mxu0 %v6161
    %8432 = vmatprep.subr.bf16.mxu0 0
    %8433 = vmatpush1.bf16.msra.mxu0 %v6162
    %8434 = vmatprep.subr.bf16.mxu0 0
    %8435 = vmatpush1.bf16.msra.mxu0 %v6163
    %8436 = vmatprep.subr.bf16.mxu0 0
    %8437 = vmatpush1.bf16.msra.mxu0 %v6164
    %8438 = vmatprep.subr.bf16.mxu0 0
    %8439 = vmatpush1.bf16.msra.mxu0 %v6165
    %8440 = vmatprep.subr.bf16.mxu0 0
    %8441 = vmatpush1.bf16.msra.mxu0 %v6166
    %8442 = vmatprep.subr.bf16.mxu0 0
    %8443 = vmatpush1.bf16.msra.mxu0 %v6167
    %8444 = vmatprep.subr.bf16.mxu0 0
    %8445 = vmatpush1.bf16.msra.mxu0 %v6168
    %8446 = vmatprep.subr.bf16.mxu0 0
    %8447 = vmatpush1.bf16.msra.mxu0 %v6169
    %8448 = vmatprep.mubr.bf16.mxu0 %v2391
    %8449 = vmatmul.mubr.bf16.gmra.mrb[0].mxu0 %v2390
    %v8450 = vpop.f32.mrb[0].mxu0
    %v8451 = vadd.f32 %v8402, %v8450
    %v8452 = vpop.f32.mrb[0].mxu0
    %v8453 = vpop.f32.mrb[0].mxu0
    %v8454 = vadd.f32 %v8405, %v8453
    %v8455 = vpop.f32.mrb[0].mxu0
    %8456 = vmatprep.mubr.bf16.mxu0 %v2487
    %8457 = vmatmul.mubr.bf16.gmra.mrb[0].mxu0 %v2486
    %v8458 = vpop.f32.mrb[0].mxu0
    %v8459 = vadd.f32 %v8410, %v8458
    %v8460 = vpop.f32.mrb[0].mxu0
    %v8461 = vpop.f32.mrb[0].mxu0
    %v8462 = vadd.f32 %v8413, %v8461
    %v8463 = vpop.f32.mrb[0].mxu0
    %8464 = vdwg.mxu0
    %8465 = vmatprep.subr.bf16.mxu0 0
    %8466 = vmatpush1.bf16.msra.mxu0 %v6170
    %8467 = vmatprep.subr.bf16.mxu0 0
    %8468 = vmatpush1.bf16.msra.mxu0 %v6171
    %8469 = vmatprep.subr.bf16.mxu0 0
    %8470 = vmatpush1.bf16.msra.mxu0 %v6172
    %8471 = vmatprep.subr.bf16.mxu0 0
    %8472 = vmatpush1.bf16.msra.mxu0 %v6173
    %8473 = vmatprep.subr.bf16.mxu0 0
    %8474 = vmatpush1.bf16.msra.mxu0 %v6174
    %8475 = vmatprep.subr.bf16.mxu0 0
    %8476 = vmatpush1.bf16.msra.mxu0 %v6175
    %8477 = vmatprep.subr.bf16.mxu0 0
    %8478 = vmatpush1.bf16.msra.mxu0 %v6176
    %8479 = vmatprep.subr.bf16.mxu0 0
    %8480 = vmatpush1.bf16.msra.mxu0 %v6177
    %8481 = vmatprep.subr.bf16.mxu0 0
    %8482 = vmatpush1.bf16.msra.mxu0 %v6178
    %8483 = vmatprep.subr.bf16.mxu0 0
    %8484 = vmatpush1.bf16.msra.mxu0 %v6179
    %8485 = vmatprep.subr.bf16.mxu0 0
    %8486 = vmatpush1.bf16.msra.mxu0 %v6180
    %8487 = vmatprep.subr.bf16.mxu0 0
    %8488 = vmatpush1.bf16.msra.mxu0 %v6181
    %8489 = vmatprep.subr.bf16.mxu0 0
    %8490 = vmatpush1.bf16.msra.mxu0 %v6182
    %8491 = vmatprep.subr.bf16.mxu0 0
    %8492 = vmatpush1.bf16.msra.mxu0 %v6183
    %8493 = vmatprep.subr.bf16.mxu0 0
    %8494 = vmatpush1.bf16.msra.mxu0 %v6184
    %8495 = vmatprep.subr.bf16.mxu0 0
    %8496 = vmatpush1.bf16.msra.mxu0 %v6185
    %8497 = vmatprep.mubr.bf16.mxu0 %v2393
    %8498 = vmatmul.mubr.bf16.gmra.mrb[0].mxu0 %v2392
    %v8499 = vpop.f32.mrb[0].mxu0
    %v8500 = vadd.f32 %v8451, %v8499
    %v8501 = vpop.f32.mrb[0].mxu0
    %v8502 = vpop.f32.mrb[0].mxu0
    %v8503 = vadd.f32 %v8454, %v8502
    %v8504 = vpop.f32.mrb[0].mxu0
    %8505 = vmatprep.mubr.bf16.mxu0 %v2489
    %8506 = vmatmul.mubr.bf16.gmra.mrb[0].mxu0 %v2488
    %v8507 = vpop.f32.mrb[0].mxu0
    %v8508 = vadd.f32 %v8459, %v8507
    %v8509 = vpop.f32.mrb[0].mxu0
    %v8510 = vpop.f32.mrb[0].mxu0
    %v8511 = vadd.f32 %v8462, %v8510
    %v8512 = vpop.f32.mrb[0].mxu0
    %8513 = vdwg.mxu0
    %8514 = vmatprep.subr.bf16.mxu0 0
    %8515 = vmatpush1.bf16.msra.mxu0 %v6186
    %8516 = vmatprep.subr.bf16.mxu0 0
    %8517 = vmatpush1.bf16.msra.mxu0 %v6187
    %8518 = vmatprep.subr.bf16.mxu0 0
    %8519 = vmatpush1.bf16.msra.mxu0 %v6188
    %8520 = vmatprep.subr.bf16.mxu0 0
    %8521 = vmatpush1.bf16.msra.mxu0 %v6189
    %8522 = vmatprep.subr.bf16.mxu0 0
    %8523 = vmatpush1.bf16.msra.mxu0 %v6190
    %8524 = vmatprep.subr.bf16.mxu0 0
    %8525 = vmatpush1.bf16.msra.mxu0 %v6191
    %8526 = vmatprep.subr.bf16.mxu0 0
    %8527 = vmatpush1.bf16.msra.mxu0 %v6192
    %8528 = vmatprep.subr.bf16.mxu0 0
    %8529 = vmatpush1.bf16.msra.mxu0 %v6193
    %8530 = vmatprep.subr.bf16.mxu0 0
    %8531 = vmatpush1.bf16.msra.mxu0 %v6194
    %8532 = vmatprep.subr.bf16.mxu0 0
    %8533 = vmatpush1.bf16.msra.mxu0 %v6195
    %8534 = vmatprep.subr.bf16.mxu0 0
    %8535 = vmatpush1.bf16.msra.mxu0 %v6196
    %8536 = vmatprep.subr.bf16.mxu0 0
    %8537 = vmatpush1.bf16.msra.mxu0 %v6197
    %8538 = vmatprep.subr.bf16.mxu0 0
    %8539 = vmatpush1.bf16.msra.mxu0 %v6198
    %8540 = vmatprep.subr.bf16.mxu0 0
    %8541 = vmatpush1.bf16.msra.mxu0 %v6199
    %8542 = vmatprep.subr.bf16.mxu0 0
    %8543 = vmatpush1.bf16.msra.mxu0 %v6200
    %8544 = vmatprep.subr.bf16.mxu0 0
    %8545 = vmatpush1.bf16.msra.mxu0 %v6201
    %8546 = vmatprep.mubr.bf16.mxu0 %v2395
    %8547 = vmatmul.mubr.bf16.gmra.mrb[0].mxu0 %v2394
    %v8548 = vpop.f32.mrb[0].mxu0
    %v8549 = vadd.f32 %v8500, %v8548
    %v8550 = vpop.f32.mrb[0].mxu0
    %v8551 = vpop.f32.mrb[0].mxu0
    %v8552 = vadd.f32 %v8503, %v8551
    %v8553 = vpop.f32.mrb[0].mxu0
    %8554 = vmatprep.mubr.bf16.mxu0 %v2491
    %8555 = vmatmul.mubr.bf16.gmra.mrb[0].mxu0 %v2490
    %v8556 = vpop.f32.mrb[0].mxu0
    %v8557 = vadd.f32 %v8508, %v8556
    %v8558 = vpop.f32.mrb[0].mxu0
    %v8559 = vpop.f32.mrb[0].mxu0
    %v8560 = vadd.f32 %v8511, %v8559
    %v8561 = vpop.f32.mrb[0].mxu0
    %8562 = vdwg.mxu0
    %8563 = vmatprep.subr.bf16.mxu0 0
    %8564 = vmatpush1.bf16.msra.mxu0 %v6202
    %8565 = vmatprep.subr.bf16.mxu0 0
    %8566 = vmatpush1.bf16.msra.mxu0 %v6203
    %8567 = vmatprep.subr.bf16.mxu0 0
    %8568 = vmatpush1.bf16.msra.mxu0 %v6204
    %8569 = vmatprep.subr.bf16.mxu0 0
    %8570 = vmatpush1.bf16.msra.mxu0 %v6205
    %8571 = vmatprep.subr.bf16.mxu0 0
    %8572 = vmatpush1.bf16.msra.mxu0 %v6206
    %8573 = vmatprep.subr.bf16.mxu0 0
    %8574 = vmatpush1.bf16.msra.mxu0 %v6207
    %8575 = vmatprep.subr.bf16.mxu0 0
    %8576 = vmatpush1.bf16.msra.mxu0 %v6208
    %8577 = vmatprep.subr.bf16.mxu0 0
    %8578 = vmatpush1.bf16.msra.mxu0 %v6209
    %8579 = vmatprep.subr.bf16.mxu0 0
    %8580 = vmatpush1.bf16.msra.mxu0 %v6210
    %8581 = vmatprep.subr.bf16.mxu0 0
    %8582 = vmatpush1.bf16.msra.mxu0 %v6211
    %8583 = vmatprep.subr.bf16.mxu0 0
    %8584 = vmatpush1.bf16.msra.mxu0 %v6212
    %8585 = vmatprep.subr.bf16.mxu0 0
    %8586 = vmatpush1.bf16.msra.mxu0 %v6213
    %8587 = vmatprep.subr.bf16.mxu0 0
    %8588 = vmatpush1.bf16.msra.mxu0 %v6214
    %8589 = vmatprep.subr.bf16.mxu0 0
    %8590 = vmatpush1.bf16.msra.mxu0 %v6215
    %8591 = vmatprep.subr.bf16.mxu0 0
    %8592 = vmatpush1.bf16.msra.mxu0 %v6216
    %8593 = vmatprep.subr.bf16.mxu0 0
    %8594 = vmatpush1.bf16.msra.mxu0 %v6217
    %8595 = vmatprep.mubr.bf16.mxu0 %v2397
    %8596 = vmatmul.mubr.bf16.gmra.mrb[0].mxu0 %v2396
    %v8597 = vpop.f32.mrb[0].mxu0
    %v8598 = vadd.f32 %v8549, %v8597
    %v8599 = vpop.f32.mrb[0].mxu0
    %v8600 = vpop.f32.mrb[0].mxu0
    %v8601 = vadd.f32 %v8552, %v8600
    %v8602 = vpop.f32.mrb[0].mxu0
    %8603 = vmatprep.mubr.bf16.mxu0 %v2493
    %8604 = vmatmul.mubr.bf16.gmra.mrb[0].mxu0 %v2492
    %v8605 = vpop.f32.mrb[0].mxu0
    %v8606 = vadd.f32 %v8557, %v8605
    %v8607 = vpop.f32.mrb[0].mxu0
    %v8608 = vpop.f32.mrb[0].mxu0
    %v8609 = vadd.f32 %v8560, %v8608
    %v8610 = vpop.f32.mrb[0].mxu0
    %8611 = vdwg.mxu0
    %8612 = vmatprep.subr.bf16.mxu0 0
    %8613 = vmatpush1.bf16.msra.mxu0 %v6218
    %8614 = vmatprep.subr.bf16.mxu0 0
    %8615 = vmatpush1.bf16.msra.mxu0 %v6219
    %8616 = vmatprep.subr.bf16.mxu0 0
    %8617 = vmatpush1.bf16.msra.mxu0 %v6220
    %8618 = vmatprep.subr.bf16.mxu0 0
    %8619 = vmatpush1.bf16.msra.mxu0 %v6221
    %8620 = vmatprep.subr.bf16.mxu0 0
    %8621 = vmatpush1.bf16.msra.mxu0 %v6222
    %8622 = vmatprep.subr.bf16.mxu0 0
    %8623 = vmatpush1.bf16.msra.mxu0 %v6223
    %8624 = vmatprep.subr.bf16.mxu0 0
    %8625 = vmatpush1.bf16.msra.mxu0 %v6224
    %8626 = vmatprep.subr.bf16.mxu0 0
    %8627 = vmatpush1.bf16.msra.mxu0 %v6225
    %8628 = vmatprep.subr.bf16.mxu0 0
    %8629 = vmatpush1.bf16.msra.mxu0 %v6226
    %8630 = vmatprep.subr.bf16.mxu0 0
    %8631 = vmatpush1.bf16.msra.mxu0 %v6227
    %8632 = vmatprep.subr.bf16.mxu0 0
    %8633 = vmatpush1.bf16.msra.mxu0 %v6228
    %8634 = vmatprep.subr.bf16.mxu0 0
    %8635 = vmatpush1.bf16.msra.mxu0 %v6229
    %8636 = vmatprep.subr.bf16.mxu0 0
    %8637 = vmatpush1.bf16.msra.mxu0 %v6230
    %8638 = vmatprep.subr.bf16.mxu0 0
    %8639 = vmatpush1.bf16.msra.mxu0 %v6231
    %8640 = vmatprep.subr.bf16.mxu0 0
    %8641 = vmatpush1.bf16.msra.mxu0 %v6232
    %8642 = vmatprep.subr.bf16.mxu0 0
    %8643 = vmatpush1.bf16.msra.mxu0 %v6233
    %8644 = vmatprep.mubr.bf16.mxu0 %v2399
    %8645 = vmatmul.mubr.bf16.gmra.mrb[0].mxu0 %v2398
    %v8646 = vpop.f32.mrb[0].mxu0
    %v8647 = vadd.f32 %v8598, %v8646
    %v8648 = vpop.f32.mrb[0].mxu0
    %v8649 = vpop.f32.mrb[0].mxu0
    %v8650 = vadd.f32 %v8601, %v8649
    %v8651 = vpop.f32.mrb[0].mxu0
    %8652 = vmatprep.mubr.bf16.mxu0 %v2495
    %8653 = vmatmul.mubr.bf16.gmra.mrb[0].mxu0 %v2494
    %v8654 = vpop.f32.mrb[0].mxu0
    %v8655 = vadd.f32 %v8606, %v8654
    %v8656 = vpop.f32.mrb[0].mxu0
    %v8657 = vpop.f32.mrb[0].mxu0
    %v8658 = vadd.f32 %v8609, %v8657
    %v8659 = vpop.f32.mrb[0].mxu0
    %8660 = vdwg.mxu0
    %8661 = vmatprep.subr.bf16.mxu0 0
    %8662 = vmatpush1.bf16.msra.mxu0 %v6234
    %8663 = vmatprep.subr.bf16.mxu0 0
    %8664 = vmatpush1.bf16.msra.mxu0 %v6235
    %8665 = vmatprep.subr.bf16.mxu0 0
    %8666 = vmatpush1.bf16.msra.mxu0 %v6236
    %8667 = vmatprep.subr.bf16.mxu0 0
    %8668 = vmatpush1.bf16.msra.mxu0 %v6237
    %8669 = vmatprep.subr.bf16.mxu0 0
    %8670 = vmatpush1.bf16.msra.mxu0 %v6238
    %8671 = vmatprep.subr.bf16.mxu0 0
    %8672 = vmatpush1.bf16.msra.mxu0 %v6239
    %8673 = vmatprep.subr.bf16.mxu0 0
    %8674 = vmatpush1.bf16.msra.mxu0 %v6240
    %8675 = vmatprep.subr.bf16.mxu0 0
    %8676 = vmatpush1.bf16.msra.mxu0 %v6241
    %8677 = vmatprep.subr.bf16.mxu0 0
    %8678 = vmatpush1.bf16.msra.mxu0 %v6242
    %8679 = vmatprep.subr.bf16.mxu0 0
    %8680 = vmatpush1.bf16.msra.mxu0 %v6243
    %8681 = vmatprep.subr.bf16.mxu0 0
    %8682 = vmatpush1.bf16.msra.mxu0 %v6244
    %8683 = vmatprep.subr.bf16.mxu0 0
    %8684 = vmatpush1.bf16.msra.mxu0 %v6245
    %8685 = vmatprep.subr.bf16.mxu0 0
    %8686 = vmatpush1.bf16.msra.mxu0 %v6246
    %8687 = vmatprep.subr.bf16.mxu0 0
    %8688 = vmatpush1.bf16.msra.mxu0 %v6247
    %8689 = vmatprep.subr.bf16.mxu0 0
    %8690 = vmatpush1.bf16.msra.mxu0 %v6248
    %8691 = vmatprep.subr.bf16.mxu0 0
    %8692 = vmatpush1.bf16.msra.mxu0 %v6249
    %8693 = vmatprep.mubr.bf16.mxu0 %v2401
    %8694 = vmatmul.mubr.bf16.gmra.mrb[0].mxu0 %v2400
    %v8695 = vpop.f32.mrb[0].mxu0
    %v8696 = vadd.f32 %v8647, %v8695
    %v8697 = vpop.f32.mrb[0].mxu0
    %v8698 = vpop.f32.mrb[0].mxu0
    %v8699 = vadd.f32 %v8650, %v8698
    %v8700 = vpop.f32.mrb[0].mxu0
    %8701 = vmatprep.mubr.bf16.mxu0 %v2497
    %8702 = vmatmul.mubr.bf16.gmra.mrb[0].mxu0 %v2496
    %v8703 = vpop.f32.mrb[0].mxu0
    %v8704 = vadd.f32 %v8655, %v8703
    %v8705 = vpop.f32.mrb[0].mxu0
    %v8706 = vpop.f32.mrb[0].mxu0
    %v8707 = vadd.f32 %v8658, %v8706
    %v8708 = vpop.f32.mrb[0].mxu0
    %8709 = vdwg.mxu0
    %8710 = vmatprep.subr.bf16.mxu0 0
    %8711 = vmatpush1.bf16.msra.mxu0 %v6250
    %8712 = vmatprep.subr.bf16.mxu0 0
    %8713 = vmatpush1.bf16.msra.mxu0 %v6251
    %8714 = vmatprep.subr.bf16.mxu0 0
    %8715 = vmatpush1.bf16.msra.mxu0 %v6252
    %8716 = vmatprep.subr.bf16.mxu0 0
    %8717 = vmatpush1.bf16.msra.mxu0 %v6253
    %8718 = vmatprep.subr.bf16.mxu0 0
    %8719 = vmatpush1.bf16.msra.mxu0 %v6254
    %8720 = vmatprep.subr.bf16.mxu0 0
    %8721 = vmatpush1.bf16.msra.mxu0 %v6255
    %8722 = vmatprep.subr.bf16.mxu0 0
    %8723 = vmatpush1.bf16.msra.mxu0 %v6256
    %8724 = vmatprep.subr.bf16.mxu0 0
    %8725 = vmatpush1.bf16.msra.mxu0 %v6257
    %8726 = vmatprep.subr.bf16.mxu0 0
    %8727 = vmatpush1.bf16.msra.mxu0 %v6258
    %8728 = vmatprep.subr.bf16.mxu0 0
    %8729 = vmatpush1.bf16.msra.mxu0 %v6259
    %8730 = vmatprep.subr.bf16.mxu0 0
    %8731 = vmatpush1.bf16.msra.mxu0 %v6260
    %8732 = vmatprep.subr.bf16.mxu0 0
    %8733 = vmatpush1.bf16.msra.mxu0 %v6261
    %8734 = vmatprep.subr.bf16.mxu0 0
    %8735 = vmatpush1.bf16.msra.mxu0 %v6262
    %8736 = vmatprep.subr.bf16.mxu0 0
    %8737 = vmatpush1.bf16.msra.mxu0 %v6263
    %8738 = vmatprep.subr.bf16.mxu0 0
    %8739 = vmatpush1.bf16.msra.mxu0 %v6264
    %8740 = vmatprep.subr.bf16.mxu0 0
    %8741 = vmatpush1.bf16.msra.mxu0 %v6265
    %8742 = vmatprep.mubr.bf16.mxu0 %v2403
    %8743 = vmatmul.mubr.bf16.gmra.mrb[0].mxu0 %v2402
    %v8744 = vpop.f32.mrb[0].mxu0
    %v8745 = vadd.f32 %v8696, %v8744
    %v8746 = vpop.f32.mrb[0].mxu0
    %v8747 = vpop.f32.mrb[0].mxu0
    %v8748 = vadd.f32 %v8699, %v8747
    %v8749 = vpop.f32.mrb[0].mxu0
    %8750 = vmatprep.mubr.bf16.mxu0 %v2499
    %8751 = vmatmul.mubr.bf16.gmra.mrb[0].mxu0 %v2498
    %v8752 = vpop.f32.mrb[0].mxu0
    %v8753 = vadd.f32 %v8704, %v8752
    %v8754 = vpop.f32.mrb[0].mxu0
    %v8755 = vpop.f32.mrb[0].mxu0
    %v8756 = vadd.f32 %v8707, %v8755
    %v8757 = vpop.f32.mrb[0].mxu0
    %8758 = vdwg.mxu0
    %8759 = vmatprep.subr.bf16.mxu0 0
    %8760 = vmatpush1.bf16.msra.mxu0 %v6266
    %8761 = vmatprep.subr.bf16.mxu0 0
    %8762 = vmatpush1.bf16.msra.mxu0 %v6267
    %8763 = vmatprep.subr.bf16.mxu0 0
    %8764 = vmatpush1.bf16.msra.mxu0 %v6268
    %8765 = vmatprep.subr.bf16.mxu0 0
    %8766 = vmatpush1.bf16.msra.mxu0 %v6269
    %8767 = vmatprep.subr.bf16.mxu0 0
    %8768 = vmatpush1.bf16.msra.mxu0 %v6270
    %8769 = vmatprep.subr.bf16.mxu0 0
    %8770 = vmatpush1.bf16.msra.mxu0 %v6271
    %8771 = vmatprep.subr.bf16.mxu0 0
    %8772 = vmatpush1.bf16.msra.mxu0 %v6272
    %8773 = vmatprep.subr.bf16.mxu0 0
    %8774 = vmatpush1.bf16.msra.mxu0 %v6273
    %8775 = vmatprep.subr.bf16.mxu0 0
    %8776 = vmatpush1.bf16.msra.mxu0 %v6274
    %8777 = vmatprep.subr.bf16.mxu0 0
    %8778 = vmatpush1.bf16.msra.mxu0 %v6275
    %8779 = vmatprep.subr.bf16.mxu0 0
    %8780 = vmatpush1.bf16.msra.mxu0 %v6276
    %8781 = vmatprep.subr.bf16.mxu0 0
    %8782 = vmatpush1.bf16.msra.mxu0 %v6277
    %8783 = vmatprep.subr.bf16.mxu0 0
    %8784 = vmatpush1.bf16.msra.mxu0 %v6278
    %8785 = vmatprep.subr.bf16.mxu0 0
    %8786 = vmatpush1.bf16.msra.mxu0 %v6279
    %8787 = vmatprep.subr.bf16.mxu0 0
    %8788 = vmatpush1.bf16.msra.mxu0 %v6280
    %8789 = vmatprep.subr.bf16.mxu0 0
    %8790 = vmatpush1.bf16.msra.mxu0 %v6281
    %8791 = vmatprep.mubr.bf16.mxu0 %v2405
    %8792 = vmatmul.mubr.bf16.gmra.mrb[0].mxu0 %v2404
    %v8793 = vpop.f32.mrb[0].mxu0
    %v8794 = vadd.f32 %v8745, %v8793
    %v8795 = vpop.f32.mrb[0].mxu0
    %v8796 = vpop.f32.mrb[0].mxu0
    %v8797 = vadd.f32 %v8748, %v8796
    %v8798 = vpop.f32.mrb[0].mxu0
    %8799 = vmatprep.mubr.bf16.mxu0 %v2501
    %8800 = vmatmul.mubr.bf16.gmra.mrb[0].mxu0 %v2500
    %v8801 = vpop.f32.mrb[0].mxu0
    %v8802 = vadd.f32 %v8753, %v8801
    %v8803 = vpop.f32.mrb[0].mxu0
    %v8804 = vpop.f32.mrb[0].mxu0
    %v8805 = vadd.f32 %v8756, %v8804
    %v8806 = vpop.f32.mrb[0].mxu0
    %8807 = vdwg.mxu0
    %8808 = vmatprep.subr.bf16.mxu0 0
    %8809 = vmatpush1.bf16.msra.mxu0 %v6282
    %8810 = vmatprep.subr.bf16.mxu0 0
    %8811 = vmatpush1.bf16.msra.mxu0 %v6283
    %8812 = vmatprep.subr.bf16.mxu0 0
    %8813 = vmatpush1.bf16.msra.mxu0 %v6284
    %8814 = vmatprep.subr.bf16.mxu0 0
    %8815 = vmatpush1.bf16.msra.mxu0 %v6285
    %8816 = vmatprep.subr.bf16.mxu0 0
    %8817 = vmatpush1.bf16.msra.mxu0 %v6286
    %8818 = vmatprep.subr.bf16.mxu0 0
    %8819 = vmatpush1.bf16.msra.mxu0 %v6287
    %8820 = vmatprep.subr.bf16.mxu0 0
    %8821 = vmatpush1.bf16.msra.mxu0 %v6288
    %8822 = vmatprep.subr.bf16.mxu0 0
    %8823 = vmatpush1.bf16.msra.mxu0 %v6289
    %8824 = vmatprep.subr.bf16.mxu0 0
    %8825 = vmatpush1.bf16.msra.mxu0 %v6290
    %8826 = vmatprep.subr.bf16.mxu0 0
    %8827 = vmatpush1.bf16.msra.mxu0 %v6291
    %8828 = vmatprep.subr.bf16.mxu0 0
    %8829 = vmatpush1.bf16.msra.mxu0 %v6292
    %8830 = vmatprep.subr.bf16.mxu0 0
    %8831 = vmatpush1.bf16.msra.mxu0 %v6293
    %8832 = vmatprep.subr.bf16.mxu0 0
    %8833 = vmatpush1.bf16.msra.mxu0 %v6294
    %8834 = vmatprep.subr.bf16.mxu0 0
    %8835 = vmatpush1.bf16.msra.mxu0 %v6295
    %8836 = vmatprep.subr.bf16.mxu0 0
    %8837 = vmatpush1.bf16.msra.mxu0 %v6296
    %8838 = vmatprep.subr.bf16.mxu0 0
    %8839 = vmatpush1.bf16.msra.mxu0 %v6297
    %8840 = vmatprep.mubr.bf16.mxu0 %v2407
    %8841 = vmatmul.mubr.bf16.gmra.mrb[0].mxu0 %v2406
    %v8842 = vpop.f32.mrb[0].mxu0
    %v8843 = vadd.f32 %v8794, %v8842
    %v8844 = vpop.f32.mrb[0].mxu0
    %v8845 = vpop.f32.mrb[0].mxu0
    %v8846 = vadd.f32 %v8797, %v8845
    %v8847 = vpop.f32.mrb[0].mxu0
    %8848 = vmatprep.mubr.bf16.mxu0 %v2503
    %8849 = vmatmul.mubr.bf16.gmra.mrb[0].mxu0 %v2502
    %v8850 = vpop.f32.mrb[0].mxu0
    %v8851 = vadd.f32 %v8802, %v8850
    %v8852 = vpop.f32.mrb[0].mxu0
    %v8853 = vpop.f32.mrb[0].mxu0
    %v8854 = vadd.f32 %v8805, %v8853
    %v8855 = vpop.f32.mrb[0].mxu0
    %8856 = vdwg.mxu0
    %8857 = vmatprep.subr.bf16.mxu0 0
    %8858 = vmatpush1.bf16.msra.mxu0 %v6298
    %8859 = vmatprep.subr.bf16.mxu0 0
    %8860 = vmatpush1.bf16.msra.mxu0 %v6299
    %8861 = vmatprep.subr.bf16.mxu0 0
    %8862 = vmatpush1.bf16.msra.mxu0 %v6300
    %8863 = vmatprep.subr.bf16.mxu0 0
    %8864 = vmatpush1.bf16.msra.mxu0 %v6301
    %8865 = vmatprep.subr.bf16.mxu0 0
    %8866 = vmatpush1.bf16.msra.mxu0 %v6302
    %8867 = vmatprep.subr.bf16.mxu0 0
    %8868 = vmatpush1.bf16.msra.mxu0 %v6303
    %8869 = vmatprep.subr.bf16.mxu0 0
    %8870 = vmatpush1.bf16.msra.mxu0 %v6304
    %8871 = vmatprep.subr.bf16.mxu0 0
    %8872 = vmatpush1.bf16.msra.mxu0 %v6305
    %8873 = vmatprep.subr.bf16.mxu0 0
    %8874 = vmatpush1.bf16.msra.mxu0 %v6306
    %8875 = vmatprep.subr.bf16.mxu0 0
    %8876 = vmatpush1.bf16.msra.mxu0 %v6307
    %8877 = vmatprep.subr.bf16.mxu0 0
    %8878 = vmatpush1.bf16.msra.mxu0 %v6308
    %8879 = vmatprep.subr.bf16.mxu0 0
    %8880 = vmatpush1.bf16.msra.mxu0 %v6309
    %8881 = vmatprep.subr.bf16.mxu0 0
    %8882 = vmatpush1.bf16.msra.mxu0 %v6310
    %8883 = vmatprep.subr.bf16.mxu0 0
    %8884 = vmatpush1.bf16.msra.mxu0 %v6311
    %8885 = vmatprep.subr.bf16.mxu0 0
    %8886 = vmatpush1.bf16.msra.mxu0 %v6312
    %8887 = vmatprep.subr.bf16.mxu0 0
    %8888 = vmatpush1.bf16.msra.mxu0 %v6313
    %8889 = vmatprep.mubr.bf16.mxu0 %v2409
    %8890 = vmatmul.mubr.bf16.gmra.mrb[0].mxu0 %v2408
    %v8891 = vpop.f32.mrb[0].mxu0
    %v8892 = vadd.f32 %v8843, %v8891
    %v8893 = vpop.f32.mrb[0].mxu0
    %v8894 = vpop.f32.mrb[0].mxu0
    %v8895 = vadd.f32 %v8846, %v8894
    %v8896 = vpop.f32.mrb[0].mxu0
    %8897 = vmatprep.mubr.bf16.mxu0 %v2505
    %8898 = vmatmul.mubr.bf16.gmra.mrb[0].mxu0 %v2504
    %v8899 = vpop.f32.mrb[0].mxu0
    %v8900 = vadd.f32 %v8851, %v8899
    %v8901 = vpop.f32.mrb[0].mxu0
    %v8902 = vpop.f32.mrb[0].mxu0
    %v8903 = vadd.f32 %v8854, %v8902
    %v8904 = vpop.f32.mrb[0].mxu0
    %8905 = vdwg.mxu0
    %8906 = vmatprep.subr.bf16.mxu0 0
    %8907 = vmatpush1.bf16.msra.mxu0 %v6314
    %8908 = vmatprep.subr.bf16.mxu0 0
    %8909 = vmatpush1.bf16.msra.mxu0 %v6315
    %8910 = vmatprep.subr.bf16.mxu0 0
    %8911 = vmatpush1.bf16.msra.mxu0 %v6316
    %8912 = vmatprep.subr.bf16.mxu0 0
    %8913 = vmatpush1.bf16.msra.mxu0 %v6317
    %8914 = vmatprep.subr.bf16.mxu0 0
    %8915 = vmatpush1.bf16.msra.mxu0 %v6318
    %8916 = vmatprep.subr.bf16.mxu0 0
    %8917 = vmatpush1.bf16.msra.mxu0 %v6319
    %8918 = vmatprep.subr.bf16.mxu0 0
    %8919 = vmatpush1.bf16.msra.mxu0 %v6320
    %8920 = vmatprep.subr.bf16.mxu0 0
    %8921 = vmatpush1.bf16.msra.mxu0 %v6321
    %8922 = vmatprep.subr.bf16.mxu0 0
    %8923 = vmatpush1.bf16.msra.mxu0 %v6322
    %8924 = vmatprep.subr.bf16.mxu0 0
    %8925 = vmatpush1.bf16.msra.mxu0 %v6323
    %8926 = vmatprep.subr.bf16.mxu0 0
    %8927 = vmatpush1.bf16.msra.mxu0 %v6324
    %8928 = vmatprep.subr.bf16.mxu0 0
    %8929 = vmatpush1.bf16.msra.mxu0 %v6325
    %8930 = vmatprep.subr.bf16.mxu0 0
    %8931 = vmatpush1.bf16.msra.mxu0 %v6326
    %8932 = vmatprep.subr.bf16.mxu0 0
    %8933 = vmatpush1.bf16.msra.mxu0 %v6327
    %8934 = vmatprep.subr.bf16.mxu0 0
    %8935 = vmatpush1.bf16.msra.mxu0 %v6328
    %8936 = vmatprep.subr.bf16.mxu0 0
    %8937 = vmatpush1.bf16.msra.mxu0 %v6329
    %8938 = vmatprep.mubr.bf16.mxu0 %v2411
    %8939 = vmatmul.mubr.bf16.gmra.mrb[0].mxu0 %v2410
    %v8940 = vpop.f32.mrb[0].mxu0
    %v8941 = vadd.f32 %v8892, %v8940
    %v8942 = vpop.f32.mrb[0].mxu0
    %v8943 = vpop.f32.mrb[0].mxu0
    %v8944 = vadd.f32 %v8895, %v8943
    %v8945 = vpop.f32.mrb[0].mxu0
    %8946 = vmatprep.mubr.bf16.mxu0 %v2507
    %8947 = vmatmul.mubr.bf16.gmra.mrb[0].mxu0 %v2506
    %v8948 = vpop.f32.mrb[0].mxu0
    %v8949 = vadd.f32 %v8900, %v8948
    %v8950 = vpop.f32.mrb[0].mxu0
    %v8951 = vpop.f32.mrb[0].mxu0
    %v8952 = vadd.f32 %v8903, %v8951
    %v8953 = vpop.f32.mrb[0].mxu0
    %8954 = vdwg.mxu0
    %8955 = vmatprep.subr.bf16.mxu0 0
    %8956 = vmatpush1.bf16.msra.mxu0 %v6330
    %8957 = vmatprep.subr.bf16.mxu0 0
    %8958 = vmatpush1.bf16.msra.mxu0 %v6331
    %8959 = vmatprep.subr.bf16.mxu0 0
    %8960 = vmatpush1.bf16.msra.mxu0 %v6332
    %8961 = vmatprep.subr.bf16.mxu0 0
    %8962 = vmatpush1.bf16.msra.mxu0 %v6333
    %8963 = vmatprep.subr.bf16.mxu0 0
    %8964 = vmatpush1.bf16.msra.mxu0 %v6334
    %8965 = vmatprep.subr.bf16.mxu0 0
    %8966 = vmatpush1.bf16.msra.mxu0 %v6335
    %8967 = vmatprep.subr.bf16.mxu0 0
    %8968 = vmatpush1.bf16.msra.mxu0 %v6336
    %8969 = vmatprep.subr.bf16.mxu0 0
    %8970 = vmatpush1.bf16.msra.mxu0 %v6337
    %8971 = vmatprep.subr.bf16.mxu0 0
    %8972 = vmatpush1.bf16.msra.mxu0 %v6338
    %8973 = vmatprep.subr.bf16.mxu0 0
    %8974 = vmatpush1.bf16.msra.mxu0 %v6339
    %8975 = vmatprep.subr.bf16.mxu0 0
    %8976 = vmatpush1.bf16.msra.mxu0 %v6340
    %8977 = vmatprep.subr.bf16.mxu0 0
    %8978 = vmatpush1.bf16.msra.mxu0 %v6341
    %8979 = vmatprep.subr.bf16.mxu0 0
    %8980 = vmatpush1.bf16.msra.mxu0 %v6342
    %8981 = vmatprep.subr.bf16.mxu0 0
    %8982 = vmatpush1.bf16.msra.mxu0 %v6343
    %8983 = vmatprep.subr.bf16.mxu0 0
    %8984 = vmatpush1.bf16.msra.mxu0 %v6344
    %8985 = vmatprep.subr.bf16.mxu0 0
    %8986 = vmatpush1.bf16.msra.mxu0 %v6345
    %8987 = vmatprep.mubr.bf16.mxu0 %v2413
    %8988 = vmatmul.mubr.bf16.gmra.mrb[0].mxu0 %v2412
    %v8989 = vpop.f32.mrb[0].mxu0
    %v8990 = vadd.f32 %v8941, %v8989
    %v8991 = vpop.f32.mrb[0].mxu0
    %v8992 = vpop.f32.mrb[0].mxu0
    %v8993 = vadd.f32 %v8944, %v8992
    %v8994 = vpop.f32.mrb[0].mxu0
    %8995 = vmatprep.mubr.bf16.mxu0 %v2509
    %8996 = vmatmul.mubr.bf16.gmra.mrb[0].mxu0 %v2508
    %v8997 = vpop.f32.mrb[0].mxu0
    %v8998 = vadd.f32 %v8949, %v8997
    %v8999 = vpop.f32.mrb[0].mxu0
    %v9000 = vpop.f32.mrb[0].mxu0
    %v9001 = vadd.f32 %v8952, %v9000
    %v9002 = vpop.f32.mrb[0].mxu0
    %9003 = vdwg.mxu0
    %9004 = vmatprep.subr.bf16.mxu0 0
    %9005 = vmatpush1.bf16.msra.mxu0 %v6346
    %9006 = vmatprep.subr.bf16.mxu0 0
    %9007 = vmatpush1.bf16.msra.mxu0 %v6347
    %9008 = vmatprep.subr.bf16.mxu0 0
    %9009 = vmatpush1.bf16.msra.mxu0 %v6348
    %9010 = vmatprep.subr.bf16.mxu0 0
    %9011 = vmatpush1.bf16.msra.mxu0 %v6349
    %9012 = vmatprep.subr.bf16.mxu0 0
    %9013 = vmatpush1.bf16.msra.mxu0 %v6350
    %9014 = vmatprep.subr.bf16.mxu0 0
    %9015 = vmatpush1.bf16.msra.mxu0 %v6351
    %9016 = vmatprep.subr.bf16.mxu0 0
    %9017 = vmatpush1.bf16.msra.mxu0 %v6352
    %9018 = vmatprep.subr.bf16.mxu0 0
    %9019 = vmatpush1.bf16.msra.mxu0 %v6353
    %9020 = vmatprep.subr.bf16.mxu0 0
    %9021 = vmatpush1.bf16.msra.mxu0 %v6354
    %9022 = vmatprep.subr.bf16.mxu0 0
    %9023 = vmatpush1.bf16.msra.mxu0 %v6355
    %9024 = vmatprep.subr.bf16.mxu0 0
    %9025 = vmatpush1.bf16.msra.mxu0 %v6356
    %9026 = vmatprep.subr.bf16.mxu0 0
    %9027 = vmatpush1.bf16.msra.mxu0 %v6357
    %9028 = vmatprep.subr.bf16.mxu0 0
    %9029 = vmatpush1.bf16.msra.mxu0 %v6358
    %9030 = vmatprep.subr.bf16.mxu0 0
    %9031 = vmatpush1.bf16.msra.mxu0 %v6359
    %9032 = vmatprep.subr.bf16.mxu0 0
    %9033 = vmatpush1.bf16.msra.mxu0 %v6360
    %9034 = vmatprep.subr.bf16.mxu0 0
    %9035 = vmatpush1.bf16.msra.mxu0 %v6361
    %9036 = vmatprep.mubr.bf16.mxu0 %v2415
    %9037 = vmatmul.mubr.bf16.gmra.mrb[0].mxu0 %v2414
    %v9038 = vpop.f32.mrb[0].mxu0
    %v9039 = vadd.f32 %v8990, %v9038
    %v9040 = vpop.f32.mrb[0].mxu0
    %v9041 = vpop.f32.mrb[0].mxu0
    %v9042 = vadd.f32 %v8993, %v9041
    %v9043 = vpop.f32.mrb[0].mxu0
    %9044 = vmatprep.mubr.bf16.mxu0 %v2511
    %9045 = vmatmul.mubr.bf16.gmra.mrb[0].mxu0 %v2510
    %v9046 = vpop.f32.mrb[0].mxu0
    %v9047 = vadd.f32 %v8998, %v9046
    %v9048 = vpop.f32.mrb[0].mxu0
    %v9049 = vpop.f32.mrb[0].mxu0
    %v9050 = vadd.f32 %v9001, %v9049
    %v9051 = vpop.f32.mrb[0].mxu0
    %9052 = vdwg.mxu0
    %9053 = vmatprep.subr.bf16.mxu0 0
    %9054 = vmatpush1.bf16.msra.mxu0 %v6362
    %9055 = vmatprep.subr.bf16.mxu0 0
    %9056 = vmatpush1.bf16.msra.mxu0 %v6363
    %9057 = vmatprep.subr.bf16.mxu0 0
    %9058 = vmatpush1.bf16.msra.mxu0 %v6364
    %9059 = vmatprep.subr.bf16.mxu0 0
    %9060 = vmatpush1.bf16.msra.mxu0 %v6365
    %9061 = vmatprep.subr.bf16.mxu0 0
    %9062 = vmatpush1.bf16.msra.mxu0 %v6366
    %9063 = vmatprep.subr.bf16.mxu0 0
    %9064 = vmatpush1.bf16.msra.mxu0 %v6367
    %9065 = vmatprep.subr.bf16.mxu0 0
    %9066 = vmatpush1.bf16.msra.mxu0 %v6368
    %9067 = vmatprep.subr.bf16.mxu0 0
    %9068 = vmatpush1.bf16.msra.mxu0 %v6369
    %9069 = vmatprep.subr.bf16.mxu0 0
    %9070 = vmatpush1.bf16.msra.mxu0 %v6370
    %9071 = vmatprep.subr.bf16.mxu0 0
    %9072 = vmatpush1.bf16.msra.mxu0 %v6371
    %9073 = vmatprep.subr.bf16.mxu0 0
    %9074 = vmatpush1.bf16.msra.mxu0 %v6372
    %9075 = vmatprep.subr.bf16.mxu0 0
    %9076 = vmatpush1.bf16.msra.mxu0 %v6373
    %9077 = vmatprep.subr.bf16.mxu0 0
    %9078 = vmatpush1.bf16.msra.mxu0 %v6374
    %9079 = vmatprep.subr.bf16.mxu0 0
    %9080 = vmatpush1.bf16.msra.mxu0 %v6375
    %9081 = vmatprep.subr.bf16.mxu0 0
    %9082 = vmatpush1.bf16.msra.mxu0 %v6376
    %9083 = vmatprep.subr.bf16.mxu0 0
    %9084 = vmatpush1.bf16.msra.mxu0 %v6377
    %9085 = vmatprep.mubr.bf16.mxu0 %v2417
    %9086 = vmatmul.mubr.bf16.gmra.mrb[0].mxu0 %v2416
    %v9087 = vpop.f32.mrb[0].mxu0
    %v9088 = vadd.f32 %v9039, %v9087
    %v9089 = vpop.f32.mrb[0].mxu0
    %v9090 = vpop.f32.mrb[0].mxu0
    %v9091 = vadd.f32 %v9042, %v9090
    %v9092 = vpop.f32.mrb[0].mxu0
    %9093 = vmatprep.mubr.bf16.mxu0 %v2513
    %9094 = vmatmul.mubr.bf16.gmra.mrb[0].mxu0 %v2512
    %v9095 = vpop.f32.mrb[0].mxu0
    %v9096 = vadd.f32 %v9047, %v9095
    %v9097 = vpop.f32.mrb[0].mxu0
    %v9098 = vpop.f32.mrb[0].mxu0
    %v9099 = vadd.f32 %v9050, %v9098
    %v9100 = vpop.f32.mrb[0].mxu0
    %9101 = vdwg.mxu0
    %9102 = vmatprep.subr.bf16.mxu0 0
    %9103 = vmatpush1.bf16.msra.mxu0 %v6378
    %9104 = vmatprep.subr.bf16.mxu0 0
    %9105 = vmatpush1.bf16.msra.mxu0 %v6379
    %9106 = vmatprep.subr.bf16.mxu0 0
    %9107 = vmatpush1.bf16.msra.mxu0 %v6380
    %9108 = vmatprep.subr.bf16.mxu0 0
    %9109 = vmatpush1.bf16.msra.mxu0 %v6381
    %9110 = vmatprep.subr.bf16.mxu0 0
    %9111 = vmatpush1.bf16.msra.mxu0 %v6382
    %9112 = vmatprep.subr.bf16.mxu0 0
    %9113 = vmatpush1.bf16.msra.mxu0 %v6383
    %9114 = vmatprep.subr.bf16.mxu0 0
    %9115 = vmatpush1.bf16.msra.mxu0 %v6384
    %9116 = vmatprep.subr.bf16.mxu0 0
    %9117 = vmatpush1.bf16.msra.mxu0 %v6385
    %9118 = vmatprep.subr.bf16.mxu0 0
    %9119 = vmatpush1.bf16.msra.mxu0 %v6386
    %9120 = vmatprep.subr.bf16.mxu0 0
    %9121 = vmatpush1.bf16.msra.mxu0 %v6387
    %9122 = vmatprep.subr.bf16.mxu0 0
    %9123 = vmatpush1.bf16.msra.mxu0 %v6388
    %9124 = vmatprep.subr.bf16.mxu0 0
    %9125 = vmatpush1.bf16.msra.mxu0 %v6389
    %9126 = vmatprep.subr.bf16.mxu0 0
    %9127 = vmatpush1.bf16.msra.mxu0 %v6390
    %9128 = vmatprep.subr.bf16.mxu0 0
    %9129 = vmatpush1.bf16.msra.mxu0 %v6391
    %9130 = vmatprep.subr.bf16.mxu0 0
    %9131 = vmatpush1.bf16.msra.mxu0 %v6392
    %9132 = vmatprep.subr.bf16.mxu0 0
    %9133 = vmatpush1.bf16.msra.mxu0 %v6393
    %9134 = vmatprep.mubr.bf16.mxu0 %v2419
    %9135 = vmatmul.mubr.bf16.gmra.mrb[0].mxu0 %v2418
    %v9136 = vpop.f32.mrb[0].mxu0
    %v9137 = vadd.f32 %v9088, %v9136
    %v9138 = vpop.f32.mrb[0].mxu0
    %v9139 = vpop.f32.mrb[0].mxu0
    %v9140 = vadd.f32 %v9091, %v9139
    %v9141 = vpop.f32.mrb[0].mxu0
    %9142 = vmatprep.mubr.bf16.mxu0 %v2515
    %9143 = vmatmul.mubr.bf16.gmra.mrb[0].mxu0 %v2514
    %v9144 = vpop.f32.mrb[0].mxu0
    %v9145 = vadd.f32 %v9096, %v9144
    %v9146 = vpop.f32.mrb[0].mxu0
    %v9147 = vpop.f32.mrb[0].mxu0
    %v9148 = vadd.f32 %v9099, %v9147
    %v9149 = vpop.f32.mrb[0].mxu0
    %9150 = vdwg.mxu0
    %9151 = vmatprep.subr.bf16.mxu0 0
    %9152 = vmatpush1.bf16.msra.mxu0 %v6394
    %9153 = vmatprep.subr.bf16.mxu0 0
    %9154 = vmatpush1.bf16.msra.mxu0 %v6395
    %9155 = vmatprep.subr.bf16.mxu0 0
    %9156 = vmatpush1.bf16.msra.mxu0 %v6396
    %9157 = vmatprep.subr.bf16.mxu0 0
    %9158 = vmatpush1.bf16.msra.mxu0 %v6397
    %9159 = vmatprep.subr.bf16.mxu0 0
    %9160 = vmatpush1.bf16.msra.mxu0 %v6398
    %9161 = vmatprep.subr.bf16.mxu0 0
    %9162 = vmatpush1.bf16.msra.mxu0 %v6399
    %9163 = vmatprep.subr.bf16.mxu0 0
    %9164 = vmatpush1.bf16.msra.mxu0 %v6400
    %9165 = vmatprep.subr.bf16.mxu0 0
    %9166 = vmatpush1.bf16.msra.mxu0 %v6401
    %9167 = vmatprep.subr.bf16.mxu0 0
    %9168 = vmatpush1.bf16.msra.mxu0 %v6402
    %9169 = vmatprep.subr.bf16.mxu0 0
    %9170 = vmatpush1.bf16.msra.mxu0 %v6403
    %9171 = vmatprep.subr.bf16.mxu0 0
    %9172 = vmatpush1.bf16.msra.mxu0 %v6404
    %9173 = vmatprep.subr.bf16.mxu0 0
    %9174 = vmatpush1.bf16.msra.mxu0 %v6405
    %9175 = vmatprep.subr.bf16.mxu0 0
    %9176 = vmatpush1.bf16.msra.mxu0 %v6406
    %9177 = vmatprep.subr.bf16.mxu0 0
    %9178 = vmatpush1.bf16.msra.mxu0 %v6407
    %9179 = vmatprep.subr.bf16.mxu0 0
    %9180 = vmatpush1.bf16.msra.mxu0 %v6408
    %9181 = vmatprep.subr.bf16.mxu0 0
    %9182 = vmatpush1.bf16.msra.mxu0 %v6409
    %9183 = vmatprep.mubr.bf16.mxu0 %v2421
    %9184 = vmatmul.mubr.bf16.gmra.mrb[0].mxu0 %v2420
    %v9185 = vpop.f32.mrb[0].mxu0
    %v9186 = vadd.f32 %v9137, %v9185
    %v9187 = vpop.f32.mrb[0].mxu0
    %v9188 = vpop.f32.mrb[0].mxu0
    %v9189 = vadd.f32 %v9140, %v9188
    %v9190 = vpop.f32.mrb[0].mxu0
    %9191 = vmatprep.mubr.bf16.mxu0 %v2517
    %9192 = vmatmul.mubr.bf16.gmra.mrb[0].mxu0 %v2516
    %v9193 = vpop.f32.mrb[0].mxu0
    %v9194 = vadd.f32 %v9145, %v9193
    %v9195 = vpop.f32.mrb[0].mxu0
    %v9196 = vpop.f32.mrb[0].mxu0
    %v9197 = vadd.f32 %v9148, %v9196
    %v9198 = vpop.f32.mrb[0].mxu0
    %9199 = vdwg.mxu0
    %9200 = vmatprep.subr.bf16.mxu0 0
    %9201 = vmatpush1.bf16.msra.mxu0 %v6410
    %9202 = vmatprep.subr.bf16.mxu0 0
    %9203 = vmatpush1.bf16.msra.mxu0 %v6411
    %9204 = vmatprep.subr.bf16.mxu0 0
    %9205 = vmatpush1.bf16.msra.mxu0 %v6412
    %9206 = vmatprep.subr.bf16.mxu0 0
    %9207 = vmatpush1.bf16.msra.mxu0 %v6413
    %9208 = vmatprep.subr.bf16.mxu0 0
    %9209 = vmatpush1.bf16.msra.mxu0 %v6414
    %9210 = vmatprep.subr.bf16.mxu0 0
    %9211 = vmatpush1.bf16.msra.mxu0 %v6415
    %9212 = vmatprep.subr.bf16.mxu0 0
    %9213 = vmatpush1.bf16.msra.mxu0 %v6416
    %9214 = vmatprep.subr.bf16.mxu0 0
    %9215 = vmatpush1.bf16.msra.mxu0 %v6417
    %9216 = vmatprep.subr.bf16.mxu0 0
    %9217 = vmatpush1.bf16.msra.mxu0 %v6418
    %9218 = vmatprep.subr.bf16.mxu0 0
    %9219 = vmatpush1.bf16.msra.mxu0 %v6419
    %9220 = vmatprep.subr.bf16.mxu0 0
    %9221 = vmatpush1.bf16.msra.mxu0 %v6420
    %9222 = vmatprep.subr.bf16.mxu0 0
    %9223 = vmatpush1.bf16.msra.mxu0 %v6421
    %9224 = vmatprep.subr.bf16.mxu0 0
    %9225 = vmatpush1.bf16.msra.mxu0 %v6422
    %9226 = vmatprep.subr.bf16.mxu0 0
    %9227 = vmatpush1.bf16.msra.mxu0 %v6423
    %9228 = vmatprep.subr.bf16.mxu0 0
    %9229 = vmatpush1.bf16.msra.mxu0 %v6424
    %9230 = vmatprep.subr.bf16.mxu0 0
    %9231 = vmatpush1.bf16.msra.mxu0 %v6425
    %9232 = vmatprep.mubr.bf16.mxu0 %v2423
    %9233 = vmatmul.mubr.bf16.gmra.mrb[0].mxu0 %v2422
    %v9234 = vpop.f32.mrb[0].mxu0
    %v9235 = vadd.f32 %v9186, %v9234
    %v9236 = vpop.f32.mrb[0].mxu0
    %v9237 = vpop.f32.mrb[0].mxu0
    %v9238 = vadd.f32 %v9189, %v9237
    %v9239 = vpop.f32.mrb[0].mxu0
    %9240 = vmatprep.mubr.bf16.mxu0 %v2519
    %9241 = vmatmul.mubr.bf16.gmra.mrb[0].mxu0 %v2518
    %v9242 = vpop.f32.mrb[0].mxu0
    %v9243 = vadd.f32 %v9194, %v9242
    %v9244 = vpop.f32.mrb[0].mxu0
    %v9245 = vpop.f32.mrb[0].mxu0
    %v9246 = vadd.f32 %v9197, %v9245
    %v9247 = vpop.f32.mrb[0].mxu0
    %9248 = vdwg.mxu0
    %9249 = vmatprep.subr.bf16.mxu0 0
    %9250 = vmatpush1.bf16.msra.mxu0 %v6426
    %9251 = vmatprep.subr.bf16.mxu0 0
    %9252 = vmatpush1.bf16.msra.mxu0 %v6427
    %9253 = vmatprep.subr.bf16.mxu0 0
    %9254 = vmatpush1.bf16.msra.mxu0 %v6428
    %9255 = vmatprep.subr.bf16.mxu0 0
    %9256 = vmatpush1.bf16.msra.mxu0 %v6429
    %9257 = vmatprep.subr.bf16.mxu0 0
    %9258 = vmatpush1.bf16.msra.mxu0 %v6430
    %9259 = vmatprep.subr.bf16.mxu0 0
    %9260 = vmatpush1.bf16.msra.mxu0 %v6431
    %9261 = vmatprep.subr.bf16.mxu0 0
    %9262 = vmatpush1.bf16.msra.mxu0 %v6432
    %9263 = vmatprep.subr.bf16.mxu0 0
    %9264 = vmatpush1.bf16.msra.mxu0 %v6433
    %9265 = vmatprep.subr.bf16.mxu0 0
    %9266 = vmatpush1.bf16.msra.mxu0 %v6434
    %9267 = vmatprep.subr.bf16.mxu0 0
    %9268 = vmatpush1.bf16.msra.mxu0 %v6435
    %9269 = vmatprep.subr.bf16.mxu0 0
    %9270 = vmatpush1.bf16.msra.mxu0 %v6436
    %9271 = vmatprep.subr.bf16.mxu0 0
    %9272 = vmatpush1.bf16.msra.mxu0 %v6437
    %9273 = vmatprep.subr.bf16.mxu0 0
    %9274 = vmatpush1.bf16.msra.mxu0 %v6438
    %9275 = vmatprep.subr.bf16.mxu0 0
    %9276 = vmatpush1.bf16.msra.mxu0 %v6439
    %9277 = vmatprep.subr.bf16.mxu0 0
    %9278 = vmatpush1.bf16.msra.mxu0 %v6440
    %9279 = vmatprep.subr.bf16.mxu0 0
    %9280 = vmatpush1.bf16.msra.mxu0 %v6441
    %9281 = vmatprep.mubr.bf16.mxu0 %v2425
    %9282 = vmatmul.mubr.bf16.gmra.mrb[0].mxu0 %v2424
    %v9283 = vpop.f32.mrb[0].mxu0
    %v9284 = vadd.f32 %v9235, %v9283
    %v9285 = vpop.f32.mrb[0].mxu0
    %v9286 = vpop.f32.mrb[0].mxu0
    %v9287 = vadd.f32 %v9238, %v9286
    %v9288 = vpop.f32.mrb[0].mxu0
    %9289 = vmatprep.mubr.bf16.mxu0 %v2521
    %9290 = vmatmul.mubr.bf16.gmra.mrb[0].mxu0 %v2520
    %v9291 = vpop.f32.mrb[0].mxu0
    %v9292 = vadd.f32 %v9243, %v9291
    %v9293 = vpop.f32.mrb[0].mxu0
    %v9294 = vpop.f32.mrb[0].mxu0
    %v9295 = vadd.f32 %v9246, %v9294
    %v9296 = vpop.f32.mrb[0].mxu0
    %9297 = vdwg.mxu0
    %9298 = vmatprep.subr.bf16.mxu0 0
    %9299 = vmatpush1.bf16.msra.mxu0 %v6442
    %9300 = vmatprep.subr.bf16.mxu0 0
    %9301 = vmatpush1.bf16.msra.mxu0 %v6443
    %9302 = vmatprep.subr.bf16.mxu0 0
    %9303 = vmatpush1.bf16.msra.mxu0 %v6444
    %9304 = vmatprep.subr.bf16.mxu0 0
    %9305 = vmatpush1.bf16.msra.mxu0 %v6445
    %9306 = vmatprep.subr.bf16.mxu0 0
    %9307 = vmatpush1.bf16.msra.mxu0 %v6446
    %9308 = vmatprep.subr.bf16.mxu0 0
    %9309 = vmatpush1.bf16.msra.mxu0 %v6447
    %9310 = vmatprep.subr.bf16.mxu0 0
    %9311 = vmatpush1.bf16.msra.mxu0 %v6448
    %9312 = vmatprep.subr.bf16.mxu0 0
    %9313 = vmatpush1.bf16.msra.mxu0 %v6449
    %9314 = vmatprep.subr.bf16.mxu0 0
    %9315 = vmatpush1.bf16.msra.mxu0 %v6450
    %9316 = vmatprep.subr.bf16.mxu0 0
    %9317 = vmatpush1.bf16.msra.mxu0 %v6451
    %9318 = vmatprep.subr.bf16.mxu0 0
    %9319 = vmatpush1.bf16.msra.mxu0 %v6452
    %9320 = vmatprep.subr.bf16.mxu0 0
    %9321 = vmatpush1.bf16.msra.mxu0 %v6453
    %9322 = vmatprep.subr.bf16.mxu0 0
    %9323 = vmatpush1.bf16.msra.mxu0 %v6454
    %9324 = vmatprep.subr.bf16.mxu0 0
    %9325 = vmatpush1.bf16.msra.mxu0 %v6455
    %9326 = vmatprep.subr.bf16.mxu0 0
    %9327 = vmatpush1.bf16.msra.mxu0 %v6456
    %9328 = vmatprep.subr.bf16.mxu0 0
    %9329 = vmatpush1.bf16.msra.mxu0 %v6457
    %9330 = vmatprep.mubr.bf16.mxu0 %v2427
    %9331 = vmatmul.mubr.bf16.gmra.mrb[0].mxu0 %v2426
    %v9332 = vpop.f32.mrb[0].mxu0
    %v9333 = vadd.f32 %v9284, %v9332
    %v9334 = vpop.f32.mrb[0].mxu0
    %v9335 = vpop.f32.mrb[0].mxu0
    %v9336 = vadd.f32 %v9287, %v9335
    %v9337 = vpop.f32.mrb[0].mxu0
    %9338 = vmatprep.mubr.bf16.mxu0 %v2523
    %9339 = vmatmul.mubr.bf16.gmra.mrb[0].mxu0 %v2522
    %v9340 = vpop.f32.mrb[0].mxu0
    %v9341 = vadd.f32 %v9292, %v9340
    %v9342 = vpop.f32.mrb[0].mxu0
    %v9343 = vpop.f32.mrb[0].mxu0
    %v9344 = vadd.f32 %v9295, %v9343
    %v9345 = vpop.f32.mrb[0].mxu0
    %9346 = vdwg.mxu0
    %9347 = vmatprep.subr.bf16.mxu0 0
    %9348 = vmatpush1.bf16.msra.mxu0 %v6458
    %9349 = vmatprep.subr.bf16.mxu0 0
    %9350 = vmatpush1.bf16.msra.mxu0 %v6459
    %9351 = vmatprep.subr.bf16.mxu0 0
    %9352 = vmatpush1.bf16.msra.mxu0 %v6460
    %9353 = vmatprep.subr.bf16.mxu0 0
    %9354 = vmatpush1.bf16.msra.mxu0 %v6461
    %9355 = vmatprep.subr.bf16.mxu0 0
    %9356 = vmatpush1.bf16.msra.mxu0 %v6462
    %9357 = vmatprep.subr.bf16.mxu0 0
    %9358 = vmatpush1.bf16.msra.mxu0 %v6463
    %9359 = vmatprep.subr.bf16.mxu0 0
    %9360 = vmatpush1.bf16.msra.mxu0 %v6464
    %9361 = vmatprep.subr.bf16.mxu0 0
    %9362 = vmatpush1.bf16.msra.mxu0 %v6465
    %9363 = vmatprep.subr.bf16.mxu0 0
    %9364 = vmatpush1.bf16.msra.mxu0 %v6466
    %9365 = vmatprep.subr.bf16.mxu0 0
    %9366 = vmatpush1.bf16.msra.mxu0 %v6467
    %9367 = vmatprep.subr.bf16.mxu0 0
    %9368 = vmatpush1.bf16.msra.mxu0 %v6468
    %9369 = vmatprep.subr.bf16.mxu0 0
    %9370 = vmatpush1.bf16.msra.mxu0 %v6469
    %9371 = vmatprep.subr.bf16.mxu0 0
    %9372 = vmatpush1.bf16.msra.mxu0 %v6470
    %9373 = vmatprep.subr.bf16.mxu0 0
    %9374 = vmatpush1.bf16.msra.mxu0 %v6471
    %9375 = vmatprep.subr.bf16.mxu0 0
    %9376 = vmatpush1.bf16.msra.mxu0 %v6472
    %9377 = vmatprep.subr.bf16.mxu0 0
    %9378 = vmatpush1.bf16.msra.mxu0 %v6473
    %9379 = vmatprep.mubr.bf16.mxu0 %v2429
    %9380 = vmatmul.mubr.bf16.gmra.mrb[0].mxu0 %v2428
    %v9381 = vpop.f32.mrb[0].mxu0
    %v9382 = vadd.f32 %v9333, %v9381
    %v9383 = vpop.f32.mrb[0].mxu0
    %v9384 = vpop.f32.mrb[0].mxu0
    %v9385 = vadd.f32 %v9336, %v9384
    %v9386 = vpop.f32.mrb[0].mxu0
    %9387 = vmatprep.mubr.bf16.mxu0 %v2525
    %9388 = vmatmul.mubr.bf16.gmra.mrb[0].mxu0 %v2524
    %v9389 = vpop.f32.mrb[0].mxu0
    %v9390 = vadd.f32 %v9341, %v9389
    %v9391 = vpop.f32.mrb[0].mxu0
    %v9392 = vpop.f32.mrb[0].mxu0
    %v9393 = vadd.f32 %v9344, %v9392
    %v9394 = vpop.f32.mrb[0].mxu0
    %9395 = vdwg.mxu0
    %9396 = vmatprep.subr.bf16.mxu0 0
    %9397 = vmatpush1.bf16.msra.mxu0 %v6474
    %9398 = vmatprep.subr.bf16.mxu0 0
    %9399 = vmatpush1.bf16.msra.mxu0 %v6475
    %9400 = vmatprep.subr.bf16.mxu0 0
    %9401 = vmatpush1.bf16.msra.mxu0 %v6476
    %9402 = vmatprep.subr.bf16.mxu0 0
    %9403 = vmatpush1.bf16.msra.mxu0 %v6477
    %9404 = vmatprep.subr.bf16.mxu0 0
    %9405 = vmatpush1.bf16.msra.mxu0 %v6478
    %9406 = vmatprep.subr.bf16.mxu0 0
    %9407 = vmatpush1.bf16.msra.mxu0 %v6479
    %9408 = vmatprep.subr.bf16.mxu0 0
    %9409 = vmatpush1.bf16.msra.mxu0 %v6480
    %9410 = vmatprep.subr.bf16.mxu0 0
    %9411 = vmatpush1.bf16.msra.mxu0 %v6481
    %9412 = vmatprep.subr.bf16.mxu0 0
    %9413 = vmatpush1.bf16.msra.mxu0 %v6482
    %9414 = vmatprep.subr.bf16.mxu0 0
    %9415 = vmatpush1.bf16.msra.mxu0 %v6483
    %9416 = vmatprep.subr.bf16.mxu0 0
    %9417 = vmatpush1.bf16.msra.mxu0 %v6484
    %9418 = vmatprep.subr.bf16.mxu0 0
    %9419 = vmatpush1.bf16.msra.mxu0 %v6485
    %9420 = vmatprep.subr.bf16.mxu0 0
    %9421 = vmatpush1.bf16.msra.mxu0 %v6486
    %9422 = vmatprep.subr.bf16.mxu0 0
    %9423 = vmatpush1.bf16.msra.mxu0 %v6487
    %9424 = vmatprep.subr.bf16.mxu0 0
    %9425 = vmatpush1.bf16.msra.mxu0 %v6488
    %9426 = vmatprep.subr.bf16.mxu0 0
    %9427 = vmatpush1.bf16.msra.mxu0 %v6489
    %9428 = vmatprep.mubr.bf16.mxu0 %v2431
    %9429 = vmatmul.mubr.bf16.gmra.mrb[0].mxu0 %v2430
    %v9430 = vpop.f32.mrb[0].mxu0
    %v9431 = vadd.f32 %v9382, %v9430
    %v9432 = vpop.f32.mrb[0].mxu0
    %v9433 = vpop.f32.mrb[0].mxu0
    %v9434 = vadd.f32 %v9385, %v9433
    %v9435 = vpop.f32.mrb[0].mxu0
    %9436 = vmatprep.mubr.bf16.mxu0 %v2527
    %9437 = vmatmul.mubr.bf16.gmra.mrb[0].mxu0 %v2526
    %v9438 = vpop.f32.mrb[0].mxu0
    %v9439 = vadd.f32 %v9390, %v9438
    %v9440 = vpop.f32.mrb[0].mxu0
    %v9441 = vpop.f32.mrb[0].mxu0
    %v9442 = vadd.f32 %v9393, %v9441
    %v9443 = vpop.f32.mrb[0].mxu0
    %9444 = vdwg.mxu0
    %9445 = vmatprep.subr.bf16.mxu0 0
    %9446 = vmatpush1.bf16.msra.mxu0 %v6490
    %9447 = vmatprep.subr.bf16.mxu0 0
    %9448 = vmatpush1.bf16.msra.mxu0 %v6491
    %9449 = vmatprep.subr.bf16.mxu0 0
    %9450 = vmatpush1.bf16.msra.mxu0 %v6492
    %9451 = vmatprep.subr.bf16.mxu0 0
    %9452 = vmatpush1.bf16.msra.mxu0 %v6493
    %9453 = vmatprep.subr.bf16.mxu0 0
    %9454 = vmatpush1.bf16.msra.mxu0 %v6494
    %9455 = vmatprep.subr.bf16.mxu0 0
    %9456 = vmatpush1.bf16.msra.mxu0 %v6495
    %9457 = vmatprep.subr.bf16.mxu0 0
    %9458 = vmatpush1.bf16.msra.mxu0 %v6496
    %9459 = vmatprep.subr.bf16.mxu0 0
    %9460 = vmatpush1.bf16.msra.mxu0 %v6497
    %9461 = vmatprep.subr.bf16.mxu0 0
    %9462 = vmatpush1.bf16.msra.mxu0 %v6498
    %9463 = vmatprep.subr.bf16.mxu0 0
    %9464 = vmatpush1.bf16.msra.mxu0 %v6499
    %9465 = vmatprep.subr.bf16.mxu0 0
    %9466 = vmatpush1.bf16.msra.mxu0 %v6500
    %9467 = vmatprep.subr.bf16.mxu0 0
    %9468 = vmatpush1.bf16.msra.mxu0 %v6501
    %9469 = vmatprep.subr.bf16.mxu0 0
    %9470 = vmatpush1.bf16.msra.mxu0 %v6502
    %9471 = vmatprep.subr.bf16.mxu0 0
    %9472 = vmatpush1.bf16.msra.mxu0 %v6503
    %9473 = vmatprep.subr.bf16.mxu0 0
    %9474 = vmatpush1.bf16.msra.mxu0 %v6504
    %9475 = vmatprep.subr.bf16.mxu0 0
    %9476 = vmatpush1.bf16.msra.mxu0 %v6505
    %9477 = vmatprep.mubr.bf16.mxu0 %v2433
    %9478 = vmatmul.mubr.bf16.gmra.mrb[0].mxu0 %v2432
    %v9479 = vpop.f32.mrb[0].mxu0
    %v9480 = vadd.f32 %v9431, %v9479
    %v9481 = vpop.f32.mrb[0].mxu0
    %v9482 = vpop.f32.mrb[0].mxu0
    %v9483 = vadd.f32 %v9434, %v9482
    %v9484 = vpop.f32.mrb[0].mxu0
    %9485 = vmatprep.mubr.bf16.mxu0 %v2529
    %9486 = vmatmul.mubr.bf16.gmra.mrb[0].mxu0 %v2528
    %v9487 = vpop.f32.mrb[0].mxu0
    %v9488 = vadd.f32 %v9439, %v9487
    %v9489 = vpop.f32.mrb[0].mxu0
    %v9490 = vpop.f32.mrb[0].mxu0
    %v9491 = vadd.f32 %v9442, %v9490
    %v9492 = vpop.f32.mrb[0].mxu0
    %9493 = vdwg.mxu0
    %9494 = vmatprep.subr.bf16.mxu0 0
    %9495 = vmatpush1.bf16.msra.mxu0 %v6506
    %9496 = vmatprep.subr.bf16.mxu0 0
    %9497 = vmatpush1.bf16.msra.mxu0 %v6507
    %9498 = vmatprep.subr.bf16.mxu0 0
    %9499 = vmatpush1.bf16.msra.mxu0 %v6508
    %9500 = vmatprep.subr.bf16.mxu0 0
    %9501 = vmatpush1.bf16.msra.mxu0 %v6509
    %9502 = vmatprep.subr.bf16.mxu0 0
    %9503 = vmatpush1.bf16.msra.mxu0 %v6510
    %9504 = vmatprep.subr.bf16.mxu0 0
    %9505 = vmatpush1.bf16.msra.mxu0 %v6511
    %9506 = vmatprep.subr.bf16.mxu0 0
    %9507 = vmatpush1.bf16.msra.mxu0 %v6512
    %9508 = vmatprep.subr.bf16.mxu0 0
    %9509 = vmatpush1.bf16.msra.mxu0 %v6513
    %9510 = vmatprep.subr.bf16.mxu0 0
    %9511 = vmatpush1.bf16.msra.mxu0 %v6514
    %9512 = vmatprep.subr.bf16.mxu0 0
    %9513 = vmatpush1.bf16.msra.mxu0 %v6515
    %9514 = vmatprep.subr.bf16.mxu0 0
    %9515 = vmatpush1.bf16.msra.mxu0 %v6516
    %9516 = vmatprep.subr.bf16.mxu0 0
    %9517 = vmatpush1.bf16.msra.mxu0 %v6517
    %9518 = vmatprep.subr.bf16.mxu0 0
    %9519 = vmatpush1.bf16.msra.mxu0 %v6518
    %9520 = vmatprep.subr.bf16.mxu0 0
    %9521 = vmatpush1.bf16.msra.mxu0 %v6519
    %9522 = vmatprep.subr.bf16.mxu0 0
    %9523 = vmatpush1.bf16.msra.mxu0 %v6520
    %9524 = vmatprep.subr.bf16.mxu0 0
    %9525 = vmatpush1.bf16.msra.mxu0 %v6521
    %9526 = vmatprep.mubr.bf16.mxu0 %v2435
    %9527 = vmatmul.mubr.bf16.gmra.mrb[0].mxu0 %v2434
    %v9528 = vpop.f32.mrb[0].mxu0
    %v9529 = vadd.f32 %v9480, %v9528
    %v9530 = vpop.f32.mrb[0].mxu0
    %v9531 = vpop.f32.mrb[0].mxu0
    %v9532 = vadd.f32 %v9483, %v9531
    %v9533 = vpop.f32.mrb[0].mxu0
    %9534 = vmatprep.mubr.bf16.mxu0 %v2531
    %9535 = vmatmul.mubr.bf16.gmra.mrb[0].mxu0 %v2530
    %v9536 = vpop.f32.mrb[0].mxu0
    %v9537 = vadd.f32 %v9488, %v9536
    %v9538 = vpop.f32.mrb[0].mxu0
    %v9539 = vpop.f32.mrb[0].mxu0
    %v9540 = vadd.f32 %v9491, %v9539
    %v9541 = vpop.f32.mrb[0].mxu0
    %9542 = vdwg.mxu0
    %9543 = vmatprep.subr.bf16.mxu0 0
    %9544 = vmatpush1.bf16.msra.mxu0 %v6522
    %9545 = vmatprep.subr.bf16.mxu0 0
    %9546 = vmatpush1.bf16.msra.mxu0 %v6523
    %9547 = vmatprep.subr.bf16.mxu0 0
    %9548 = vmatpush1.bf16.msra.mxu0 %v6524
    %9549 = vmatprep.subr.bf16.mxu0 0
    %9550 = vmatpush1.bf16.msra.mxu0 %v6525
    %9551 = vmatprep.subr.bf16.mxu0 0
    %9552 = vmatpush1.bf16.msra.mxu0 %v6526
    %9553 = vmatprep.subr.bf16.mxu0 0
    %9554 = vmatpush1.bf16.msra.mxu0 %v6527
    %9555 = vmatprep.subr.bf16.mxu0 0
    %9556 = vmatpush1.bf16.msra.mxu0 %v6528
    %9557 = vmatprep.subr.bf16.mxu0 0
    %9558 = vmatpush1.bf16.msra.mxu0 %v6529
    %9559 = vmatprep.subr.bf16.mxu0 0
    %9560 = vmatpush1.bf16.msra.mxu0 %v6530
    %9561 = vmatprep.subr.bf16.mxu0 0
    %9562 = vmatpush1.bf16.msra.mxu0 %v6531
    %9563 = vmatprep.subr.bf16.mxu0 0
    %9564 = vmatpush1.bf16.msra.mxu0 %v6532
    %9565 = vmatprep.subr.bf16.mxu0 0
    %9566 = vmatpush1.bf16.msra.mxu0 %v6533
    %9567 = vmatprep.subr.bf16.mxu0 0
    %9568 = vmatpush1.bf16.msra.mxu0 %v6534
    %9569 = vmatprep.subr.bf16.mxu0 0
    %9570 = vmatpush1.bf16.msra.mxu0 %v6535
    %9571 = vmatprep.subr.bf16.mxu0 0
    %9572 = vmatpush1.bf16.msra.mxu0 %v6536
    %9573 = vmatprep.subr.bf16.mxu0 0
    %9574 = vmatpush1.bf16.msra.mxu0 %v6537
    %9575 = vmatprep.mubr.bf16.mxu0 %v2437
    %9576 = vmatmul.mubr.bf16.gmra.mrb[0].mxu0 %v2436
    %v9577 = vpop.f32.mrb[0].mxu0
    %v9578 = vadd.f32 %v9529, %v9577
    %v9579 = vpop.f32.mrb[0].mxu0
    %v9580 = vpop.f32.mrb[0].mxu0
    %v9581 = vadd.f32 %v9532, %v9580
    %v9582 = vpop.f32.mrb[0].mxu0
    %9583 = vmatprep.mubr.bf16.mxu0 %v2533
    %9584 = vmatmul.mubr.bf16.gmra.mrb[0].mxu0 %v2532
    %v9585 = vpop.f32.mrb[0].mxu0
    %v9586 = vadd.f32 %v9537, %v9585
    %v9587 = vpop.f32.mrb[0].mxu0
    %v9588 = vpop.f32.mrb[0].mxu0
    %v9589 = vadd.f32 %v9540, %v9588
    %v9590 = vpop.f32.mrb[0].mxu0
    %9591 = vdwg.mxu0
    %9592 = vmatprep.subr.bf16.mxu0 0
    %9593 = vmatpush1.bf16.msra.mxu0 %v6538
    %9594 = vmatprep.subr.bf16.mxu0 0
    %9595 = vmatpush1.bf16.msra.mxu0 %v6539
    %9596 = vmatprep.subr.bf16.mxu0 0
    %9597 = vmatpush1.bf16.msra.mxu0 %v6540
    %9598 = vmatprep.subr.bf16.mxu0 0
    %9599 = vmatpush1.bf16.msra.mxu0 %v6541
    %9600 = vmatprep.subr.bf16.mxu0 0
    %9601 = vmatpush1.bf16.msra.mxu0 %v6542
    %9602 = vmatprep.subr.bf16.mxu0 0
    %9603 = vmatpush1.bf16.msra.mxu0 %v6543
    %9604 = vmatprep.subr.bf16.mxu0 0
    %9605 = vmatpush1.bf16.msra.mxu0 %v6544
    %9606 = vmatprep.subr.bf16.mxu0 0
    %9607 = vmatpush1.bf16.msra.mxu0 %v6545
    %9608 = vmatprep.subr.bf16.mxu0 0
    %9609 = vmatpush1.bf16.msra.mxu0 %v6546
    %9610 = vmatprep.subr.bf16.mxu0 0
    %9611 = vmatpush1.bf16.msra.mxu0 %v6547
    %9612 = vmatprep.subr.bf16.mxu0 0
    %9613 = vmatpush1.bf16.msra.mxu0 %v6548
    %9614 = vmatprep.subr.bf16.mxu0 0
    %9615 = vmatpush1.bf16.msra.mxu0 %v6549
    %9616 = vmatprep.subr.bf16.mxu0 0
    %9617 = vmatpush1.bf16.msra.mxu0 %v6550
    %9618 = vmatprep.subr.bf16.mxu0 0
    %9619 = vmatpush1.bf16.msra.mxu0 %v6551
    %9620 = vmatprep.subr.bf16.mxu0 0
    %9621 = vmatpush1.bf16.msra.mxu0 %v6552
    %9622 = vmatprep.subr.bf16.mxu0 0
    %9623 = vmatpush1.bf16.msra.mxu0 %v6553
    %9624 = vmatprep.mubr.bf16.mxu0 %v2439
    %9625 = vmatmul.mubr.bf16.gmra.mrb[0].mxu0 %v2438
    %v9626 = vpop.f32.mrb[0].mxu0
    %v9627 = vadd.f32 %v9578, %v9626
    %v9628 = vpop.f32.mrb[0].mxu0
    %v9629 = vpop.f32.mrb[0].mxu0
    %v9630 = vadd.f32 %v9581, %v9629
    %v9631 = vpop.f32.mrb[0].mxu0
    %9632 = vmatprep.mubr.bf16.mxu0 %v2535
    %9633 = vmatmul.mubr.bf16.gmra.mrb[0].mxu0 %v2534
    %v9634 = vpop.f32.mrb[0].mxu0
    %v9635 = vadd.f32 %v9586, %v9634
    %v9636 = vpop.f32.mrb[0].mxu0
    %v9637 = vpop.f32.mrb[0].mxu0
    %v9638 = vadd.f32 %v9589, %v9637
    %v9639 = vpop.f32.mrb[0].mxu0
    %9640 = vdwg.mxu0
    %9641 = vmatprep.subr.bf16.mxu0 0
    %9642 = vmatpush1.bf16.msra.mxu0 %v6554
    %9643 = vmatprep.subr.bf16.mxu0 0
    %9644 = vmatpush1.bf16.msra.mxu0 %v6555
    %9645 = vmatprep.subr.bf16.mxu0 0
    %9646 = vmatpush1.bf16.msra.mxu0 %v6556
    %9647 = vmatprep.subr.bf16.mxu0 0
    %9648 = vmatpush1.bf16.msra.mxu0 %v6557
    %9649 = vmatprep.subr.bf16.mxu0 0
    %9650 = vmatpush1.bf16.msra.mxu0 %v6558
    %9651 = vmatprep.subr.bf16.mxu0 0
    %9652 = vmatpush1.bf16.msra.mxu0 %v6559
    %9653 = vmatprep.subr.bf16.mxu0 0
    %9654 = vmatpush1.bf16.msra.mxu0 %v6560
    %9655 = vmatprep.subr.bf16.mxu0 0
    %9656 = vmatpush1.bf16.msra.mxu0 %v6561
    %9657 = vmatprep.subr.bf16.mxu0 0
    %9658 = vmatpush1.bf16.msra.mxu0 %v6562
    %9659 = vmatprep.subr.bf16.mxu0 0
    %9660 = vmatpush1.bf16.msra.mxu0 %v6563
    %9661 = vmatprep.subr.bf16.mxu0 0
    %9662 = vmatpush1.bf16.msra.mxu0 %v6564
    %9663 = vmatprep.subr.bf16.mxu0 0
    %9664 = vmatpush1.bf16.msra.mxu0 %v6565
    %9665 = vmatprep.subr.bf16.mxu0 0
    %9666 = vmatpush1.bf16.msra.mxu0 %v6566
    %9667 = vmatprep.subr.bf16.mxu0 0
    %9668 = vmatpush1.bf16.msra.mxu0 %v6567
    %9669 = vmatprep.subr.bf16.mxu0 0
    %9670 = vmatpush1.bf16.msra.mxu0 %v6568
    %9671 = vmatprep.subr.bf16.mxu0 0
    %9672 = vmatpush1.bf16.msra.mxu0 %v6569
    %9673 = vmatprep.mubr.bf16.mxu0 %v2441
    %9674 = vmatmul.mubr.bf16.gmra.mrb[0].mxu0 %v2440
    %v9675 = vpop.f32.mrb[0].mxu0
    %v9676 = vadd.f32 %v9627, %v9675
    %v9677 = vpop.f32.mrb[0].mxu0
    %v9678 = vpop.f32.mrb[0].mxu0
    %v9679 = vadd.f32 %v9630, %v9678
    %v9680 = vpop.f32.mrb[0].mxu0
    %9681 = vmatprep.mubr.bf16.mxu0 %v2537
    %9682 = vmatmul.mubr.bf16.gmra.mrb[0].mxu0 %v2536
    %v9683 = vpop.f32.mrb[0].mxu0
    %v9684 = vadd.f32 %v9635, %v9683
    %v9685 = vpop.f32.mrb[0].mxu0
    %v9686 = vpop.f32.mrb[0].mxu0
    %v9687 = vadd.f32 %v9638, %v9686
    %v9688 = vpop.f32.mrb[0].mxu0
    %9689 = vdwg.mxu0
    %9690 = vst [vmem:[#allocation2] sm:$0xff] 0.0
    %9691 = vst [vmem:[#allocation2 + $0x28] sm:$0xff] 0.0
    %9692 = vst [vmem:[#allocation2 + $0x8] sm:$0xff] %v9676
    %9693 = vst [vmem:[#allocation2 + $0x10] sm:$0xff] %v9679
    %9694 = vst [vmem:[#allocation2 + $0x18] sm:$0xff] %v9684
    %9695 = vst [vmem:[#allocation2 + $0x20] sm:$0xff] %v9687
    %v9696 = vld [vmem:[#allocation2 + $0x5] sm:$0xff]
    %v9697 = vld [vmem:[#allocation2 + $0xd] sm:$0xff]
    %v9698 = vld [vmem:[#allocation2 + $0x15] sm:$0xff]
    %v9699 = vld [vmem:[#allocation2 + $0x1d] sm:$0xff]
    %v9700 = vld [vmem:[#allocation2 + $0x6] sm:$0xff]
    %v9701 = vld [vmem:[#allocation2 + $0xe] sm:$0xff]
    %v9702 = vld [vmem:[#allocation2 + $0x16] sm:$0xff]
    %v9703 = vld [vmem:[#allocation2 + $0x1e] sm:$0xff]
    %v9704 = vld [vmem:[#allocation2 + $0x7] sm:$0xff]
    %v9705 = vld [vmem:[#allocation2 + $0xf] sm:$0xff]
    %v9706 = vld [vmem:[#allocation2 + $0x17] sm:$0xff]
    %v9707 = vld [vmem:[#allocation2 + $0x1f] sm:$0xff]
    %v9708 = vld [vmem:[#allocation2 + $0x8] sm:$0xff]
    %v9709 = vld [vmem:[#allocation2 + $0x10] sm:$0xff]
    %v9710 = vld [vmem:[#allocation2 + $0x18] sm:$0xff]
    %v9711 = vld [vmem:[#allocation2 + $0x20] sm:$0xff]
    %v9712 = vld [vmem:[#allocation2 + $0x9] sm:$0xff]
    %v9713 = vld [vmem:[#allocation2 + $0x11] sm:$0xff]
    %v9714 = vld [vmem:[#allocation2 + $0x19] sm:$0xff]
    %v9715 = vld [vmem:[#allocation2 + $0x21] sm:$0xff]
    %v9716 = vld [vmem:[#allocation2 + $0xa] sm:$0xff]
    %v9717 = vld [vmem:[#allocation2 + $0x12] sm:$0xff]
    %v9718 = vld [vmem:[#allocation2 + $0x1a] sm:$0xff]
    %v9719 = vld [vmem:[#allocation2 + $0x22] sm:$0xff]
    %v9720 = vld [vmem:[#allocation2 + $0xb] sm:$0xff]
    %v9721 = vld [vmem:[#allocation2 + $0x13] sm:$0xff]
    %v9722 = vld [vmem:[#allocation2 + $0x1b] sm:$0xff]
    %v9723 = vld [vmem:[#allocation2 + $0x23] sm:$0xff]
    %v9724 = vld [vmem:[%s2] sm:$0xff]
    %v9725 = vld [vmem:[%s2 + $0x8] sm:$0xff]
    %v9726 = vld [vmem:[%s2 + $0x10] sm:$0xff]
    %v9727 = vld [vmem:[%s2 + $0x18] sm:$0xff]
    %v9728 = vld [vmem:[%s2 + $0x20] sm:$0xff]
    %v9729 = vld [vmem:[%s2 + $0x28] sm:$0xff]
    %v9730 = vld [vmem:[%s2 + $0x30] sm:$0xff]
    %v9731 = vld [vmem:[%s2 + $0x38] sm:$0xff]
    %v9732 = vld [vmem:[%s2 + $0x40] sm:$0xff]
    %v9733 = vld [vmem:[%s2 + $0x48] sm:$0xff]
    %v9734 = vld [vmem:[%s2 + $0x50] sm:$0xff]
    %v9735 = vld [vmem:[%s2 + $0x58] sm:$0xff]
    %v9736 = vld [vmem:[%s2 + $0x60] sm:$0xff]
    %v9737 = vld [vmem:[%s2 + $0x68] sm:$0xff]
    %v9738 = vld [vmem:[%s2 + $0x70] sm:$0xff]
    %v9739 = vld [vmem:[%s2 + $0x78] sm:$0xff]
    %v9740 = vld [vmem:[%s2 + $0x80] sm:$0xff]
    %v9741 = vld [vmem:[%s2 + $0x88] sm:$0xff]
    %v9742 = vld [vmem:[%s2 + $0x90] sm:$0xff]
    %v9743 = vld [vmem:[%s2 + $0x98] sm:$0xff]
    %v9744 = vld [vmem:[%s2 + $0xa0] sm:$0xff]
    %v9745 = vld [vmem:[%s2 + $0xa8] sm:$0xff]
    %v9746 = vld [vmem:[%s2 + $0xb0] sm:$0xff]
    %v9747 = vld [vmem:[%s2 + $0xb8] sm:$0xff]
    %v9748 = vld [vmem:[%s2 + $0xc0] sm:$0xff]
    %v9749 = vld [vmem:[%s2 + $0xc8] sm:$0xff]
    %v9750 = vld [vmem:[%s2 + $0xd0] sm:$0xff]
    %v9751 = vld [vmem:[%s2 + $0xd8] sm:$0xff]
    %v9752 = vld [vmem:[%s2 + $0xe0] sm:$0xff]
    %v9753 = vld [vmem:[%s2 + $0xe8] sm:$0xff]
    %v9754 = vld [vmem:[%s2 + $0xf0] sm:$0xff]
    %v9755 = vld [vmem:[%s2 + $0xf8] sm:$0xff]
    %v9756 = vld [vmem:[%s2 + $0x100] sm:$0xff]
    %v9757 = vld [vmem:[%s2 + $0x108] sm:$0xff]
    %v9758 = vld [vmem:[%s2 + $0x110] sm:$0xff]
    %v9759 = vld [vmem:[%s2 + $0x118] sm:$0xff]
    %v9760 = vmul.f32 %v9696, %v9724
    %v9761 = vmul.f32 %v9700, %v9725
    %v9762 = vmul.f32 %v9704, %v9726
    %v9763 = vmul.f32 %v9704, %v9727
    %v9764 = vmul.f32 %v9708, %v9728
    %v9765 = vmul.f32 %v9712, %v9729
    %v9766 = vmul.f32 %v9712, %v9730
    %v9767 = vmul.f32 %v9716, %v9731
    %v9768 = vmul.f32 %v9720, %v9732
    %v9769 = vmul.f32 %v9697, %v9733
    %v9770 = vmul.f32 %v9701, %v9734
    %v9771 = vmul.f32 %v9705, %v9735
    %v9772 = vmul.f32 %v9705, %v9736
    %v9773 = vmul.f32 %v9709, %v9737
    %v9774 = vmul.f32 %v9713, %v9738
    %v9775 = vmul.f32 %v9713, %v9739
    %v9776 = vmul.f32 %v9717, %v9740
    %v9777 = vmul.f32 %v9721, %v9741
    %v9778 = vmul.f32 %v9698, %v9742
    %v9779 = vmul.f32 %v9702, %v9743
    %v9780 = vmul.f32 %v9706, %v9744
    %v9781 = vmul.f32 %v9706, %v9745
    %v9782 = vmul.f32 %v9710, %v9746
    %v9783 = vmul.f32 %v9714, %v9747
    %v9784 = vmul.f32 %v9714, %v9748
    %v9785 = vmul.f32 %v9718, %v9749
    %v9786 = vmul.f32 %v9722, %v9750
    %v9787 = vmul.f32 %v9699, %v9751
    %v9788 = vmul.f32 %v9703, %v9752
    %v9789 = vmul.f32 %v9707, %v9753
    %v9790 = vmul.f32 %v9707, %v9754
    %v9791 = vmul.f32 %v9711, %v9755
    %v9792 = vmul.f32 %v9715, %v9756
    %v9793 = vmul.f32 %v9715, %v9757
    %v9794 = vmul.f32 %v9719, %v9758
    %v9795 = vmul.f32 %v9723, %v9759
    %v9796 = vpack.c.bf16 %v9769, %v9760
    %v9797 = vpack.c.bf16 %v9770, %v9761
    %v9798 = vpack.c.bf16 %v9771, %v9762
    %v9799 = vpack.c.bf16 %v9772, %v9763
    %v9800 = vpack.c.bf16 %v9773, %v9764
    %v9801 = vpack.c.bf16 %v9774, %v9765
    %v9802 = vpack.c.bf16 %v9775, %v9766
    %v9803 = vpack.c.bf16 %v9776, %v9767
    %v9804 = vpack.c.bf16 %v9777, %v9768
    %v9805 = vpack.c.bf16 %v9787, %v9778
    %v9806 = vpack.c.bf16 %v9788, %v9779
    %v9807 = vpack.c.bf16 %v9789, %v9780
    %v9808 = vpack.c.bf16 %v9790, %v9781
    %v9809 = vpack.c.bf16 %v9791, %v9782
    %v9810 = vpack.c.bf16 %v9792, %v9783
    %v9811 = vpack.c.bf16 %v9793, %v9784
    %v9812 = vpack.c.bf16 %v9794, %v9785
    %v9813 = vpack.c.bf16 %v9795, %v9786
    %v9814 = vld [vmem:[%s3] sm:$0xff]
    %v9815 = vld [vmem:[%s3 + $0x8] sm:$0xff]
    %v9816 = vld [vmem:[%s3 + $0x10] sm:$0xff]
    %v9817 = vld [vmem:[%s3 + $0x18] sm:$0xff]
    %v9818 = vld [vmem:[%s3 + $0x20] sm:$0xff]
    %v9819 = vld [vmem:[%s3 + $0x28] sm:$0xff]
    %v9820 = vld [vmem:[%s3 + $0x30] sm:$0xff]
    %v9821 = vld [vmem:[%s3 + $0x38] sm:$0xff]
    %v9822 = vld [vmem:[%s3 + $0x40] sm:$0xff]
    %v9823 = vld [vmem:[%s3 + $0x48] sm:$0xff]
    %v9824 = vld [vmem:[%s3 + $0x50] sm:$0xff]
    %v9825 = vld [vmem:[%s3 + $0x58] sm:$0xff]
    %v9826 = vld [vmem:[%s3 + $0x60] sm:$0xff]
    %v9827 = vld [vmem:[%s3 + $0x68] sm:$0xff]
    %v9828 = vld [vmem:[%s3 + $0x70] sm:$0xff]
    %v9829 = vld [vmem:[%s3 + $0x78] sm:$0xff]
    %v9830 = vld [vmem:[%s3 + $0x80] sm:$0xff]
    %v9831 = vld [vmem:[%s3 + $0x88] sm:$0xff]
    %v9832 = vld [vmem:[%s3 + $0x90] sm:$0xff]
    %v9833 = vld [vmem:[%s3 + $0x98] sm:$0xff]
    %v9834 = vld [vmem:[%s3 + $0xa0] sm:$0xff]
    %v9835 = vld [vmem:[%s3 + $0xa8] sm:$0xff]
    %v9836 = vld [vmem:[%s3 + $0xb0] sm:$0xff]
    %v9837 = vld [vmem:[%s3 + $0xb8] sm:$0xff]
    %v9838 = vld [vmem:[%s3 + $0xc0] sm:$0xff]
    %v9839 = vld [vmem:[%s3 + $0xc8] sm:$0xff]
    %v9840 = vld [vmem:[%s3 + $0xd0] sm:$0xff]
    %v9841 = vld [vmem:[%s3 + $0xd8] sm:$0xff]
    %v9842 = vld [vmem:[%s3 + $0xe0] sm:$0xff]
    %v9843 = vld [vmem:[%s3 + $0xe8] sm:$0xff]
    %v9844 = vld [vmem:[%s3 + $0xf0] sm:$0xff]
    %v9845 = vld [vmem:[%s3 + $0xf8] sm:$0xff]
    %v9846 = vld [vmem:[%s3 + $0x100] sm:$0xff]
    %v9847 = vld [vmem:[%s3 + $0x108] sm:$0xff]
    %v9848 = vld [vmem:[%s3 + $0x110] sm:$0xff]
    %v9849 = vld [vmem:[%s3 + $0x118] sm:$0xff]
    %v9850 = vld [vmem:[%s3 + $0x120] sm:$0xff]
    %v9851 = vld [vmem:[%s3 + $0x128] sm:$0xff]
    %v9852 = vld [vmem:[%s3 + $0x130] sm:$0xff]
    %v9853 = vld [vmem:[%s3 + $0x138] sm:$0xff]
    %v9854 = vld [vmem:[%s3 + $0x140] sm:$0xff]
    %v9855 = vld [vmem:[%s3 + $0x148] sm:$0xff]
    %v9856 = vld [vmem:[%s3 + $0x150] sm:$0xff]
    %v9857 = vld [vmem:[%s3 + $0x158] sm:$0xff]
    %v9858 = vld [vmem:[%s3 + $0x160] sm:$0xff]
    %v9859 = vld [vmem:[%s3 + $0x168] sm:$0xff]
    %v9860 = vld [vmem:[%s3 + $0x170] sm:$0xff]
    %v9861 = vld [vmem:[%s3 + $0x178] sm:$0xff]
    %v9862 = vld [vmem:[%s3 + $0x180] sm:$0xff]
    %v9863 = vld [vmem:[%s3 + $0x188] sm:$0xff]
    %v9864 = vld [vmem:[%s3 + $0x190] sm:$0xff]
    %v9865 = vld [vmem:[%s3 + $0x198] sm:$0xff]
    %v9866 = vld [vmem:[%s3 + $0x1a0] sm:$0xff]
    %v9867 = vld [vmem:[%s3 + $0x1a8] sm:$0xff]
    %v9868 = vld [vmem:[%s3 + $0x1b0] sm:$0xff]
    %v9869 = vld [vmem:[%s3 + $0x1b8] sm:$0xff]
    %v9870 = vld [vmem:[%s3 + $0x1c0] sm:$0xff]
    %v9871 = vld [vmem:[%s3 + $0x1c8] sm:$0xff]
    %v9872 = vld [vmem:[%s3 + $0x1d0] sm:$0xff]
    %v9873 = vld [vmem:[%s3 + $0x1d8] sm:$0xff]
    %v9874 = vld [vmem:[%s3 + $0x1e0] sm:$0xff]
    %v9875 = vld [vmem:[%s3 + $0x1e8] sm:$0xff]
    %v9876 = vld [vmem:[%s3 + $0x1f0] sm:$0xff]
    %v9877 = vld [vmem:[%s3 + $0x1f8] sm:$0xff]
    %v9878 = vld [vmem:[%s3 + $0x200] sm:$0xff]
    %v9879 = vld [vmem:[%s3 + $0x208] sm:$0xff]
    %v9880 = vld [vmem:[%s3 + $0x210] sm:$0xff]
    %v9881 = vld [vmem:[%s3 + $0x218] sm:$0xff]
    %v9882 = vld [vmem:[%s3 + $0x220] sm:$0xff]
    %v9883 = vld [vmem:[%s3 + $0x228] sm:$0xff]
    %v9884 = vld [vmem:[%s3 + $0x230] sm:$0xff]
    %v9885 = vld [vmem:[%s3 + $0x238] sm:$0xff]
    %v9886 = vld [vmem:[%s3 + $0x240] sm:$0xff]
    %v9887 = vld [vmem:[%s3 + $0x248] sm:$0xff]
    %v9888 = vld [vmem:[%s3 + $0x250] sm:$0xff]
    %v9889 = vld [vmem:[%s3 + $0x258] sm:$0xff]
    %v9890 = vld [vmem:[%s3 + $0x260] sm:$0xff]
    %v9891 = vld [vmem:[%s3 + $0x268] sm:$0xff]
    %v9892 = vld [vmem:[%s3 + $0x270] sm:$0xff]
    %v9893 = vld [vmem:[%s3 + $0x278] sm:$0xff]
    %v9894 = vld [vmem:[%s3 + $0x280] sm:$0xff]
    %v9895 = vld [vmem:[%s3 + $0x288] sm:$0xff]
    %v9896 = vld [vmem:[%s3 + $0x290] sm:$0xff]
    %v9897 = vld [vmem:[%s3 + $0x298] sm:$0xff]
    %v9898 = vld [vmem:[%s3 + $0x2a0] sm:$0xff]
    %v9899 = vld [vmem:[%s3 + $0x2a8] sm:$0xff]
    %v9900 = vld [vmem:[%s3 + $0x2b0] sm:$0xff]
    %v9901 = vld [vmem:[%s3 + $0x2b8] sm:$0xff]
    %v9902 = vld [vmem:[%s3 + $0x2c0] sm:$0xff]
    %v9903 = vld [vmem:[%s3 + $0x2c8] sm:$0xff]
    %v9904 = vld [vmem:[%s3 + $0x2d0] sm:$0xff]
    %v9905 = vld [vmem:[%s3 + $0x2d8] sm:$0xff]
    %v9906 = vld [vmem:[%s3 + $0x2e0] sm:$0xff]
    %v9907 = vld [vmem:[%s3 + $0x2e8] sm:$0xff]
    %v9908 = vld [vmem:[%s3 + $0x2f0] sm:$0xff]
    %v9909 = vld [vmem:[%s3 + $0x2f8] sm:$0xff]
    %v9910 = vld [vmem:[%s3 + $0x300] sm:$0xff]
    %v9911 = vld [vmem:[%s3 + $0x308] sm:$0xff]
    %v9912 = vld [vmem:[%s3 + $0x310] sm:$0xff]
    %v9913 = vld [vmem:[%s3 + $0x318] sm:$0xff]
    %v9914 = vld [vmem:[%s3 + $0x320] sm:$0xff]
    %v9915 = vld [vmem:[%s3 + $0x328] sm:$0xff]
    %v9916 = vld [vmem:[%s3 + $0x330] sm:$0xff]
    %v9917 = vld [vmem:[%s3 + $0x338] sm:$0xff]
    %v9918 = vld [vmem:[%s3 + $0x340] sm:$0xff]
    %v9919 = vld [vmem:[%s3 + $0x348] sm:$0xff]
    %v9920 = vld [vmem:[%s3 + $0x350] sm:$0xff]
    %v9921 = vld [vmem:[%s3 + $0x358] sm:$0xff]
    %v9922 = vld [vmem:[%s3 + $0x360] sm:$0xff]
    %v9923 = vld [vmem:[%s3 + $0x368] sm:$0xff]
    %v9924 = vld [vmem:[%s3 + $0x370] sm:$0xff]
    %v9925 = vld [vmem:[%s3 + $0x378] sm:$0xff]
    %v9926 = vld [vmem:[%s3 + $0x380] sm:$0xff]
    %v9927 = vld [vmem:[%s3 + $0x388] sm:$0xff]
    %v9928 = vld [vmem:[%s3 + $0x390] sm:$0xff]
    %v9929 = vld [vmem:[%s3 + $0x398] sm:$0xff]
    %v9930 = vld [vmem:[%s3 + $0x3a0] sm:$0xff]
    %v9931 = vld [vmem:[%s3 + $0x3a8] sm:$0xff]
    %v9932 = vld [vmem:[%s3 + $0x3b0] sm:$0xff]
    %v9933 = vld [vmem:[%s3 + $0x3b8] sm:$0xff]
    %v9934 = vld [vmem:[%s3 + $0x3c0] sm:$0xff]
    %v9935 = vld [vmem:[%s3 + $0x3c8] sm:$0xff]
    %v9936 = vld [vmem:[%s3 + $0x3d0] sm:$0xff]
    %v9937 = vld [vmem:[%s3 + $0x3d8] sm:$0xff]
    %v9938 = vld [vmem:[%s3 + $0x3e0] sm:$0xff]
    %v9939 = vld [vmem:[%s3 + $0x3e8] sm:$0xff]
    %v9940 = vld [vmem:[%s3 + $0x3f0] sm:$0xff]
    %v9941 = vld [vmem:[%s3 + $0x3f8] sm:$0xff]
    %v9942 = vld [vmem:[%s3 + $0x400] sm:$0xff]
    %v9943 = vld [vmem:[%s3 + $0x408] sm:$0xff]
    %v9944 = vld [vmem:[%s3 + $0x410] sm:$0xff]
    %v9945 = vld [vmem:[%s3 + $0x418] sm:$0xff]
    %v9946 = vld [vmem:[%s3 + $0x420] sm:$0xff]
    %v9947 = vld [vmem:[%s3 + $0x428] sm:$0xff]
    %v9948 = vld [vmem:[%s3 + $0x430] sm:$0xff]
    %v9949 = vld [vmem:[%s3 + $0x438] sm:$0xff]
    %v9950 = vld [vmem:[%s3 + $0x440] sm:$0xff]
    %v9951 = vld [vmem:[%s3 + $0x448] sm:$0xff]
    %v9952 = vld [vmem:[%s3 + $0x450] sm:$0xff]
    %v9953 = vld [vmem:[%s3 + $0x458] sm:$0xff]
    %v9954 = vld [vmem:[%s3 + $0x460] sm:$0xff]
    %v9955 = vld [vmem:[%s3 + $0x468] sm:$0xff]
    %v9956 = vld [vmem:[%s3 + $0x470] sm:$0xff]
    %v9957 = vld [vmem:[%s3 + $0x478] sm:$0xff]
    %v9958 = vld [vmem:[%s3 + $0x480] sm:$0xff]
    %v9959 = vld [vmem:[%s3 + $0x488] sm:$0xff]
    %v9960 = vld [vmem:[%s3 + $0x490] sm:$0xff]
    %v9961 = vld [vmem:[%s3 + $0x498] sm:$0xff]
    %v9962 = vld [vmem:[%s3 + $0x4a0] sm:$0xff]
    %v9963 = vld [vmem:[%s3 + $0x4a8] sm:$0xff]
    %v9964 = vld [vmem:[%s3 + $0x4b0] sm:$0xff]
    %v9965 = vld [vmem:[%s3 + $0x4b8] sm:$0xff]
    %v9966 = vld [vmem:[%s3 + $0x4c0] sm:$0xff]
    %v9967 = vld [vmem:[%s3 + $0x4c8] sm:$0xff]
    %v9968 = vld [vmem:[%s3 + $0x4d0] sm:$0xff]
    %v9969 = vld [vmem:[%s3 + $0x4d8] sm:$0xff]
    %v9970 = vld [vmem:[%s3 + $0x4e0] sm:$0xff]
    %v9971 = vld [vmem:[%s3 + $0x4e8] sm:$0xff]
    %v9972 = vld [vmem:[%s3 + $0x4f0] sm:$0xff]
    %v9973 = vld [vmem:[%s3 + $0x4f8] sm:$0xff]
    %v9974 = vld [vmem:[%s3 + $0x500] sm:$0xff]
    %v9975 = vld [vmem:[%s3 + $0x508] sm:$0xff]
    %v9976 = vld [vmem:[%s3 + $0x510] sm:$0xff]
    %v9977 = vld [vmem:[%s3 + $0x518] sm:$0xff]
    %v9978 = vld [vmem:[%s3 + $0x520] sm:$0xff]
    %v9979 = vld [vmem:[%s3 + $0x528] sm:$0xff]
    %v9980 = vld [vmem:[%s3 + $0x530] sm:$0xff]
    %v9981 = vld [vmem:[%s3 + $0x538] sm:$0xff]
    %v9982 = vld [vmem:[%s3 + $0x540] sm:$0xff]
    %v9983 = vld [vmem:[%s3 + $0x548] sm:$0xff]
    %v9984 = vld [vmem:[%s3 + $0x550] sm:$0xff]
    %v9985 = vld [vmem:[%s3 + $0x558] sm:$0xff]
    %v9986 = vld [vmem:[%s3 + $0x560] sm:$0xff]
    %v9987 = vld [vmem:[%s3 + $0x568] sm:$0xff]
    %v9988 = vld [vmem:[%s3 + $0x570] sm:$0xff]
    %v9989 = vld [vmem:[%s3 + $0x578] sm:$0xff]
    %v9990 = vld [vmem:[%s3 + $0x580] sm:$0xff]
    %v9991 = vld [vmem:[%s3 + $0x588] sm:$0xff]
    %v9992 = vld [vmem:[%s3 + $0x590] sm:$0xff]
    %v9993 = vld [vmem:[%s3 + $0x598] sm:$0xff]
    %v9994 = vld [vmem:[%s3 + $0x5a0] sm:$0xff]
    %v9995 = vld [vmem:[%s3 + $0x5a8] sm:$0xff]
    %v9996 = vld [vmem:[%s3 + $0x5b0] sm:$0xff]
    %v9997 = vld [vmem:[%s3 + $0x5b8] sm:$0xff]
    %v9998 = vld [vmem:[%s3 + $0x5c0] sm:$0xff]
    %v9999 = vld [vmem:[%s3 + $0x5c8] sm:$0xff]
    %v10000 = vld [vmem:[%s3 + $0x5d0] sm:$0xff]
    %v10001 = vld [vmem:[%s3 + $0x5d8] sm:$0xff]
    %v10002 = vld [vmem:[%s3 + $0x5e0] sm:$0xff]
    %v10003 = vld [vmem:[%s3 + $0x5e8] sm:$0xff]
    %v10004 = vld [vmem:[%s3 + $0x5f0] sm:$0xff]
    %v10005 = vld [vmem:[%s3 + $0x5f8] sm:$0xff]
    %v10006 = vld [vmem:[%s3 + $0x600] sm:$0xff]
    %v10007 = vld [vmem:[%s3 + $0x608] sm:$0xff]
    %v10008 = vld [vmem:[%s3 + $0x610] sm:$0xff]
    %v10009 = vld [vmem:[%s3 + $0x618] sm:$0xff]
    %v10010 = vld [vmem:[%s3 + $0x620] sm:$0xff]
    %v10011 = vld [vmem:[%s3 + $0x628] sm:$0xff]
    %v10012 = vld [vmem:[%s3 + $0x630] sm:$0xff]
    %v10013 = vld [vmem:[%s3 + $0x638] sm:$0xff]
    %v10014 = vld [vmem:[%s3 + $0x640] sm:$0xff]
    %v10015 = vld [vmem:[%s3 + $0x648] sm:$0xff]
    %v10016 = vld [vmem:[%s3 + $0x650] sm:$0xff]
    %v10017 = vld [vmem:[%s3 + $0x658] sm:$0xff]
    %v10018 = vld [vmem:[%s3 + $0x660] sm:$0xff]
    %v10019 = vld [vmem:[%s3 + $0x668] sm:$0xff]
    %v10020 = vld [vmem:[%s3 + $0x670] sm:$0xff]
    %v10021 = vld [vmem:[%s3 + $0x678] sm:$0xff]
    %v10022 = vld [vmem:[%s3 + $0x680] sm:$0xff]
    %v10023 = vld [vmem:[%s3 + $0x688] sm:$0xff]
    %v10024 = vld [vmem:[%s3 + $0x690] sm:$0xff]
    %v10025 = vld [vmem:[%s3 + $0x698] sm:$0xff]
    %v10026 = vld [vmem:[%s3 + $0x6a0] sm:$0xff]
    %v10027 = vld [vmem:[%s3 + $0x6a8] sm:$0xff]
    %v10028 = vld [vmem:[%s3 + $0x6b0] sm:$0xff]
    %v10029 = vld [vmem:[%s3 + $0x6b8] sm:$0xff]
    %v10030 = vld [vmem:[%s3 + $0x6c0] sm:$0xff]
    %v10031 = vld [vmem:[%s3 + $0x6c8] sm:$0xff]
    %v10032 = vld [vmem:[%s3 + $0x6d0] sm:$0xff]
    %v10033 = vld [vmem:[%s3 + $0x6d8] sm:$0xff]
    %v10034 = vld [vmem:[%s3 + $0x6e0] sm:$0xff]
    %v10035 = vld [vmem:[%s3 + $0x6e8] sm:$0xff]
    %v10036 = vld [vmem:[%s3 + $0x6f0] sm:$0xff]
    %v10037 = vld [vmem:[%s3 + $0x6f8] sm:$0xff]
    %v10038 = vld [vmem:[%s3 + $0x700] sm:$0xff]
    %v10039 = vld [vmem:[%s3 + $0x708] sm:$0xff]
    %v10040 = vld [vmem:[%s3 + $0x710] sm:$0xff]
    %v10041 = vld [vmem:[%s3 + $0x718] sm:$0xff]
    %v10042 = vld [vmem:[%s3 + $0x720] sm:$0xff]
    %v10043 = vld [vmem:[%s3 + $0x728] sm:$0xff]
    %v10044 = vld [vmem:[%s3 + $0x730] sm:$0xff]
    %v10045 = vld [vmem:[%s3 + $0x738] sm:$0xff]
    %v10046 = vld [vmem:[%s3 + $0x740] sm:$0xff]
    %v10047 = vld [vmem:[%s3 + $0x748] sm:$0xff]
    %v10048 = vld [vmem:[%s3 + $0x750] sm:$0xff]
    %v10049 = vld [vmem:[%s3 + $0x758] sm:$0xff]
    %v10050 = vld [vmem:[%s3 + $0x760] sm:$0xff]
    %v10051 = vld [vmem:[%s3 + $0x768] sm:$0xff]
    %v10052 = vld [vmem:[%s3 + $0x770] sm:$0xff]
    %v10053 = vld [vmem:[%s3 + $0x778] sm:$0xff]
    %v10054 = vld [vmem:[%s3 + $0x780] sm:$0xff]
    %v10055 = vld [vmem:[%s3 + $0x788] sm:$0xff]
    %v10056 = vld [vmem:[%s3 + $0x790] sm:$0xff]
    %v10057 = vld [vmem:[%s3 + $0x798] sm:$0xff]
    %v10058 = vld [vmem:[%s3 + $0x7a0] sm:$0xff]
    %v10059 = vld [vmem:[%s3 + $0x7a8] sm:$0xff]
    %v10060 = vld [vmem:[%s3 + $0x7b0] sm:$0xff]
    %v10061 = vld [vmem:[%s3 + $0x7b8] sm:$0xff]
    %v10062 = vld [vmem:[%s3 + $0x7c0] sm:$0xff]
    %v10063 = vld [vmem:[%s3 + $0x7c8] sm:$0xff]
    %v10064 = vld [vmem:[%s3 + $0x7d0] sm:$0xff]
    %v10065 = vld [vmem:[%s3 + $0x7d8] sm:$0xff]
    %v10066 = vld [vmem:[%s3 + $0x7e0] sm:$0xff]
    %v10067 = vld [vmem:[%s3 + $0x7e8] sm:$0xff]
    %v10068 = vld [vmem:[%s3 + $0x7f0] sm:$0xff]
    %v10069 = vld [vmem:[%s3 + $0x7f8] sm:$0xff]
    %v10070 = vld [vmem:[%s3 + $0x800] sm:$0xff]
    %v10071 = vld [vmem:[%s3 + $0x808] sm:$0xff]
    %v10072 = vld [vmem:[%s3 + $0x810] sm:$0xff]
    %v10073 = vld [vmem:[%s3 + $0x818] sm:$0xff]
    %v10074 = vld [vmem:[%s3 + $0x820] sm:$0xff]
    %v10075 = vld [vmem:[%s3 + $0x828] sm:$0xff]
    %v10076 = vld [vmem:[%s3 + $0x830] sm:$0xff]
    %v10077 = vld [vmem:[%s3 + $0x838] sm:$0xff]
    %v10078 = vld [vmem:[%s3 + $0x840] sm:$0xff]
    %v10079 = vld [vmem:[%s3 + $0x848] sm:$0xff]
    %v10080 = vld [vmem:[%s3 + $0x850] sm:$0xff]
    %v10081 = vld [vmem:[%s3 + $0x858] sm:$0xff]
    %v10082 = vld [vmem:[%s3 + $0x860] sm:$0xff]
    %v10083 = vld [vmem:[%s3 + $0x868] sm:$0xff]
    %v10084 = vld [vmem:[%s3 + $0x870] sm:$0xff]
    %v10085 = vld [vmem:[%s3 + $0x878] sm:$0xff]
    %v10086 = vld [vmem:[%s3 + $0x880] sm:$0xff]
    %v10087 = vld [vmem:[%s3 + $0x888] sm:$0xff]
    %v10088 = vld [vmem:[%s3 + $0x890] sm:$0xff]
    %v10089 = vld [vmem:[%s3 + $0x898] sm:$0xff]
    %v10090 = vld [vmem:[%s3 + $0x8a0] sm:$0xff]
    %v10091 = vld [vmem:[%s3 + $0x8a8] sm:$0xff]
    %v10092 = vld [vmem:[%s3 + $0x8b0] sm:$0xff]
    %v10093 = vld [vmem:[%s3 + $0x8b8] sm:$0xff]
    %v10094 = vld [vmem:[%s3 + $0x8c0] sm:$0xff]
    %v10095 = vld [vmem:[%s3 + $0x8c8] sm:$0xff]
    %v10096 = vld [vmem:[%s3 + $0x8d0] sm:$0xff]
    %v10097 = vld [vmem:[%s3 + $0x8d8] sm:$0xff]
    %v10098 = vld [vmem:[%s3 + $0x8e0] sm:$0xff]
    %v10099 = vld [vmem:[%s3 + $0x8e8] sm:$0xff]
    %v10100 = vld [vmem:[%s3 + $0x8f0] sm:$0xff]
    %v10101 = vld [vmem:[%s3 + $0x8f8] sm:$0xff]
    %v10102 = vld [vmem:[%s4] sm:$0xf]
    %v10104 = vlaneseq
    %v10105 = vshrl.u32 %v10104, 7
    %v10106 = vsub.s32 0, %v10105
    %v10107 = vrot.slane %v10102, %v10106
    %v10108 = vlaneseq
    %v10109 = vshrl.u32 %v10108, 7
    %v10110 = vsub.s32 1, %v10109
    %v10111 = vrot.slane %v10102, %v10110
    %v10112 = vlaneseq
    %v10113 = vshrl.u32 %v10112, 7
    %v10114 = vsub.s32 2, %v10113
    %v10115 = vrot.slane %v10102, %v10114
    %v10116 = vlaneseq
    %v10117 = vshrl.u32 %v10116, 7
    %v10118 = vsub.s32 3, %v10117
    %v10119 = vrot.slane %v10102, %v10118
    %v10412 = vunpack.c.l.b16 %v9814
    %v10413 = vunpack.c.h.b16 %v9814
    %v10414 = vunpack.c.l.b16 %v9815
    %v10415 = vunpack.c.h.b16 %v9815
    %v10416 = vunpack.c.l.b16 %v9816
    %v10417 = vunpack.c.h.b16 %v9816
    %v10418 = vunpack.c.l.b16 %v9817
    %v10419 = vunpack.c.h.b16 %v9817
    %v10420 = vunpack.c.l.b16 %v9818
    %v10421 = vunpack.c.h.b16 %v9818
    %v10422 = vunpack.c.l.b16 %v9819
    %v10423 = vunpack.c.h.b16 %v9819
    %v10424 = vunpack.c.l.b16 %v9820
    %v10425 = vunpack.c.h.b16 %v9820
    %v10426 = vunpack.c.l.b16 %v9821
    %v10427 = vunpack.c.h.b16 %v9821
    %v10428 = vunpack.c.l.b16 %v9822
    %v10429 = vunpack.c.h.b16 %v9822
    %v10430 = vunpack.c.l.b16 %v9823
    %v10431 = vunpack.c.h.b16 %v9823
    %v10432 = vunpack.c.l.b16 %v9824
    %v10433 = vunpack.c.h.b16 %v9824
    %v10434 = vunpack.c.l.b16 %v9825
    %v10435 = vunpack.c.h.b16 %v9825
    %v10436 = vunpack.c.l.b16 %v9826
    %v10437 = vunpack.c.h.b16 %v9826
    %v10438 = vunpack.c.l.b16 %v9827
    %v10439 = vunpack.c.h.b16 %v9827
    %v10440 = vunpack.c.l.b16 %v9828
    %v10441 = vunpack.c.h.b16 %v9828
    %v10442 = vunpack.c.l.b16 %v9829
    %v10443 = vunpack.c.h.b16 %v9829
    %v10444 = vunpack.c.l.b16 %v9830
    %v10445 = vunpack.c.h.b16 %v9830
    %v10446 = vunpack.c.l.b16 %v9831
    %v10447 = vunpack.c.h.b16 %v9831
    %v10448 = vunpack.c.l.b16 %v9832
    %v10449 = vunpack.c.h.b16 %v9832
    %v10450 = vunpack.c.l.b16 %v9833
    %v10451 = vunpack.c.h.b16 %v9833
    %v10452 = vunpack.c.l.b16 %v9834
    %v10453 = vunpack.c.h.b16 %v9834
    %v10454 = vunpack.c.l.b16 %v9835
    %v10455 = vunpack.c.h.b16 %v9835
    %v10456 = vunpack.c.l.b16 %v9836
    %v10457 = vunpack.c.h.b16 %v9836
    %v10458 = vunpack.c.l.b16 %v9837
    %v10459 = vunpack.c.h.b16 %v9837
    %v10460 = vunpack.c.l.b16 %v9838
    %v10461 = vunpack.c.h.b16 %v9838
    %v10462 = vunpack.c.l.b16 %v9839
    %v10463 = vunpack.c.h.b16 %v9839
    %v10464 = vunpack.c.l.b16 %v9840
    %v10465 = vunpack.c.h.b16 %v9840
    %v10466 = vunpack.c.l.b16 %v9841
    %v10467 = vunpack.c.h.b16 %v9841
    %v10468 = vunpack.c.l.b16 %v9842
    %v10469 = vunpack.c.h.b16 %v9842
    %v10470 = vunpack.c.l.b16 %v9843
    %v10471 = vunpack.c.h.b16 %v9843
    %v10472 = vunpack.c.l.b16 %v9844
    %v10473 = vunpack.c.h.b16 %v9844
    %v10474 = vunpack.c.l.b16 %v9845
    %v10475 = vunpack.c.h.b16 %v9845
    %v10476 = vunpack.c.l.b16 %v9846
    %v10477 = vunpack.c.h.b16 %v9846
    %v10478 = vunpack.c.l.b16 %v9847
    %v10479 = vunpack.c.h.b16 %v9847
    %v10480 = vunpack.c.l.b16 %v9848
    %v10481 = vunpack.c.h.b16 %v9848
    %v10482 = vunpack.c.l.b16 %v9849
    %v10483 = vunpack.c.h.b16 %v9849
    %v10484 = vunpack.c.l.b16 %v9850
    %v10485 = vunpack.c.h.b16 %v9850
    %v10486 = vunpack.c.l.b16 %v9851
    %v10487 = vunpack.c.h.b16 %v9851
    %v10488 = vunpack.c.l.b16 %v9852
    %v10489 = vunpack.c.h.b16 %v9852
    %v10490 = vunpack.c.l.b16 %v9853
    %v10491 = vunpack.c.h.b16 %v9853
    %v10492 = vunpack.c.l.b16 %v9854
    %v10493 = vunpack.c.h.b16 %v9854
    %v10494 = vunpack.c.l.b16 %v9855
    %v10495 = vunpack.c.h.b16 %v9855
    %v10496 = vunpack.c.l.b16 %v9856
    %v10497 = vunpack.c.h.b16 %v9856
    %v10498 = vunpack.c.l.b16 %v9857
    %v10499 = vunpack.c.h.b16 %v9857
    %v10500 = vunpack.c.l.b16 %v9858
    %v10501 = vunpack.c.h.b16 %v9858
    %v10502 = vunpack.c.l.b16 %v9859
    %v10503 = vunpack.c.h.b16 %v9859
    %v10504 = vunpack.c.l.b16 %v9860
    %v10505 = vunpack.c.h.b16 %v9860
    %v10506 = vunpack.c.l.b16 %v9861
    %v10507 = vunpack.c.h.b16 %v9861
    %v10508 = vunpack.c.l.b16 %v9862
    %v10509 = vunpack.c.h.b16 %v9862
    %v10510 = vunpack.c.l.b16 %v9863
    %v10511 = vunpack.c.h.b16 %v9863
    %v10512 = vunpack.c.l.b16 %v9864
    %v10513 = vunpack.c.h.b16 %v9864
    %v10514 = vunpack.c.l.b16 %v9865
    %v10515 = vunpack.c.h.b16 %v9865
    %v10516 = vunpack.c.l.b16 %v9866
    %v10517 = vunpack.c.h.b16 %v9866
    %v10518 = vunpack.c.l.b16 %v9867
    %v10519 = vunpack.c.h.b16 %v9867
    %v10520 = vunpack.c.l.b16 %v9868
    %v10521 = vunpack.c.h.b16 %v9868
    %v10522 = vunpack.c.l.b16 %v9869
    %v10523 = vunpack.c.h.b16 %v9869
    %v10524 = vunpack.c.l.b16 %v9870
    %v10525 = vunpack.c.h.b16 %v9870
    %v10526 = vunpack.c.l.b16 %v9871
    %v10527 = vunpack.c.h.b16 %v9871
    %v10528 = vunpack.c.l.b16 %v9872
    %v10529 = vunpack.c.h.b16 %v9872
    %v10530 = vunpack.c.l.b16 %v9873
    %v10531 = vunpack.c.h.b16 %v9873
    %v10532 = vunpack.c.l.b16 %v9874
    %v10533 = vunpack.c.h.b16 %v9874
    %v10534 = vunpack.c.l.b16 %v9875
    %v10535 = vunpack.c.h.b16 %v9875
    %v10536 = vunpack.c.l.b16 %v9876
    %v10537 = vunpack.c.h.b16 %v9876
    %v10538 = vunpack.c.l.b16 %v9877
    %v10539 = vunpack.c.h.b16 %v9877
    %v10540 = vunpack.c.l.b16 %v9878
    %v10541 = vunpack.c.h.b16 %v9878
    %v10542 = vunpack.c.l.b16 %v9879
    %v10543 = vunpack.c.h.b16 %v9879
    %v10544 = vunpack.c.l.b16 %v9880
    %v10545 = vunpack.c.h.b16 %v9880
    %v10546 = vunpack.c.l.b16 %v9881
    %v10547 = vunpack.c.h.b16 %v9881
    %v10548 = vunpack.c.l.b16 %v9882
    %v10549 = vunpack.c.h.b16 %v9882
    %v10550 = vunpack.c.l.b16 %v9883
    %v10551 = vunpack.c.h.b16 %v9883
    %v10552 = vunpack.c.l.b16 %v9884
    %v10553 = vunpack.c.h.b16 %v9884
    %v10554 = vunpack.c.l.b16 %v9885
    %v10555 = vunpack.c.h.b16 %v9885
    %v10556 = vunpack.c.l.b16 %v9886
    %v10557 = vunpack.c.h.b16 %v9886
    %v10558 = vunpack.c.l.b16 %v9887
    %v10559 = vunpack.c.h.b16 %v9887
    %v10560 = vunpack.c.l.b16 %v9888
    %v10561 = vunpack.c.h.b16 %v9888
    %v10562 = vunpack.c.l.b16 %v9889
    %v10563 = vunpack.c.h.b16 %v9889
    %v10564 = vunpack.c.l.b16 %v9890
    %v10565 = vunpack.c.h.b16 %v9890
    %v10566 = vunpack.c.l.b16 %v9891
    %v10567 = vunpack.c.h.b16 %v9891
    %v10568 = vunpack.c.l.b16 %v9892
    %v10569 = vunpack.c.h.b16 %v9892
    %v10570 = vunpack.c.l.b16 %v9893
    %v10571 = vunpack.c.h.b16 %v9893
    %v10572 = vunpack.c.l.b16 %v9894
    %v10573 = vunpack.c.h.b16 %v9894
    %v10574 = vunpack.c.l.b16 %v9895
    %v10575 = vunpack.c.h.b16 %v9895
    %v10576 = vunpack.c.l.b16 %v9896
    %v10577 = vunpack.c.h.b16 %v9896
    %v10578 = vunpack.c.l.b16 %v9897
    %v10579 = vunpack.c.h.b16 %v9897
    %v10580 = vunpack.c.l.b16 %v9898
    %v10581 = vunpack.c.h.b16 %v9898
    %v10582 = vunpack.c.l.b16 %v9899
    %v10583 = vunpack.c.h.b16 %v9899
    %v10584 = vunpack.c.l.b16 %v9900
    %v10585 = vunpack.c.h.b16 %v9900
    %v10586 = vunpack.c.l.b16 %v9901
    %v10587 = vunpack.c.h.b16 %v9901
    %v10588 = vunpack.c.l.b16 %v9902
    %v10589 = vunpack.c.h.b16 %v9902
    %v10590 = vunpack.c.l.b16 %v9903
    %v10591 = vunpack.c.h.b16 %v9903
    %v10592 = vunpack.c.l.b16 %v9904
    %v10593 = vunpack.c.h.b16 %v9904
    %v10594 = vunpack.c.l.b16 %v9905
    %v10595 = vunpack.c.h.b16 %v9905
    %v10596 = vunpack.c.l.b16 %v9906
    %v10597 = vunpack.c.h.b16 %v9906
    %v10598 = vunpack.c.l.b16 %v9907
    %v10599 = vunpack.c.h.b16 %v9907
    %v10600 = vunpack.c.l.b16 %v9908
    %v10601 = vunpack.c.h.b16 %v9908
    %v10602 = vunpack.c.l.b16 %v9909
    %v10603 = vunpack.c.h.b16 %v9909
    %v10604 = vunpack.c.l.b16 %v9910
    %v10605 = vunpack.c.h.b16 %v9910
    %v10606 = vunpack.c.l.b16 %v9911
    %v10607 = vunpack.c.h.b16 %v9911
    %v10608 = vunpack.c.l.b16 %v9912
    %v10609 = vunpack.c.h.b16 %v9912
    %v10610 = vunpack.c.l.b16 %v9913
    %v10611 = vunpack.c.h.b16 %v9913
    %v10612 = vunpack.c.l.b16 %v9914
    %v10613 = vunpack.c.h.b16 %v9914
    %v10614 = vunpack.c.l.b16 %v9915
    %v10615 = vunpack.c.h.b16 %v9915
    %v10616 = vunpack.c.l.b16 %v9916
    %v10617 = vunpack.c.h.b16 %v9916
    %v10618 = vunpack.c.l.b16 %v9917
    %v10619 = vunpack.c.h.b16 %v9917
    %v10620 = vunpack.c.l.b16 %v9918
    %v10621 = vunpack.c.h.b16 %v9918
    %v10622 = vunpack.c.l.b16 %v9919
    %v10623 = vunpack.c.h.b16 %v9919
    %v10624 = vunpack.c.l.b16 %v9920
    %v10625 = vunpack.c.h.b16 %v9920
    %v10626 = vunpack.c.l.b16 %v9921
    %v10627 = vunpack.c.h.b16 %v9921
    %v10628 = vunpack.c.l.b16 %v9922
    %v10629 = vunpack.c.h.b16 %v9922
    %v10630 = vunpack.c.l.b16 %v9923
    %v10631 = vunpack.c.h.b16 %v9923
    %v10632 = vunpack.c.l.b16 %v9924
    %v10633 = vunpack.c.h.b16 %v9924
    %v10634 = vunpack.c.l.b16 %v9925
    %v10635 = vunpack.c.h.b16 %v9925
    %v10636 = vunpack.c.l.b16 %v9926
    %v10637 = vunpack.c.h.b16 %v9926
    %v10638 = vunpack.c.l.b16 %v9927
    %v10639 = vunpack.c.h.b16 %v9927
    %v10640 = vunpack.c.l.b16 %v9928
    %v10641 = vunpack.c.h.b16 %v9928
    %v10642 = vunpack.c.l.b16 %v9929
    %v10643 = vunpack.c.h.b16 %v9929
    %v10644 = vunpack.c.l.b16 %v9930
    %v10645 = vunpack.c.h.b16 %v9930
    %v10646 = vunpack.c.l.b16 %v9931
    %v10647 = vunpack.c.h.b16 %v9931
    %v10648 = vunpack.c.l.b16 %v9932
    %v10649 = vunpack.c.h.b16 %v9932
    %v10650 = vunpack.c.l.b16 %v9933
    %v10651 = vunpack.c.h.b16 %v9933
    %v10652 = vunpack.c.l.b16 %v9934
    %v10653 = vunpack.c.h.b16 %v9934
    %v10654 = vunpack.c.l.b16 %v9935
    %v10655 = vunpack.c.h.b16 %v9935
    %v10656 = vunpack.c.l.b16 %v9936
    %v10657 = vunpack.c.h.b16 %v9936
    %v10658 = vunpack.c.l.b16 %v9937
    %v10659 = vunpack.c.h.b16 %v9937
    %v10660 = vunpack.c.l.b16 %v9938
    %v10661 = vunpack.c.h.b16 %v9938
    %v10662 = vunpack.c.l.b16 %v9939
    %v10663 = vunpack.c.h.b16 %v9939
    %v10664 = vunpack.c.l.b16 %v9940
    %v10665 = vunpack.c.h.b16 %v9940
    %v10666 = vunpack.c.l.b16 %v9941
    %v10667 = vunpack.c.h.b16 %v9941
    %v10668 = vunpack.c.l.b16 %v9942
    %v10669 = vunpack.c.h.b16 %v9942
    %v10670 = vunpack.c.l.b16 %v9943
    %v10671 = vunpack.c.h.b16 %v9943
    %v10672 = vunpack.c.l.b16 %v9944
    %v10673 = vunpack.c.h.b16 %v9944
    %v10674 = vunpack.c.l.b16 %v9945
    %v10675 = vunpack.c.h.b16 %v9945
    %v10676 = vunpack.c.l.b16 %v9946
    %v10677 = vunpack.c.h.b16 %v9946
    %v10678 = vunpack.c.l.b16 %v9947
    %v10679 = vunpack.c.h.b16 %v9947
    %v10680 = vunpack.c.l.b16 %v9948
    %v10681 = vunpack.c.h.b16 %v9948
    %v10682 = vunpack.c.l.b16 %v9949
    %v10683 = vunpack.c.h.b16 %v9949
    %v10684 = vunpack.c.l.b16 %v9950
    %v10685 = vunpack.c.h.b16 %v9950
    %v10686 = vunpack.c.l.b16 %v9951
    %v10687 = vunpack.c.h.b16 %v9951
    %v10688 = vunpack.c.l.b16 %v9952
    %v10689 = vunpack.c.h.b16 %v9952
    %v10690 = vunpack.c.l.b16 %v9953
    %v10691 = vunpack.c.h.b16 %v9953
    %v10692 = vunpack.c.l.b16 %v9954
    %v10693 = vunpack.c.h.b16 %v9954
    %v10694 = vunpack.c.l.b16 %v9955
    %v10695 = vunpack.c.h.b16 %v9955
    %v10696 = vunpack.c.l.b16 %v9956
    %v10697 = vunpack.c.h.b16 %v9956
    %v10698 = vunpack.c.l.b16 %v9957
    %v10699 = vunpack.c.h.b16 %v9957
    %v10700 = vunpack.c.l.b16 %v9958
    %v10701 = vunpack.c.h.b16 %v9958
    %v10702 = vunpack.c.l.b16 %v9959
    %v10703 = vunpack.c.h.b16 %v9959
    %v10704 = vunpack.c.l.b16 %v9960
    %v10705 = vunpack.c.h.b16 %v9960
    %v10706 = vunpack.c.l.b16 %v9961
    %v10707 = vunpack.c.h.b16 %v9961
    %v10708 = vunpack.c.l.b16 %v9962
    %v10709 = vunpack.c.h.b16 %v9962
    %v10710 = vunpack.c.l.b16 %v9963
    %v10711 = vunpack.c.h.b16 %v9963
    %v10712 = vunpack.c.l.b16 %v9964
    %v10713 = vunpack.c.h.b16 %v9964
    %v10714 = vunpack.c.l.b16 %v9965
    %v10715 = vunpack.c.h.b16 %v9965
    %v10716 = vunpack.c.l.b16 %v9966
    %v10717 = vunpack.c.h.b16 %v9966
    %v10718 = vunpack.c.l.b16 %v9967
    %v10719 = vunpack.c.h.b16 %v9967
    %v10720 = vunpack.c.l.b16 %v9968
    %v10721 = vunpack.c.h.b16 %v9968
    %v10722 = vunpack.c.l.b16 %v9969
    %v10723 = vunpack.c.h.b16 %v9969
    %v10724 = vunpack.c.l.b16 %v9970
    %v10725 = vunpack.c.h.b16 %v9970
    %v10726 = vunpack.c.l.b16 %v9971
    %v10727 = vunpack.c.h.b16 %v9971
    %v10728 = vunpack.c.l.b16 %v9972
    %v10729 = vunpack.c.h.b16 %v9972
    %v10730 = vunpack.c.l.b16 %v9973
    %v10731 = vunpack.c.h.b16 %v9973
    %v10732 = vunpack.c.l.b16 %v9974
    %v10733 = vunpack.c.h.b16 %v9974
    %v10734 = vunpack.c.l.b16 %v9975
    %v10735 = vunpack.c.h.b16 %v9975
    %v10736 = vunpack.c.l.b16 %v9976
    %v10737 = vunpack.c.h.b16 %v9976
    %v10738 = vunpack.c.l.b16 %v9977
    %v10739 = vunpack.c.h.b16 %v9977
    %v10740 = vunpack.c.l.b16 %v9978
    %v10741 = vunpack.c.h.b16 %v9978
    %v10742 = vunpack.c.l.b16 %v9979
    %v10743 = vunpack.c.h.b16 %v9979
    %v10744 = vunpack.c.l.b16 %v9980
    %v10745 = vunpack.c.h.b16 %v9980
    %v10746 = vunpack.c.l.b16 %v9981
    %v10747 = vunpack.c.h.b16 %v9981
    %v10748 = vunpack.c.l.b16 %v9982
    %v10749 = vunpack.c.h.b16 %v9982
    %v10750 = vunpack.c.l.b16 %v9983
    %v10751 = vunpack.c.h.b16 %v9983
    %v10752 = vunpack.c.l.b16 %v9984
    %v10753 = vunpack.c.h.b16 %v9984
    %v10754 = vunpack.c.l.b16 %v9985
    %v10755 = vunpack.c.h.b16 %v9985
    %v10756 = vunpack.c.l.b16 %v9986
    %v10757 = vunpack.c.h.b16 %v9986
    %v10758 = vunpack.c.l.b16 %v9987
    %v10759 = vunpack.c.h.b16 %v9987
    %v10760 = vunpack.c.l.b16 %v9988
    %v10761 = vunpack.c.h.b16 %v9988
    %v10762 = vunpack.c.l.b16 %v9989
    %v10763 = vunpack.c.h.b16 %v9989
    %v10764 = vunpack.c.l.b16 %v9990
    %v10765 = vunpack.c.h.b16 %v9990
    %v10766 = vunpack.c.l.b16 %v9991
    %v10767 = vunpack.c.h.b16 %v9991
    %v10768 = vunpack.c.l.b16 %v9992
    %v10769 = vunpack.c.h.b16 %v9992
    %v10770 = vunpack.c.l.b16 %v9993
    %v10771 = vunpack.c.h.b16 %v9993
    %v10772 = vunpack.c.l.b16 %v9994
    %v10773 = vunpack.c.h.b16 %v9994
    %v10774 = vunpack.c.l.b16 %v9995
    %v10775 = vunpack.c.h.b16 %v9995
    %v10776 = vunpack.c.l.b16 %v9996
    %v10777 = vunpack.c.h.b16 %v9996
    %v10778 = vunpack.c.l.b16 %v9997
    %v10779 = vunpack.c.h.b16 %v9997
    %v10780 = vunpack.c.l.b16 %v9998
    %v10781 = vunpack.c.h.b16 %v9998
    %v10782 = vunpack.c.l.b16 %v9999
    %v10783 = vunpack.c.h.b16 %v9999
    %v10784 = vunpack.c.l.b16 %v10000
    %v10785 = vunpack.c.h.b16 %v10000
    %v10786 = vunpack.c.l.b16 %v10001
    %v10787 = vunpack.c.h.b16 %v10001
    %v10788 = vunpack.c.l.b16 %v10002
    %v10789 = vunpack.c.h.b16 %v10002
    %v10790 = vunpack.c.l.b16 %v10003
    %v10791 = vunpack.c.h.b16 %v10003
    %v10792 = vunpack.c.l.b16 %v10004
    %v10793 = vunpack.c.h.b16 %v10004
    %v10794 = vunpack.c.l.b16 %v10005
    %v10795 = vunpack.c.h.b16 %v10005
    %v10796 = vunpack.c.l.b16 %v10006
    %v10797 = vunpack.c.h.b16 %v10006
    %v10798 = vunpack.c.l.b16 %v10007
    %v10799 = vunpack.c.h.b16 %v10007
    %v10800 = vunpack.c.l.b16 %v10008
    %v10801 = vunpack.c.h.b16 %v10008
    %v10802 = vunpack.c.l.b16 %v10009
    %v10803 = vunpack.c.h.b16 %v10009
    %v10804 = vunpack.c.l.b16 %v10010
    %v10805 = vunpack.c.h.b16 %v10010
    %v10806 = vunpack.c.l.b16 %v10011
    %v10807 = vunpack.c.h.b16 %v10011
    %v10808 = vunpack.c.l.b16 %v10012
    %v10809 = vunpack.c.h.b16 %v10012
    %v10810 = vunpack.c.l.b16 %v10013
    %v10811 = vunpack.c.h.b16 %v10013
    %v10812 = vunpack.c.l.b16 %v10014
    %v10813 = vunpack.c.h.b16 %v10014
    %v10814 = vunpack.c.l.b16 %v10015
    %v10815 = vunpack.c.h.b16 %v10015
    %v10816 = vunpack.c.l.b16 %v10016
    %v10817 = vunpack.c.h.b16 %v10016
    %v10818 = vunpack.c.l.b16 %v10017
    %v10819 = vunpack.c.h.b16 %v10017
    %v10820 = vunpack.c.l.b16 %v10018
    %v10821 = vunpack.c.h.b16 %v10018
    %v10822 = vunpack.c.l.b16 %v10019
    %v10823 = vunpack.c.h.b16 %v10019
    %v10824 = vunpack.c.l.b16 %v10020
    %v10825 = vunpack.c.h.b16 %v10020
    %v10826 = vunpack.c.l.b16 %v10021
    %v10827 = vunpack.c.h.b16 %v10021
    %v10828 = vunpack.c.l.b16 %v10022
    %v10829 = vunpack.c.h.b16 %v10022
    %v10830 = vunpack.c.l.b16 %v10023
    %v10831 = vunpack.c.h.b16 %v10023
    %v10832 = vunpack.c.l.b16 %v10024
    %v10833 = vunpack.c.h.b16 %v10024
    %v10834 = vunpack.c.l.b16 %v10025
    %v10835 = vunpack.c.h.b16 %v10025
    %v10836 = vunpack.c.l.b16 %v10026
    %v10837 = vunpack.c.h.b16 %v10026
    %v10838 = vunpack.c.l.b16 %v10027
    %v10839 = vunpack.c.h.b16 %v10027
    %v10840 = vunpack.c.l.b16 %v10028
    %v10841 = vunpack.c.h.b16 %v10028
    %v10842 = vunpack.c.l.b16 %v10029
    %v10843 = vunpack.c.h.b16 %v10029
    %v10844 = vunpack.c.l.b16 %v10030
    %v10845 = vunpack.c.h.b16 %v10030
    %v10846 = vunpack.c.l.b16 %v10031
    %v10847 = vunpack.c.h.b16 %v10031
    %v10848 = vunpack.c.l.b16 %v10032
    %v10849 = vunpack.c.h.b16 %v10032
    %v10850 = vunpack.c.l.b16 %v10033
    %v10851 = vunpack.c.h.b16 %v10033
    %v10852 = vunpack.c.l.b16 %v10034
    %v10853 = vunpack.c.h.b16 %v10034
    %v10854 = vunpack.c.l.b16 %v10035
    %v10855 = vunpack.c.h.b16 %v10035
    %v10856 = vunpack.c.l.b16 %v10036
    %v10857 = vunpack.c.h.b16 %v10036
    %v10858 = vunpack.c.l.b16 %v10037
    %v10859 = vunpack.c.h.b16 %v10037
    %v10860 = vunpack.c.l.b16 %v10038
    %v10861 = vunpack.c.h.b16 %v10038
    %v10862 = vunpack.c.l.b16 %v10039
    %v10863 = vunpack.c.h.b16 %v10039
    %v10864 = vunpack.c.l.b16 %v10040
    %v10865 = vunpack.c.h.b16 %v10040
    %v10866 = vunpack.c.l.b16 %v10041
    %v10867 = vunpack.c.h.b16 %v10041
    %v10868 = vunpack.c.l.b16 %v10042
    %v10869 = vunpack.c.h.b16 %v10042
    %v10870 = vunpack.c.l.b16 %v10043
    %v10871 = vunpack.c.h.b16 %v10043
    %v10872 = vunpack.c.l.b16 %v10044
    %v10873 = vunpack.c.h.b16 %v10044
    %v10874 = vunpack.c.l.b16 %v10045
    %v10875 = vunpack.c.h.b16 %v10045
    %v10876 = vunpack.c.l.b16 %v10046
    %v10877 = vunpack.c.h.b16 %v10046
    %v10878 = vunpack.c.l.b16 %v10047
    %v10879 = vunpack.c.h.b16 %v10047
    %v10880 = vunpack.c.l.b16 %v10048
    %v10881 = vunpack.c.h.b16 %v10048
    %v10882 = vunpack.c.l.b16 %v10049
    %v10883 = vunpack.c.h.b16 %v10049
    %v10884 = vunpack.c.l.b16 %v10050
    %v10885 = vunpack.c.h.b16 %v10050
    %v10886 = vunpack.c.l.b16 %v10051
    %v10887 = vunpack.c.h.b16 %v10051
    %v10888 = vunpack.c.l.b16 %v10052
    %v10889 = vunpack.c.h.b16 %v10052
    %v10890 = vunpack.c.l.b16 %v10053
    %v10891 = vunpack.c.h.b16 %v10053
    %v10892 = vunpack.c.l.b16 %v10054
    %v10893 = vunpack.c.h.b16 %v10054
    %v10894 = vunpack.c.l.b16 %v10055
    %v10895 = vunpack.c.h.b16 %v10055
    %v10896 = vunpack.c.l.b16 %v10056
    %v10897 = vunpack.c.h.b16 %v10056
    %v10898 = vunpack.c.l.b16 %v10057
    %v10899 = vunpack.c.h.b16 %v10057
    %v10900 = vunpack.c.l.b16 %v10058
    %v10901 = vunpack.c.h.b16 %v10058
    %v10902 = vunpack.c.l.b16 %v10059
    %v10903 = vunpack.c.h.b16 %v10059
    %v10904 = vunpack.c.l.b16 %v10060
    %v10905 = vunpack.c.h.b16 %v10060
    %v10906 = vunpack.c.l.b16 %v10061
    %v10907 = vunpack.c.h.b16 %v10061
    %v10908 = vunpack.c.l.b16 %v10062
    %v10909 = vunpack.c.h.b16 %v10062
    %v10910 = vunpack.c.l.b16 %v10063
    %v10911 = vunpack.c.h.b16 %v10063
    %v10912 = vunpack.c.l.b16 %v10064
    %v10913 = vunpack.c.h.b16 %v10064
    %v10914 = vunpack.c.l.b16 %v10065
    %v10915 = vunpack.c.h.b16 %v10065
    %v10916 = vunpack.c.l.b16 %v10066
    %v10917 = vunpack.c.h.b16 %v10066
    %v10918 = vunpack.c.l.b16 %v10067
    %v10919 = vunpack.c.h.b16 %v10067
    %v10920 = vunpack.c.l.b16 %v10068
    %v10921 = vunpack.c.h.b16 %v10068
    %v10922 = vunpack.c.l.b16 %v10069
    %v10923 = vunpack.c.h.b16 %v10069
    %v10924 = vunpack.c.l.b16 %v10070
    %v10925 = vunpack.c.h.b16 %v10070
    %v10926 = vunpack.c.l.b16 %v10071
    %v10927 = vunpack.c.h.b16 %v10071
    %v10928 = vunpack.c.l.b16 %v10072
    %v10929 = vunpack.c.h.b16 %v10072
    %v10930 = vunpack.c.l.b16 %v10073
    %v10931 = vunpack.c.h.b16 %v10073
    %v10932 = vunpack.c.l.b16 %v10074
    %v10933 = vunpack.c.h.b16 %v10074
    %v10934 = vunpack.c.l.b16 %v10075
    %v10935 = vunpack.c.h.b16 %v10075
    %v10936 = vunpack.c.l.b16 %v10076
    %v10937 = vunpack.c.h.b16 %v10076
    %v10938 = vunpack.c.l.b16 %v10077
    %v10939 = vunpack.c.h.b16 %v10077
    %v10940 = vunpack.c.l.b16 %v10078
    %v10941 = vunpack.c.h.b16 %v10078
    %v10942 = vunpack.c.l.b16 %v10079
    %v10943 = vunpack.c.h.b16 %v10079
    %v10944 = vunpack.c.l.b16 %v10080
    %v10945 = vunpack.c.h.b16 %v10080
    %v10946 = vunpack.c.l.b16 %v10081
    %v10947 = vunpack.c.h.b16 %v10081
    %v10948 = vunpack.c.l.b16 %v10082
    %v10949 = vunpack.c.h.b16 %v10082
    %v10950 = vunpack.c.l.b16 %v10083
    %v10951 = vunpack.c.h.b16 %v10083
    %v10952 = vunpack.c.l.b16 %v10084
    %v10953 = vunpack.c.h.b16 %v10084
    %v10954 = vunpack.c.l.b16 %v10085
    %v10955 = vunpack.c.h.b16 %v10085
    %v10956 = vunpack.c.l.b16 %v10086
    %v10957 = vunpack.c.h.b16 %v10086
    %v10958 = vunpack.c.l.b16 %v10087
    %v10959 = vunpack.c.h.b16 %v10087
    %v10960 = vunpack.c.l.b16 %v10088
    %v10961 = vunpack.c.h.b16 %v10088
    %v10962 = vunpack.c.l.b16 %v10089
    %v10963 = vunpack.c.h.b16 %v10089
    %v10964 = vunpack.c.l.b16 %v10090
    %v10965 = vunpack.c.h.b16 %v10090
    %v10966 = vunpack.c.l.b16 %v10091
    %v10967 = vunpack.c.h.b16 %v10091
    %v10968 = vunpack.c.l.b16 %v10092
    %v10969 = vunpack.c.h.b16 %v10092
    %v10970 = vunpack.c.l.b16 %v10093
    %v10971 = vunpack.c.h.b16 %v10093
    %v10972 = vunpack.c.l.b16 %v10094
    %v10973 = vunpack.c.h.b16 %v10094
    %v10974 = vunpack.c.l.b16 %v10095
    %v10975 = vunpack.c.h.b16 %v10095
    %v10976 = vunpack.c.l.b16 %v10096
    %v10977 = vunpack.c.h.b16 %v10096
    %v10978 = vunpack.c.l.b16 %v10097
    %v10979 = vunpack.c.h.b16 %v10097
    %v10980 = vunpack.c.l.b16 %v10098
    %v10981 = vunpack.c.h.b16 %v10098
    %v10982 = vunpack.c.l.b16 %v10099
    %v10983 = vunpack.c.h.b16 %v10099
    %v10984 = vunpack.c.l.b16 %v10100
    %v10985 = vunpack.c.h.b16 %v10100
    %v10986 = vunpack.c.l.b16 %v10101
    %v10987 = vunpack.c.h.b16 %v10101
    %v10988 = vpack.c.b16 %v10416, %v10412
    %v10989 = vpack.c.b16 %v10417, %v10413
    %v10990 = vpack.c.b16 %v10418, %v10414
    %v10991 = vpack.c.b16 %v10419, %v10415
    %v10992 = vpack.c.b16 %v10424, %v10420
    %v10993 = vpack.c.b16 %v10425, %v10421
    %v10994 = vpack.c.b16 %v10426, %v10422
    %v10995 = vpack.c.b16 %v10427, %v10423
    %v10996 = vpack.c.b16 %v10432, %v10428
    %v10997 = vpack.c.b16 %v10433, %v10429
    %v10998 = vpack.c.b16 %v10434, %v10430
    %v10999 = vpack.c.b16 %v10435, %v10431
    %v11000 = vpack.c.b16 %v10440, %v10436
    %v11001 = vpack.c.b16 %v10441, %v10437
    %v11002 = vpack.c.b16 %v10442, %v10438
    %v11003 = vpack.c.b16 %v10443, %v10439
    %v11004 = vpack.c.b16 %v10448, %v10444
    %v11005 = vpack.c.b16 %v10449, %v10445
    %v11006 = vpack.c.b16 %v10450, %v10446
    %v11007 = vpack.c.b16 %v10451, %v10447
    %v11008 = vpack.c.b16 %v10456, %v10452
    %v11009 = vpack.c.b16 %v10457, %v10453
    %v11010 = vpack.c.b16 %v10458, %v10454
    %v11011 = vpack.c.b16 %v10459, %v10455
    %v11012 = vpack.c.b16 %v10464, %v10460
    %v11013 = vpack.c.b16 %v10465, %v10461
    %v11014 = vpack.c.b16 %v10466, %v10462
    %v11015 = vpack.c.b16 %v10467, %v10463
    %v11016 = vpack.c.b16 %v10472, %v10468
    %v11017 = vpack.c.b16 %v10473, %v10469
    %v11018 = vpack.c.b16 %v10474, %v10470
    %v11019 = vpack.c.b16 %v10475, %v10471
    %v11020 = vpack.c.b16 %v10480, %v10476
    %v11021 = vpack.c.b16 %v10481, %v10477
    %v11022 = vpack.c.b16 %v10482, %v10478
    %v11023 = vpack.c.b16 %v10483, %v10479
    %v11024 = vpack.c.b16 %v10488, %v10484
    %v11025 = vpack.c.b16 %v10489, %v10485
    %v11026 = vpack.c.b16 %v10490, %v10486
    %v11027 = vpack.c.b16 %v10491, %v10487
    %v11028 = vpack.c.b16 %v10496, %v10492
    %v11029 = vpack.c.b16 %v10497, %v10493
    %v11030 = vpack.c.b16 %v10498, %v10494
    %v11031 = vpack.c.b16 %v10499, %v10495
    %v11032 = vpack.c.b16 %v10504, %v10500
    %v11033 = vpack.c.b16 %v10505, %v10501
    %v11034 = vpack.c.b16 %v10506, %v10502
    %v11035 = vpack.c.b16 %v10507, %v10503
    %v11036 = vpack.c.b16 %v10512, %v10508
    %v11037 = vpack.c.b16 %v10513, %v10509
    %v11038 = vpack.c.b16 %v10514, %v10510
    %v11039 = vpack.c.b16 %v10515, %v10511
    %v11040 = vpack.c.b16 %v10520, %v10516
    %v11041 = vpack.c.b16 %v10521, %v10517
    %v11042 = vpack.c.b16 %v10522, %v10518
    %v11043 = vpack.c.b16 %v10523, %v10519
    %v11044 = vpack.c.b16 %v10528, %v10524
    %v11045 = vpack.c.b16 %v10529, %v10525
    %v11046 = vpack.c.b16 %v10530, %v10526
    %v11047 = vpack.c.b16 %v10531, %v10527
    %v11048 = vpack.c.b16 %v10536, %v10532
    %v11049 = vpack.c.b16 %v10537, %v10533
    %v11050 = vpack.c.b16 %v10538, %v10534
    %v11051 = vpack.c.b16 %v10539, %v10535
    %v11052 = vpack.c.b16 %v10544, %v10540
    %v11053 = vpack.c.b16 %v10545, %v10541
    %v11054 = vpack.c.b16 %v10546, %v10542
    %v11055 = vpack.c.b16 %v10547, %v10543
    %v11056 = vpack.c.b16 %v10552, %v10548
    %v11057 = vpack.c.b16 %v10553, %v10549
    %v11058 = vpack.c.b16 %v10554, %v10550
    %v11059 = vpack.c.b16 %v10555, %v10551
    %v11060 = vpack.c.b16 %v10560, %v10556
    %v11061 = vpack.c.b16 %v10561, %v10557
    %v11062 = vpack.c.b16 %v10562, %v10558
    %v11063 = vpack.c.b16 %v10563, %v10559
    %v11064 = vpack.c.b16 %v10568, %v10564
    %v11065 = vpack.c.b16 %v10569, %v10565
    %v11066 = vpack.c.b16 %v10570, %v10566
    %v11067 = vpack.c.b16 %v10571, %v10567
    %v11068 = vpack.c.b16 %v10576, %v10572
    %v11069 = vpack.c.b16 %v10577, %v10573
    %v11070 = vpack.c.b16 %v10578, %v10574
    %v11071 = vpack.c.b16 %v10579, %v10575
    %v11072 = vpack.c.b16 %v10584, %v10580
    %v11073 = vpack.c.b16 %v10585, %v10581
    %v11074 = vpack.c.b16 %v10586, %v10582
    %v11075 = vpack.c.b16 %v10587, %v10583
    %v11076 = vpack.c.b16 %v10592, %v10588
    %v11077 = vpack.c.b16 %v10593, %v10589
    %v11078 = vpack.c.b16 %v10594, %v10590
    %v11079 = vpack.c.b16 %v10595, %v10591
    %v11080 = vpack.c.b16 %v10600, %v10596
    %v11081 = vpack.c.b16 %v10601, %v10597
    %v11082 = vpack.c.b16 %v10602, %v10598
    %v11083 = vpack.c.b16 %v10603, %v10599
    %v11084 = vpack.c.b16 %v10608, %v10604
    %v11085 = vpack.c.b16 %v10609, %v10605
    %v11086 = vpack.c.b16 %v10610, %v10606
    %v11087 = vpack.c.b16 %v10611, %v10607
    %v11088 = vpack.c.b16 %v10616, %v10612
    %v11089 = vpack.c.b16 %v10617, %v10613
    %v11090 = vpack.c.b16 %v10618, %v10614
    %v11091 = vpack.c.b16 %v10619, %v10615
    %v11092 = vpack.c.b16 %v10624, %v10620
    %v11093 = vpack.c.b16 %v10625, %v10621
    %v11094 = vpack.c.b16 %v10626, %v10622
    %v11095 = vpack.c.b16 %v10627, %v10623
    %v11096 = vpack.c.b16 %v10632, %v10628
    %v11097 = vpack.c.b16 %v10633, %v10629
    %v11098 = vpack.c.b16 %v10634, %v10630
    %v11099 = vpack.c.b16 %v10635, %v10631
    %v11100 = vpack.c.b16 %v10640, %v10636
    %v11101 = vpack.c.b16 %v10641, %v10637
    %v11102 = vpack.c.b16 %v10642, %v10638
    %v11103 = vpack.c.b16 %v10643, %v10639
    %v11104 = vpack.c.b16 %v10648, %v10644
    %v11105 = vpack.c.b16 %v10649, %v10645
    %v11106 = vpack.c.b16 %v10650, %v10646
    %v11107 = vpack.c.b16 %v10651, %v10647
    %v11108 = vpack.c.b16 %v10656, %v10652
    %v11109 = vpack.c.b16 %v10657, %v10653
    %v11110 = vpack.c.b16 %v10658, %v10654
    %v11111 = vpack.c.b16 %v10659, %v10655
    %v11112 = vpack.c.b16 %v10664, %v10660
    %v11113 = vpack.c.b16 %v10665, %v10661
    %v11114 = vpack.c.b16 %v10666, %v10662
    %v11115 = vpack.c.b16 %v10667, %v10663
    %v11116 = vpack.c.b16 %v10672, %v10668
    %v11117 = vpack.c.b16 %v10673, %v10669
    %v11118 = vpack.c.b16 %v10674, %v10670
    %v11119 = vpack.c.b16 %v10675, %v10671
    %v11120 = vpack.c.b16 %v10680, %v10676
    %v11121 = vpack.c.b16 %v10681, %v10677
    %v11122 = vpack.c.b16 %v10682, %v10678
    %v11123 = vpack.c.b16 %v10683, %v10679
    %v11124 = vpack.c.b16 %v10688, %v10684
    %v11125 = vpack.c.b16 %v10689, %v10685
    %v11126 = vpack.c.b16 %v10690, %v10686
    %v11127 = vpack.c.b16 %v10691, %v10687
    %v11128 = vpack.c.b16 %v10696, %v10692
    %v11129 = vpack.c.b16 %v10697, %v10693
    %v11130 = vpack.c.b16 %v10698, %v10694
    %v11131 = vpack.c.b16 %v10699, %v10695
    %v11132 = vpack.c.b16 %v10704, %v10700
    %v11133 = vpack.c.b16 %v10705, %v10701
    %v11134 = vpack.c.b16 %v10706, %v10702
    %v11135 = vpack.c.b16 %v10707, %v10703
    %v11136 = vpack.c.b16 %v10712, %v10708
    %v11137 = vpack.c.b16 %v10713, %v10709
    %v11138 = vpack.c.b16 %v10714, %v10710
    %v11139 = vpack.c.b16 %v10715, %v10711
    %v11140 = vpack.c.b16 %v10720, %v10716
    %v11141 = vpack.c.b16 %v10721, %v10717
    %v11142 = vpack.c.b16 %v10722, %v10718
    %v11143 = vpack.c.b16 %v10723, %v10719
    %v11144 = vpack.c.b16 %v10728, %v10724
    %v11145 = vpack.c.b16 %v10729, %v10725
    %v11146 = vpack.c.b16 %v10730, %v10726
    %v11147 = vpack.c.b16 %v10731, %v10727
    %v11148 = vpack.c.b16 %v10736, %v10732
    %v11149 = vpack.c.b16 %v10737, %v10733
    %v11150 = vpack.c.b16 %v10738, %v10734
    %v11151 = vpack.c.b16 %v10739, %v10735
    %v11152 = vpack.c.b16 %v10744, %v10740
    %v11153 = vpack.c.b16 %v10745, %v10741
    %v11154 = vpack.c.b16 %v10746, %v10742
    %v11155 = vpack.c.b16 %v10747, %v10743
    %v11156 = vpack.c.b16 %v10752, %v10748
    %v11157 = vpack.c.b16 %v10753, %v10749
    %v11158 = vpack.c.b16 %v10754, %v10750
    %v11159 = vpack.c.b16 %v10755, %v10751
    %v11160 = vpack.c.b16 %v10760, %v10756
    %v11161 = vpack.c.b16 %v10761, %v10757
    %v11162 = vpack.c.b16 %v10762, %v10758
    %v11163 = vpack.c.b16 %v10763, %v10759
    %v11164 = vpack.c.b16 %v10768, %v10764
    %v11165 = vpack.c.b16 %v10769, %v10765
    %v11166 = vpack.c.b16 %v10770, %v10766
    %v11167 = vpack.c.b16 %v10771, %v10767
    %v11168 = vpack.c.b16 %v10776, %v10772
    %v11169 = vpack.c.b16 %v10777, %v10773
    %v11170 = vpack.c.b16 %v10778, %v10774
    %v11171 = vpack.c.b16 %v10779, %v10775
    %v11172 = vpack.c.b16 %v10784, %v10780
    %v11173 = vpack.c.b16 %v10785, %v10781
    %v11174 = vpack.c.b16 %v10786, %v10782
    %v11175 = vpack.c.b16 %v10787, %v10783
    %v11176 = vpack.c.b16 %v10792, %v10788
    %v11177 = vpack.c.b16 %v10793, %v10789
    %v11178 = vpack.c.b16 %v10794, %v10790
    %v11179 = vpack.c.b16 %v10795, %v10791
    %v11180 = vpack.c.b16 %v10800, %v10796
    %v11181 = vpack.c.b16 %v10801, %v10797
    %v11182 = vpack.c.b16 %v10802, %v10798
    %v11183 = vpack.c.b16 %v10803, %v10799
    %v11184 = vpack.c.b16 %v10808, %v10804
    %v11185 = vpack.c.b16 %v10809, %v10805
    %v11186 = vpack.c.b16 %v10810, %v10806
    %v11187 = vpack.c.b16 %v10811, %v10807
    %v11188 = vpack.c.b16 %v10816, %v10812
    %v11189 = vpack.c.b16 %v10817, %v10813
    %v11190 = vpack.c.b16 %v10818, %v10814
    %v11191 = vpack.c.b16 %v10819, %v10815
    %v11192 = vpack.c.b16 %v10824, %v10820
    %v11193 = vpack.c.b16 %v10825, %v10821
    %v11194 = vpack.c.b16 %v10826, %v10822
    %v11195 = vpack.c.b16 %v10827, %v10823
    %v11196 = vpack.c.b16 %v10832, %v10828
    %v11197 = vpack.c.b16 %v10833, %v10829
    %v11198 = vpack.c.b16 %v10834, %v10830
    %v11199 = vpack.c.b16 %v10835, %v10831
    %v11200 = vpack.c.b16 %v10840, %v10836
    %v11201 = vpack.c.b16 %v10841, %v10837
    %v11202 = vpack.c.b16 %v10842, %v10838
    %v11203 = vpack.c.b16 %v10843, %v10839
    %v11204 = vpack.c.b16 %v10848, %v10844
    %v11205 = vpack.c.b16 %v10849, %v10845
    %v11206 = vpack.c.b16 %v10850, %v10846
    %v11207 = vpack.c.b16 %v10851, %v10847
    %v11208 = vpack.c.b16 %v10856, %v10852
    %v11209 = vpack.c.b16 %v10857, %v10853
    %v11210 = vpack.c.b16 %v10858, %v10854
    %v11211 = vpack.c.b16 %v10859, %v10855
    %v11212 = vpack.c.b16 %v10864, %v10860
    %v11213 = vpack.c.b16 %v10865, %v10861
    %v11214 = vpack.c.b16 %v10866, %v10862
    %v11215 = vpack.c.b16 %v10867, %v10863
    %v11216 = vpack.c.b16 %v10872, %v10868
    %v11217 = vpack.c.b16 %v10873, %v10869
    %v11218 = vpack.c.b16 %v10874, %v10870
    %v11219 = vpack.c.b16 %v10875, %v10871
    %v11220 = vpack.c.b16 %v10880, %v10876
    %v11221 = vpack.c.b16 %v10881, %v10877
    %v11222 = vpack.c.b16 %v10882, %v10878
    %v11223 = vpack.c.b16 %v10883, %v10879
    %v11224 = vpack.c.b16 %v10888, %v10884
    %v11225 = vpack.c.b16 %v10889, %v10885
    %v11226 = vpack.c.b16 %v10890, %v10886
    %v11227 = vpack.c.b16 %v10891, %v10887
    %v11228 = vpack.c.b16 %v10896, %v10892
    %v11229 = vpack.c.b16 %v10897, %v10893
    %v11230 = vpack.c.b16 %v10898, %v10894
    %v11231 = vpack.c.b16 %v10899, %v10895
    %v11232 = vpack.c.b16 %v10904, %v10900
    %v11233 = vpack.c.b16 %v10905, %v10901
    %v11234 = vpack.c.b16 %v10906, %v10902
    %v11235 = vpack.c.b16 %v10907, %v10903
    %v11236 = vpack.c.b16 %v10912, %v10908
    %v11237 = vpack.c.b16 %v10913, %v10909
    %v11238 = vpack.c.b16 %v10914, %v10910
    %v11239 = vpack.c.b16 %v10915, %v10911
    %v11240 = vpack.c.b16 %v10920, %v10916
    %v11241 = vpack.c.b16 %v10921, %v10917
    %v11242 = vpack.c.b16 %v10922, %v10918
    %v11243 = vpack.c.b16 %v10923, %v10919
    %v11244 = vpack.c.b16 %v10928, %v10924
    %v11245 = vpack.c.b16 %v10929, %v10925
    %v11246 = vpack.c.b16 %v10930, %v10926
    %v11247 = vpack.c.b16 %v10931, %v10927
    %v11248 = vpack.c.b16 %v10936, %v10932
    %v11249 = vpack.c.b16 %v10937, %v10933
    %v11250 = vpack.c.b16 %v10938, %v10934
    %v11251 = vpack.c.b16 %v10939, %v10935
    %v11252 = vpack.c.b16 %v10944, %v10940
    %v11253 = vpack.c.b16 %v10945, %v10941
    %v11254 = vpack.c.b16 %v10946, %v10942
    %v11255 = vpack.c.b16 %v10947, %v10943
    %v11256 = vpack.c.b16 %v10952, %v10948
    %v11257 = vpack.c.b16 %v10953, %v10949
    %v11258 = vpack.c.b16 %v10954, %v10950
    %v11259 = vpack.c.b16 %v10955, %v10951
    %v11260 = vpack.c.b16 %v10960, %v10956
    %v11261 = vpack.c.b16 %v10961, %v10957
    %v11262 = vpack.c.b16 %v10962, %v10958
    %v11263 = vpack.c.b16 %v10963, %v10959
    %v11264 = vpack.c.b16 %v10968, %v10964
    %v11265 = vpack.c.b16 %v10969, %v10965
    %v11266 = vpack.c.b16 %v10970, %v10966
    %v11267 = vpack.c.b16 %v10971, %v10967
    %v11268 = vpack.c.b16 %v10976, %v10972
    %v11269 = vpack.c.b16 %v10977, %v10973
    %v11270 = vpack.c.b16 %v10978, %v10974
    %v11271 = vpack.c.b16 %v10979, %v10975
    %v11272 = vpack.c.b16 %v10984, %v10980
    %v11273 = vpack.c.b16 %v10985, %v10981
    %v11274 = vpack.c.b16 %v10986, %v10982
    %v11275 = vpack.c.b16 %v10987, %v10983
    %11564 = vmatprep.subr.bf16.mxu0 %v10989
    %11565 = vmatpush1.bf16.msra.mxu0 %v10988
    %11566 = vmatprep.subr.bf16.mxu0 %v10993
    %11567 = vmatpush1.bf16.msra.mxu0 %v10992
    %11568 = vmatprep.subr.bf16.mxu0 %v10997
    %11569 = vmatpush1.bf16.msra.mxu0 %v10996
    %11570 = vmatprep.subr.bf16.mxu0 %v11001
    %11571 = vmatpush1.bf16.msra.mxu0 %v11000
    %11572 = vmatprep.subr.bf16.mxu0 %v11005
    %11573 = vmatpush1.bf16.msra.mxu0 %v11004
    %11574 = vmatprep.subr.bf16.mxu0 %v11009
    %11575 = vmatpush1.bf16.msra.mxu0 %v11008
    %11576 = vmatprep.subr.bf16.mxu0 %v11013
    %11577 = vmatpush1.bf16.msra.mxu0 %v11012
    %11578 = vmatprep.subr.bf16.mxu0 %v11017
    %11579 = vmatpush1.bf16.msra.mxu0 %v11016
    %11580 = vmatprep.subr.bf16.mxu0 %v11021
    %11581 = vmatpush1.bf16.msra.mxu0 %v11020
    %11582 = vmatprep.subr.bf16.mxu0 %v11025
    %11583 = vmatpush1.bf16.msra.mxu0 %v11024
    %11584 = vmatprep.subr.bf16.mxu0 %v11029
    %11585 = vmatpush1.bf16.msra.mxu0 %v11028
    %11586 = vmatprep.subr.bf16.mxu0 %v11033
    %11587 = vmatpush1.bf16.msra.mxu0 %v11032
    %11588 = vmatprep.subr.bf16.mxu0 %v11037
    %11589 = vmatpush1.bf16.msra.mxu0 %v11036
    %11590 = vmatprep.subr.bf16.mxu0 %v11041
    %11591 = vmatpush1.bf16.msra.mxu0 %v11040
    %11592 = vmatprep.subr.bf16.mxu0 %v11045
    %11593 = vmatpush1.bf16.msra.mxu0 %v11044
    %11594 = vmatprep.subr.bf16.mxu0 %v11049
    %11595 = vmatpush1.bf16.msra.mxu0 %v11048
    %11596 = vmatprep.mubr.bf16.mxu0 %v9797
    %11597 = vmatmul.mubr.bf16.gmra.mrb[0].mxu0 %v9796
    %v11598 = vpop.f32.mrb[0].mxu0
    %v11599 = vadd.f32 %v10107, %v11598
    %v11600 = vpop.f32.mrb[0].mxu0
    %v11601 = vadd.f32 %v10111, %v11600
    %v11602 = vpop.f32.mrb[0].mxu0
    %v11603 = vadd.f32 %v10107, %v11602
    %v11604 = vpop.f32.mrb[0].mxu0
    %v11605 = vadd.f32 %v10111, %v11604
    %11606 = vmatprep.mubr.bf16.mxu0 %v9806
    %11607 = vmatmul.mubr.bf16.gmra.mrb[0].mxu0 %v9805
    %v11608 = vpop.f32.mrb[0].mxu0
    %v11609 = vadd.f32 %v10107, %v11608
    %v11610 = vpop.f32.mrb[0].mxu0
    %v11611 = vadd.f32 %v10111, %v11610
    %v11612 = vpop.f32.mrb[0].mxu0
    %v11613 = vadd.f32 %v10107, %v11612
    %v11614 = vpop.f32.mrb[0].mxu0
    %v11615 = vadd.f32 %v10111, %v11614
    %11616 = vdwg.mxu0
    %11617 = vmatprep.subr.bf16.mxu0 %v11053
    %11618 = vmatpush1.bf16.msra.mxu0 %v11052
    %11619 = vmatprep.subr.bf16.mxu0 %v11057
    %11620 = vmatpush1.bf16.msra.mxu0 %v11056
    %11621 = vmatprep.subr.bf16.mxu0 %v11061
    %11622 = vmatpush1.bf16.msra.mxu0 %v11060
    %11623 = vmatprep.subr.bf16.mxu0 %v11065
    %11624 = vmatpush1.bf16.msra.mxu0 %v11064
    %11625 = vmatprep.subr.bf16.mxu0 %v11069
    %11626 = vmatpush1.bf16.msra.mxu0 %v11068
    %11627 = vmatprep.subr.bf16.mxu0 %v11073
    %11628 = vmatpush1.bf16.msra.mxu0 %v11072
    %11629 = vmatprep.subr.bf16.mxu0 %v11077
    %11630 = vmatpush1.bf16.msra.mxu0 %v11076
    %11631 = vmatprep.subr.bf16.mxu0 %v11081
    %11632 = vmatpush1.bf16.msra.mxu0 %v11080
    %11633 = vmatprep.subr.bf16.mxu0 %v11085
    %11634 = vmatpush1.bf16.msra.mxu0 %v11084
    %11635 = vmatprep.subr.bf16.mxu0 %v11089
    %11636 = vmatpush1.bf16.msra.mxu0 %v11088
    %11637 = vmatprep.subr.bf16.mxu0 %v11093
    %11638 = vmatpush1.bf16.msra.mxu0 %v11092
    %11639 = vmatprep.subr.bf16.mxu0 %v11097
    %11640 = vmatpush1.bf16.msra.mxu0 %v11096
    %11641 = vmatprep.subr.bf16.mxu0 %v11101
    %11642 = vmatpush1.bf16.msra.mxu0 %v11100
    %11643 = vmatprep.subr.bf16.mxu0 %v11105
    %11644 = vmatpush1.bf16.msra.mxu0 %v11104
    %11645 = vmatprep.subr.bf16.mxu0 %v11109
    %11646 = vmatpush1.bf16.msra.mxu0 %v11108
    %11647 = vmatprep.subr.bf16.mxu0 %v11113
    %11648 = vmatpush1.bf16.msra.mxu0 %v11112
    %11649 = vmatprep.mubr.bf16.mxu0 %v9799
    %11650 = vmatmul.mubr.bf16.gmra.mrb[0].mxu0 %v9798
    %v11651 = vpop.f32.mrb[0].mxu0
    %v11652 = vadd.f32 %v11599, %v11651
    %v11653 = vpop.f32.mrb[0].mxu0
    %v11654 = vadd.f32 %v11601, %v11653
    %v11655 = vpop.f32.mrb[0].mxu0
    %v11656 = vadd.f32 %v11603, %v11655
    %v11657 = vpop.f32.mrb[0].mxu0
    %v11658 = vadd.f32 %v11605, %v11657
    %11659 = vmatprep.mubr.bf16.mxu0 %v9808
    %11660 = vmatmul.mubr.bf16.gmra.mrb[0].mxu0 %v9807
    %v11661 = vpop.f32.mrb[0].mxu0
    %v11662 = vadd.f32 %v11609, %v11661
    %v11663 = vpop.f32.mrb[0].mxu0
    %v11664 = vadd.f32 %v11611, %v11663
    %v11665 = vpop.f32.mrb[0].mxu0
    %v11666 = vadd.f32 %v11613, %v11665
    %v11667 = vpop.f32.mrb[0].mxu0
    %v11668 = vadd.f32 %v11615, %v11667
    %11669 = vdwg.mxu0
    %11670 = vmatprep.subr.bf16.mxu0 %v11117
    %11671 = vmatpush1.bf16.msra.mxu0 %v11116
    %11672 = vmatprep.subr.bf16.mxu0 %v11121
    %11673 = vmatpush1.bf16.msra.mxu0 %v11120
    %11674 = vmatprep.subr.bf16.mxu0 %v11125
    %11675 = vmatpush1.bf16.msra.mxu0 %v11124
    %11676 = vmatprep.subr.bf16.mxu0 %v11129
    %11677 = vmatpush1.bf16.msra.mxu0 %v11128
    %11678 = vmatprep.subr.bf16.mxu0 %v11133
    %11679 = vmatpush1.bf16.msra.mxu0 %v11132
    %11680 = vmatprep.subr.bf16.mxu0 %v11137
    %11681 = vmatpush1.bf16.msra.mxu0 %v11136
    %11682 = vmatprep.subr.bf16.mxu0 %v11141
    %11683 = vmatpush1.bf16.msra.mxu0 %v11140
    %11684 = vmatprep.subr.bf16.mxu0 %v11145
    %11685 = vmatpush1.bf16.msra.mxu0 %v11144
    %11686 = vmatprep.subr.bf16.mxu0 %v11149
    %11687 = vmatpush1.bf16.msra.mxu0 %v11148
    %11688 = vmatprep.subr.bf16.mxu0 %v11153
    %11689 = vmatpush1.bf16.msra.mxu0 %v11152
    %11690 = vmatprep.subr.bf16.mxu0 %v11157
    %11691 = vmatpush1.bf16.msra.mxu0 %v11156
    %11692 = vmatprep.subr.bf16.mxu0 %v11161
    %11693 = vmatpush1.bf16.msra.mxu0 %v11160
    %11694 = vmatprep.subr.bf16.mxu0 %v11165
    %11695 = vmatpush1.bf16.msra.mxu0 %v11164
    %11696 = vmatprep.subr.bf16.mxu0 %v11169
    %11697 = vmatpush1.bf16.msra.mxu0 %v11168
    %11698 = vmatprep.subr.bf16.mxu0 %v11173
    %11699 = vmatpush1.bf16.msra.mxu0 %v11172
    %11700 = vmatprep.subr.bf16.mxu0 %v11177
    %11701 = vmatpush1.bf16.msra.mxu0 %v11176
    %11702 = vmatprep.mubr.bf16.mxu0 %v9801
    %11703 = vmatmul.mubr.bf16.gmra.mrb[0].mxu0 %v9800
    %v11704 = vpop.f32.mrb[0].mxu0
    %v11705 = vadd.f32 %v11652, %v11704
    %v11706 = vpop.f32.mrb[0].mxu0
    %v11707 = vadd.f32 %v11654, %v11706
    %v11708 = vpop.f32.mrb[0].mxu0
    %v11709 = vadd.f32 %v11656, %v11708
    %v11710 = vpop.f32.mrb[0].mxu0
    %v11711 = vadd.f32 %v11658, %v11710
    %11712 = vmatprep.mubr.bf16.mxu0 %v9810
    %11713 = vmatmul.mubr.bf16.gmra.mrb[0].mxu0 %v9809
    %v11714 = vpop.f32.mrb[0].mxu0
    %v11715 = vadd.f32 %v11662, %v11714
    %v11716 = vpop.f32.mrb[0].mxu0
    %v11717 = vadd.f32 %v11664, %v11716
    %v11718 = vpop.f32.mrb[0].mxu0
    %v11719 = vadd.f32 %v11666, %v11718
    %v11720 = vpop.f32.mrb[0].mxu0
    %v11721 = vadd.f32 %v11668, %v11720
    %11722 = vdwg.mxu0
    %11723 = vmatprep.subr.bf16.mxu0 %v11181
    %11724 = vmatpush1.bf16.msra.mxu0 %v11180
    %11725 = vmatprep.subr.bf16.mxu0 %v11185
    %11726 = vmatpush1.bf16.msra.mxu0 %v11184
    %11727 = vmatprep.subr.bf16.mxu0 %v11189
    %11728 = vmatpush1.bf16.msra.mxu0 %v11188
    %11729 = vmatprep.subr.bf16.mxu0 %v11193
    %11730 = vmatpush1.bf16.msra.mxu0 %v11192
    %11731 = vmatprep.subr.bf16.mxu0 %v11197
    %11732 = vmatpush1.bf16.msra.mxu0 %v11196
    %11733 = vmatprep.subr.bf16.mxu0 %v11201
    %11734 = vmatpush1.bf16.msra.mxu0 %v11200
    %11735 = vmatprep.subr.bf16.mxu0 %v11205
    %11736 = vmatpush1.bf16.msra.mxu0 %v11204
    %11737 = vmatprep.subr.bf16.mxu0 %v11209
    %11738 = vmatpush1.bf16.msra.mxu0 %v11208
    %11739 = vmatprep.subr.bf16.mxu0 %v11213
    %11740 = vmatpush1.bf16.msra.mxu0 %v11212
    %11741 = vmatprep.subr.bf16.mxu0 %v11217
    %11742 = vmatpush1.bf16.msra.mxu0 %v11216
    %11743 = vmatprep.subr.bf16.mxu0 %v11221
    %11744 = vmatpush1.bf16.msra.mxu0 %v11220
    %11745 = vmatprep.subr.bf16.mxu0 %v11225
    %11746 = vmatpush1.bf16.msra.mxu0 %v11224
    %11747 = vmatprep.subr.bf16.mxu0 %v11229
    %11748 = vmatpush1.bf16.msra.mxu0 %v11228
    %11749 = vmatprep.subr.bf16.mxu0 %v11233
    %11750 = vmatpush1.bf16.msra.mxu0 %v11232
    %11751 = vmatprep.subr.bf16.mxu0 %v11237
    %11752 = vmatpush1.bf16.msra.mxu0 %v11236
    %11753 = vmatprep.subr.bf16.mxu0 %v11241
    %11754 = vmatpush1.bf16.msra.mxu0 %v11240
    %11755 = vmatprep.mubr.bf16.mxu0 %v9803
    %11756 = vmatmul.mubr.bf16.gmra.mrb[0].mxu0 %v9802
    %v11757 = vpop.f32.mrb[0].mxu0
    %v11758 = vadd.f32 %v11705, %v11757
    %v11759 = vpop.f32.mrb[0].mxu0
    %v11760 = vadd.f32 %v11707, %v11759
    %v11761 = vpop.f32.mrb[0].mxu0
    %v11762 = vadd.f32 %v11709, %v11761
    %v11763 = vpop.f32.mrb[0].mxu0
    %v11764 = vadd.f32 %v11711, %v11763
    %11765 = vmatprep.mubr.bf16.mxu0 %v9812
    %11766 = vmatmul.mubr.bf16.gmra.mrb[0].mxu0 %v9811
    %v11767 = vpop.f32.mrb[0].mxu0
    %v11768 = vadd.f32 %v11715, %v11767
    %v11769 = vpop.f32.mrb[0].mxu0
    %v11770 = vadd.f32 %v11717, %v11769
    %v11771 = vpop.f32.mrb[0].mxu0
    %v11772 = vadd.f32 %v11719, %v11771
    %v11773 = vpop.f32.mrb[0].mxu0
    %v11774 = vadd.f32 %v11721, %v11773
    %11775 = vdwg.mxu0
    %11776 = vmatprep.subr.bf16.mxu0 %v11245
    %11777 = vmatpush1.bf16.msra.mxu0 %v11244
    %11778 = vmatprep.subr.bf16.mxu0 %v11249
    %11779 = vmatpush1.bf16.msra.mxu0 %v11248
    %11780 = vmatprep.subr.bf16.mxu0 %v11253
    %11781 = vmatpush1.bf16.msra.mxu0 %v11252
    %11782 = vmatprep.subr.bf16.mxu0 %v11257
    %11783 = vmatpush1.bf16.msra.mxu0 %v11256
    %11784 = vmatprep.subr.bf16.mxu0 %v11261
    %11785 = vmatpush1.bf16.msra.mxu0 %v11260
    %11786 = vmatprep.subr.bf16.mxu0 %v11265
    %11787 = vmatpush1.bf16.msra.mxu0 %v11264
    %11788 = vmatprep.subr.bf16.mxu0 %v11269
    %11789 = vmatpush1.bf16.msra.mxu0 %v11268
    %11790 = vmatprep.subr.bf16.mxu0 %v11273
    %11791 = vmatpush1.bf16.msra.mxu0 %v11272
    %11792 = vmatprep.subr.bf16.mxu0 0
    %11793 = vmatpush1.bf16.msra.mxu0 0
    %11794 = vmatprep.subr.bf16.mxu0 0
    %11795 = vmatpush1.bf16.msra.mxu0 0
    %11796 = vmatprep.subr.bf16.mxu0 0
    %11797 = vmatpush1.bf16.msra.mxu0 0
    %11798 = vmatprep.subr.bf16.mxu0 0
    %11799 = vmatpush1.bf16.msra.mxu0 0
    %11800 = vmatprep.subr.bf16.mxu0 0
    %11801 = vmatpush1.bf16.msra.mxu0 0
    %11802 = vmatprep.subr.bf16.mxu0 0
    %11803 = vmatpush1.bf16.msra.mxu0 0
    %11804 = vmatprep.subr.bf16.mxu0 0
    %11805 = vmatpush1.bf16.msra.mxu0 0
    %11806 = vmatprep.subr.bf16.mxu0 0
    %11807 = vmatpush1.bf16.msra.mxu0 0
    %11808 = vmatprep.mubr.bf16.mxu0 0
    %11809 = vmatmul.mubr.bf16.gmra.mrb[0].mxu0 %v9804
    %v11810 = vpop.f32.mrb[0].mxu0
    %v11811 = vadd.f32 %v11758, %v11810
    %v11812 = vpop.f32.mrb[0].mxu0
    %v11813 = vadd.f32 %v11760, %v11812
    %v11814 = vpop.f32.mrb[0].mxu0
    %v11815 = vadd.f32 %v11762, %v11814
    %v11816 = vpop.f32.mrb[0].mxu0
    %v11817 = vadd.f32 %v11764, %v11816
    %11818 = vmatprep.mubr.bf16.mxu0 0
    %11819 = vmatmul.mubr.bf16.gmra.mrb[0].mxu0 %v9813
    %v11820 = vpop.f32.mrb[0].mxu0
    %v11821 = vadd.f32 %v11768, %v11820
    %v11822 = vpop.f32.mrb[0].mxu0
    %v11823 = vadd.f32 %v11770, %v11822
    %v11824 = vpop.f32.mrb[0].mxu0
    %v11825 = vadd.f32 %v11772, %v11824
    %v11826 = vpop.f32.mrb[0].mxu0
    %v11827 = vadd.f32 %v11774, %v11826
    %11828 = vdwg.mxu0
    %11829 = vmatprep.subr.bf16.mxu0 %v10991
    %11830 = vmatpush1.bf16.msra.mxu0 %v10990
    %11831 = vmatprep.subr.bf16.mxu0 %v10995
    %11832 = vmatpush1.bf16.msra.mxu0 %v10994
    %11833 = vmatprep.subr.bf16.mxu0 %v10999
    %11834 = vmatpush1.bf16.msra.mxu0 %v10998
    %11835 = vmatprep.subr.bf16.mxu0 %v11003
    %11836 = vmatpush1.bf16.msra.mxu0 %v11002
    %11837 = vmatprep.subr.bf16.mxu0 %v11007
    %11838 = vmatpush1.bf16.msra.mxu0 %v11006
    %11839 = vmatprep.subr.bf16.mxu0 %v11011
    %11840 = vmatpush1.bf16.msra.mxu0 %v11010
    %11841 = vmatprep.subr.bf16.mxu0 %v11015
    %11842 = vmatpush1.bf16.msra.mxu0 %v11014
    %11843 = vmatprep.subr.bf16.mxu0 %v11019
    %11844 = vmatpush1.bf16.msra.mxu0 %v11018
    %11845 = vmatprep.subr.bf16.mxu0 %v11023
    %11846 = vmatpush1.bf16.msra.mxu0 %v11022
    %11847 = vmatprep.subr.bf16.mxu0 %v11027
    %11848 = vmatpush1.bf16.msra.mxu0 %v11026
    %11849 = vmatprep.subr.bf16.mxu0 %v11031
    %11850 = vmatpush1.bf16.msra.mxu0 %v11030
    %11851 = vmatprep.subr.bf16.mxu0 %v11035
    %11852 = vmatpush1.bf16.msra.mxu0 %v11034
    %11853 = vmatprep.subr.bf16.mxu0 %v11039
    %11854 = vmatpush1.bf16.msra.mxu0 %v11038
    %11855 = vmatprep.subr.bf16.mxu0 %v11043
    %11856 = vmatpush1.bf16.msra.mxu0 %v11042
    %11857 = vmatprep.subr.bf16.mxu0 %v11047
    %11858 = vmatpush1.bf16.msra.mxu0 %v11046
    %11859 = vmatprep.subr.bf16.mxu0 %v11051
    %11860 = vmatpush1.bf16.msra.mxu0 %v11050
    %11861 = vmatprep.mubr.bf16.mxu0 %v9797
    %11862 = vmatmul.mubr.bf16.gmra.mrb[0].mxu0 %v9796
    %v11863 = vpop.f32.mrb[0].mxu0
    %v11864 = vadd.f32 %v10115, %v11863
    %v11865 = vpop.f32.mrb[0].mxu0
    %v11866 = vadd.f32 %v10119, %v11865
    %v11867 = vpop.f32.mrb[0].mxu0
    %v11868 = vadd.f32 %v10115, %v11867
    %v11869 = vpop.f32.mrb[0].mxu0
    %v11870 = vadd.f32 %v10119, %v11869
    %11871 = vmatprep.mubr.bf16.mxu0 %v9806
    %11872 = vmatmul.mubr.bf16.gmra.mrb[0].mxu0 %v9805
    %v11873 = vpop.f32.mrb[0].mxu0
    %v11874 = vadd.f32 %v10115, %v11873
    %v11875 = vpop.f32.mrb[0].mxu0
    %v11876 = vadd.f32 %v10119, %v11875
    %v11877 = vpop.f32.mrb[0].mxu0
    %v11878 = vadd.f32 %v10115, %v11877
    %v11879 = vpop.f32.mrb[0].mxu0
    %v11880 = vadd.f32 %v10119, %v11879
    %11881 = vdwg.mxu0
    %11882 = vmatprep.subr.bf16.mxu0 %v11055
    %11883 = vmatpush1.bf16.msra.mxu0 %v11054
    %11884 = vmatprep.subr.bf16.mxu0 %v11059
    %11885 = vmatpush1.bf16.msra.mxu0 %v11058
    %11886 = vmatprep.subr.bf16.mxu0 %v11063
    %11887 = vmatpush1.bf16.msra.mxu0 %v11062
    %11888 = vmatprep.subr.bf16.mxu0 %v11067
    %11889 = vmatpush1.bf16.msra.mxu0 %v11066
    %11890 = vmatprep.subr.bf16.mxu0 %v11071
    %11891 = vmatpush1.bf16.msra.mxu0 %v11070
    %11892 = vmatprep.subr.bf16.mxu0 %v11075
    %11893 = vmatpush1.bf16.msra.mxu0 %v11074
    %11894 = vmatprep.subr.bf16.mxu0 %v11079
    %11895 = vmatpush1.bf16.msra.mxu0 %v11078
    %11896 = vmatprep.subr.bf16.mxu0 %v11083
    %11897 = vmatpush1.bf16.msra.mxu0 %v11082
    %11898 = vmatprep.subr.bf16.mxu0 %v11087
    %11899 = vmatpush1.bf16.msra.mxu0 %v11086
    %11900 = vmatprep.subr.bf16.mxu0 %v11091
    %11901 = vmatpush1.bf16.msra.mxu0 %v11090
    %11902 = vmatprep.subr.bf16.mxu0 %v11095
    %11903 = vmatpush1.bf16.msra.mxu0 %v11094
    %11904 = vmatprep.subr.bf16.mxu0 %v11099
    %11905 = vmatpush1.bf16.msra.mxu0 %v11098
    %11906 = vmatprep.subr.bf16.mxu0 %v11103
    %11907 = vmatpush1.bf16.msra.mxu0 %v11102
    %11908 = vmatprep.subr.bf16.mxu0 %v11107
    %11909 = vmatpush1.bf16.msra.mxu0 %v11106
    %11910 = vmatprep.subr.bf16.mxu0 %v11111
    %11911 = vmatpush1.bf16.msra.mxu0 %v11110
    %11912 = vmatprep.subr.bf16.mxu0 %v11115
    %11913 = vmatpush1.bf16.msra.mxu0 %v11114
    %11914 = vmatprep.mubr.bf16.mxu0 %v9799
    %11915 = vmatmul.mubr.bf16.gmra.mrb[0].mxu0 %v9798
    %v11916 = vpop.f32.mrb[0].mxu0
    %v11917 = vadd.f32 %v11864, %v11916
    %v11918 = vpop.f32.mrb[0].mxu0
    %v11919 = vadd.f32 %v11866, %v11918
    %v11920 = vpop.f32.mrb[0].mxu0
    %v11921 = vadd.f32 %v11868, %v11920
    %v11922 = vpop.f32.mrb[0].mxu0
    %v11923 = vadd.f32 %v11870, %v11922
    %11924 = vmatprep.mubr.bf16.mxu0 %v9808
    %11925 = vmatmul.mubr.bf16.gmra.mrb[0].mxu0 %v9807
    %v11926 = vpop.f32.mrb[0].mxu0
    %v11927 = vadd.f32 %v11874, %v11926
    %v11928 = vpop.f32.mrb[0].mxu0
    %v11929 = vadd.f32 %v11876, %v11928
    %v11930 = vpop.f32.mrb[0].mxu0
    %v11931 = vadd.f32 %v11878, %v11930
    %v11932 = vpop.f32.mrb[0].mxu0
    %v11933 = vadd.f32 %v11880, %v11932
    %11934 = vdwg.mxu0
    %11935 = vmatprep.subr.bf16.mxu0 %v11119
    %11936 = vmatpush1.bf16.msra.mxu0 %v11118
    %11937 = vmatprep.subr.bf16.mxu0 %v11123
    %11938 = vmatpush1.bf16.msra.mxu0 %v11122
    %11939 = vmatprep.subr.bf16.mxu0 %v11127
    %11940 = vmatpush1.bf16.msra.mxu0 %v11126
    %11941 = vmatprep.subr.bf16.mxu0 %v11131
    %11942 = vmatpush1.bf16.msra.mxu0 %v11130
    %11943 = vmatprep.subr.bf16.mxu0 %v11135
    %11944 = vmatpush1.bf16.msra.mxu0 %v11134
    %11945 = vmatprep.subr.bf16.mxu0 %v11139
    %11946 = vmatpush1.bf16.msra.mxu0 %v11138
    %11947 = vmatprep.subr.bf16.mxu0 %v11143
    %11948 = vmatpush1.bf16.msra.mxu0 %v11142
    %11949 = vmatprep.subr.bf16.mxu0 %v11147
    %11950 = vmatpush1.bf16.msra.mxu0 %v11146
    %11951 = vmatprep.subr.bf16.mxu0 %v11151
    %11952 = vmatpush1.bf16.msra.mxu0 %v11150
    %11953 = vmatprep.subr.bf16.mxu0 %v11155
    %11954 = vmatpush1.bf16.msra.mxu0 %v11154
    %11955 = vmatprep.subr.bf16.mxu0 %v11159
    %11956 = vmatpush1.bf16.msra.mxu0 %v11158
    %11957 = vmatprep.subr.bf16.mxu0 %v11163
    %11958 = vmatpush1.bf16.msra.mxu0 %v11162
    %11959 = vmatprep.subr.bf16.mxu0 %v11167
    %11960 = vmatpush1.bf16.msra.mxu0 %v11166
    %11961 = vmatprep.subr.bf16.mxu0 %v11171
    %11962 = vmatpush1.bf16.msra.mxu0 %v11170
    %11963 = vmatprep.subr.bf16.mxu0 %v11175
    %11964 = vmatpush1.bf16.msra.mxu0 %v11174
    %11965 = vmatprep.subr.bf16.mxu0 %v11179
    %11966 = vmatpush1.bf16.msra.mxu0 %v11178
    %11967 = vmatprep.mubr.bf16.mxu0 %v9801
    %11968 = vmatmul.mubr.bf16.gmra.mrb[0].mxu0 %v9800
    %v11969 = vpop.f32.mrb[0].mxu0
    %v11970 = vadd.f32 %v11917, %v11969
    %v11971 = vpop.f32.mrb[0].mxu0
    %v11972 = vadd.f32 %v11919, %v11971
    %v11973 = vpop.f32.mrb[0].mxu0
    %v11974 = vadd.f32 %v11921, %v11973
    %v11975 = vpop.f32.mrb[0].mxu0
    %v11976 = vadd.f32 %v11923, %v11975
    %11977 = vmatprep.mubr.bf16.mxu0 %v9810
    %11978 = vmatmul.mubr.bf16.gmra.mrb[0].mxu0 %v9809
    %v11979 = vpop.f32.mrb[0].mxu0
    %v11980 = vadd.f32 %v11927, %v11979
    %v11981 = vpop.f32.mrb[0].mxu0
    %v11982 = vadd.f32 %v11929, %v11981
    %v11983 = vpop.f32.mrb[0].mxu0
    %v11984 = vadd.f32 %v11931, %v11983
    %v11985 = vpop.f32.mrb[0].mxu0
    %v11986 = vadd.f32 %v11933, %v11985
    %11987 = vdwg.mxu0
    %11988 = vmatprep.subr.bf16.mxu0 %v11183
    %11989 = vmatpush1.bf16.msra.mxu0 %v11182
    %11990 = vmatprep.subr.bf16.mxu0 %v11187
    %11991 = vmatpush1.bf16.msra.mxu0 %v11186
    %11992 = vmatprep.subr.bf16.mxu0 %v11191
    %11993 = vmatpush1.bf16.msra.mxu0 %v11190
    %11994 = vmatprep.subr.bf16.mxu0 %v11195
    %11995 = vmatpush1.bf16.msra.mxu0 %v11194
    %11996 = vmatprep.subr.bf16.mxu0 %v11199
    %11997 = vmatpush1.bf16.msra.mxu0 %v11198
    %11998 = vmatprep.subr.bf16.mxu0 %v11203
    %11999 = vmatpush1.bf16.msra.mxu0 %v11202
    %12000 = vmatprep.subr.bf16.mxu0 %v11207
    %12001 = vmatpush1.bf16.msra.mxu0 %v11206
    %12002 = vmatprep.subr.bf16.mxu0 %v11211
    %12003 = vmatpush1.bf16.msra.mxu0 %v11210
    %12004 = vmatprep.subr.bf16.mxu0 %v11215
    %12005 = vmatpush1.bf16.msra.mxu0 %v11214
    %12006 = vmatprep.subr.bf16.mxu0 %v11219
    %12007 = vmatpush1.bf16.msra.mxu0 %v11218
    %12008 = vmatprep.subr.bf16.mxu0 %v11223
    %12009 = vmatpush1.bf16.msra.mxu0 %v11222
    %12010 = vmatprep.subr.bf16.mxu0 %v11227
    %12011 = vmatpush1.bf16.msra.mxu0 %v11226
    %12012 = vmatprep.subr.bf16.mxu0 %v11231
    %12013 = vmatpush1.bf16.msra.mxu0 %v11230
    %12014 = vmatprep.subr.bf16.mxu0 %v11235
    %12015 = vmatpush1.bf16.msra.mxu0 %v11234
    %12016 = vmatprep.subr.bf16.mxu0 %v11239
    %12017 = vmatpush1.bf16.msra.mxu0 %v11238
    %12018 = vmatprep.subr.bf16.mxu0 %v11243
    %12019 = vmatpush1.bf16.msra.mxu0 %v11242
    %12020 = vmatprep.mubr.bf16.mxu0 %v9803
    %12021 = vmatmul.mubr.bf16.gmra.mrb[0].mxu0 %v9802
    %v12022 = vpop.f32.mrb[0].mxu0
    %v12023 = vadd.f32 %v11970, %v12022
    %v12024 = vpop.f32.mrb[0].mxu0
    %v12025 = vadd.f32 %v11972, %v12024
    %v12026 = vpop.f32.mrb[0].mxu0
    %v12027 = vadd.f32 %v11974, %v12026
    %v12028 = vpop.f32.mrb[0].mxu0
    %v12029 = vadd.f32 %v11976, %v12028
    %12030 = vmatprep.mubr.bf16.mxu0 %v9812
    %12031 = vmatmul.mubr.bf16.gmra.mrb[0].mxu0 %v9811
    %v12032 = vpop.f32.mrb[0].mxu0
    %v12033 = vadd.f32 %v11980, %v12032
    %v12034 = vpop.f32.mrb[0].mxu0
    %v12035 = vadd.f32 %v11982, %v12034
    %v12036 = vpop.f32.mrb[0].mxu0
    %v12037 = vadd.f32 %v11984, %v12036
    %v12038 = vpop.f32.mrb[0].mxu0
    %v12039 = vadd.f32 %v11986, %v12038
    %12040 = vdwg.mxu0
    %12041 = vmatprep.subr.bf16.mxu0 %v11247
    %12042 = vmatpush1.bf16.msra.mxu0 %v11246
    %12043 = vmatprep.subr.bf16.mxu0 %v11251
    %12044 = vmatpush1.bf16.msra.mxu0 %v11250
    %12045 = vmatprep.subr.bf16.mxu0 %v11255
    %12046 = vmatpush1.bf16.msra.mxu0 %v11254
    %12047 = vmatprep.subr.bf16.mxu0 %v11259
    %12048 = vmatpush1.bf16.msra.mxu0 %v11258
    %12049 = vmatprep.subr.bf16.mxu0 %v11263
    %12050 = vmatpush1.bf16.msra.mxu0 %v11262
    %12051 = vmatprep.subr.bf16.mxu0 %v11267
    %12052 = vmatpush1.bf16.msra.mxu0 %v11266
    %12053 = vmatprep.subr.bf16.mxu0 %v11271
    %12054 = vmatpush1.bf16.msra.mxu0 %v11270
    %12055 = vmatprep.subr.bf16.mxu0 %v11275
    %12056 = vmatpush1.bf16.msra.mxu0 %v11274
    %12057 = vmatprep.subr.bf16.mxu0 0
    %12058 = vmatpush1.bf16.msra.mxu0 0
    %12059 = vmatprep.subr.bf16.mxu0 0
    %12060 = vmatpush1.bf16.msra.mxu0 0
    %12061 = vmatprep.subr.bf16.mxu0 0
    %12062 = vmatpush1.bf16.msra.mxu0 0
    %12063 = vmatprep.subr.bf16.mxu0 0
    %12064 = vmatpush1.bf16.msra.mxu0 0
    %12065 = vmatprep.subr.bf16.mxu0 0
    %12066 = vmatpush1.bf16.msra.mxu0 0
    %12067 = vmatprep.subr.bf16.mxu0 0
    %12068 = vmatpush1.bf16.msra.mxu0 0
    %12069 = vmatprep.subr.bf16.mxu0 0
    %12070 = vmatpush1.bf16.msra.mxu0 0
    %12071 = vmatprep.subr.bf16.mxu0 0
    %12072 = vmatpush1.bf16.msra.mxu0 0
    %12073 = vmatprep.mubr.bf16.mxu0 0
    %12074 = vmatmul.mubr.bf16.gmra.mrb[0].mxu0 %v9804
    %v12075 = vpop.f32.mrb[0].mxu0
    %v12076 = vadd.f32 %v12023, %v12075
    %v12077 = vpop.f32.mrb[0].mxu0
    %v12078 = vadd.f32 %v12025, %v12077
    %v12079 = vpop.f32.mrb[0].mxu0
    %v12080 = vadd.f32 %v12027, %v12079
    %v12081 = vpop.f32.mrb[0].mxu0
    %v12082 = vadd.f32 %v12029, %v12081
    %12083 = vmatprep.mubr.bf16.mxu0 0
    %12084 = vmatmul.mubr.bf16.gmra.mrb[0].mxu0 %v9813
    %v12085 = vpop.f32.mrb[0].mxu0
    %v12086 = vadd.f32 %v12033, %v12085
    %v12087 = vpop.f32.mrb[0].mxu0
    %v12088 = vadd.f32 %v12035, %v12087
    %v12089 = vpop.f32.mrb[0].mxu0
    %v12090 = vadd.f32 %v12037, %v12089
    %v12091 = vpop.f32.mrb[0].mxu0
    %v12092 = vadd.f32 %v12039, %v12091
    %12093 = vdwg.mxu0
    %vm12094 = vcmp.gt.f32.partialorder %v11811, 0.0
    %vm12095 = vcmp.gt.f32.partialorder %v11813, 0.0
    %vm12096 = vcmp.gt.f32.partialorder %v12076, 0.0
    %vm12097 = vcmp.gt.f32.partialorder %v12078, 0.0
    %vm12098 = vcmp.gt.f32.partialorder %v11815, 0.0
    %vm12099 = vcmp.gt.f32.partialorder %v11817, 0.0
    %vm12100 = vcmp.gt.f32.partialorder %v12080, 0.0
    %vm12101 = vcmp.gt.f32.partialorder %v12082, 0.0
    %vm12102 = vcmp.gt.f32.partialorder %v11821, 0.0
    %vm12103 = vcmp.gt.f32.partialorder %v11823, 0.0
    %vm12104 = vcmp.gt.f32.partialorder %v12086, 0.0
    %vm12105 = vcmp.gt.f32.partialorder %v12088, 0.0
    %vm12106 = vcmp.gt.f32.partialorder %v11825, 0.0
    %vm12107 = vcmp.gt.f32.partialorder %v11827, 0.0
    %vm12108 = vcmp.gt.f32.partialorder %v12090, 0.0
    %vm12109 = vcmp.gt.f32.partialorder %v12092, 0.0
    %v12110 = vmul.f32 %v11811, 0.1
    %v12111 = vmul.f32 %v11813, 0.1
    %v12112 = vmul.f32 %v12076, 0.1
    %v12113 = vmul.f32 %v12078, 0.1
    %v12114 = vmul.f32 %v11815, 0.1
    %v12115 = vmul.f32 %v11817, 0.1
    %v12116 = vmul.f32 %v12080, 0.1
    %v12117 = vmul.f32 %v12082, 0.1
    %v12118 = vmul.f32 %v11821, 0.1
    %v12119 = vmul.f32 %v11823, 0.1
    %v12120 = vmul.f32 %v12086, 0.1
    %v12121 = vmul.f32 %v12088, 0.1
    %v12122 = vmul.f32 %v11825, 0.1
    %v12123 = vmul.f32 %v11827, 0.1
    %v12124 = vmul.f32 %v12090, 0.1
    %v12125 = vmul.f32 %v12092, 0.1
    %v12126 = vsel %vm12094, %v11811, %v12110
    %v12127 = vsel %vm12095, %v11813, %v12111
    %v12128 = vsel %vm12096, %v12076, %v12112
    %v12129 = vsel %vm12097, %v12078, %v12113
    %v12130 = vsel %vm12098, %v11815, %v12114
    %v12131 = vsel %vm12099, %v11817, %v12115
    %v12132 = vsel %vm12100, %v12080, %v12116
    %v12133 = vsel %vm12101, %v12082, %v12117
    %v12134 = vsel %vm12102, %v11821, %v12118
    %v12135 = vsel %vm12103, %v11823, %v12119
    %v12136 = vsel %vm12104, %v12086, %v12120
    %v12137 = vsel %vm12105, %v12088, %v12121
    %v12138 = vsel %vm12106, %v11825, %v12122
    %v12139 = vsel %vm12107, %v11827, %v12123
    %v12140 = vsel %vm12108, %v12090, %v12124
    %v12141 = vsel %vm12109, %v12092, %v12125
    %v12142 = vpack.c.bf16 %v12130, %v12126
    %v12143 = vpack.c.bf16 %v12131, %v12127
    %v12144 = vpack.c.bf16 %v12132, %v12128
    %v12145 = vpack.c.bf16 %v12133, %v12129
    %v12146 = vpack.c.bf16 %v12138, %v12134
    %v12147 = vpack.c.bf16 %v12139, %v12135
    %v12148 = vpack.c.bf16 %v12140, %v12136
    %v12149 = vpack.c.bf16 %v12141, %v12137
    %v12150 = vld [vmem:[%s5] sm:$0xf]
    %v12151 = vld [vmem:[%s5 + $0x4] sm:$0xf]
    %v12152 = vld [vmem:[%s5 + $0x8] sm:$0xf]
    %v12153 = vld [vmem:[%s5 + $0xc] sm:$0xf]
    %v12154 = vld [vmem:[%s5 + $0x10] sm:$0xf]
    %v12155 = vld [vmem:[%s5 + $0x14] sm:$0xf]
    %v12156 = vld [vmem:[%s5 + $0x18] sm:$0xf]
    %v12157 = vld [vmem:[%s5 + $0x1c] sm:$0xf]
    %v12158 = vld [vmem:[%s5 + $0x20] sm:$0xf]
    %v12159 = vld [vmem:[%s5 + $0x24] sm:$0xf]
    %v12160 = vld [vmem:[%s5 + $0x28] sm:$0xf]
    %v12161 = vld [vmem:[%s5 + $0x2c] sm:$0xf]
    %v12162 = vld [vmem:[%s5 + $0x30] sm:$0xf]
    %v12163 = vld [vmem:[%s5 + $0x34] sm:$0xf]
    %v12164 = vld [vmem:[%s5 + $0x38] sm:$0xf]
    %v12165 = vld [vmem:[%s5 + $0x3c] sm:$0xf]
    %v12166 = vld [vmem:[%s5 + $0x40] sm:$0xf]
    %v12167 = vld [vmem:[%s5 + $0x44] sm:$0xf]
    %v12168 = vld [vmem:[%s5 + $0x48] sm:$0xf]
    %v12169 = vld [vmem:[%s5 + $0x4c] sm:$0xf]
    %v12170 = vld [vmem:[%s5 + $0x50] sm:$0xf]
    %v12171 = vld [vmem:[%s5 + $0x54] sm:$0xf]
    %v12172 = vld [vmem:[%s5 + $0x58] sm:$0xf]
    %v12173 = vld [vmem:[%s5 + $0x5c] sm:$0xf]
    %v12174 = vld [vmem:[%s5 + $0x60] sm:$0xf]
    %v12175 = vld [vmem:[%s5 + $0x64] sm:$0xf]
    %v12176 = vld [vmem:[%s5 + $0x68] sm:$0xf]
    %v12177 = vld [vmem:[%s5 + $0x6c] sm:$0xf]
    %v12178 = vld [vmem:[%s5 + $0x70] sm:$0xf]
    %v12179 = vld [vmem:[%s5 + $0x74] sm:$0xf]
    %v12180 = vld [vmem:[%s5 + $0x78] sm:$0xf]
    %v12181 = vld [vmem:[%s5 + $0x7c] sm:$0xf]
    %v12182 = vld [vmem:[%s5 + $0x80] sm:$0xf]
    %v12183 = vld [vmem:[%s5 + $0x84] sm:$0xf]
    %v12184 = vld [vmem:[%s5 + $0x88] sm:$0xf]
    %v12185 = vld [vmem:[%s5 + $0x8c] sm:$0xf]
    %v12186 = vld [vmem:[%s5 + $0x90] sm:$0xf]
    %v12187 = vld [vmem:[%s5 + $0x94] sm:$0xf]
    %v12188 = vld [vmem:[%s5 + $0x98] sm:$0xf]
    %v12189 = vld [vmem:[%s5 + $0x9c] sm:$0xf]
    %v12190 = vld [vmem:[%s5 + $0xa0] sm:$0xf]
    %v12191 = vld [vmem:[%s5 + $0xa4] sm:$0xf]
    %v12192 = vld [vmem:[%s5 + $0xa8] sm:$0xf]
    %v12193 = vld [vmem:[%s5 + $0xac] sm:$0xf]
    %v12194 = vld [vmem:[%s5 + $0xb0] sm:$0xf]
    %v12195 = vld [vmem:[%s5 + $0xb4] sm:$0xf]
    %v12196 = vld [vmem:[%s5 + $0xb8] sm:$0xf]
    %v12197 = vld [vmem:[%s5 + $0xbc] sm:$0xf]
    %v12198 = vld [vmem:[%s5 + $0xc0] sm:$0xf]
    %v12199 = vld [vmem:[%s5 + $0xc4] sm:$0xf]
    %v12200 = vld [vmem:[%s5 + $0xc8] sm:$0xf]
    %v12201 = vld [vmem:[%s5 + $0xcc] sm:$0xf]
    %v12202 = vld [vmem:[%s5 + $0xd0] sm:$0xf]
    %v12203 = vld [vmem:[%s5 + $0xd4] sm:$0xf]
    %v12204 = vld [vmem:[%s5 + $0xd8] sm:$0xf]
    %v12205 = vld [vmem:[%s5 + $0xdc] sm:$0xf]
    %v12206 = vld [vmem:[%s5 + $0xe0] sm:$0xf]
    %v12207 = vld [vmem:[%s5 + $0xe4] sm:$0xf]
    %v12208 = vld [vmem:[%s5 + $0xe8] sm:$0xf]
    %v12209 = vld [vmem:[%s5 + $0xec] sm:$0xf]
    %v12210 = vld [vmem:[%s5 + $0xf0] sm:$0xf]
    %v12211 = vld [vmem:[%s5 + $0xf4] sm:$0xf]
    %v12212 = vld [vmem:[%s5 + $0xf8] sm:$0xf]
    %v12213 = vld [vmem:[%s5 + $0xfc] sm:$0xf]
    %v12214 = vld [vmem:[%s6] sm:$0x1]
    %v12216 = vlaneseq
    %v12217 = vshrl.u32 %v12216, 7
    %v12218 = vsub.s32 0, %v12217
    %v12219 = vrot.slane %v12214, %v12218
    %v12285 = vunpack.c.l.b16 %v12150
    %v12286 = vunpack.c.l.b16 %v12151
    %v12287 = vunpack.c.l.b16 %v12152
    %v12288 = vunpack.c.l.b16 %v12153
    %v12289 = vunpack.c.l.b16 %v12154
    %v12290 = vunpack.c.l.b16 %v12155
    %v12291 = vunpack.c.l.b16 %v12156
    %v12292 = vunpack.c.l.b16 %v12157
    %v12293 = vunpack.c.l.b16 %v12158
    %v12294 = vunpack.c.l.b16 %v12159
    %v12295 = vunpack.c.l.b16 %v12160
    %v12296 = vunpack.c.l.b16 %v12161
    %v12297 = vunpack.c.l.b16 %v12162
    %v12298 = vunpack.c.l.b16 %v12163
    %v12299 = vunpack.c.l.b16 %v12164
    %v12300 = vunpack.c.l.b16 %v12165
    %v12301 = vunpack.c.l.b16 %v12166
    %v12302 = vunpack.c.l.b16 %v12167
    %v12303 = vunpack.c.l.b16 %v12168
    %v12304 = vunpack.c.l.b16 %v12169
    %v12305 = vunpack.c.l.b16 %v12170
    %v12306 = vunpack.c.l.b16 %v12171
    %v12307 = vunpack.c.l.b16 %v12172
    %v12308 = vunpack.c.l.b16 %v12173
    %v12309 = vunpack.c.l.b16 %v12174
    %v12310 = vunpack.c.l.b16 %v12175
    %v12311 = vunpack.c.l.b16 %v12176
    %v12312 = vunpack.c.l.b16 %v12177
    %v12313 = vunpack.c.l.b16 %v12178
    %v12314 = vunpack.c.l.b16 %v12179
    %v12315 = vunpack.c.l.b16 %v12180
    %v12316 = vunpack.c.l.b16 %v12181
    %v12317 = vunpack.c.l.b16 %v12182
    %v12318 = vunpack.c.l.b16 %v12183
    %v12319 = vunpack.c.l.b16 %v12184
    %v12320 = vunpack.c.l.b16 %v12185
    %v12321 = vunpack.c.l.b16 %v12186
    %v12322 = vunpack.c.l.b16 %v12187
    %v12323 = vunpack.c.l.b16 %v12188
    %v12324 = vunpack.c.l.b16 %v12189
    %v12325 = vunpack.c.l.b16 %v12190
    %v12326 = vunpack.c.l.b16 %v12191
    %v12327 = vunpack.c.l.b16 %v12192
    %v12328 = vunpack.c.l.b16 %v12193
    %v12329 = vunpack.c.l.b16 %v12194
    %v12330 = vunpack.c.l.b16 %v12195
    %v12331 = vunpack.c.l.b16 %v12196
    %v12332 = vunpack.c.l.b16 %v12197
    %v12333 = vunpack.c.l.b16 %v12198
    %v12334 = vunpack.c.l.b16 %v12199
    %v12335 = vunpack.c.l.b16 %v12200
    %v12336 = vunpack.c.l.b16 %v12201
    %v12337 = vunpack.c.l.b16 %v12202
    %v12338 = vunpack.c.l.b16 %v12203
    %v12339 = vunpack.c.l.b16 %v12204
    %v12340 = vunpack.c.l.b16 %v12205
    %v12341 = vunpack.c.l.b16 %v12206
    %v12342 = vunpack.c.l.b16 %v12207
    %v12343 = vunpack.c.l.b16 %v12208
    %v12344 = vunpack.c.l.b16 %v12209
    %v12345 = vunpack.c.l.b16 %v12210
    %v12346 = vunpack.c.l.b16 %v12211
    %v12347 = vunpack.c.l.b16 %v12212
    %v12348 = vunpack.c.l.b16 %v12213
    %v12349 = vpack.c.b16 %v12286, %v12285
    %v12350 = vpack.c.b16 %v12288, %v12287
    %v12351 = vpack.c.b16 %v12290, %v12289
    %v12352 = vpack.c.b16 %v12292, %v12291
    %v12353 = vpack.c.b16 %v12294, %v12293
    %v12354 = vpack.c.b16 %v12296, %v12295
    %v12355 = vpack.c.b16 %v12298, %v12297
    %v12356 = vpack.c.b16 %v12300, %v12299
    %v12357 = vpack.c.b16 %v12302, %v12301
    %v12358 = vpack.c.b16 %v12304, %v12303
    %v12359 = vpack.c.b16 %v12306, %v12305
    %v12360 = vpack.c.b16 %v12308, %v12307
    %v12361 = vpack.c.b16 %v12310, %v12309
    %v12362 = vpack.c.b16 %v12312, %v12311
    %v12363 = vpack.c.b16 %v12314, %v12313
    %v12364 = vpack.c.b16 %v12316, %v12315
    %v12365 = vpack.c.b16 %v12318, %v12317
    %v12366 = vpack.c.b16 %v12320, %v12319
    %v12367 = vpack.c.b16 %v12322, %v12321
    %v12368 = vpack.c.b16 %v12324, %v12323
    %v12369 = vpack.c.b16 %v12326, %v12325
    %v12370 = vpack.c.b16 %v12328, %v12327
    %v12371 = vpack.c.b16 %v12330, %v12329
    %v12372 = vpack.c.b16 %v12332, %v12331
    %v12373 = vpack.c.b16 %v12334, %v12333
    %v12374 = vpack.c.b16 %v12336, %v12335
    %v12375 = vpack.c.b16 %v12338, %v12337
    %v12376 = vpack.c.b16 %v12340, %v12339
    %v12377 = vpack.c.b16 %v12342, %v12341
    %v12378 = vpack.c.b16 %v12344, %v12343
    %v12379 = vpack.c.b16 %v12346, %v12345
    %v12380 = vpack.c.b16 %v12348, %v12347
    %12413 = vmatprep.subr.bf16.mxu0 0
    %12414 = vmatpush1.bf16.msra.mxu0 %v12349
    %12415 = vmatprep.subr.bf16.mxu0 0
    %12416 = vmatpush1.bf16.msra.mxu0 %v12350
    %12417 = vmatprep.subr.bf16.mxu0 0
    %12418 = vmatpush1.bf16.msra.mxu0 %v12351
    %12419 = vmatprep.subr.bf16.mxu0 0
    %12420 = vmatpush1.bf16.msra.mxu0 %v12352
    %12421 = vmatprep.subr.bf16.mxu0 0
    %12422 = vmatpush1.bf16.msra.mxu0 %v12353
    %12423 = vmatprep.subr.bf16.mxu0 0
    %12424 = vmatpush1.bf16.msra.mxu0 %v12354
    %12425 = vmatprep.subr.bf16.mxu0 0
    %12426 = vmatpush1.bf16.msra.mxu0 %v12355
    %12427 = vmatprep.subr.bf16.mxu0 0
    %12428 = vmatpush1.bf16.msra.mxu0 %v12356
    %12429 = vmatprep.subr.bf16.mxu0 0
    %12430 = vmatpush1.bf16.msra.mxu0 %v12357
    %12431 = vmatprep.subr.bf16.mxu0 0
    %12432 = vmatpush1.bf16.msra.mxu0 %v12358
    %12433 = vmatprep.subr.bf16.mxu0 0
    %12434 = vmatpush1.bf16.msra.mxu0 %v12359
    %12435 = vmatprep.subr.bf16.mxu0 0
    %12436 = vmatpush1.bf16.msra.mxu0 %v12360
    %12437 = vmatprep.subr.bf16.mxu0 0
    %12438 = vmatpush1.bf16.msra.mxu0 %v12361
    %12439 = vmatprep.subr.bf16.mxu0 0
    %12440 = vmatpush1.bf16.msra.mxu0 %v12362
    %12441 = vmatprep.subr.bf16.mxu0 0
    %12442 = vmatpush1.bf16.msra.mxu0 %v12363
    %12443 = vmatprep.subr.bf16.mxu0 0
    %12444 = vmatpush1.bf16.msra.mxu0 %v12364
    %12445 = vmatprep.mubr.bf16.mxu0 %v12143
    %12446 = vmatmul.mubr.bf16.gmra.mrb[0].mxu0 %v12142
    %v12447 = vpop.f32.mrb[0].mxu0
    %v12448 = vadd.f32 %v12219, %v12447
    %v12449 = vpop.f32.mrb[0].mxu0
    %v12450 = vpop.f32.mrb[0].mxu0
    %v12451 = vadd.f32 %v12219, %v12450
    %v12452 = vpop.f32.mrb[0].mxu0
    %12453 = vmatprep.mubr.bf16.mxu0 %v12147
    %12454 = vmatmul.mubr.bf16.gmra.mrb[0].mxu0 %v12146
    %v12455 = vpop.f32.mrb[0].mxu0
    %v12456 = vadd.f32 %v12219, %v12455
    %v12457 = vpop.f32.mrb[0].mxu0
    %v12458 = vpop.f32.mrb[0].mxu0
    %v12459 = vadd.f32 %v12219, %v12458
    %v12460 = vpop.f32.mrb[0].mxu0
    %12461 = vdwg.mxu0
    %12462 = vmatprep.subr.bf16.mxu0 0
    %12463 = vmatpush1.bf16.msra.mxu0 %v12365
    %12464 = vmatprep.subr.bf16.mxu0 0
    %12465 = vmatpush1.bf16.msra.mxu0 %v12366
    %12466 = vmatprep.subr.bf16.mxu0 0
    %12467 = vmatpush1.bf16.msra.mxu0 %v12367
    %12468 = vmatprep.subr.bf16.mxu0 0
    %12469 = vmatpush1.bf16.msra.mxu0 %v12368
    %12470 = vmatprep.subr.bf16.mxu0 0
    %12471 = vmatpush1.bf16.msra.mxu0 %v12369
    %12472 = vmatprep.subr.bf16.mxu0 0
    %12473 = vmatpush1.bf16.msra.mxu0 %v12370
    %12474 = vmatprep.subr.bf16.mxu0 0
    %12475 = vmatpush1.bf16.msra.mxu0 %v12371
    %12476 = vmatprep.subr.bf16.mxu0 0
    %12477 = vmatpush1.bf16.msra.mxu0 %v12372
    %12478 = vmatprep.subr.bf16.mxu0 0
    %12479 = vmatpush1.bf16.msra.mxu0 %v12373
    %12480 = vmatprep.subr.bf16.mxu0 0
    %12481 = vmatpush1.bf16.msra.mxu0 %v12374
    %12482 = vmatprep.subr.bf16.mxu0 0
    %12483 = vmatpush1.bf16.msra.mxu0 %v12375
    %12484 = vmatprep.subr.bf16.mxu0 0
    %12485 = vmatpush1.bf16.msra.mxu0 %v12376
    %12486 = vmatprep.subr.bf16.mxu0 0
    %12487 = vmatpush1.bf16.msra.mxu0 %v12377
    %12488 = vmatprep.subr.bf16.mxu0 0
    %12489 = vmatpush1.bf16.msra.mxu0 %v12378
    %12490 = vmatprep.subr.bf16.mxu0 0
    %12491 = vmatpush1.bf16.msra.mxu0 %v12379
    %12492 = vmatprep.subr.bf16.mxu0 0
    %12493 = vmatpush1.bf16.msra.mxu0 %v12380
    %12494 = vmatprep.mubr.bf16.mxu0 %v12145
    %12495 = vmatmul.mubr.bf16.gmra.mrb[0].mxu0 %v12144
    %v12496 = vpop.f32.mrb[0].mxu0
    %v12497 = vadd.f32 %v12448, %v12496
    %v12498 = vpop.f32.mrb[0].mxu0
    %v12499 = vpop.f32.mrb[0].mxu0
    %v12500 = vadd.f32 %v12451, %v12499
    %v12501 = vpop.f32.mrb[0].mxu0
    %12502 = vmatprep.mubr.bf16.mxu0 %v12149
    %12503 = vmatmul.mubr.bf16.gmra.mrb[0].mxu0 %v12148
    %v12504 = vpop.f32.mrb[0].mxu0
    %v12505 = vadd.f32 %v12456, %v12504
    %v12506 = vpop.f32.mrb[0].mxu0
    %v12507 = vpop.f32.mrb[0].mxu0
    %v12508 = vadd.f32 %v12459, %v12507
    %v12509 = vpop.f32.mrb[0].mxu0
    %12510 = vdwg.mxu0
    %v12511 = vxor.u32 %v12497, 2147483648
    %v12512 = vxor.u32 %v12500, 2147483648
    %v12513 = vxor.u32 %v12505, 2147483648
    %v12514 = vxor.u32 %v12508, 2147483648
    %v12515 = vmul.f32 %v12511, 1.442695
    %v12516 = vpow.pop %v12515
    %v12517 = vmul.f32 %v12512, 1.442695
    %v12518 = vpow.pop %v12517
    %v12519 = vmul.f32 %v12513, 1.442695
    %v12520 = vpow.pop %v12519
    %v12521 = vmul.f32 %v12514, 1.442695
    %v12522 = vpow.pop %v12521
    %v12523 = vadd.f32 %v12516, 1.0
    %v12524 = vadd.f32 %v12518, 1.0
    %v12525 = vadd.f32 %v12520, 1.0
    %v12526 = vadd.f32 %v12522, 1.0
    %v12527 = vrcp.pop %v12523
    %v12528 = vmul.f32 1.0, %v12527
    %v12529 = vrcp.pop %v12524
    %v12530 = vmul.f32 1.0, %v12529
    %v12531 = vrcp.pop %v12525
    %v12532 = vmul.f32 1.0, %v12531
    %v12533 = vrcp.pop %v12526
    %v12534 = vmul.f32 1.0, %v12533
    %12535 = vst [vmem:[#allocation6] sm:$0xff] %v12528
    %12536 = vst [vmem:[#allocation6 + $0x8] sm:$0xff] %v12530
    %12537 = vst [vmem:[#allocation6 + $0x10] sm:$0xff] %v12532
    %12538 = vst [vmem:[#allocation6 + $0x18] sm:$0xff] %v12534
    // Predicated region
    $region34: #{_lambda_.1} parent=1 // pred_check
      _
    $region35: #{_lambda_.1} parent=1 // pred_check_branch
      %12540 = sbr.rel (0) target = $region37
    $region36: #{_lambda_.1} parent=1 // pred_region
      %s12542 = ssub.s32 512, 512
      %12543 = vsyncadd [#allocation5], %s12542
      %s12544 = sshll.u32 [#allocation6], 4
      %s12545 = int_to_ptr.vmem [resolvable:$true] %s12544
      %12550 = dma.vmem_to_hbm [thread:$0]  %s12545, 512, %s7, [#allocation5], 128, 128, 8
    $region37: #{_lambda_.1} parent=1 // pred_fallthru
      _
    // Predicated region
    $region38: #{_lambda_.1} parent=1 // pred_check
      _
    $region39: #{_lambda_.1} parent=1 // pred_check_branch
      %12552 = sbr.rel (0) target = $region41
    $region40: #{_lambda_.1} parent=1 // pred_region
      %12553 = dma.done [#allocation5], 512
    $region41: #{_lambda_.1} parent=1 // pred_fallthru
      _
    %12554 = vsyncpa [#allocation4], 1
    %12555 = vsyncpa [#allocation5], 1

</llo_original>
